<compile_context>
chip_gen: v5e
topology: v5e:2x2
jax: 0.10.0
libtpu: 0.0.40
codegen_flags: <defaults>
</compile_context>

<pallas_src>
import functools

import jax
import jax.numpy as jnp
from jax.experimental import pallas as pl
from jax.experimental.pallas import tpu as pltpu

SELU_ALPHA = 1.6732632423543772
SELU_SCALE = 1.0507009873554805


def _selu(x):
    return SELU_SCALE * jnp.where(x > 0, x, SELU_ALPHA * (jnp.exp(x) - 1.0))


def _round_up(x, m):
    return (x + m - 1) // m * m


def _pad2d(a, rows, cols):
    r, c = a.shape
    if (r, c) == (rows, cols):
        return a
    return jnp.pad(a, ((0, rows - r), (0, cols - c)))


# ---------------------------------------------------------------------------
# Kernel 1: fused matmul + bias + activation (bf16 in, f32 accumulate/epilogue)
# ---------------------------------------------------------------------------
def _matmul_bias_act_kernel(x_ref, w_ref, b_ref, o_ref, *, act):
    acc = jnp.dot(x_ref[...], w_ref[...], preferred_element_type=jnp.float32)
    acc = acc + b_ref[...]
    if act == "selu":
        acc = _selu(acc)
    elif act == "sigmoid":
        acc = jax.nn.sigmoid(acc)
    o_ref[...] = acc


def matmul_bias_act(x, w_prepped, b2d, act):
    """act(x @ w + b).  x:(M,K) float; w_prepped:(Kp,Np) bf16; b2d:(1,Np) f32."""
    M, K = x.shape
    Kp, Np = w_prepped.shape
    tm = 256 if M > 256 else _round_up(M, 8)
    Mp = _round_up(M, tm)
    xb = _pad2d(x.astype(jnp.bfloat16), Mp, Kp)
    out = pl.pallas_call(
        functools.partial(_matmul_bias_act_kernel, act=act),
        out_shape=jax.ShapeDtypeStruct((Mp, Np), jnp.float32),
        grid=(Mp // tm,),
        in_specs=[
            pl.BlockSpec((tm, Kp), lambda i: (i, 0)),
            pl.BlockSpec((Kp, Np), lambda i: (0, 0)),
            pl.BlockSpec((1, Np), lambda i: (0, 0)),
        ],
        out_specs=pl.BlockSpec((tm, Np), lambda i: (i, 0)),
        compiler_params=pltpu.CompilerParams(dimension_semantics=("parallel",)),
    )(xb, w_prepped, b2d)
    return out[:M]


# ---------------------------------------------------------------------------
# Kernel 2: fused fc21/fc22 + reparameterization + fc3 ("latent block")
#   out[:, 0:128]   -> mu      (cols 0..lat_dim real)
#   out[:, 128:256] -> logvar  (cols 0..lat_dim real)
#   out[:, 256:]    -> selu(fc3([z, onehot]))  (1024 cols, NHWC-permuted)
# ---------------------------------------------------------------------------
def _latent_kernel(h_ref, wcat_ref, bcat_ref, eps_ref, oneh_ref,
                   w3z_ref, w3c_ref, b3_ref, o_ref):
    acc = jnp.dot(h_ref[...], wcat_ref[...], preferred_element_type=jnp.float32)
    acc = acc + bcat_ref[...]
    mu = acc[:, 0:128]
    logvar = acc[:, 128:256]
    z = mu + eps_ref[...] * jnp.exp(0.5 * logvar)
    h3 = jnp.dot(z.astype(jnp.bfloat16), w3z_ref[...],
                 preferred_element_type=jnp.float32)
    h3 = h3 + jnp.dot(oneh_ref[...], w3c_ref[...],
                      preferred_element_type=jnp.float32)
    h3 = _selu(h3 + b3_ref[...])
    o_ref[...] = jnp.concatenate([mu, logvar, h3], axis=1)


def latent_block(h1, eps, onehot, pp, lat_dim):
    N = h1.shape[0]
    Mp = _round_up(N, 8)
    h = _pad2d(h1.astype(jnp.bfloat16), Mp, 256)
    e = _pad2d(eps.astype(jnp.float32), Mp, 128)
    oh = _pad2d(onehot.astype(jnp.bfloat16), Mp, 128)
    out = pl.pallas_call(
        _latent_kernel,
        out_shape=jax.ShapeDtypeStruct((Mp, 1280), jnp.float32),
    )(h, pp["wcat"], pp["bcat"], e, oh, pp["w3z"], pp["w3c"], pp["b3"])
    mu = out[:N, 0:lat_dim]
    logvar = out[:N, 128:128 + lat_dim]
    h3 = out[:N, 256:1280]
    return mu, logvar, h3


# ---------------------------------------------------------------------------
# Conv / ConvTranspose layers (NHWC), thin plain-JAX glue around the kernels
# ---------------------------------------------------------------------------
def _im2col_nhwc(x, k, stride):
    """x:(N,H,W,C) -> patches (N*Ho*Wo, k*k*C), col = (i*k+j)*C + c."""
    N, H, W, C = x.shape
    Ho = (H - k) // stride + 1
    Wo = (W - k) // stride + 1
    cols = []
    for i in range(k):
        for j in range(k):
            cols.append(x[:, i:i + stride * (Ho - 1) + 1:stride,
                            j:j + stride * (Wo - 1) + 1:stride, :])
    p = jnp.stack(cols, axis=3)                       # (N, Ho, Wo, k*k, C)
    return p.reshape(N * Ho * Wo, k * k * C), Ho, Wo


def conv2d_nhwc(x, w_prepped, b2d, stride, k, o_ch, act):
    N = x.shape[0]
    patches, Ho, Wo = _im2col_nhwc(x, k, stride)
    y = matmul_bias_act(patches, w_prepped, b2d, act)
    return y[:, :o_ch].reshape(N, Ho, Wo, o_ch)


def conv_transpose2d_nhwc(x, w_prepped, b2d, o_ch, act):
    """ConvTranspose2d(k=4, stride=2, padding=1) via merged sub-pixel phases.

    out[n, 2v+py, 2u+px, o] = sum_{a,b,c} xpad[n, v+py+a, u+px+b, c]
                                          * w[c, o, 3-2a-py, 3-2b-px]
    -> one matmul with K = 9*C (3x3 taps of xpad) and N = 4*O (phases).
    """
    N, H, W, C = x.shape
    xp = jnp.pad(x, ((0, 0), (1, 1), (1, 1), (0, 0)))
    cols = [xp[:, dy:dy + H, dx:dx + W, :] for dy in range(3) for dx in range(3)]
    p = jnp.stack(cols, axis=3).reshape(N * H * W, 9 * C)
    y = matmul_bias_act(p, w_prepped, b2d, act)         # (N*H*W, Np)
    y = y[:, :4 * o_ch].reshape(N, H, W, 2, 2, o_ch)    # (n, v, u, py, px, o)
    y = y.transpose(0, 1, 3, 2, 4, 5)                   # (n, v, py, u, px, o)
    return y.reshape(N, 2 * H, 2 * W, o_ch)


# ---------------------------------------------------------------------------
# Parameter init (PyTorch layouts) + one-time repacking for the kernels
# ---------------------------------------------------------------------------
def _xavier(key, shape, fan_in, fan_out):
    bound = (6.0 / (fan_in + fan_out)) ** 0.5
    return jax.random.uniform(key, shape, jnp.float32, -bound, bound)


def init_params(key, color_channels=1, lat_dim=20):
    filters = 64 if color_channels != 3 else 256
    ks = jax.random.split(key, 16)
    k4 = 4 * 4
    p = {}
    # encoder convs (Conv2d weight layout: (out, in, k, k))
    p["conv1e_w"] = _xavier(ks[0], (filters, color_channels, 4, 4),
                            color_channels * k4, filters * k4)
    p["conv1e_b"] = 0.01 * jnp.ones((filters,), jnp.float32)
    p["conv2e_w"] = _xavier(ks[1], (filters, filters, 4, 4),
                            filters * k4, filters * k4)
    p["conv2e_b"] = 0.01 * jnp.ones((filters,), jnp.float32)
    p["conv3e_w"] = _xavier(ks[2], (64, filters, 4, 4), filters * k4, 64 * k4)
    p["conv3e_b"] = 0.01 * jnp.ones((64,), jnp.float32)
    # fc heads (Linear weight layout: (out, in))
    p["fc21_w"] = _xavier(ks[3], (lat_dim, 256), 256, lat_dim)
    p["fc21_b"] = 0.01 * jnp.ones((lat_dim,), jnp.float32)
    p["fc22_w"] = _xavier(ks[4], (lat_dim, 256), 256, lat_dim)
    p["fc22_b"] = 0.01 * jnp.ones((lat_dim,), jnp.float32)
    # standard decoder
    p["fc3_w"] = _xavier(ks[5], (64 * 4 * 4, lat_dim + 10), lat_dim + 10, 64 * 4 * 4)
    p["fc3_b"] = 0.01 * jnp.ones((64 * 4 * 4,), jnp.float32)
    # ConvTranspose2d weight layout: (in, out, k, k)
    p["conv1d_w"] = _xavier(ks[6], (64, filters, 4, 4), 64 * k4, filters * k4)
    p["conv1d_b"] = 0.01 * jnp.ones((filters,), jnp.float32)
    p["conv2d_w"] = _xavier(ks[7], (filters, filters, 4, 4),
                            filters * k4, filters * k4)
    p["conv2d_b"] = 0.01 * jnp.ones((filters,), jnp.float32)
    p["conv3d_w"] = _xavier(ks[8], (filters, color_channels, 4, 4),
                            filters * k4, color_channels * k4)
    p["conv3d_b"] = 0.01 * jnp.ones((color_channels,), jnp.float32)
    return p


def prepare_params(params, color_channels=1, lat_dim=20):
    """One-time repack: permute to NHWC/im2col layouts, zero-pad K/N to 128
    multiples, cast matmul operands to bf16 (biases stay f32)."""
    pp = {}

    def conv_w(w):                               # (O, C, k, k) -> (Kp, Np) bf16
        O, C, k, _ = w.shape
        wm = w.transpose(2, 3, 1, 0).reshape(k * k * C, O)
        return _pad2d(wm, _round_up(k * k * C, 128),
                      _round_up(O, 128)).astype(jnp.bfloat16)

    def bias_row(b, n_pad):
        return _pad2d(b.astype(jnp.float32)[None, :], 1, n_pad)

    def convT_w(w):                              # (C, O, 4, 4) -> (Kp, Np) bf16
        C, O = w.shape[0], w.shape[1]
        wm = jnp.zeros((9 * C, 4 * O), jnp.float32)
        for py in range(2):
            for px in range(2):
                for a in range(2):
                    for bb in range(2):
                        dy, dx = py + a, px + bb
                        ii, jj = 3 - 2 * a - py, 3 - 2 * bb - px
                        tap, ph = dy * 3 + dx, py * 2 + px
                        wm = wm.at[tap * C:(tap + 1) * C,
                                   ph * O:(ph + 1) * O].set(w[:, :, ii, jj])
        return _pad2d(wm, _round_up(9 * C, 128),
                      _round_up(4 * O, 128)).astype(jnp.bfloat16)

    def convT_b(b):
        O = b.shape[0]
        return _pad2d(jnp.tile(b.astype(jnp.float32), 4)[None, :], 1,
                      _round_up(4 * O, 128))

    # encoder convs
    for name in ("conv1e", "conv2e", "conv3e"):
        o_ch = params[name + "_w"].shape[0]
        pp[name + "_w"] = conv_w(params[name + "_w"])
        pp[name + "_b"] = bias_row(params[name + "_b"], _round_up(o_ch, 128))

    # fc21/fc22 merged head.  PyTorch flattens (N,64,2,2) NCHW as c*4+h*2+w;
    # our NHWC flatten is (h*2+w)*64+c, so permute the K axis accordingly.
    def head_w(w):                               # (lat, 256) -> (256, lat)
        lat = w.shape[0]
        return w.reshape(lat, 64, 2, 2).transpose(2, 3, 1, 0).reshape(256, lat)

    wcat = jnp.zeros((256, 256), jnp.float32)
    wcat = wcat.at[:, :lat_dim].set(head_w(params["fc21_w"]))
    wcat = wcat.at[:, 128:128 + lat_dim].set(head_w(params["fc22_w"]))
    pp["wcat"] = wcat.astype(jnp.bfloat16)
    bcat = jnp.zeros((1, 256), jnp.float32)
    bcat = bcat.at[0, :lat_dim].set(params["fc21_b"])
    bcat = bcat.at[0, 128:128 + lat_dim].set(params["fc22_b"])
    pp["bcat"] = bcat

    # fc3: permute output axis from NCHW flatten (c*16+h*4+w) to NHWC flatten
    # ((h*4+w)*64+c), split K into the z part and the onehot part.
    D = lat_dim + 10
    w3p = params["fc3_w"].reshape(64, 4, 4, D).transpose(1, 2, 0, 3).reshape(1024, D)
    b3p = params["fc3_b"].reshape(64, 4, 4).transpose(1, 2, 0).reshape(1024)
    pp["w3z"] = _pad2d(w3p[:, :lat_dim].T, 128, 1024).astype(jnp.bfloat16)
    pp["w3c"] = _pad2d(w3p[:, lat_dim:].T, 128, 1024).astype(jnp.bfloat16)
    pp["b3"] = b3p[None, :].astype(jnp.float32)

    # decoder transpose convs (merged-phase layout)
    for name in ("conv1d", "conv2d", "conv3d"):
        pp[name + "_w"] = convT_w(params[name + "_w"])
        pp[name + "_b"] = convT_b(params[name + "_b"])
    return pp


# ---------------------------------------------------------------------------
# VAE forward (standard architecture, activ = selu)
# ---------------------------------------------------------------------------
def vae_forward(pp, x, c, eps, color_channels=1, lat_dim=20):
    N = x.shape[0]
    filters = 64 if color_channels != 3 else 256
    x = x.reshape(N, color_channels, 32, 32).transpose(0, 2, 3, 1)     # NHWC

    # encode
    h = conv2d_nhwc(x, pp["conv1e_w"], pp["conv1e_b"], 2, 4, filters, "selu")  # (N,15,15,F)
    h = conv2d_nhwc(h, pp["conv2e_w"], pp["conv2e_b"], 2, 4, filters, "selu")  # (N,6,6,F)
    h = conv2d_nhwc(h, pp["conv3e_w"], pp["conv3e_b"], 2, 4, 64, "selu")       # (N,2,2,64)
    h1 = h.reshape(N, 256)

    # fc21/fc22 + reparameterize (eps = torch.randn_like) + fc3, all fused
    onehot = jax.nn.one_hot(c, 10, dtype=jnp.float32)                  # idx2onehot
    mu, logvar, h3 = latent_block(h1, eps, onehot, pp, lat_dim)

    # decode
    d = h3.reshape(N, 4, 4, 64)
    d = conv_transpose2d_nhwc(d, pp["conv1d_w"], pp["conv1d_b"], filters, "selu")           # (N,8,8,F)
    d = conv_transpose2d_nhwc(d, pp["conv2d_w"], pp["conv2d_b"], filters, "selu")           # (N,16,16,F)
    d = conv_transpose2d_nhwc(d, pp["conv3d_w"], pp["conv3d_b"], color_channels, "sigmoid") # (N,32,32,C)
    recon = d.transpose(0, 3, 1, 2).reshape(N, 32 * 32 * color_channels)
    return recon, mu, logvar


if __name__ == "__main__":
    COLOR_CHANNELS = 1
    LAT_DIM = 20
    BATCH = 2

    key = jax.random.PRNGKey(0)
    pkey, xkey, ckey, ekey = jax.random.split(key, 4)

    params = init_params(pkey, COLOR_CHANNELS, LAT_DIM)
    pp = prepare_params(params, COLOR_CHANNELS, LAT_DIM)   # one-time weight repack

    x = jax.random.uniform(xkey, (BATCH, COLOR_CHANNELS, 32, 32), jnp.float32)
    c = jax.random.randint(ckey, (BATCH,), 0, 10)
    eps = jax.random.normal(ekey, (BATCH, LAT_DIM), jnp.float32)

    fwd = jax.jit(functools.partial(vae_forward,
                                    color_channels=COLOR_CHANNELS,
                                    lat_dim=LAT_DIM))
    recon, mu, logvar = fwd(pp, x, c, eps)
    jax.block_until_ready((recon, mu, logvar))

    assert recon.shape == (BATCH, 32 * 32 * COLOR_CHANNELS)
    assert mu.shape == (BATCH, LAT_DIM) and logvar.shape == (BATCH, LAT_DIM)
    assert bool(jnp.all(jnp.isfinite(recon)))
    assert bool(jnp.all(jnp.isfinite(mu))) and bool(jnp.all(jnp.isfinite(logvar)))
    assert bool(jnp.all((recon >= 0.0) & (recon <= 1.0)))
    print("KERNEL_OK")
</pallas_src>

<mosaic_0001>
module attributes {stable_mosaic.version = 11 : i64} {
  func.func @_matmul_bias_act_kernel(%arg0: i32, %arg1: memref<256x128xbf16, #tpu.memory_space<vmem>>, %arg2: memref<128x128xbf16, #tpu.memory_space<vmem>>, %arg3: memref<1x128xf32, #tpu.memory_space<vmem>>, %arg4: memref<256x128xf32, #tpu.memory_space<vmem>>) attributes {dimension_semantics = [#tpu.dimension_semantics<parallel>], iteration_bounds = array<i64: 2>, scalar_prefetch = 0 : i64, scratch_operands = 0 : i64, tpu.core_type = #tpu.core_type<tc>, window_params = [{transform_indices = @transform_0, window_bounds = array<i64: 256, 128>}, {pipeline_mode = #tpu.pipeline_mode<synchronous>, transform_indices = @transform_1, window_bounds = array<i64: 128, 128>}, {pipeline_mode = #tpu.pipeline_mode<synchronous>, transform_indices = @transform_2, window_bounds = array<i64: 1, 128>}, {transform_indices = @transform_3, window_bounds = array<i64: 256, 128>}]} {
    %c0 = arith.constant 0 : index
    %c0_0 = arith.constant 0 : index
    %0 = vector.load %arg1[%c0, %c0_0] : memref<256x128xbf16, #tpu.memory_space<vmem>>, vector<256x128xbf16>
    %c0_1 = arith.constant 0 : index
    %c0_2 = arith.constant 0 : index
    %1 = vector.load %arg2[%c0_1, %c0_2] : memref<128x128xbf16, #tpu.memory_space<vmem>>, vector<128x128xbf16>
    %cst = arith.constant dense<0.000000e+00> : vector<256x128xf32>
    %2 = tpu.matmul %0, %1, %cst {dimension_numbers = #tpu.dot_dimension_numbers<[1], [0], [0], [1], [0, 0, 1, 1], [], []>} : vector<256x128xbf16>, vector<128x128xbf16>, vector<256x128xf32> -> vector<256x128xf32>
    %c0_3 = arith.constant 0 : index
    %c0_4 = arith.constant 0 : index
    %3 = vector.load %arg3[%c0_3, %c0_4] : memref<1x128xf32, #tpu.memory_space<vmem>>, vector<1x128xf32>
    %4 = vector.broadcast %3 : vector<1x128xf32> to vector<256x128xf32>
    %5 = arith.addf %2, %4 : vector<256x128xf32>
    %cst_5 = arith.constant 0.000000e+00 : f32
    %6 = vector.broadcast %cst_5 : f32 to vector<256x128xf32>
    %7 = arith.cmpf ogt, %5, %6 : vector<256x128xf32>
    %8 = math.exp %5 : vector<256x128xf32>
    %cst_6 = arith.constant 1.000000e+00 : f32
    %9 = vector.broadcast %cst_6 : f32 to vector<256x128xf32>
    %10 = arith.subf %8, %9 : vector<256x128xf32>
    %cst_7 = arith.constant 1.67326319 : f32
    %11 = vector.broadcast %cst_7 : f32 to vector<256x128xf32>
    %12 = arith.mulf %11, %10 : vector<256x128xf32>
    %13 = arith.select %7, %5, %12 : vector<256x128xi1>, vector<256x128xf32>
    %cst_8 = arith.constant 1.05070102 : f32
    %14 = vector.broadcast %cst_8 : f32 to vector<256x128xf32>
    %15 = arith.mulf %14, %13 : vector<256x128xf32>
    %c0_9 = arith.constant 0 : index
    %c0_10 = arith.constant 0 : index
    %16 = vector.load %arg4[%c0_9, %c0_10] : memref<256x128xf32, #tpu.memory_space<vmem>>, vector<256x128xf32>
    tpu.vector_store %arg4[%c0_9, %c0_10], %15 {strides = array<i32>} : memref<256x128xf32, #tpu.memory_space<vmem>>, vector<256x128xf32>,
    return
  }
  func.func @transform_0(%arg0: i32) -> (i32, i32) {
    %c0_i32 = arith.constant 0 : i32
    %c0_i32_0 = arith.constant 0 : i32
    return %arg0, %c0_i32 : i32, i32
  }
  func.func @transform_1(%arg0: i32) -> (i32, i32) {
    %c0_i32 = arith.constant 0 : i32
    %c0_i32_0 = arith.constant 0 : i32
    %c0_i32_1 = arith.constant 0 : i32
    return %c0_i32, %c0_i32_0 : i32, i32
  }
  func.func @transform_2(%arg0: i32) -> (i32, i32) {
    %c0_i32 = arith.constant 0 : i32
    %c0_i32_0 = arith.constant 0 : i32
    %c0_i32_1 = arith.constant 0 : i32
    return %c0_i32, %c0_i32_0 : i32, i32
  }
  func.func @transform_3(%arg0: i32) -> (i32, i32) {
    %c0_i32 = arith.constant 0 : i32
    %c0_i32_0 = arith.constant 0 : i32
    return %arg0, %c0_i32 : i32, i32
  }
}

module attributes {stable_mosaic.version = 11 : i64} {
  func.func @_matmul_bias_act_kernel(%arg0: i32, %arg1: memref<72x1024xbf16, #tpu.memory_space<vmem>>, %arg2: memref<1024x128xbf16, #tpu.memory_space<vmem>>, %arg3: memref<1x128xf32, #tpu.memory_space<vmem>>, %arg4: memref<72x128xf32, #tpu.memory_space<vmem>>) attributes {dimension_semantics = [#tpu.dimension_semantics<parallel>], iteration_bounds = array<i64: 1>, scalar_prefetch = 0 : i64, scratch_operands = 0 : i64, tpu.core_type = #tpu.core_type<tc>, window_params = [{transform_indices = @transform_0, window_bounds = array<i64: 72, 1024>}, {pipeline_mode = #tpu.pipeline_mode<synchronous>, transform_indices = @transform_1, window_bounds = array<i64: 1024, 128>}, {pipeline_mode = #tpu.pipeline_mode<synchronous>, transform_indices = @transform_2, window_bounds = array<i64: 1, 128>}, {transform_indices = @transform_3, window_bounds = array<i64: 72, 128>}]} {
    %c0 = arith.constant 0 : index
    %c0_0 = arith.constant 0 : index
    %0 = vector.load %arg1[%c0, %c0_0] : memref<72x1024xbf16, #tpu.memory_space<vmem>>, vector<72x1024xbf16>
    %c0_1 = arith.constant 0 : index
    %c0_2 = arith.constant 0 : index
    %1 = vector.load %arg2[%c0_1, %c0_2] : memref<1024x128xbf16, #tpu.memory_space<vmem>>, vector<1024x128xbf16>
    %cst = arith.constant dense<0.000000e+00> : vector<72x128xf32>
    %2 = tpu.matmul %0, %1, %cst {dimension_numbers = #tpu.dot_dimension_numbers<[1], [0], [0], [1], [0, 0, 1, 1], [], []>} : vector<72x1024xbf16>, vector<1024x128xbf16>, vector<72x128xf32> -> vector<72x128xf32>
    %c0_3 = arith.constant 0 : index
    %c0_4 = arith.constant 0 : index
    %3 = vector.load %arg3[%c0_3, %c0_4] : memref<1x128xf32, #tpu.memory_space<vmem>>, vector<1x128xf32>
    %4 = vector.broadcast %3 : vector<1x128xf32> to vector<72x128xf32>
    %5 = arith.addf %2, %4 : vector<72x128xf32>
    %cst_5 = arith.constant 0.000000e+00 : f32
    %6 = vector.broadcast %cst_5 : f32 to vector<72x128xf32>
    %7 = arith.cmpf ogt, %5, %6 : vector<72x128xf32>
    %8 = math.exp %5 : vector<72x128xf32>
    %cst_6 = arith.constant 1.000000e+00 : f32
    %9 = vector.broadcast %cst_6 : f32 to vector<72x128xf32>
    %10 = arith.subf %8, %9 : vector<72x128xf32>
    %cst_7 = arith.constant 1.67326319 : f32
    %11 = vector.broadcast %cst_7 : f32 to vector<72x128xf32>
    %12 = arith.mulf %11, %10 : vector<72x128xf32>
    %13 = arith.select %7, %5, %12 : vector<72x128xi1>, vector<72x128xf32>
    %cst_8 = arith.constant 1.05070102 : f32
    %14 = vector.broadcast %cst_8 : f32 to vector<72x128xf32>
    %15 = arith.mulf %14, %13 : vector<72x128xf32>
    %c0_9 = arith.constant 0 : index
    %c0_10 = arith.constant 0 : index
    %16 = vector.load %arg4[%c0_9, %c0_10] : memref<72x128xf32, #tpu.memory_space<vmem>>, vector<72x128xf32>
    tpu.vector_store %arg4[%c0_9, %c0_10], %15 {strides = array<i32>} : memref<72x128xf32, #tpu.memory_space<vmem>>, vector<72x128xf32>,
    return
  }
  func.func @transform_0(%arg0: i32) -> (i32, i32) {
    %c0_i32 = arith.constant 0 : i32
    %c0_i32_0 = arith.constant 0 : i32
    return %arg0, %c0_i32 : i32, i32
  }
  func.func @transform_1(%arg0: i32) -> (i32, i32) {
    %c0_i32 = arith.constant 0 : i32
    %c0_i32_0 = arith.constant 0 : i32
    %c0_i32_1 = arith.constant 0 : i32
    return %c0_i32, %c0_i32_0 : i32, i32
  }
  func.func @transform_2(%arg0: i32) -> (i32, i32) {
    %c0_i32 = arith.constant 0 : i32
    %c0_i32_0 = arith.constant 0 : i32
    %c0_i32_1 = arith.constant 0 : i32
    return %c0_i32, %c0_i32_0 : i32, i32
  }
  func.func @transform_3(%arg0: i32) -> (i32, i32) {
    %c0_i32 = arith.constant 0 : i32
    %c0_i32_0 = arith.constant 0 : i32
    return %arg0, %c0_i32 : i32, i32
  }
}

module attributes {stable_mosaic.version = 11 : i64} {
  func.func @_matmul_bias_act_kernel(%arg0: i32, %arg1: memref<8x1024xbf16, #tpu.memory_space<vmem>>, %arg2: memref<1024x128xbf16, #tpu.memory_space<vmem>>, %arg3: memref<1x128xf32, #tpu.memory_space<vmem>>, %arg4: memref<8x128xf32, #tpu.memory_space<vmem>>) attributes {dimension_semantics = [#tpu.dimension_semantics<parallel>], iteration_bounds = array<i64: 1>, scalar_prefetch = 0 : i64, scratch_operands = 0 : i64, tpu.core_type = #tpu.core_type<tc>, window_params = [{transform_indices = @transform_0, window_bounds = array<i64: 8, 1024>}, {pipeline_mode = #tpu.pipeline_mode<synchronous>, transform_indices = @transform_1, window_bounds = array<i64: 1024, 128>}, {pipeline_mode = #tpu.pipeline_mode<synchronous>, transform_indices = @transform_2, window_bounds = array<i64: 1, 128>}, {transform_indices = @transform_3, window_bounds = array<i64: 8, 128>}]} {
    %c0 = arith.constant 0 : index
    %c0_0 = arith.constant 0 : index
    %0 = vector.load %arg1[%c0, %c0_0] : memref<8x1024xbf16, #tpu.memory_space<vmem>>, vector<8x1024xbf16>
    %c0_1 = arith.constant 0 : index
    %c0_2 = arith.constant 0 : index
    %1 = vector.load %arg2[%c0_1, %c0_2] : memref<1024x128xbf16, #tpu.memory_space<vmem>>, vector<1024x128xbf16>
    %cst = arith.constant dense<0.000000e+00> : vector<8x128xf32>
    %2 = tpu.matmul %0, %1, %cst {dimension_numbers = #tpu.dot_dimension_numbers<[1], [0], [0], [1], [0, 0, 1, 1], [], []>} : vector<8x1024xbf16>, vector<1024x128xbf16>, vector<8x128xf32> -> vector<8x128xf32>
    %c0_3 = arith.constant 0 : index
    %c0_4 = arith.constant 0 : index
    %3 = vector.load %arg3[%c0_3, %c0_4] : memref<1x128xf32, #tpu.memory_space<vmem>>, vector<1x128xf32>
    %4 = vector.broadcast %3 : vector<1x128xf32> to vector<8x128xf32>
    %5 = arith.addf %2, %4 : vector<8x128xf32>
    %cst_5 = arith.constant 0.000000e+00 : f32
    %6 = vector.broadcast %cst_5 : f32 to vector<8x128xf32>
    %7 = arith.cmpf ogt, %5, %6 : vector<8x128xf32>
    %8 = math.exp %5 : vector<8x128xf32>
    %cst_6 = arith.constant 1.000000e+00 : f32
    %9 = vector.broadcast %cst_6 : f32 to vector<8x128xf32>
    %10 = arith.subf %8, %9 : vector<8x128xf32>
    %cst_7 = arith.constant 1.67326319 : f32
    %11 = vector.broadcast %cst_7 : f32 to vector<8x128xf32>
    %12 = arith.mulf %11, %10 : vector<8x128xf32>
    %13 = arith.select %7, %5, %12 : vector<8x128xi1>, vector<8x128xf32>
    %cst_8 = arith.constant 1.05070102 : f32
    %14 = vector.broadcast %cst_8 : f32 to vector<8x128xf32>
    %15 = arith.mulf %14, %13 : vector<8x128xf32>
    %c0_9 = arith.constant 0 : index
    %c0_10 = arith.constant 0 : index
    %16 = vector.load %arg4[%c0_9, %c0_10] : memref<8x128xf32, #tpu.memory_space<vmem>>, vector<8x128xf32>
    tpu.vector_store %arg4[%c0_9, %c0_10], %15 {strides = array<i32>} : memref<8x128xf32, #tpu.memory_space<vmem>>, vector<8x128xf32>,
    return
  }
  func.func @transform_0(%arg0: i32) -> (i32, i32) {
    %c0_i32 = arith.constant 0 : i32
    %c0_i32_0 = arith.constant 0 : i32
    return %arg0, %c0_i32 : i32, i32
  }
  func.func @transform_1(%arg0: i32) -> (i32, i32) {
    %c0_i32 = arith.constant 0 : i32
    %c0_i32_0 = arith.constant 0 : i32
    %c0_i32_1 = arith.constant 0 : i32
    return %c0_i32, %c0_i32_0 : i32, i32
  }
  func.func @transform_2(%arg0: i32) -> (i32, i32) {
    %c0_i32 = arith.constant 0 : i32
    %c0_i32_0 = arith.constant 0 : i32
    %c0_i32_1 = arith.constant 0 : i32
    return %c0_i32, %c0_i32_0 : i32, i32
  }
  func.func @transform_3(%arg0: i32) -> (i32, i32) {
    %c0_i32 = arith.constant 0 : i32
    %c0_i32_0 = arith.constant 0 : i32
    return %arg0, %c0_i32 : i32, i32
  }
}

module attributes {stable_mosaic.version = 11 : i64} {
  func.func @_latent_kernel(%arg0: memref<8x256xbf16, #tpu.memory_space<vmem>>, %arg1: memref<256x256xbf16, #tpu.memory_space<vmem>>, %arg2: memref<1x256xf32, #tpu.memory_space<vmem>>, %arg3: memref<8x128xf32, #tpu.memory_space<vmem>>, %arg4: memref<8x128xbf16, #tpu.memory_space<vmem>>, %arg5: memref<128x1024xbf16, #tpu.memory_space<vmem>>, %arg6: memref<128x1024xbf16, #tpu.memory_space<vmem>>, %arg7: memref<1x1024xf32, #tpu.memory_space<vmem>>, %arg8: memref<8x1280xf32, #tpu.memory_space<vmem>>) attributes {dimension_semantics = [], scalar_prefetch = 0 : i64, scratch_operands = 0 : i64, tpu.core_type = #tpu.core_type<tc>} {
    %c0 = arith.constant 0 : index
    %c0_0 = arith.constant 0 : index
    %0 = vector.load %arg0[%c0, %c0_0] : memref<8x256xbf16, #tpu.memory_space<vmem>>, vector<8x256xbf16>
    %c0_1 = arith.constant 0 : index
    %c0_2 = arith.constant 0 : index
    %1 = vector.load %arg1[%c0_1, %c0_2] : memref<256x256xbf16, #tpu.memory_space<vmem>>, vector<256x256xbf16>
    %cst = arith.constant dense<0.000000e+00> : vector<8x256xf32>
    %2 = tpu.matmul %0, %1, %cst {dimension_numbers = #tpu.dot_dimension_numbers<[1], [0], [0], [1], [0, 0, 1, 1], [], []>} : vector<8x256xbf16>, vector<256x256xbf16>, vector<8x256xf32> -> vector<8x256xf32>
    %c0_3 = arith.constant 0 : index
    %c0_4 = arith.constant 0 : index
    %3 = vector.load %arg2[%c0_3, %c0_4] : memref<1x256xf32, #tpu.memory_space<vmem>>, vector<1x256xf32>
    %4 = vector.broadcast %3 : vector<1x256xf32> to vector<8x256xf32>
    %5 = arith.addf %2, %4 : vector<8x256xf32>
    %6 = vector.extract_strided_slice %5 {offsets = [0, 0], sizes = [8, 128], strides = [1, 1]} : vector<8x256xf32> to vector<8x128xf32>
    %7 = vector.extract_strided_slice %5 {offsets = [0, 128], sizes = [8, 128], strides = [1, 1]} : vector<8x256xf32> to vector<8x128xf32>
    %c0_5 = arith.constant 0 : index
    %c0_6 = arith.constant 0 : index
    %8 = vector.load %arg3[%c0_5, %c0_6] : memref<8x128xf32, #tpu.memory_space<vmem>>, vector<8x128xf32>
    %cst_7 = arith.constant 5.000000e-01 : f32
    %9 = vector.broadcast %cst_7 : f32 to vector<8x128xf32>
    %10 = arith.mulf %9, %7 : vector<8x128xf32>
    %11 = math.exp %10 : vector<8x128xf32>
    %12 = arith.mulf %8, %11 : vector<8x128xf32>
    %13 = arith.addf %6, %12 : vector<8x128xf32>
    %14 = arith.truncf %13 : vector<8x128xf32> to vector<8x128xbf16>
    %c0_8 = arith.constant 0 : index
    %c0_9 = arith.constant 0 : index
    %15 = vector.load %arg5[%c0_8, %c0_9] : memref<128x1024xbf16, #tpu.memory_space<vmem>>, vector<128x1024xbf16>
    %cst_10 = arith.constant dense<0.000000e+00> : vector<8x1024xf32>
    %16 = tpu.matmul %14, %15, %cst_10 {dimension_numbers = #tpu.dot_dimension_numbers<[1], [0], [0], [1], [0, 0, 1, 1], [], []>} : vector<8x128xbf16>, vector<128x1024xbf16>, vector<8x1024xf32> -> vector<8x1024xf32>
    %c0_11 = arith.constant 0 : index
    %c0_12 = arith.constant 0 : index
    %17 = vector.load %arg4[%c0_11, %c0_12] : memref<8x128xbf16, #tpu.memory_space<vmem>>, vector<8x128xbf16>
    %c0_13 = arith.constant 0 : index
    %c0_14 = arith.constant 0 : index
    %18 = vector.load %arg6[%c0_13, %c0_14] : memref<128x1024xbf16, #tpu.memory_space<vmem>>, vector<128x1024xbf16>
    %cst_15 = arith.constant dense<0.000000e+00> : vector<8x1024xf32>
    %19 = tpu.matmul %17, %18, %cst_15 {dimension_numbers = #tpu.dot_dimension_numbers<[1], [0], [0], [1], [0, 0, 1, 1], [], []>} : vector<8x128xbf16>, vector<128x1024xbf16>, vector<8x1024xf32> -> vector<8x1024xf32>
    %20 = arith.addf %16, %19 : vector<8x1024xf32>
    %c0_16 = arith.constant 0 : index
    %c0_17 = arith.constant 0 : index
    %21 = vector.load %arg7[%c0_16, %c0_17] : memref<1x1024xf32, #tpu.memory_space<vmem>>, vector<1x1024xf32>
    %22 = vector.broadcast %21 : vector<1x1024xf32> to vector<8x1024xf32>
    %23 = arith.addf %20, %22 : vector<8x1024xf32>
    %cst_18 = arith.constant 0.000000e+00 : f32
    %24 = vector.broadcast %cst_18 : f32 to vector<8x1024xf32>
    %25 = arith.cmpf ogt, %23, %24 : vector<8x1024xf32>
    %26 = math.exp %23 : vector<8x1024xf32>
    %cst_19 = arith.constant 1.000000e+00 : f32
    %27 = vector.broadcast %cst_19 : f32 to vector<8x1024xf32>
    %28 = arith.subf %26, %27 : vector<8x1024xf32>
    %cst_20 = arith.constant 1.67326319 : f32
    %29 = vector.broadcast %cst_20 : f32 to vector<8x1024xf32>
    %30 = arith.mulf %29, %28 : vector<8x1024xf32>
    %31 = arith.select %25, %23, %30 : vector<8x1024xi1>, vector<8x1024xf32>
    %cst_21 = arith.constant 1.05070102 : f32
    %32 = vector.broadcast %cst_21 : f32 to vector<8x1024xf32>
    %33 = arith.mulf %32, %31 : vector<8x1024xf32>
    %34 = tpu.concatenate %6, %7, %33 in 1 : vector<8x128xf32>, vector<8x128xf32>, vector<8x1024xf32> -> vector<8x1280xf32>
    %c0_22 = arith.constant 0 : index
    %c0_23 = arith.constant 0 : index
    %35 = vector.load %arg8[%c0_22, %c0_23] : memref<8x1280xf32, #tpu.memory_space<vmem>>, vector<8x1280xf32>
    tpu.vector_store %arg8[%c0_22, %c0_23], %34 {strides = array<i32>} : memref<8x1280xf32, #tpu.memory_space<vmem>>, vector<8x1280xf32>,
    return
  }
}

module attributes {stable_mosaic.version = 11 : i64} {
  func.func @_matmul_bias_act_kernel(%arg0: i32, %arg1: memref<32x640xbf16, #tpu.memory_space<vmem>>, %arg2: memref<640x256xbf16, #tpu.memory_space<vmem>>, %arg3: memref<1x256xf32, #tpu.memory_space<vmem>>, %arg4: memref<32x256xf32, #tpu.memory_space<vmem>>) attributes {dimension_semantics = [#tpu.dimension_semantics<parallel>], iteration_bounds = array<i64: 1>, scalar_prefetch = 0 : i64, scratch_operands = 0 : i64, tpu.core_type = #tpu.core_type<tc>, window_params = [{transform_indices = @transform_0, window_bounds = array<i64: 32, 640>}, {pipeline_mode = #tpu.pipeline_mode<synchronous>, transform_indices = @transform_1, window_bounds = array<i64: 640, 256>}, {pipeline_mode = #tpu.pipeline_mode<synchronous>, transform_indices = @transform_2, window_bounds = array<i64: 1, 256>}, {transform_indices = @transform_3, window_bounds = array<i64: 32, 256>}]} {
    %c0 = arith.constant 0 : index
    %c0_0 = arith.constant 0 : index
    %0 = vector.load %arg1[%c0, %c0_0] : memref<32x640xbf16, #tpu.memory_space<vmem>>, vector<32x640xbf16>
    %c0_1 = arith.constant 0 : index
    %c0_2 = arith.constant 0 : index
    %1 = vector.load %arg2[%c0_1, %c0_2] : memref<640x256xbf16, #tpu.memory_space<vmem>>, vector<640x256xbf16>
    %cst = arith.constant dense<0.000000e+00> : vector<32x256xf32>
    %2 = tpu.matmul %0, %1, %cst {dimension_numbers = #tpu.dot_dimension_numbers<[1], [0], [0], [1], [0, 0, 1, 1], [], []>} : vector<32x640xbf16>, vector<640x256xbf16>, vector<32x256xf32> -> vector<32x256xf32>
    %c0_3 = arith.constant 0 : index
    %c0_4 = arith.constant 0 : index
    %3 = vector.load %arg3[%c0_3, %c0_4] : memref<1x256xf32, #tpu.memory_space<vmem>>, vector<1x256xf32>
    %4 = vector.broadcast %3 : vector<1x256xf32> to vector<32x256xf32>
    %5 = arith.addf %2, %4 : vector<32x256xf32>
    %cst_5 = arith.constant 0.000000e+00 : f32
    %6 = vector.broadcast %cst_5 : f32 to vector<32x256xf32>
    %7 = arith.cmpf ogt, %5, %6 : vector<32x256xf32>
    %8 = math.exp %5 : vector<32x256xf32>
    %cst_6 = arith.constant 1.000000e+00 : f32
    %9 = vector.broadcast %cst_6 : f32 to vector<32x256xf32>
    %10 = arith.subf %8, %9 : vector<32x256xf32>
    %cst_7 = arith.constant 1.67326319 : f32
    %11 = vector.broadcast %cst_7 : f32 to vector<32x256xf32>
    %12 = arith.mulf %11, %10 : vector<32x256xf32>
    %13 = arith.select %7, %5, %12 : vector<32x256xi1>, vector<32x256xf32>
    %cst_8 = arith.constant 1.05070102 : f32
    %14 = vector.broadcast %cst_8 : f32 to vector<32x256xf32>
    %15 = arith.mulf %14, %13 : vector<32x256xf32>
    %c0_9 = arith.constant 0 : index
    %c0_10 = arith.constant 0 : index
    %16 = vector.load %arg4[%c0_9, %c0_10] : memref<32x256xf32, #tpu.memory_space<vmem>>, vector<32x256xf32>
    tpu.vector_store %arg4[%c0_9, %c0_10], %15 {strides = array<i32>} : memref<32x256xf32, #tpu.memory_space<vmem>>, vector<32x256xf32>,
    return
  }
  func.func @transform_0(%arg0: i32) -> (i32, i32) {
    %c0_i32 = arith.constant 0 : i32
    %c0_i32_0 = arith.constant 0 : i32
    return %arg0, %c0_i32 : i32, i32
  }
  func.func @transform_1(%arg0: i32) -> (i32, i32) {
    %c0_i32 = arith.constant 0 : i32
    %c0_i32_0 = arith.constant 0 : i32
    %c0_i32_1 = arith.constant 0 : i32
    return %c0_i32, %c0_i32_0 : i32, i32
  }
  func.func @transform_2(%arg0: i32) -> (i32, i32) {
    %c0_i32 = arith.constant 0 : i32
    %c0_i32_0 = arith.constant 0 : i32
    %c0_i32_1 = arith.constant 0 : i32
    return %c0_i32, %c0_i32_0 : i32, i32
  }
  func.func @transform_3(%arg0: i32) -> (i32, i32) {
    %c0_i32 = arith.constant 0 : i32
    %c0_i32_0 = arith.constant 0 : i32
    return %arg0, %c0_i32 : i32, i32
  }
}

module attributes {stable_mosaic.version = 11 : i64} {
  func.func @_matmul_bias_act_kernel(%arg0: i32, %arg1: memref<128x640xbf16, #tpu.memory_space<vmem>>, %arg2: memref<640x256xbf16, #tpu.memory_space<vmem>>, %arg3: memref<1x256xf32, #tpu.memory_space<vmem>>, %arg4: memref<128x256xf32, #tpu.memory_space<vmem>>) attributes {dimension_semantics = [#tpu.dimension_semantics<parallel>], iteration_bounds = array<i64: 1>, scalar_prefetch = 0 : i64, scratch_operands = 0 : i64, tpu.core_type = #tpu.core_type<tc>, window_params = [{transform_indices = @transform_0, window_bounds = array<i64: 128, 640>}, {pipeline_mode = #tpu.pipeline_mode<synchronous>, transform_indices = @transform_1, window_bounds = array<i64: 640, 256>}, {pipeline_mode = #tpu.pipeline_mode<synchronous>, transform_indices = @transform_2, window_bounds = array<i64: 1, 256>}, {transform_indices = @transform_3, window_bounds = array<i64: 128, 256>}]} {
    %c0 = arith.constant 0 : index
    %c0_0 = arith.constant 0 : index
    %0 = vector.load %arg1[%c0, %c0_0] : memref<128x640xbf16, #tpu.memory_space<vmem>>, vector<128x640xbf16>
    %c0_1 = arith.constant 0 : index
    %c0_2 = arith.constant 0 : index
    %1 = vector.load %arg2[%c0_1, %c0_2] : memref<640x256xbf16, #tpu.memory_space<vmem>>, vector<640x256xbf16>
    %cst = arith.constant dense<0.000000e+00> : vector<128x256xf32>
    %2 = tpu.matmul %0, %1, %cst {dimension_numbers = #tpu.dot_dimension_numbers<[1], [0], [0], [1], [0, 0, 1, 1], [], []>} : vector<128x640xbf16>, vector<640x256xbf16>, vector<128x256xf32> -> vector<128x256xf32>
    %c0_3 = arith.constant 0 : index
    %c0_4 = arith.constant 0 : index
    %3 = vector.load %arg3[%c0_3, %c0_4] : memref<1x256xf32, #tpu.memory_space<vmem>>, vector<1x256xf32>
    %4 = vector.broadcast %3 : vector<1x256xf32> to vector<128x256xf32>
    %5 = arith.addf %2, %4 : vector<128x256xf32>
    %cst_5 = arith.constant 0.000000e+00 : f32
    %6 = vector.broadcast %cst_5 : f32 to vector<128x256xf32>
    %7 = arith.cmpf ogt, %5, %6 : vector<128x256xf32>
    %8 = math.exp %5 : vector<128x256xf32>
    %cst_6 = arith.constant 1.000000e+00 : f32
    %9 = vector.broadcast %cst_6 : f32 to vector<128x256xf32>
    %10 = arith.subf %8, %9 : vector<128x256xf32>
    %cst_7 = arith.constant 1.67326319 : f32
    %11 = vector.broadcast %cst_7 : f32 to vector<128x256xf32>
    %12 = arith.mulf %11, %10 : vector<128x256xf32>
    %13 = arith.select %7, %5, %12 : vector<128x256xi1>, vector<128x256xf32>
    %cst_8 = arith.constant 1.05070102 : f32
    %14 = vector.broadcast %cst_8 : f32 to vector<128x256xf32>
    %15 = arith.mulf %14, %13 : vector<128x256xf32>
    %c0_9 = arith.constant 0 : index
    %c0_10 = arith.constant 0 : index
    %16 = vector.load %arg4[%c0_9, %c0_10] : memref<128x256xf32, #tpu.memory_space<vmem>>, vector<128x256xf32>
    tpu.vector_store %arg4[%c0_9, %c0_10], %15 {strides = array<i32>} : memref<128x256xf32, #tpu.memory_space<vmem>>, vector<128x256xf32>,
    return
  }
  func.func @transform_0(%arg0: i32) -> (i32, i32) {
    %c0_i32 = arith.constant 0 : i32
    %c0_i32_0 = arith.constant 0 : i32
    return %arg0, %c0_i32 : i32, i32
  }
  func.func @transform_1(%arg0: i32) -> (i32, i32) {
    %c0_i32 = arith.constant 0 : i32
    %c0_i32_0 = arith.constant 0 : i32
    %c0_i32_1 = arith.constant 0 : i32
    return %c0_i32, %c0_i32_0 : i32, i32
  }
  func.func @transform_2(%arg0: i32) -> (i32, i32) {
    %c0_i32 = arith.constant 0 : i32
    %c0_i32_0 = arith.constant 0 : i32
    %c0_i32_1 = arith.constant 0 : i32
    return %c0_i32, %c0_i32_0 : i32, i32
  }
  func.func @transform_3(%arg0: i32) -> (i32, i32) {
    %c0_i32 = arith.constant 0 : i32
    %c0_i32_0 = arith.constant 0 : i32
    return %arg0, %c0_i32 : i32, i32
  }
}

module attributes {stable_mosaic.version = 11 : i64} {
  func.func @_matmul_bias_act_kernel(%arg0: i32, %arg1: memref<256x640xbf16, #tpu.memory_space<vmem>>, %arg2: memref<640x128xbf16, #tpu.memory_space<vmem>>, %arg3: memref<1x128xf32, #tpu.memory_space<vmem>>, %arg4: memref<256x128xf32, #tpu.memory_space<vmem>>) attributes {dimension_semantics = [#tpu.dimension_semantics<parallel>], iteration_bounds = array<i64: 2>, scalar_prefetch = 0 : i64, scratch_operands = 0 : i64, tpu.core_type = #tpu.core_type<tc>, window_params = [{transform_indices = @transform_0, window_bounds = array<i64: 256, 640>}, {pipeline_mode = #tpu.pipeline_mode<synchronous>, transform_indices = @transform_1, window_bounds = array<i64: 640, 128>}, {pipeline_mode = #tpu.pipeline_mode<synchronous>, transform_indices = @transform_2, window_bounds = array<i64: 1, 128>}, {transform_indices = @transform_3, window_bounds = array<i64: 256, 128>}]} {
    %c0 = arith.constant 0 : index
    %c0_0 = arith.constant 0 : index
    %0 = vector.load %arg1[%c0, %c0_0] : memref<256x640xbf16, #tpu.memory_space<vmem>>, vector<256x640xbf16>
    %c0_1 = arith.constant 0 : index
    %c0_2 = arith.constant 0 : index
    %1 = vector.load %arg2[%c0_1, %c0_2] : memref<640x128xbf16, #tpu.memory_space<vmem>>, vector<640x128xbf16>
    %cst = arith.constant dense<0.000000e+00> : vector<256x128xf32>
    %2 = tpu.matmul %0, %1, %cst {dimension_numbers = #tpu.dot_dimension_numbers<[1], [0], [0], [1], [0, 0, 1, 1], [], []>} : vector<256x640xbf16>, vector<640x128xbf16>, vector<256x128xf32> -> vector<256x128xf32>
    %c0_3 = arith.constant 0 : index
    %c0_4 = arith.constant 0 : index
    %3 = vector.load %arg3[%c0_3, %c0_4] : memref<1x128xf32, #tpu.memory_space<vmem>>, vector<1x128xf32>
    %4 = vector.broadcast %3 : vector<1x128xf32> to vector<256x128xf32>
    %5 = arith.addf %2, %4 : vector<256x128xf32>
    %6 = arith.negf %5 : vector<256x128xf32>
    %7 = math.exp %6 : vector<256x128xf32>
    %cst_5 = arith.constant 1.000000e+00 : f32
    %8 = vector.broadcast %cst_5 : f32 to vector<256x128xf32>
    %9 = arith.addf %8, %7 : vector<256x128xf32>
    %10 = arith.divf %8, %9 : vector<256x128xf32>
    %c0_6 = arith.constant 0 : index
    %c0_7 = arith.constant 0 : index
    %11 = vector.load %arg4[%c0_6, %c0_7] : memref<256x128xf32, #tpu.memory_space<vmem>>, vector<256x128xf32>
    tpu.vector_store %arg4[%c0_6, %c0_7], %10 {strides = array<i32>} : memref<256x128xf32, #tpu.memory_space<vmem>>, vector<256x128xf32>,
    return
  }
  func.func @transform_0(%arg0: i32) -> (i32, i32) {
    %c0_i32 = arith.constant 0 : i32
    %c0_i32_0 = arith.constant 0 : i32
    return %arg0, %c0_i32 : i32, i32
  }
  func.func @transform_1(%arg0: i32) -> (i32, i32) {
    %c0_i32 = arith.constant 0 : i32
    %c0_i32_0 = arith.constant 0 : i32
    %c0_i32_1 = arith.constant 0 : i32
    return %c0_i32, %c0_i32_0 : i32, i32
  }
  func.func @transform_2(%arg0: i32) -> (i32, i32) {
    %c0_i32 = arith.constant 0 : i32
    %c0_i32_0 = arith.constant 0 : i32
    %c0_i32_1 = arith.constant 0 : i32
    return %c0_i32, %c0_i32_0 : i32, i32
  }
  func.func @transform_3(%arg0: i32) -> (i32, i32) {
    %c0_i32 = arith.constant 0 : i32
    %c0_i32_0 = arith.constant 0 : i32
    return %arg0, %c0_i32 : i32, i32
  }
}

</mosaic_0001>

<llo_original>
// kernel: vae_forward.7
$region0: #{vae_forward.7}
  #allocation0 [shape = 'u32[]', space=smem, size = 0x4, offset = 0x4, fixed_abs, tag = 'smem constant byte address 0x4 - core index']
  #allocation1 [shape = 'u32[72,128]{1,0:T(1,128)}', space=vmem, size = 0x9000, scoped, tag = 'internal scratch']
  %s0 = inlined_call_operand.vmem [shape: bf16[512,128], index: 0, kind: input, shape index: {}]
  %s1 = inlined_call_operand.hbm [shape: bf16[128,128], index: 1, kind: input, shape index: {}]
  %s2 = inlined_call_operand.hbm [shape: f32[1,128], index: 2, kind: input, shape index: {}]
  %s3 = inlined_call_operand.vmem [shape: f32[512,128], index: 3, kind: output, shape index: {}]
  %s4 = sld [smem:[#allocation0]]
  $region53: #{vae_forward.7} parent=0
    _
  %s6 = ssub.s32 1, %s4
  %s7 = scalar_select 0, %s6, %s4
  $region1: #{vae_forward.7} parent=0
    #allocation2 [shape = 'u8[32768]{0}', space=vmem, size = 0x8000, scoped, tag = 'input window, operand 1, single buffered']
    #allocation3 [shape = 's32[2]{0}', space=sflag, size = 0x8, scoped, tag = 'scoped memory for vae_forward.7']
    #allocation4 [shape = 'u8[512]{0}', space=vmem, size = 0x400, scoped, tag = 'input window, operand 2, single buffered']
    #allocation5 [shape = 's32[1]{0}', space=sflag, size = 0x4, scoped, tag = 'scoped memory for vae_forward.7']
    %8 = vsyncpa [#allocation3], 0
    %9 = vsyncpa [#allocation5], 0
    loop: start=0, step=1, limit=4
    $region2: #{vae_forward.7} parent=1 // loop_pre_header
      _
    $region3: #{vae_forward.7} parent=1 // loop_header
      %s11 = sphi 0, %s15
      %p12 = scmp.ge.s32.totalorder %s11, 4
      %s21 = sphi 0, %s23
      %s24 = sphi 0, %s21
      %s25 = sphi 0, %s24
      %s41 = sphi 0, %s25
      %s45 = sphi 0, %s45
      %s47 = sphi 0, %s45
      %s48 = sphi 0, %s47
      %s62 = sphi 0, %s48
      %s66 = sphi 0, %s66
      %s68 = sphi 0, %s66
      %s69 = sphi 0, %s68
      %s83 = sphi 0, %s69
      %s89 = sphi 0, %s91
      %s92 = sphi 0, %s89
      %s93 = sphi 0, %s92
      %s109 = sphi 0, %s93
    $region4: #{vae_forward.7} parent=1 // loop_header_branch
      %14 = sbr.rel (%p12) target = $region8
    $region5: #{vae_forward.7} parent=1 // loop_body
      %s16 = ssub.s32 %s11, 1
      %s17 = ssub.s32 %s11, 2
      %s18 = sadd.s32 %s11, 1
      %s19 = ssub.s32 %s11, %s18
      %p20 = scmp.eq.s32.totalorder %s19, 0
      %s22 = sadd.s32 %s21, 1
      %s23 = scalar_select %p20, %s21, %s22
      %p26 = pneg %p20
      %p27 = scmp.eq.s32.totalorder %s11, 1
      %p28 = por %p26, %p27
      %p29 = scmp.ne.s32.totalorder %s21, %s24
      %p30 = scmp.eq.s32.totalorder %s11, 0
      %p31 = por %p29, %p30
      %p32 = scmp.ne.s32.totalorder %s21, %s24
      %p33 = scmp.eq.s32.totalorder %s16, 1
      %p34 = por %p32, %p33
      %p35 = scmp.ne.s32.totalorder %s24, %s25
      %p36 = scmp.eq.s32.totalorder %s16, 0
      %p37 = por %p35, %p36
      %p38 = scmp.ne.s32.totalorder %s24, %s25
      %p39 = scmp.eq.s32.totalorder %s17, 1
      %p40 = por %p38, %p39
      %p42 = scmp.ne.s32.totalorder %s25, %s41
      %p43 = scmp.eq.s32.totalorder %s17, 0
      %p44 = por %p42, %p43
      %s46 = sadd.s32 %s45, 1
      %p49 = scmp.eq.s32.totalorder %s11, 1
      %p50 = scmp.ne.s32.totalorder %s45, %s47
      %p51 = scmp.eq.s32.totalorder %s11, 0
      %p52 = por %p50, %p51
      %p53 = scmp.ne.s32.totalorder %s45, %s47
      %p54 = scmp.eq.s32.totalorder %s16, 1
      %p55 = por %p53, %p54
      %p56 = scmp.ne.s32.totalorder %s47, %s48
      %p57 = scmp.eq.s32.totalorder %s16, 0
      %p58 = por %p56, %p57
      %p59 = scmp.ne.s32.totalorder %s47, %s48
      %p60 = scmp.eq.s32.totalorder %s17, 1
      %p61 = por %p59, %p60
      %p63 = scmp.ne.s32.totalorder %s48, %s62
      %p64 = scmp.eq.s32.totalorder %s17, 0
      %p65 = por %p63, %p64
      %s67 = sadd.s32 %s66, 1
      %p70 = scmp.eq.s32.totalorder %s11, 1
      %p71 = scmp.ne.s32.totalorder %s66, %s68
      %p72 = scmp.eq.s32.totalorder %s11, 0
      %p73 = por %p71, %p72
      %p74 = scmp.ne.s32.totalorder %s66, %s68
      %p75 = scmp.eq.s32.totalorder %s16, 1
      %p76 = por %p74, %p75
      %p77 = scmp.ne.s32.totalorder %s68, %s69
      %p78 = scmp.eq.s32.totalorder %s16, 0
      %p79 = por %p77, %p78
      %p80 = scmp.ne.s32.totalorder %s68, %s69
      %p81 = scmp.eq.s32.totalorder %s17, 1
      %p82 = por %p80, %p81
      %p84 = scmp.ne.s32.totalorder %s69, %s83
      %p85 = scmp.eq.s32.totalorder %s17, 0
      %p86 = por %p84, %p85
      %s87 = ssub.s32 %s11, %s18
      %p88 = scmp.eq.s32.totalorder %s87, 0
      %s90 = sadd.s32 %s89, 1
      %s91 = scalar_select %p88, %s89, %s90
      %p94 = pneg %p88
      %p95 = scmp.eq.s32.totalorder %s11, 1
      %p96 = por %p94, %p95
      %p97 = scmp.ne.s32.totalorder %s89, %s92
      %p98 = scmp.eq.s32.totalorder %s11, 0
      %p99 = por %p97, %p98
      %p100 = scmp.ne.s32.totalorder %s89, %s92
      %p101 = scmp.eq.s32.totalorder %s16, 1
      %p102 = por %p100, %p101
      %p103 = scmp.ne.s32.totalorder %s92, %s93
      %p104 = scmp.eq.s32.totalorder %s16, 0
      %p105 = por %p103, %p104
      %p106 = scmp.ne.s32.totalorder %s92, %s93
      %p107 = scmp.eq.s32.totalorder %s17, 1
      %p108 = por %p106, %p107
      %p110 = scmp.ne.s32.totalorder %s93, %s109
      %p111 = scmp.eq.s32.totalorder %s17, 0
      %p112 = por %p110, %p111
      %p113 = scmp.le.s32.totalorder 1, %s11
      %p114 = scmp.lt.s32.totalorder %s11, 3
      %p115 = pnand %p113, %p114
      %p116 = pneg %p115
      // Predicated region
      $region9: #{vae_forward.7} parent=5 // pred_check
        _
      $region10: #{vae_forward.7} parent=5 // pred_check_branch
        %118 = sbr.rel (%p115) target = $region12
      $region11: #{vae_forward.7} parent=5 // pred_region
        %s119 = ssub.s32 %s11, 1
        // Predicated region
        $region13: #{vae_forward.7} parent=11 // pred_check
          %p120 = pneg %p58
        $region14: #{vae_forward.7} parent=11 // pred_check_branch
          %122 = sbr.rel (%p120) target = $region16
        $region15: #{vae_forward.7} parent=11 // pred_region
          %124 = vsyncadd [#allocation3], 0
          %s125 = sshll.u32 %s1, 4
          %s126 = int_to_ptr.hbm [resolvable:$true] %s125
          %s127 = sshll.u32 [#allocation2], 4
          %s128 = int_to_ptr.vmem [resolvable:$true] %s127
          %133 = dma.hbm_to_vmem [thread:$0]  %s126, 1024, %s128, [#allocation3], 64, 64, 4
        $region16: #{vae_forward.7} parent=11 // pred_fallthru
          _
        // Predicated region
        $region17: #{vae_forward.7} parent=11 // pred_check
          %p134 = pneg %p79
        $region18: #{vae_forward.7} parent=11 // pred_check_branch
          %136 = sbr.rel (%p134) target = $region20
        $region19: #{vae_forward.7} parent=11 // pred_region
          %138 = vsyncadd [#allocation5], 0
          %s140 = sshll.u32 %s2, 4
          %s141 = int_to_ptr.hbm [resolvable:$true] %s140
          %s142 = sshll.u32 [#allocation4], 4
          %s143 = int_to_ptr.vmem [resolvable:$true] %s142
          %145 = dma.hbm_to_vmem [thread:$0]  %s141, 16, %s143, [#allocation5]
        $region20: #{vae_forward.7} parent=11 // pred_fallthru
          _
      $region12: #{vae_forward.7} parent=5 // pred_fallthru
        _
      %p146 = scmp.lt.s32.totalorder %s11, 2
      // Predicated region
      $region21: #{vae_forward.7} parent=5 // pred_check
        %p147 = pneg %p146
      $region22: #{vae_forward.7} parent=5 // pred_check_branch
        %149 = sbr.rel (%p147) target = $region24
      $region23: #{vae_forward.7} parent=5 // pred_region
        // Predicated region
        $region25: #{vae_forward.7} parent=23 // pred_check
          %p150 = pneg %p31
        $region26: #{vae_forward.7} parent=23 // pred_check_branch
          %152 = sbr.rel (%p150) target = $region28
        $region27: #{vae_forward.7} parent=23 // pred_region
          %s153 = smul.u32 32, %s11
          %p154 = scmp.lt.s32.totalorder %s153, 63
          %s155 = scalar_select %p154, %s153, 63
          %s156 = smul.addr %s155, 4
          %s157 = scalar_lea.vmem %s0, %s156
          %s158 = smul.u32 32, %s11
        $region28: #{vae_forward.7} parent=23 // pred_fallthru
          _
      $region24: #{vae_forward.7} parent=5 // pred_fallthru
        _
      %p159 = scmp.le.s32.totalorder 1, %s11
      %p160 = scmp.lt.s32.totalorder %s11, 3
      %p161 = pnand %p159, %p160
      %p162 = pneg %p161
      // Predicated region
      $region29: #{vae_forward.7} parent=5 // pred_check
        _
      $region30: #{vae_forward.7} parent=5 // pred_check_branch
        %164 = sbr.rel (%p161) target = $region32
      $region31: #{vae_forward.7} parent=5 // pred_region
        %s165 = ssub.s32 %s11, 1
        // Predicated region
        $region33: #{vae_forward.7} parent=31 // pred_check
          %p166 = pneg %p58
        $region34: #{vae_forward.7} parent=31 // pred_check_branch
          %168 = sbr.rel (%p166) target = $region36
        $region35: #{vae_forward.7} parent=31 // pred_region
          %170 = dma.done [#allocation3], 1024
        $region36: #{vae_forward.7} parent=31 // pred_fallthru
          _
        // Predicated region
        $region37: #{vae_forward.7} parent=31 // pred_check
          %p171 = pneg %p79
        $region38: #{vae_forward.7} parent=31 // pred_check_branch
          %173 = sbr.rel (%p171) target = $region40
        $region39: #{vae_forward.7} parent=31 // pred_region
          %175 = dma.done [#allocation5], 16
        $region40: #{vae_forward.7} parent=31 // pred_fallthru
          _
        %s176 = smul.u32 32, %s16
        %p177 = scmp.lt.s32.totalorder %s176, 63
        %s178 = scalar_select %p177, %s176, 63
        %s179 = smul.addr %s178, 4
        %s180 = scalar_lea.vmem %s0, %s179
        %p181 = pneg %p37
        %p182 = pneg %p34
        %p183 = pneg %p58
        %p184 = pneg %p55
        %p185 = pneg %p79
        %p186 = pneg %p76
        %p187 = pneg %p105
        %p188 = pneg %p102
        %s189 = smul.u32 32, %s16
        %p190 = scmp.lt.s32.totalorder %s189, 63
        %s191 = scalar_select %p190, %s189, 63
        %s192 = smul.addr %s191, 8
        %s193 = scalar_lea.vmem %s3, %s192
        %s194 = smul.u32 32, %s16
        %p195 = scmp.lt.s32.totalorder %s194, 63
        %s196 = scalar_select %p195, %s194, 63
        %s197 = smul.addr %s196, 4
        %s198 = scalar_lea.vmem %s0, %s197
        %s199 = smul.u32 32, %s16
        %s200 = smul.u32 32, %s16
        %p201 = scmp.lt.s32.totalorder %s200, 63
        %s202 = scalar_select %p201, %s200, 63
        %s203 = smul.addr %s202, 8
        %s204 = scalar_lea.vmem %s3, %s203
        %s205 = smul.u32 32, %s16
        %v206 = vld [vmem:[%s198] sm:$0xf]
        %v207 = vld [vmem:[%s198 + $0x4] sm:$0xf]
        %v208 = vld [vmem:[%s198 + $0x8] sm:$0xf]
        %v209 = vld [vmem:[%s198 + $0xc] sm:$0xf]
        %v210 = vld [vmem:[%s198 + $0x10] sm:$0xf]
        %v211 = vld [vmem:[%s198 + $0x14] sm:$0xf]
        %v212 = vld [vmem:[%s198 + $0x18] sm:$0xf]
        %v213 = vld [vmem:[%s198 + $0x1c] sm:$0xf]
        %v214 = vld [vmem:[%s198 + $0x20] sm:$0xf]
        %v215 = vld [vmem:[%s198 + $0x24] sm:$0xf]
        %v216 = vld [vmem:[%s198 + $0x28] sm:$0xf]
        %v217 = vld [vmem:[%s198 + $0x2c] sm:$0xf]
        %v218 = vld [vmem:[%s198 + $0x30] sm:$0xf]
        %v219 = vld [vmem:[%s198 + $0x34] sm:$0xf]
        %v220 = vld [vmem:[%s198 + $0x38] sm:$0xf]
        %v221 = vld [vmem:[%s198 + $0x3c] sm:$0xf]
        %v222 = vld [vmem:[%s198 + $0x40] sm:$0xf]
        %v223 = vld [vmem:[%s198 + $0x44] sm:$0xf]
        %v224 = vld [vmem:[%s198 + $0x48] sm:$0xf]
        %v225 = vld [vmem:[%s198 + $0x4c] sm:$0xf]
        %v226 = vld [vmem:[%s198 + $0x50] sm:$0xf]
        %v227 = vld [vmem:[%s198 + $0x54] sm:$0xf]
        %v228 = vld [vmem:[%s198 + $0x58] sm:$0xf]
        %v229 = vld [vmem:[%s198 + $0x5c] sm:$0xf]
        %v230 = vld [vmem:[%s198 + $0x60] sm:$0xf]
        %v231 = vld [vmem:[%s198 + $0x64] sm:$0xf]
        %v232 = vld [vmem:[%s198 + $0x68] sm:$0xf]
        %v233 = vld [vmem:[%s198 + $0x6c] sm:$0xf]
        %v234 = vld [vmem:[%s198 + $0x70] sm:$0xf]
        %v235 = vld [vmem:[%s198 + $0x74] sm:$0xf]
        %v236 = vld [vmem:[%s198 + $0x78] sm:$0xf]
        %v237 = vld [vmem:[%s198 + $0x7c] sm:$0xf]
        %v238 = vld [vmem:[#allocation2] sm:$0xf]
        %v239 = vld [vmem:[#allocation2 + $0x4] sm:$0xf]
        %v240 = vld [vmem:[#allocation2 + $0x8] sm:$0xf]
        %v241 = vld [vmem:[#allocation2 + $0xc] sm:$0xf]
        %v242 = vld [vmem:[#allocation2 + $0x10] sm:$0xf]
        %v243 = vld [vmem:[#allocation2 + $0x14] sm:$0xf]
        %v244 = vld [vmem:[#allocation2 + $0x18] sm:$0xf]
        %v245 = vld [vmem:[#allocation2 + $0x1c] sm:$0xf]
        %v246 = vld [vmem:[#allocation2 + $0x20] sm:$0xf]
        %v247 = vld [vmem:[#allocation2 + $0x24] sm:$0xf]
        %v248 = vld [vmem:[#allocation2 + $0x28] sm:$0xf]
        %v249 = vld [vmem:[#allocation2 + $0x2c] sm:$0xf]
        %v250 = vld [vmem:[#allocation2 + $0x30] sm:$0xf]
        %v251 = vld [vmem:[#allocation2 + $0x34] sm:$0xf]
        %v252 = vld [vmem:[#allocation2 + $0x38] sm:$0xf]
        %v253 = vld [vmem:[#allocation2 + $0x3c] sm:$0xf]
        %v254 = vld [vmem:[#allocation4] sm:$0x1]
        %v256 = vperm.slane %v254, 0
        %v290 = vunpack.c.l.b16 %v206
        %v291 = vunpack.c.l.b16 %v207
        %v292 = vunpack.c.l.b16 %v208
        %v293 = vunpack.c.l.b16 %v209
        %v294 = vunpack.c.l.b16 %v210
        %v295 = vunpack.c.l.b16 %v211
        %v296 = vunpack.c.l.b16 %v212
        %v297 = vunpack.c.l.b16 %v213
        %v298 = vunpack.c.l.b16 %v214
        %v299 = vunpack.c.l.b16 %v215
        %v300 = vunpack.c.l.b16 %v216
        %v301 = vunpack.c.l.b16 %v217
        %v302 = vunpack.c.l.b16 %v218
        %v303 = vunpack.c.l.b16 %v219
        %v304 = vunpack.c.l.b16 %v220
        %v305 = vunpack.c.l.b16 %v221
        %v306 = vunpack.c.l.b16 %v222
        %v307 = vunpack.c.l.b16 %v223
        %v308 = vunpack.c.l.b16 %v224
        %v309 = vunpack.c.l.b16 %v225
        %v310 = vunpack.c.l.b16 %v226
        %v311 = vunpack.c.l.b16 %v227
        %v312 = vunpack.c.l.b16 %v228
        %v313 = vunpack.c.l.b16 %v229
        %v314 = vunpack.c.l.b16 %v230
        %v315 = vunpack.c.l.b16 %v231
        %v316 = vunpack.c.l.b16 %v232
        %v317 = vunpack.c.l.b16 %v233
        %v318 = vunpack.c.l.b16 %v234
        %v319 = vunpack.c.l.b16 %v235
        %v320 = vunpack.c.l.b16 %v236
        %v321 = vunpack.c.l.b16 %v237
        %v322 = vpack.c.b16 %v291, %v290
        %v323 = vpack.c.b16 %v293, %v292
        %v324 = vpack.c.b16 %v295, %v294
        %v325 = vpack.c.b16 %v297, %v296
        %v326 = vpack.c.b16 %v299, %v298
        %v327 = vpack.c.b16 %v301, %v300
        %v328 = vpack.c.b16 %v303, %v302
        %v329 = vpack.c.b16 %v305, %v304
        %v330 = vpack.c.b16 %v307, %v306
        %v331 = vpack.c.b16 %v309, %v308
        %v332 = vpack.c.b16 %v311, %v310
        %v333 = vpack.c.b16 %v313, %v312
        %v334 = vpack.c.b16 %v315, %v314
        %v335 = vpack.c.b16 %v317, %v316
        %v336 = vpack.c.b16 %v319, %v318
        %v337 = vpack.c.b16 %v321, %v320
        %v370 = vunpack.c.l.b16 %v238
        %v371 = vunpack.c.l.b16 %v239
        %v372 = vunpack.c.l.b16 %v240
        %v373 = vunpack.c.l.b16 %v241
        %v374 = vunpack.c.l.b16 %v242
        %v375 = vunpack.c.l.b16 %v243
        %v376 = vunpack.c.l.b16 %v244
        %v377 = vunpack.c.l.b16 %v245
        %v378 = vunpack.c.l.b16 %v246
        %v379 = vunpack.c.l.b16 %v247
        %v380 = vunpack.c.l.b16 %v248
        %v381 = vunpack.c.l.b16 %v249
        %v382 = vunpack.c.l.b16 %v250
        %v383 = vunpack.c.l.b16 %v251
        %v384 = vunpack.c.l.b16 %v252
        %v385 = vunpack.c.l.b16 %v253
        %v386 = vpack.c.b16 %v371, %v370
        %v387 = vpack.c.b16 %v373, %v372
        %v388 = vpack.c.b16 %v375, %v374
        %v389 = vpack.c.b16 %v377, %v376
        %v390 = vpack.c.b16 %v379, %v378
        %v391 = vpack.c.b16 %v381, %v380
        %v392 = vpack.c.b16 %v383, %v382
        %v393 = vpack.c.b16 %v385, %v384
        %402 = vmatpush.bf16.msra.mxu0 %v393
        %403 = vmatpush.bf16.msra.mxu0 %v392
        %404 = vmatpush.bf16.msra.mxu0 %v391
        %405 = vmatpush.bf16.msra.mxu0 %v390
        %406 = vmatpush.bf16.msra.mxu0 %v389
        %407 = vmatpush.bf16.msra.mxu0 %v388
        %408 = vmatpush.bf16.msra.mxu0 %v387
        %409 = vmatpush.bf16.msra.mxu0 %v386
        %410 = vmatmul.bf16.gmra.mxu0 %v322
        %v411 = vpop.f32.mrf.mxu0
        %v412 = vadd.f32 %v256, %v411
        %v413 = vpop.f32.mrf.mxu0
        %v414 = vadd.f32 %v256, %v413
        %415 = vmatmul.bf16.gmra.mxu0 %v323
        %v416 = vpop.f32.mrf.mxu0
        %v417 = vadd.f32 %v256, %v416
        %v418 = vpop.f32.mrf.mxu0
        %v419 = vadd.f32 %v256, %v418
        %420 = vmatmul.bf16.gmra.mxu0 %v324
        %v421 = vpop.f32.mrf.mxu0
        %v422 = vadd.f32 %v256, %v421
        %v423 = vpop.f32.mrf.mxu0
        %v424 = vadd.f32 %v256, %v423
        %425 = vmatmul.bf16.gmra.mxu0 %v325
        %v426 = vpop.f32.mrf.mxu0
        %v427 = vadd.f32 %v256, %v426
        %v428 = vpop.f32.mrf.mxu0
        %v429 = vadd.f32 %v256, %v428
        %430 = vmatmul.bf16.gmra.mxu0 %v326
        %v431 = vpop.f32.mrf.mxu0
        %v432 = vadd.f32 %v256, %v431
        %v433 = vpop.f32.mrf.mxu0
        %v434 = vadd.f32 %v256, %v433
        %435 = vmatmul.bf16.gmra.mxu0 %v327
        %v436 = vpop.f32.mrf.mxu0
        %v437 = vadd.f32 %v256, %v436
        %v438 = vpop.f32.mrf.mxu0
        %v439 = vadd.f32 %v256, %v438
        %440 = vmatmul.bf16.gmra.mxu0 %v328
        %v441 = vpop.f32.mrf.mxu0
        %v442 = vadd.f32 %v256, %v441
        %v443 = vpop.f32.mrf.mxu0
        %v444 = vadd.f32 %v256, %v443
        %445 = vmatmul.bf16.gmra.mxu0 %v329
        %v446 = vpop.f32.mrf.mxu0
        %v447 = vadd.f32 %v256, %v446
        %v448 = vpop.f32.mrf.mxu0
        %v449 = vadd.f32 %v256, %v448
        %450 = vmatmul.bf16.gmra.mxu0 %v330
        %v451 = vpop.f32.mrf.mxu0
        %v452 = vadd.f32 %v256, %v451
        %v453 = vpop.f32.mrf.mxu0
        %v454 = vadd.f32 %v256, %v453
        %455 = vmatmul.bf16.gmra.mxu0 %v331
        %v456 = vpop.f32.mrf.mxu0
        %v457 = vadd.f32 %v256, %v456
        %v458 = vpop.f32.mrf.mxu0
        %v459 = vadd.f32 %v256, %v458
        %460 = vmatmul.bf16.gmra.mxu0 %v332
        %v461 = vpop.f32.mrf.mxu0
        %v462 = vadd.f32 %v256, %v461
        %v463 = vpop.f32.mrf.mxu0
        %v464 = vadd.f32 %v256, %v463
        %465 = vmatmul.bf16.gmra.mxu0 %v333
        %v466 = vpop.f32.mrf.mxu0
        %v467 = vadd.f32 %v256, %v466
        %v468 = vpop.f32.mrf.mxu0
        %v469 = vadd.f32 %v256, %v468
        %470 = vmatmul.bf16.gmra.mxu0 %v334
        %v471 = vpop.f32.mrf.mxu0
        %v472 = vadd.f32 %v256, %v471
        %v473 = vpop.f32.mrf.mxu0
        %v474 = vadd.f32 %v256, %v473
        %475 = vmatmul.bf16.gmra.mxu0 %v335
        %v476 = vpop.f32.mrf.mxu0
        %v477 = vadd.f32 %v256, %v476
        %v478 = vpop.f32.mrf.mxu0
        %v479 = vadd.f32 %v256, %v478
        %480 = vmatmul.bf16.gmra.mxu0 %v336
        %v481 = vpop.f32.mrf.mxu0
        %v482 = vadd.f32 %v256, %v481
        %v483 = vpop.f32.mrf.mxu0
        %v484 = vadd.f32 %v256, %v483
        %485 = vmatmul.bf16.gmra.mxu0 %v337
        %v486 = vpop.f32.mrf.mxu0
        %v487 = vadd.f32 %v256, %v486
        %v488 = vpop.f32.mrf.mxu0
        %v489 = vadd.f32 %v256, %v488
        %490 = vdwg.mxu0
        %vm491 = vcmp.gt.f32.partialorder %v412, 0.0
        %vm492 = vcmp.gt.f32.partialorder %v414, 0.0
        %vm493 = vcmp.gt.f32.partialorder %v417, 0.0
        %vm494 = vcmp.gt.f32.partialorder %v419, 0.0
        %vm495 = vcmp.gt.f32.partialorder %v422, 0.0
        %vm496 = vcmp.gt.f32.partialorder %v424, 0.0
        %vm497 = vcmp.gt.f32.partialorder %v427, 0.0
        %vm498 = vcmp.gt.f32.partialorder %v429, 0.0
        %vm499 = vcmp.gt.f32.partialorder %v432, 0.0
        %vm500 = vcmp.gt.f32.partialorder %v434, 0.0
        %vm501 = vcmp.gt.f32.partialorder %v437, 0.0
        %vm502 = vcmp.gt.f32.partialorder %v439, 0.0
        %vm503 = vcmp.gt.f32.partialorder %v442, 0.0
        %vm504 = vcmp.gt.f32.partialorder %v444, 0.0
        %vm505 = vcmp.gt.f32.partialorder %v447, 0.0
        %vm506 = vcmp.gt.f32.partialorder %v449, 0.0
        %vm507 = vcmp.gt.f32.partialorder %v452, 0.0
        %vm508 = vcmp.gt.f32.partialorder %v454, 0.0
        %vm509 = vcmp.gt.f32.partialorder %v457, 0.0
        %vm510 = vcmp.gt.f32.partialorder %v459, 0.0
        %vm511 = vcmp.gt.f32.partialorder %v462, 0.0
        %vm512 = vcmp.gt.f32.partialorder %v464, 0.0
        %vm513 = vcmp.gt.f32.partialorder %v467, 0.0
        %vm514 = vcmp.gt.f32.partialorder %v469, 0.0
        %vm515 = vcmp.gt.f32.partialorder %v472, 0.0
        %vm516 = vcmp.gt.f32.partialorder %v474, 0.0
        %vm517 = vcmp.gt.f32.partialorder %v477, 0.0
        %vm518 = vcmp.gt.f32.partialorder %v479, 0.0
        %vm519 = vcmp.gt.f32.partialorder %v482, 0.0
        %vm520 = vcmp.gt.f32.partialorder %v484, 0.0
        %vm521 = vcmp.gt.f32.partialorder %v487, 0.0
        %vm522 = vcmp.gt.f32.partialorder %v489, 0.0
        %v523 = vmul.f32 %v412, 1.442695
        %v524 = vpow.pop %v523
        %v525 = vmul.f32 %v414, 1.442695
        %v526 = vpow.pop %v525
        %v527 = vmul.f32 %v417, 1.442695
        %v528 = vpow.pop %v527
        %v529 = vmul.f32 %v419, 1.442695
        %v530 = vpow.pop %v529
        %v531 = vmul.f32 %v422, 1.442695
        %v532 = vpow.pop %v531
        %v533 = vmul.f32 %v424, 1.442695
        %v534 = vpow.pop %v533
        %v535 = vmul.f32 %v427, 1.442695
        %v536 = vpow.pop %v535
        %v537 = vmul.f32 %v429, 1.442695
        %v538 = vpow.pop %v537
        %v539 = vmul.f32 %v432, 1.442695
        %v540 = vpow.pop %v539
        %v541 = vmul.f32 %v434, 1.442695
        %v542 = vpow.pop %v541
        %v543 = vmul.f32 %v437, 1.442695
        %v544 = vpow.pop %v543
        %v545 = vmul.f32 %v439, 1.442695
        %v546 = vpow.pop %v545
        %v547 = vmul.f32 %v442, 1.442695
        %v548 = vpow.pop %v547
        %v549 = vmul.f32 %v444, 1.442695
        %v550 = vpow.pop %v549
        %v551 = vmul.f32 %v447, 1.442695
        %v552 = vpow.pop %v551
        %v553 = vmul.f32 %v449, 1.442695
        %v554 = vpow.pop %v553
        %v555 = vmul.f32 %v452, 1.442695
        %v556 = vpow.pop %v555
        %v557 = vmul.f32 %v454, 1.442695
        %v558 = vpow.pop %v557
        %v559 = vmul.f32 %v457, 1.442695
        %v560 = vpow.pop %v559
        %v561 = vmul.f32 %v459, 1.442695
        %v562 = vpow.pop %v561
        %v563 = vmul.f32 %v462, 1.442695
        %v564 = vpow.pop %v563
        %v565 = vmul.f32 %v464, 1.442695
        %v566 = vpow.pop %v565
        %v567 = vmul.f32 %v467, 1.442695
        %v568 = vpow.pop %v567
        %v569 = vmul.f32 %v469, 1.442695
        %v570 = vpow.pop %v569
        %v571 = vmul.f32 %v472, 1.442695
        %v572 = vpow.pop %v571
        %v573 = vmul.f32 %v474, 1.442695
        %v574 = vpow.pop %v573
        %v575 = vmul.f32 %v477, 1.442695
        %v576 = vpow.pop %v575
        %v577 = vmul.f32 %v479, 1.442695
        %v578 = vpow.pop %v577
        %v579 = vmul.f32 %v482, 1.442695
        %v580 = vpow.pop %v579
        %v581 = vmul.f32 %v484, 1.442695
        %v582 = vpow.pop %v581
        %v583 = vmul.f32 %v487, 1.442695
        %v584 = vpow.pop %v583
        %v585 = vmul.f32 %v489, 1.442695
        %v586 = vpow.pop %v585
        %v587 = vsub.f32 %v524, 1.0
        %v588 = vsub.f32 %v526, 1.0
        %v589 = vsub.f32 %v528, 1.0
        %v590 = vsub.f32 %v530, 1.0
        %v591 = vsub.f32 %v532, 1.0
        %v592 = vsub.f32 %v534, 1.0
        %v593 = vsub.f32 %v536, 1.0
        %v594 = vsub.f32 %v538, 1.0
        %v595 = vsub.f32 %v540, 1.0
        %v596 = vsub.f32 %v542, 1.0
        %v597 = vsub.f32 %v544, 1.0
        %v598 = vsub.f32 %v546, 1.0
        %v599 = vsub.f32 %v548, 1.0
        %v600 = vsub.f32 %v550, 1.0
        %v601 = vsub.f32 %v552, 1.0
        %v602 = vsub.f32 %v554, 1.0
        %v603 = vsub.f32 %v556, 1.0
        %v604 = vsub.f32 %v558, 1.0
        %v605 = vsub.f32 %v560, 1.0
        %v606 = vsub.f32 %v562, 1.0
        %v607 = vsub.f32 %v564, 1.0
        %v608 = vsub.f32 %v566, 1.0
        %v609 = vsub.f32 %v568, 1.0
        %v610 = vsub.f32 %v570, 1.0
        %v611 = vsub.f32 %v572, 1.0
        %v612 = vsub.f32 %v574, 1.0
        %v613 = vsub.f32 %v576, 1.0
        %v614 = vsub.f32 %v578, 1.0
        %v615 = vsub.f32 %v580, 1.0
        %v616 = vsub.f32 %v582, 1.0
        %v617 = vsub.f32 %v584, 1.0
        %v618 = vsub.f32 %v586, 1.0
        %v619 = vmul.f32 %v587, 1.6732632
        %v620 = vmul.f32 %v588, 1.6732632
        %v621 = vmul.f32 %v589, 1.6732632
        %v622 = vmul.f32 %v590, 1.6732632
        %v623 = vmul.f32 %v591, 1.6732632
        %v624 = vmul.f32 %v592, 1.6732632
        %v625 = vmul.f32 %v593, 1.6732632
        %v626 = vmul.f32 %v594, 1.6732632
        %v627 = vmul.f32 %v595, 1.6732632
        %v628 = vmul.f32 %v596, 1.6732632
        %v629 = vmul.f32 %v597, 1.6732632
        %v630 = vmul.f32 %v598, 1.6732632
        %v631 = vmul.f32 %v599, 1.6732632
        %v632 = vmul.f32 %v600, 1.6732632
        %v633 = vmul.f32 %v601, 1.6732632
        %v634 = vmul.f32 %v602, 1.6732632
        %v635 = vmul.f32 %v603, 1.6732632
        %v636 = vmul.f32 %v604, 1.6732632
        %v637 = vmul.f32 %v605, 1.6732632
        %v638 = vmul.f32 %v606, 1.6732632
        %v639 = vmul.f32 %v607, 1.6732632
        %v640 = vmul.f32 %v608, 1.6732632
        %v641 = vmul.f32 %v609, 1.6732632
        %v642 = vmul.f32 %v610, 1.6732632
        %v643 = vmul.f32 %v611, 1.6732632
        %v644 = vmul.f32 %v612, 1.6732632
        %v645 = vmul.f32 %v613, 1.6732632
        %v646 = vmul.f32 %v614, 1.6732632
        %v647 = vmul.f32 %v615, 1.6732632
        %v648 = vmul.f32 %v616, 1.6732632
        %v649 = vmul.f32 %v617, 1.6732632
        %v650 = vmul.f32 %v618, 1.6732632
        %v651 = vsel %vm491, %v412, %v619
        %v652 = vsel %vm492, %v414, %v620
        %v653 = vsel %vm493, %v417, %v621
        %v654 = vsel %vm494, %v419, %v622
        %v655 = vsel %vm495, %v422, %v623
        %v656 = vsel %vm496, %v424, %v624
        %v657 = vsel %vm497, %v427, %v625
        %v658 = vsel %vm498, %v429, %v626
        %v659 = vsel %vm499, %v432, %v627
        %v660 = vsel %vm500, %v434, %v628
        %v661 = vsel %vm501, %v437, %v629
        %v662 = vsel %vm502, %v439, %v630
        %v663 = vsel %vm503, %v442, %v631
        %v664 = vsel %vm504, %v444, %v632
        %v665 = vsel %vm505, %v447, %v633
        %v666 = vsel %vm506, %v449, %v634
        %v667 = vsel %vm507, %v452, %v635
        %v668 = vsel %vm508, %v454, %v636
        %v669 = vsel %vm509, %v457, %v637
        %v670 = vsel %vm510, %v459, %v638
        %v671 = vsel %vm511, %v462, %v639
        %v672 = vsel %vm512, %v464, %v640
        %v673 = vsel %vm513, %v467, %v641
        %v674 = vsel %vm514, %v469, %v642
        %v675 = vsel %vm515, %v472, %v643
        %v676 = vsel %vm516, %v474, %v644
        %v677 = vsel %vm517, %v477, %v645
        %v678 = vsel %vm518, %v479, %v646
        %v679 = vsel %vm519, %v482, %v647
        %v680 = vsel %vm520, %v484, %v648
        %v681 = vsel %vm521, %v487, %v649
        %v682 = vsel %vm522, %v489, %v650
        %v683 = vmul.f32 %v651, 1.050701
        %v684 = vmul.f32 %v652, 1.050701
        %v685 = vmul.f32 %v653, 1.050701
        %v686 = vmul.f32 %v654, 1.050701
        %v687 = vmul.f32 %v655, 1.050701
        %v688 = vmul.f32 %v656, 1.050701
        %v689 = vmul.f32 %v657, 1.050701
        %v690 = vmul.f32 %v658, 1.050701
        %v691 = vmul.f32 %v659, 1.050701
        %v692 = vmul.f32 %v660, 1.050701
        %v693 = vmul.f32 %v661, 1.050701
        %v694 = vmul.f32 %v662, 1.050701
        %v695 = vmul.f32 %v663, 1.050701
        %v696 = vmul.f32 %v664, 1.050701
        %v697 = vmul.f32 %v665, 1.050701
        %v698 = vmul.f32 %v666, 1.050701
        %v699 = vmul.f32 %v667, 1.050701
        %v700 = vmul.f32 %v668, 1.050701
        %v701 = vmul.f32 %v669, 1.050701
        %v702 = vmul.f32 %v670, 1.050701
        %v703 = vmul.f32 %v671, 1.050701
        %v704 = vmul.f32 %v672, 1.050701
        %v705 = vmul.f32 %v673, 1.050701
        %v706 = vmul.f32 %v674, 1.050701
        %v707 = vmul.f32 %v675, 1.050701
        %v708 = vmul.f32 %v676, 1.050701
        %v709 = vmul.f32 %v677, 1.050701
        %v710 = vmul.f32 %v678, 1.050701
        %v711 = vmul.f32 %v679, 1.050701
        %v712 = vmul.f32 %v680, 1.050701
        %v713 = vmul.f32 %v681, 1.050701
        %v714 = vmul.f32 %v682, 1.050701
        %715 = vst [vmem:[%s204] sm:$0xff] %v683
        %716 = vst [vmem:[%s204 + $0x8] sm:$0xff] %v684
        %717 = vst [vmem:[%s204 + $0x10] sm:$0xff] %v685
        %718 = vst [vmem:[%s204 + $0x18] sm:$0xff] %v686
        %719 = vst [vmem:[%s204 + $0x20] sm:$0xff] %v687
        %720 = vst [vmem:[%s204 + $0x28] sm:$0xff] %v688
        %721 = vst [vmem:[%s204 + $0x30] sm:$0xff] %v689
        %722 = vst [vmem:[%s204 + $0x38] sm:$0xff] %v690
        %723 = vst [vmem:[%s204 + $0x40] sm:$0xff] %v691
        %724 = vst [vmem:[%s204 + $0x48] sm:$0xff] %v692
        %725 = vst [vmem:[%s204 + $0x50] sm:$0xff] %v693
        %726 = vst [vmem:[%s204 + $0x58] sm:$0xff] %v694
        %727 = vst [vmem:[%s204 + $0x60] sm:$0xff] %v695
        %728 = vst [vmem:[%s204 + $0x68] sm:$0xff] %v696
        %729 = vst [vmem:[%s204 + $0x70] sm:$0xff] %v697
        %730 = vst [vmem:[%s204 + $0x78] sm:$0xff] %v698
        %731 = vst [vmem:[%s204 + $0x80] sm:$0xff] %v699
        %732 = vst [vmem:[%s204 + $0x88] sm:$0xff] %v700
        %733 = vst [vmem:[%s204 + $0x90] sm:$0xff] %v701
        %734 = vst [vmem:[%s204 + $0x98] sm:$0xff] %v702
        %735 = vst [vmem:[%s204 + $0xa0] sm:$0xff] %v703
        %736 = vst [vmem:[%s204 + $0xa8] sm:$0xff] %v704
        %737 = vst [vmem:[%s204 + $0xb0] sm:$0xff] %v705
        %738 = vst [vmem:[%s204 + $0xb8] sm:$0xff] %v706
        %739 = vst [vmem:[%s204 + $0xc0] sm:$0xff] %v707
        %740 = vst [vmem:[%s204 + $0xc8] sm:$0xff] %v708
        %741 = vst [vmem:[%s204 + $0xd0] sm:$0xff] %v709
        %742 = vst [vmem:[%s204 + $0xd8] sm:$0xff] %v710
        %743 = vst [vmem:[%s204 + $0xe0] sm:$0xff] %v711
        %744 = vst [vmem:[%s204 + $0xe8] sm:$0xff] %v712
        %745 = vst [vmem:[%s204 + $0xf0] sm:$0xff] %v713
        %746 = vst [vmem:[%s204 + $0xf8] sm:$0xff] %v714
        %s747 = smul.u32 32, %s16
        %p748 = scmp.lt.s32.totalorder %s747, 63
        %s749 = scalar_select %p748, %s747, 63
        %s750 = smul.addr %s749, 8
        %s751 = scalar_lea.vmem %s3, %s750
        // Predicated region
        $region41: #{vae_forward.7} parent=31 // pred_check
          %p752 = pneg %p102
        $region42: #{vae_forward.7} parent=31 // pred_check_branch
          %754 = sbr.rel (%p752) target = $region44
        $region43: #{vae_forward.7} parent=31 // pred_region
          %s755 = smul.u32 32, %s16
        $region44: #{vae_forward.7} parent=31 // pred_fallthru
          _
      $region32: #{vae_forward.7} parent=5 // pred_fallthru
        _
      %p756 = scmp.le.s32.totalorder 2, %s11
      // Predicated region
      $region45: #{vae_forward.7} parent=5 // pred_check
        %p757 = pneg %p756
      $region46: #{vae_forward.7} parent=5 // pred_check_branch
        %759 = sbr.rel (%p757) target = $region48
      $region47: #{vae_forward.7} parent=5 // pred_region
        %s760 = ssub.s32 %s11, 2
        // Predicated region
        $region49: #{vae_forward.7} parent=47 // pred_check
          %p761 = pneg %p108
        $region50: #{vae_forward.7} parent=47 // pred_check_branch
          %763 = sbr.rel (%p761) target = $region52
        $region51: #{vae_forward.7} parent=47 // pred_region
          %s764 = smul.u32 32, %s17
          %p765 = scmp.lt.s32.totalorder %s764, 63
          %s766 = scalar_select %p765, %s764, 63
          %s767 = smul.addr %s766, 8
          %s768 = scalar_lea.vmem %s3, %s767
        $region52: #{vae_forward.7} parent=47 // pred_fallthru
          _
      $region48: #{vae_forward.7} parent=5 // pred_fallthru
        _
    $region6: #{vae_forward.7} parent=1 // loop_footer
      %s15 = sadd.s32 1, %s11
    $region7: #{vae_forward.7} parent=1 // loop_footer_branch
      %10 = sbr.rel target = $region3
    $region8: #{vae_forward.7} parent=1 // loop_exit
      _
    %769 = vsyncpa [#allocation3], 1
    %s770 = scalar_lea.sflag [#allocation3], 1
    %771 = vsyncpa %s770, 1
    %772 = vsyncpa [#allocation5], 1

// kernel: vae_forward.8
$region0: #{vae_forward.8}
  #allocation0 [shape = 'u32[]', space=smem, size = 0x4, offset = 0x4, fixed_abs, tag = 'smem constant byte address 0x4 - core index']
  #allocation1 [shape = 'u32[72,128]{1,0:T(1,128)}', space=vmem, size = 0x9000, scoped, tag = 'internal scratch']
  %s0 = inlined_call_operand.vmem [shape: bf16[72,1024], index: 0, kind: input, shape index: {}]
  %s1 = inlined_call_operand.vmem [shape: bf16[1024,128], index: 1, kind: input, shape index: {}]
  %s2 = inlined_call_operand.vmem [shape: f32[1,128], index: 2, kind: input, shape index: {}]
  %s3 = inlined_call_operand.vmem [shape: f32[72,128], index: 3, kind: output, shape index: {}]
  %s4 = sld [smem:[#allocation0]]
  $region22: #{vae_forward.8} parent=0
    _
  %s6 = ssub.s32 1, %s4
  %s7 = scalar_select 0, %s6, %s4
  // Predicated region
  $region2: #{vae_forward.8} parent=0 // pred_check
    _
  $region3: #{vae_forward.8} parent=0 // pred_check_branch
    %9 = sbr.rel (0) target = $region5
  $region4: #{vae_forward.8} parent=0 // pred_region
    _
  $region5: #{vae_forward.8} parent=0 // pred_fallthru
    _
  // Predicated region
  $region6: #{vae_forward.8} parent=0 // pred_check
    _
  $region7: #{vae_forward.8} parent=0 // pred_check_branch
    %11 = sbr.rel (0) target = $region9
  $region8: #{vae_forward.8} parent=0 // pred_region
    _
  $region9: #{vae_forward.8} parent=0 // pred_fallthru
    _
  // Predicated region
  $region10: #{vae_forward.8} parent=0 // pred_check
    _
  $region11: #{vae_forward.8} parent=0 // pred_check_branch
    %13 = sbr.rel (0) target = $region13
  $region12: #{vae_forward.8} parent=0 // pred_region
    _
  $region13: #{vae_forward.8} parent=0 // pred_fallthru
    _
  %v14 = vld [vmem:[%s0] sm:$0xff]
  %v15 = vld [vmem:[%s0 + $0x8] sm:$0xff]
  %v16 = vld [vmem:[%s0 + $0x10] sm:$0xff]
  %v17 = vld [vmem:[%s0 + $0x18] sm:$0xff]
  %v18 = vld [vmem:[%s0 + $0x20] sm:$0xff]
  %v19 = vld [vmem:[%s0 + $0x28] sm:$0xff]
  %v20 = vld [vmem:[%s0 + $0x30] sm:$0xff]
  %v21 = vld [vmem:[%s0 + $0x38] sm:$0xff]
  %v22 = vld [vmem:[%s0 + $0x40] sm:$0xff]
  %v23 = vld [vmem:[%s0 + $0x48] sm:$0xff]
  %v24 = vld [vmem:[%s0 + $0x50] sm:$0xff]
  %v25 = vld [vmem:[%s0 + $0x58] sm:$0xff]
  %v26 = vld [vmem:[%s0 + $0x60] sm:$0xff]
  %v27 = vld [vmem:[%s0 + $0x68] sm:$0xff]
  %v28 = vld [vmem:[%s0 + $0x70] sm:$0xff]
  %v29 = vld [vmem:[%s0 + $0x78] sm:$0xff]
  %v30 = vld [vmem:[%s0 + $0x80] sm:$0xff]
  %v31 = vld [vmem:[%s0 + $0x88] sm:$0xff]
  %v32 = vld [vmem:[%s0 + $0x90] sm:$0xff]
  %v33 = vld [vmem:[%s0 + $0x98] sm:$0xff]
  %v34 = vld [vmem:[%s0 + $0xa0] sm:$0xff]
  %v35 = vld [vmem:[%s0 + $0xa8] sm:$0xff]
  %v36 = vld [vmem:[%s0 + $0xb0] sm:$0xff]
  %v37 = vld [vmem:[%s0 + $0xb8] sm:$0xff]
  %v38 = vld [vmem:[%s0 + $0xc0] sm:$0xff]
  %v39 = vld [vmem:[%s0 + $0xc8] sm:$0xff]
  %v40 = vld [vmem:[%s0 + $0xd0] sm:$0xff]
  %v41 = vld [vmem:[%s0 + $0xd8] sm:$0xff]
  %v42 = vld [vmem:[%s0 + $0xe0] sm:$0xff]
  %v43 = vld [vmem:[%s0 + $0xe8] sm:$0xff]
  %v44 = vld [vmem:[%s0 + $0xf0] sm:$0xff]
  %v45 = vld [vmem:[%s0 + $0xf8] sm:$0xff]
  %v46 = vld [vmem:[%s0 + $0x100] sm:$0xff]
  %v47 = vld [vmem:[%s0 + $0x108] sm:$0xff]
  %v48 = vld [vmem:[%s0 + $0x110] sm:$0xff]
  %v49 = vld [vmem:[%s0 + $0x118] sm:$0xff]
  %v50 = vld [vmem:[%s1] sm:$0xf]
  %v51 = vld [vmem:[%s1 + $0x4] sm:$0xf]
  %v52 = vld [vmem:[%s1 + $0x8] sm:$0xf]
  %v53 = vld [vmem:[%s1 + $0xc] sm:$0xf]
  %v54 = vld [vmem:[%s1 + $0x10] sm:$0xf]
  %v55 = vld [vmem:[%s1 + $0x14] sm:$0xf]
  %v56 = vld [vmem:[%s1 + $0x18] sm:$0xf]
  %v57 = vld [vmem:[%s1 + $0x1c] sm:$0xf]
  %v58 = vld [vmem:[%s1 + $0x20] sm:$0xf]
  %v59 = vld [vmem:[%s1 + $0x24] sm:$0xf]
  %v60 = vld [vmem:[%s1 + $0x28] sm:$0xf]
  %v61 = vld [vmem:[%s1 + $0x2c] sm:$0xf]
  %v62 = vld [vmem:[%s1 + $0x30] sm:$0xf]
  %v63 = vld [vmem:[%s1 + $0x34] sm:$0xf]
  %v64 = vld [vmem:[%s1 + $0x38] sm:$0xf]
  %v65 = vld [vmem:[%s1 + $0x3c] sm:$0xf]
  %v66 = vld [vmem:[%s1 + $0x40] sm:$0xf]
  %v67 = vld [vmem:[%s1 + $0x44] sm:$0xf]
  %v68 = vld [vmem:[%s1 + $0x48] sm:$0xf]
  %v69 = vld [vmem:[%s1 + $0x4c] sm:$0xf]
  %v70 = vld [vmem:[%s1 + $0x50] sm:$0xf]
  %v71 = vld [vmem:[%s1 + $0x54] sm:$0xf]
  %v72 = vld [vmem:[%s1 + $0x58] sm:$0xf]
  %v73 = vld [vmem:[%s1 + $0x5c] sm:$0xf]
  %v74 = vld [vmem:[%s1 + $0x60] sm:$0xf]
  %v75 = vld [vmem:[%s1 + $0x64] sm:$0xf]
  %v76 = vld [vmem:[%s1 + $0x68] sm:$0xf]
  %v77 = vld [vmem:[%s1 + $0x6c] sm:$0xf]
  %v78 = vld [vmem:[%s1 + $0x70] sm:$0xf]
  %v79 = vld [vmem:[%s1 + $0x74] sm:$0xf]
  %v80 = vld [vmem:[%s1 + $0x78] sm:$0xf]
  %v81 = vld [vmem:[%s1 + $0x7c] sm:$0xf]
  %v82 = vld [vmem:[%s1 + $0x80] sm:$0xf]
  %v83 = vld [vmem:[%s1 + $0x84] sm:$0xf]
  %v84 = vld [vmem:[%s1 + $0x88] sm:$0xf]
  %v85 = vld [vmem:[%s1 + $0x8c] sm:$0xf]
  %v86 = vld [vmem:[%s1 + $0x90] sm:$0xf]
  %v87 = vld [vmem:[%s1 + $0x94] sm:$0xf]
  %v88 = vld [vmem:[%s1 + $0x98] sm:$0xf]
  %v89 = vld [vmem:[%s1 + $0x9c] sm:$0xf]
  %v90 = vld [vmem:[%s1 + $0xa0] sm:$0xf]
  %v91 = vld [vmem:[%s1 + $0xa4] sm:$0xf]
  %v92 = vld [vmem:[%s1 + $0xa8] sm:$0xf]
  %v93 = vld [vmem:[%s1 + $0xac] sm:$0xf]
  %v94 = vld [vmem:[%s1 + $0xb0] sm:$0xf]
  %v95 = vld [vmem:[%s1 + $0xb4] sm:$0xf]
  %v96 = vld [vmem:[%s1 + $0xb8] sm:$0xf]
  %v97 = vld [vmem:[%s1 + $0xbc] sm:$0xf]
  %v98 = vld [vmem:[%s1 + $0xc0] sm:$0xf]
  %v99 = vld [vmem:[%s1 + $0xc4] sm:$0xf]
  %v100 = vld [vmem:[%s1 + $0xc8] sm:$0xf]
  %v101 = vld [vmem:[%s1 + $0xcc] sm:$0xf]
  %v102 = vld [vmem:[%s1 + $0xd0] sm:$0xf]
  %v103 = vld [vmem:[%s1 + $0xd4] sm:$0xf]
  %v104 = vld [vmem:[%s1 + $0xd8] sm:$0xf]
  %v105 = vld [vmem:[%s1 + $0xdc] sm:$0xf]
  %v106 = vld [vmem:[%s1 + $0xe0] sm:$0xf]
  %v107 = vld [vmem:[%s1 + $0xe4] sm:$0xf]
  %v108 = vld [vmem:[%s1 + $0xe8] sm:$0xf]
  %v109 = vld [vmem:[%s1 + $0xec] sm:$0xf]
  %v110 = vld [vmem:[%s1 + $0xf0] sm:$0xf]
  %v111 = vld [vmem:[%s1 + $0xf4] sm:$0xf]
  %v112 = vld [vmem:[%s1 + $0xf8] sm:$0xf]
  %v113 = vld [vmem:[%s1 + $0xfc] sm:$0xf]
  %v114 = vld [vmem:[%s1 + $0x100] sm:$0xf]
  %v115 = vld [vmem:[%s1 + $0x104] sm:$0xf]
  %v116 = vld [vmem:[%s1 + $0x108] sm:$0xf]
  %v117 = vld [vmem:[%s1 + $0x10c] sm:$0xf]
  %v118 = vld [vmem:[%s1 + $0x110] sm:$0xf]
  %v119 = vld [vmem:[%s1 + $0x114] sm:$0xf]
  %v120 = vld [vmem:[%s1 + $0x118] sm:$0xf]
  %v121 = vld [vmem:[%s1 + $0x11c] sm:$0xf]
  %v122 = vld [vmem:[%s1 + $0x120] sm:$0xf]
  %v123 = vld [vmem:[%s1 + $0x124] sm:$0xf]
  %v124 = vld [vmem:[%s1 + $0x128] sm:$0xf]
  %v125 = vld [vmem:[%s1 + $0x12c] sm:$0xf]
  %v126 = vld [vmem:[%s1 + $0x130] sm:$0xf]
  %v127 = vld [vmem:[%s1 + $0x134] sm:$0xf]
  %v128 = vld [vmem:[%s1 + $0x138] sm:$0xf]
  %v129 = vld [vmem:[%s1 + $0x13c] sm:$0xf]
  %v130 = vld [vmem:[%s1 + $0x140] sm:$0xf]
  %v131 = vld [vmem:[%s1 + $0x144] sm:$0xf]
  %v132 = vld [vmem:[%s1 + $0x148] sm:$0xf]
  %v133 = vld [vmem:[%s1 + $0x14c] sm:$0xf]
  %v134 = vld [vmem:[%s1 + $0x150] sm:$0xf]
  %v135 = vld [vmem:[%s1 + $0x154] sm:$0xf]
  %v136 = vld [vmem:[%s1 + $0x158] sm:$0xf]
  %v137 = vld [vmem:[%s1 + $0x15c] sm:$0xf]
  %v138 = vld [vmem:[%s1 + $0x160] sm:$0xf]
  %v139 = vld [vmem:[%s1 + $0x164] sm:$0xf]
  %v140 = vld [vmem:[%s1 + $0x168] sm:$0xf]
  %v141 = vld [vmem:[%s1 + $0x16c] sm:$0xf]
  %v142 = vld [vmem:[%s1 + $0x170] sm:$0xf]
  %v143 = vld [vmem:[%s1 + $0x174] sm:$0xf]
  %v144 = vld [vmem:[%s1 + $0x178] sm:$0xf]
  %v145 = vld [vmem:[%s1 + $0x17c] sm:$0xf]
  %v146 = vld [vmem:[%s1 + $0x180] sm:$0xf]
  %v147 = vld [vmem:[%s1 + $0x184] sm:$0xf]
  %v148 = vld [vmem:[%s1 + $0x188] sm:$0xf]
  %v149 = vld [vmem:[%s1 + $0x18c] sm:$0xf]
  %v150 = vld [vmem:[%s1 + $0x190] sm:$0xf]
  %v151 = vld [vmem:[%s1 + $0x194] sm:$0xf]
  %v152 = vld [vmem:[%s1 + $0x198] sm:$0xf]
  %v153 = vld [vmem:[%s1 + $0x19c] sm:$0xf]
  %v154 = vld [vmem:[%s1 + $0x1a0] sm:$0xf]
  %v155 = vld [vmem:[%s1 + $0x1a4] sm:$0xf]
  %v156 = vld [vmem:[%s1 + $0x1a8] sm:$0xf]
  %v157 = vld [vmem:[%s1 + $0x1ac] sm:$0xf]
  %v158 = vld [vmem:[%s1 + $0x1b0] sm:$0xf]
  %v159 = vld [vmem:[%s1 + $0x1b4] sm:$0xf]
  %v160 = vld [vmem:[%s1 + $0x1b8] sm:$0xf]
  %v161 = vld [vmem:[%s1 + $0x1bc] sm:$0xf]
  %v162 = vld [vmem:[%s1 + $0x1c0] sm:$0xf]
  %v163 = vld [vmem:[%s1 + $0x1c4] sm:$0xf]
  %v164 = vld [vmem:[%s1 + $0x1c8] sm:$0xf]
  %v165 = vld [vmem:[%s1 + $0x1cc] sm:$0xf]
  %v166 = vld [vmem:[%s1 + $0x1d0] sm:$0xf]
  %v167 = vld [vmem:[%s1 + $0x1d4] sm:$0xf]
  %v168 = vld [vmem:[%s1 + $0x1d8] sm:$0xf]
  %v169 = vld [vmem:[%s1 + $0x1dc] sm:$0xf]
  %v170 = vld [vmem:[%s1 + $0x1e0] sm:$0xf]
  %v171 = vld [vmem:[%s1 + $0x1e4] sm:$0xf]
  %v172 = vld [vmem:[%s1 + $0x1e8] sm:$0xf]
  %v173 = vld [vmem:[%s1 + $0x1ec] sm:$0xf]
  %v174 = vld [vmem:[%s1 + $0x1f0] sm:$0xf]
  %v175 = vld [vmem:[%s1 + $0x1f4] sm:$0xf]
  %v176 = vld [vmem:[%s1 + $0x1f8] sm:$0xf]
  %v177 = vld [vmem:[%s1 + $0x1fc] sm:$0xf]
  %v178 = vld [vmem:[%s2] sm:$0x1]
  %v180 = vperm.slane %v178, 0
  %v218 = vunpack.c.l.b16 %v14
  %v219 = vunpack.c.h.b16 %v14
  %v220 = vunpack.c.l.b16 %v15
  %v221 = vunpack.c.h.b16 %v15
  %v222 = vunpack.c.l.b16 %v16
  %v223 = vunpack.c.h.b16 %v16
  %v224 = vunpack.c.l.b16 %v17
  %v225 = vunpack.c.h.b16 %v17
  %v226 = vunpack.c.l.b16 %v18
  %v227 = vunpack.c.h.b16 %v18
  %v228 = vunpack.c.l.b16 %v19
  %v229 = vunpack.c.h.b16 %v19
  %v230 = vunpack.c.l.b16 %v20
  %v231 = vunpack.c.h.b16 %v20
  %v232 = vunpack.c.l.b16 %v21
  %v233 = vunpack.c.h.b16 %v21
  %v234 = vunpack.c.l.b16 %v22
  %v235 = vunpack.c.h.b16 %v22
  %v236 = vunpack.c.l.b16 %v23
  %v237 = vunpack.c.h.b16 %v23
  %v238 = vunpack.c.l.b16 %v24
  %v239 = vunpack.c.h.b16 %v24
  %v240 = vunpack.c.l.b16 %v25
  %v241 = vunpack.c.h.b16 %v25
  %v242 = vunpack.c.l.b16 %v26
  %v243 = vunpack.c.h.b16 %v26
  %v244 = vunpack.c.l.b16 %v27
  %v245 = vunpack.c.h.b16 %v27
  %v246 = vunpack.c.l.b16 %v28
  %v247 = vunpack.c.h.b16 %v28
  %v248 = vunpack.c.l.b16 %v29
  %v249 = vunpack.c.h.b16 %v29
  %v250 = vunpack.c.l.b16 %v30
  %v251 = vunpack.c.h.b16 %v30
  %v252 = vunpack.c.l.b16 %v31
  %v253 = vunpack.c.h.b16 %v31
  %v254 = vunpack.c.l.b16 %v32
  %v255 = vunpack.c.h.b16 %v32
  %v256 = vunpack.c.l.b16 %v33
  %v257 = vunpack.c.h.b16 %v33
  %v258 = vunpack.c.l.b16 %v34
  %v259 = vunpack.c.h.b16 %v34
  %v260 = vunpack.c.l.b16 %v35
  %v261 = vunpack.c.h.b16 %v35
  %v262 = vunpack.c.l.b16 %v36
  %v263 = vunpack.c.h.b16 %v36
  %v264 = vunpack.c.l.b16 %v37
  %v265 = vunpack.c.h.b16 %v37
  %v266 = vunpack.c.l.b16 %v38
  %v267 = vunpack.c.h.b16 %v38
  %v268 = vunpack.c.l.b16 %v39
  %v269 = vunpack.c.h.b16 %v39
  %v270 = vunpack.c.l.b16 %v40
  %v271 = vunpack.c.h.b16 %v40
  %v272 = vunpack.c.l.b16 %v41
  %v273 = vunpack.c.h.b16 %v41
  %v274 = vunpack.c.l.b16 %v42
  %v275 = vunpack.c.h.b16 %v42
  %v276 = vunpack.c.l.b16 %v43
  %v277 = vunpack.c.h.b16 %v43
  %v278 = vunpack.c.l.b16 %v44
  %v279 = vunpack.c.h.b16 %v44
  %v280 = vunpack.c.l.b16 %v45
  %v281 = vunpack.c.h.b16 %v45
  %v282 = vunpack.c.l.b16 %v46
  %v283 = vunpack.c.h.b16 %v46
  %v284 = vunpack.c.l.b16 %v47
  %v285 = vunpack.c.h.b16 %v47
  %v286 = vunpack.c.l.b16 %v48
  %v287 = vunpack.c.h.b16 %v48
  %v288 = vunpack.c.l.b16 %v49
  %v289 = vunpack.c.h.b16 %v49
  %v290 = vpack.c.b16 %v226, %v218
  %v291 = vpack.c.b16 %v227, %v219
  %v292 = vpack.c.b16 %v228, %v220
  %v293 = vpack.c.b16 %v229, %v221
  %v294 = vpack.c.b16 %v230, %v222
  %v295 = vpack.c.b16 %v231, %v223
  %v296 = vpack.c.b16 %v232, %v224
  %v297 = vpack.c.b16 %v233, %v225
  %v298 = vpack.c.b16 %v242, %v234
  %v299 = vpack.c.b16 %v243, %v235
  %v300 = vpack.c.b16 %v244, %v236
  %v301 = vpack.c.b16 %v245, %v237
  %v302 = vpack.c.b16 %v246, %v238
  %v303 = vpack.c.b16 %v247, %v239
  %v304 = vpack.c.b16 %v248, %v240
  %v305 = vpack.c.b16 %v249, %v241
  %v306 = vpack.c.b16 %v258, %v250
  %v307 = vpack.c.b16 %v259, %v251
  %v308 = vpack.c.b16 %v260, %v252
  %v309 = vpack.c.b16 %v261, %v253
  %v310 = vpack.c.b16 %v262, %v254
  %v311 = vpack.c.b16 %v263, %v255
  %v312 = vpack.c.b16 %v264, %v256
  %v313 = vpack.c.b16 %v265, %v257
  %v314 = vpack.c.b16 %v274, %v266
  %v315 = vpack.c.b16 %v275, %v267
  %v316 = vpack.c.b16 %v276, %v268
  %v317 = vpack.c.b16 %v277, %v269
  %v318 = vpack.c.b16 %v278, %v270
  %v319 = vpack.c.b16 %v279, %v271
  %v320 = vpack.c.b16 %v280, %v272
  %v321 = vpack.c.b16 %v281, %v273
  %v322 = vpack.c.b16 %v282, %v282
  %v323 = vpack.c.b16 %v283, %v283
  %v324 = vpack.c.b16 %v284, %v284
  %v325 = vpack.c.b16 %v285, %v285
  %v326 = vpack.c.b16 %v286, %v286
  %v327 = vpack.c.b16 %v287, %v287
  %v328 = vpack.c.b16 %v288, %v288
  %v329 = vpack.c.b16 %v289, %v289
  %v498 = vunpack.c.l.b16 %v50
  %v499 = vunpack.c.l.b16 %v51
  %v500 = vunpack.c.l.b16 %v52
  %v501 = vunpack.c.l.b16 %v53
  %v502 = vunpack.c.l.b16 %v54
  %v503 = vunpack.c.l.b16 %v55
  %v504 = vunpack.c.l.b16 %v56
  %v505 = vunpack.c.l.b16 %v57
  %v506 = vunpack.c.l.b16 %v58
  %v507 = vunpack.c.l.b16 %v59
  %v508 = vunpack.c.l.b16 %v60
  %v509 = vunpack.c.l.b16 %v61
  %v510 = vunpack.c.l.b16 %v62
  %v511 = vunpack.c.l.b16 %v63
  %v512 = vunpack.c.l.b16 %v64
  %v513 = vunpack.c.l.b16 %v65
  %v514 = vunpack.c.l.b16 %v66
  %v515 = vunpack.c.l.b16 %v67
  %v516 = vunpack.c.l.b16 %v68
  %v517 = vunpack.c.l.b16 %v69
  %v518 = vunpack.c.l.b16 %v70
  %v519 = vunpack.c.l.b16 %v71
  %v520 = vunpack.c.l.b16 %v72
  %v521 = vunpack.c.l.b16 %v73
  %v522 = vunpack.c.l.b16 %v74
  %v523 = vunpack.c.l.b16 %v75
  %v524 = vunpack.c.l.b16 %v76
  %v525 = vunpack.c.l.b16 %v77
  %v526 = vunpack.c.l.b16 %v78
  %v527 = vunpack.c.l.b16 %v79
  %v528 = vunpack.c.l.b16 %v80
  %v529 = vunpack.c.l.b16 %v81
  %v530 = vunpack.c.l.b16 %v82
  %v531 = vunpack.c.l.b16 %v83
  %v532 = vunpack.c.l.b16 %v84
  %v533 = vunpack.c.l.b16 %v85
  %v534 = vunpack.c.l.b16 %v86
  %v535 = vunpack.c.l.b16 %v87
  %v536 = vunpack.c.l.b16 %v88
  %v537 = vunpack.c.l.b16 %v89
  %v538 = vunpack.c.l.b16 %v90
  %v539 = vunpack.c.l.b16 %v91
  %v540 = vunpack.c.l.b16 %v92
  %v541 = vunpack.c.l.b16 %v93
  %v542 = vunpack.c.l.b16 %v94
  %v543 = vunpack.c.l.b16 %v95
  %v544 = vunpack.c.l.b16 %v96
  %v545 = vunpack.c.l.b16 %v97
  %v546 = vunpack.c.l.b16 %v98
  %v547 = vunpack.c.l.b16 %v99
  %v548 = vunpack.c.l.b16 %v100
  %v549 = vunpack.c.l.b16 %v101
  %v550 = vunpack.c.l.b16 %v102
  %v551 = vunpack.c.l.b16 %v103
  %v552 = vunpack.c.l.b16 %v104
  %v553 = vunpack.c.l.b16 %v105
  %v554 = vunpack.c.l.b16 %v106
  %v555 = vunpack.c.l.b16 %v107
  %v556 = vunpack.c.l.b16 %v108
  %v557 = vunpack.c.l.b16 %v109
  %v558 = vunpack.c.l.b16 %v110
  %v559 = vunpack.c.l.b16 %v111
  %v560 = vunpack.c.l.b16 %v112
  %v561 = vunpack.c.l.b16 %v113
  %v562 = vunpack.c.l.b16 %v114
  %v563 = vunpack.c.l.b16 %v115
  %v564 = vunpack.c.l.b16 %v116
  %v565 = vunpack.c.l.b16 %v117
  %v566 = vunpack.c.l.b16 %v118
  %v567 = vunpack.c.l.b16 %v119
  %v568 = vunpack.c.l.b16 %v120
  %v569 = vunpack.c.l.b16 %v121
  %v570 = vunpack.c.l.b16 %v122
  %v571 = vunpack.c.l.b16 %v123
  %v572 = vunpack.c.l.b16 %v124
  %v573 = vunpack.c.l.b16 %v125
  %v574 = vunpack.c.l.b16 %v126
  %v575 = vunpack.c.l.b16 %v127
  %v576 = vunpack.c.l.b16 %v128
  %v577 = vunpack.c.l.b16 %v129
  %v578 = vunpack.c.l.b16 %v130
  %v579 = vunpack.c.l.b16 %v131
  %v580 = vunpack.c.l.b16 %v132
  %v581 = vunpack.c.l.b16 %v133
  %v582 = vunpack.c.l.b16 %v134
  %v583 = vunpack.c.l.b16 %v135
  %v584 = vunpack.c.l.b16 %v136
  %v585 = vunpack.c.l.b16 %v137
  %v586 = vunpack.c.l.b16 %v138
  %v587 = vunpack.c.l.b16 %v139
  %v588 = vunpack.c.l.b16 %v140
  %v589 = vunpack.c.l.b16 %v141
  %v590 = vunpack.c.l.b16 %v142
  %v591 = vunpack.c.l.b16 %v143
  %v592 = vunpack.c.l.b16 %v144
  %v593 = vunpack.c.l.b16 %v145
  %v594 = vunpack.c.l.b16 %v146
  %v595 = vunpack.c.l.b16 %v147
  %v596 = vunpack.c.l.b16 %v148
  %v597 = vunpack.c.l.b16 %v149
  %v598 = vunpack.c.l.b16 %v150
  %v599 = vunpack.c.l.b16 %v151
  %v600 = vunpack.c.l.b16 %v152
  %v601 = vunpack.c.l.b16 %v153
  %v602 = vunpack.c.l.b16 %v154
  %v603 = vunpack.c.l.b16 %v155
  %v604 = vunpack.c.l.b16 %v156
  %v605 = vunpack.c.l.b16 %v157
  %v606 = vunpack.c.l.b16 %v158
  %v607 = vunpack.c.l.b16 %v159
  %v608 = vunpack.c.l.b16 %v160
  %v609 = vunpack.c.l.b16 %v161
  %v610 = vunpack.c.l.b16 %v162
  %v611 = vunpack.c.l.b16 %v163
  %v612 = vunpack.c.l.b16 %v164
  %v613 = vunpack.c.l.b16 %v165
  %v614 = vunpack.c.l.b16 %v166
  %v615 = vunpack.c.l.b16 %v167
  %v616 = vunpack.c.l.b16 %v168
  %v617 = vunpack.c.l.b16 %v169
  %v618 = vunpack.c.l.b16 %v170
  %v619 = vunpack.c.l.b16 %v171
  %v620 = vunpack.c.l.b16 %v172
  %v621 = vunpack.c.l.b16 %v173
  %v622 = vunpack.c.l.b16 %v174
  %v623 = vunpack.c.l.b16 %v175
  %v624 = vunpack.c.l.b16 %v176
  %v625 = vunpack.c.l.b16 %v177
  %v626 = vpack.c.b16 %v499, %v498
  %v627 = vpack.c.b16 %v501, %v500
  %v628 = vpack.c.b16 %v503, %v502
  %v629 = vpack.c.b16 %v505, %v504
  %v630 = vpack.c.b16 %v507, %v506
  %v631 = vpack.c.b16 %v509, %v508
  %v632 = vpack.c.b16 %v511, %v510
  %v633 = vpack.c.b16 %v513, %v512
  %v634 = vpack.c.b16 %v515, %v514
  %v635 = vpack.c.b16 %v517, %v516
  %v636 = vpack.c.b16 %v519, %v518
  %v637 = vpack.c.b16 %v521, %v520
  %v638 = vpack.c.b16 %v523, %v522
  %v639 = vpack.c.b16 %v525, %v524
  %v640 = vpack.c.b16 %v527, %v526
  %v641 = vpack.c.b16 %v529, %v528
  %v642 = vpack.c.b16 %v531, %v530
  %v643 = vpack.c.b16 %v533, %v532
  %v644 = vpack.c.b16 %v535, %v534
  %v645 = vpack.c.b16 %v537, %v536
  %v646 = vpack.c.b16 %v539, %v538
  %v647 = vpack.c.b16 %v541, %v540
  %v648 = vpack.c.b16 %v543, %v542
  %v649 = vpack.c.b16 %v545, %v544
  %v650 = vpack.c.b16 %v547, %v546
  %v651 = vpack.c.b16 %v549, %v548
  %v652 = vpack.c.b16 %v551, %v550
  %v653 = vpack.c.b16 %v553, %v552
  %v654 = vpack.c.b16 %v555, %v554
  %v655 = vpack.c.b16 %v557, %v556
  %v656 = vpack.c.b16 %v559, %v558
  %v657 = vpack.c.b16 %v561, %v560
  %v658 = vpack.c.b16 %v563, %v562
  %v659 = vpack.c.b16 %v565, %v564
  %v660 = vpack.c.b16 %v567, %v566
  %v661 = vpack.c.b16 %v569, %v568
  %v662 = vpack.c.b16 %v571, %v570
  %v663 = vpack.c.b16 %v573, %v572
  %v664 = vpack.c.b16 %v575, %v574
  %v665 = vpack.c.b16 %v577, %v576
  %v666 = vpack.c.b16 %v579, %v578
  %v667 = vpack.c.b16 %v581, %v580
  %v668 = vpack.c.b16 %v583, %v582
  %v669 = vpack.c.b16 %v585, %v584
  %v670 = vpack.c.b16 %v587, %v586
  %v671 = vpack.c.b16 %v589, %v588
  %v672 = vpack.c.b16 %v591, %v590
  %v673 = vpack.c.b16 %v593, %v592
  %v674 = vpack.c.b16 %v595, %v594
  %v675 = vpack.c.b16 %v597, %v596
  %v676 = vpack.c.b16 %v599, %v598
  %v677 = vpack.c.b16 %v601, %v600
  %v678 = vpack.c.b16 %v603, %v602
  %v679 = vpack.c.b16 %v605, %v604
  %v680 = vpack.c.b16 %v607, %v606
  %v681 = vpack.c.b16 %v609, %v608
  %v682 = vpack.c.b16 %v611, %v610
  %v683 = vpack.c.b16 %v613, %v612
  %v684 = vpack.c.b16 %v615, %v614
  %v685 = vpack.c.b16 %v617, %v616
  %v686 = vpack.c.b16 %v619, %v618
  %v687 = vpack.c.b16 %v621, %v620
  %v688 = vpack.c.b16 %v623, %v622
  %v689 = vpack.c.b16 %v625, %v624
  %754 = vmatpush.bf16.msra.mxu0 %v633
  %755 = vmatpush.bf16.msra.mxu0 %v632
  %756 = vmatpush.bf16.msra.mxu0 %v631
  %757 = vmatpush.bf16.msra.mxu0 %v630
  %758 = vmatpush.bf16.msra.mxu0 %v629
  %759 = vmatpush.bf16.msra.mxu0 %v628
  %760 = vmatpush.bf16.msra.mxu0 %v627
  %761 = vmatpush.bf16.msra.mxu0 %v626
  %762 = vmatmul.bf16.gmra.mxu0 %v290
  %v763 = vpop.f32.mrf.mxu0
  %v764 = vadd.f32 %v180, %v763
  %v765 = vpop.f32.mrf.mxu0
  %v766 = vadd.f32 %v180, %v765
  %767 = vmatmul.bf16.gmra.mxu0 %v298
  %v768 = vpop.f32.mrf.mxu0
  %v769 = vadd.f32 %v180, %v768
  %v770 = vpop.f32.mrf.mxu0
  %v771 = vadd.f32 %v180, %v770
  %772 = vmatmul.bf16.gmra.mxu0 %v306
  %v773 = vpop.f32.mrf.mxu0
  %v774 = vadd.f32 %v180, %v773
  %v775 = vpop.f32.mrf.mxu0
  %v776 = vadd.f32 %v180, %v775
  %777 = vmatmul.bf16.gmra.mxu0 %v314
  %v778 = vpop.f32.mrf.mxu0
  %v779 = vadd.f32 %v180, %v778
  %v780 = vpop.f32.mrf.mxu0
  %v781 = vadd.f32 %v180, %v780
  %782 = vmatmul.bf16.gmra.mxu0 %v322
  %v783 = vpop.f32.mrf.mxu0
  %v784 = vadd.f32 %v180, %v783
  %v785 = vpop.f32.mrf.mxu0
  %786 = vdwg.mxu0
  %787 = vmatpush.bf16.msra.mxu0 %v641
  %788 = vmatpush.bf16.msra.mxu0 %v640
  %789 = vmatpush.bf16.msra.mxu0 %v639
  %790 = vmatpush.bf16.msra.mxu0 %v638
  %791 = vmatpush.bf16.msra.mxu0 %v637
  %792 = vmatpush.bf16.msra.mxu0 %v636
  %793 = vmatpush.bf16.msra.mxu0 %v635
  %794 = vmatpush.bf16.msra.mxu0 %v634
  %795 = vmatmul.bf16.gmra.mxu0 %v291
  %v796 = vpop.f32.mrf.mxu0
  %v797 = vadd.f32 %v764, %v796
  %v798 = vpop.f32.mrf.mxu0
  %v799 = vadd.f32 %v766, %v798
  %800 = vmatmul.bf16.gmra.mxu0 %v299
  %v801 = vpop.f32.mrf.mxu0
  %v802 = vadd.f32 %v769, %v801
  %v803 = vpop.f32.mrf.mxu0
  %v804 = vadd.f32 %v771, %v803
  %805 = vmatmul.bf16.gmra.mxu0 %v307
  %v806 = vpop.f32.mrf.mxu0
  %v807 = vadd.f32 %v774, %v806
  %v808 = vpop.f32.mrf.mxu0
  %v809 = vadd.f32 %v776, %v808
  %810 = vmatmul.bf16.gmra.mxu0 %v315
  %v811 = vpop.f32.mrf.mxu0
  %v812 = vadd.f32 %v779, %v811
  %v813 = vpop.f32.mrf.mxu0
  %v814 = vadd.f32 %v781, %v813
  %815 = vmatmul.bf16.gmra.mxu0 %v323
  %v816 = vpop.f32.mrf.mxu0
  %v817 = vadd.f32 %v784, %v816
  %v818 = vpop.f32.mrf.mxu0
  %819 = vdwg.mxu0
  %820 = vmatpush.bf16.msra.mxu0 %v649
  %821 = vmatpush.bf16.msra.mxu0 %v648
  %822 = vmatpush.bf16.msra.mxu0 %v647
  %823 = vmatpush.bf16.msra.mxu0 %v646
  %824 = vmatpush.bf16.msra.mxu0 %v645
  %825 = vmatpush.bf16.msra.mxu0 %v644
  %826 = vmatpush.bf16.msra.mxu0 %v643
  %827 = vmatpush.bf16.msra.mxu0 %v642
  %828 = vmatmul.bf16.gmra.mxu0 %v292
  %v829 = vpop.f32.mrf.mxu0
  %v830 = vadd.f32 %v797, %v829
  %v831 = vpop.f32.mrf.mxu0
  %v832 = vadd.f32 %v799, %v831
  %833 = vmatmul.bf16.gmra.mxu0 %v300
  %v834 = vpop.f32.mrf.mxu0
  %v835 = vadd.f32 %v802, %v834
  %v836 = vpop.f32.mrf.mxu0
  %v837 = vadd.f32 %v804, %v836
  %838 = vmatmul.bf16.gmra.mxu0 %v308
  %v839 = vpop.f32.mrf.mxu0
  %v840 = vadd.f32 %v807, %v839
  %v841 = vpop.f32.mrf.mxu0
  %v842 = vadd.f32 %v809, %v841
  %843 = vmatmul.bf16.gmra.mxu0 %v316
  %v844 = vpop.f32.mrf.mxu0
  %v845 = vadd.f32 %v812, %v844
  %v846 = vpop.f32.mrf.mxu0
  %v847 = vadd.f32 %v814, %v846
  %848 = vmatmul.bf16.gmra.mxu0 %v324
  %v849 = vpop.f32.mrf.mxu0
  %v850 = vadd.f32 %v817, %v849
  %v851 = vpop.f32.mrf.mxu0
  %852 = vdwg.mxu0
  %853 = vmatpush.bf16.msra.mxu0 %v657
  %854 = vmatpush.bf16.msra.mxu0 %v656
  %855 = vmatpush.bf16.msra.mxu0 %v655
  %856 = vmatpush.bf16.msra.mxu0 %v654
  %857 = vmatpush.bf16.msra.mxu0 %v653
  %858 = vmatpush.bf16.msra.mxu0 %v652
  %859 = vmatpush.bf16.msra.mxu0 %v651
  %860 = vmatpush.bf16.msra.mxu0 %v650
  %861 = vmatmul.bf16.gmra.mxu0 %v293
  %v862 = vpop.f32.mrf.mxu0
  %v863 = vadd.f32 %v830, %v862
  %v864 = vpop.f32.mrf.mxu0
  %v865 = vadd.f32 %v832, %v864
  %866 = vmatmul.bf16.gmra.mxu0 %v301
  %v867 = vpop.f32.mrf.mxu0
  %v868 = vadd.f32 %v835, %v867
  %v869 = vpop.f32.mrf.mxu0
  %v870 = vadd.f32 %v837, %v869
  %871 = vmatmul.bf16.gmra.mxu0 %v309
  %v872 = vpop.f32.mrf.mxu0
  %v873 = vadd.f32 %v840, %v872
  %v874 = vpop.f32.mrf.mxu0
  %v875 = vadd.f32 %v842, %v874
  %876 = vmatmul.bf16.gmra.mxu0 %v317
  %v877 = vpop.f32.mrf.mxu0
  %v878 = vadd.f32 %v845, %v877
  %v879 = vpop.f32.mrf.mxu0
  %v880 = vadd.f32 %v847, %v879
  %881 = vmatmul.bf16.gmra.mxu0 %v325
  %v882 = vpop.f32.mrf.mxu0
  %v883 = vadd.f32 %v850, %v882
  %v884 = vpop.f32.mrf.mxu0
  %885 = vdwg.mxu0
  %886 = vmatpush.bf16.msra.mxu0 %v665
  %887 = vmatpush.bf16.msra.mxu0 %v664
  %888 = vmatpush.bf16.msra.mxu0 %v663
  %889 = vmatpush.bf16.msra.mxu0 %v662
  %890 = vmatpush.bf16.msra.mxu0 %v661
  %891 = vmatpush.bf16.msra.mxu0 %v660
  %892 = vmatpush.bf16.msra.mxu0 %v659
  %893 = vmatpush.bf16.msra.mxu0 %v658
  %894 = vmatmul.bf16.gmra.mxu0 %v294
  %v895 = vpop.f32.mrf.mxu0
  %v896 = vadd.f32 %v863, %v895
  %v897 = vpop.f32.mrf.mxu0
  %v898 = vadd.f32 %v865, %v897
  %899 = vmatmul.bf16.gmra.mxu0 %v302
  %v900 = vpop.f32.mrf.mxu0
  %v901 = vadd.f32 %v868, %v900
  %v902 = vpop.f32.mrf.mxu0
  %v903 = vadd.f32 %v870, %v902
  %904 = vmatmul.bf16.gmra.mxu0 %v310
  %v905 = vpop.f32.mrf.mxu0
  %v906 = vadd.f32 %v873, %v905
  %v907 = vpop.f32.mrf.mxu0
  %v908 = vadd.f32 %v875, %v907
  %909 = vmatmul.bf16.gmra.mxu0 %v318
  %v910 = vpop.f32.mrf.mxu0
  %v911 = vadd.f32 %v878, %v910
  %v912 = vpop.f32.mrf.mxu0
  %v913 = vadd.f32 %v880, %v912
  %914 = vmatmul.bf16.gmra.mxu0 %v326
  %v915 = vpop.f32.mrf.mxu0
  %v916 = vadd.f32 %v883, %v915
  %v917 = vpop.f32.mrf.mxu0
  %918 = vdwg.mxu0
  %919 = vmatpush.bf16.msra.mxu0 %v673
  %920 = vmatpush.bf16.msra.mxu0 %v672
  %921 = vmatpush.bf16.msra.mxu0 %v671
  %922 = vmatpush.bf16.msra.mxu0 %v670
  %923 = vmatpush.bf16.msra.mxu0 %v669
  %924 = vmatpush.bf16.msra.mxu0 %v668
  %925 = vmatpush.bf16.msra.mxu0 %v667
  %926 = vmatpush.bf16.msra.mxu0 %v666
  %927 = vmatmul.bf16.gmra.mxu0 %v295
  %v928 = vpop.f32.mrf.mxu0
  %v929 = vadd.f32 %v896, %v928
  %v930 = vpop.f32.mrf.mxu0
  %v931 = vadd.f32 %v898, %v930
  %932 = vmatmul.bf16.gmra.mxu0 %v303
  %v933 = vpop.f32.mrf.mxu0
  %v934 = vadd.f32 %v901, %v933
  %v935 = vpop.f32.mrf.mxu0
  %v936 = vadd.f32 %v903, %v935
  %937 = vmatmul.bf16.gmra.mxu0 %v311
  %v938 = vpop.f32.mrf.mxu0
  %v939 = vadd.f32 %v906, %v938
  %v940 = vpop.f32.mrf.mxu0
  %v941 = vadd.f32 %v908, %v940
  %942 = vmatmul.bf16.gmra.mxu0 %v319
  %v943 = vpop.f32.mrf.mxu0
  %v944 = vadd.f32 %v911, %v943
  %v945 = vpop.f32.mrf.mxu0
  %v946 = vadd.f32 %v913, %v945
  %947 = vmatmul.bf16.gmra.mxu0 %v327
  %v948 = vpop.f32.mrf.mxu0
  %v949 = vadd.f32 %v916, %v948
  %v950 = vpop.f32.mrf.mxu0
  %951 = vdwg.mxu0
  %952 = vmatpush.bf16.msra.mxu0 %v681
  %953 = vmatpush.bf16.msra.mxu0 %v680
  %954 = vmatpush.bf16.msra.mxu0 %v679
  %955 = vmatpush.bf16.msra.mxu0 %v678
  %956 = vmatpush.bf16.msra.mxu0 %v677
  %957 = vmatpush.bf16.msra.mxu0 %v676
  %958 = vmatpush.bf16.msra.mxu0 %v675
  %959 = vmatpush.bf16.msra.mxu0 %v674
  %960 = vmatmul.bf16.gmra.mxu0 %v296
  %v961 = vpop.f32.mrf.mxu0
  %v962 = vadd.f32 %v929, %v961
  %v963 = vpop.f32.mrf.mxu0
  %v964 = vadd.f32 %v931, %v963
  %965 = vmatmul.bf16.gmra.mxu0 %v304
  %v966 = vpop.f32.mrf.mxu0
  %v967 = vadd.f32 %v934, %v966
  %v968 = vpop.f32.mrf.mxu0
  %v969 = vadd.f32 %v936, %v968
  %970 = vmatmul.bf16.gmra.mxu0 %v312
  %v971 = vpop.f32.mrf.mxu0
  %v972 = vadd.f32 %v939, %v971
  %v973 = vpop.f32.mrf.mxu0
  %v974 = vadd.f32 %v941, %v973
  %975 = vmatmul.bf16.gmra.mxu0 %v320
  %v976 = vpop.f32.mrf.mxu0
  %v977 = vadd.f32 %v944, %v976
  %v978 = vpop.f32.mrf.mxu0
  %v979 = vadd.f32 %v946, %v978
  %980 = vmatmul.bf16.gmra.mxu0 %v328
  %v981 = vpop.f32.mrf.mxu0
  %v982 = vadd.f32 %v949, %v981
  %v983 = vpop.f32.mrf.mxu0
  %984 = vdwg.mxu0
  %985 = vmatpush.bf16.msra.mxu0 %v689
  %986 = vmatpush.bf16.msra.mxu0 %v688
  %987 = vmatpush.bf16.msra.mxu0 %v687
  %988 = vmatpush.bf16.msra.mxu0 %v686
  %989 = vmatpush.bf16.msra.mxu0 %v685
  %990 = vmatpush.bf16.msra.mxu0 %v684
  %991 = vmatpush.bf16.msra.mxu0 %v683
  %992 = vmatpush.bf16.msra.mxu0 %v682
  %993 = vmatmul.bf16.gmra.mxu0 %v297
  %v994 = vpop.f32.mrf.mxu0
  %v995 = vadd.f32 %v962, %v994
  %v996 = vpop.f32.mrf.mxu0
  %v997 = vadd.f32 %v964, %v996
  %998 = vmatmul.bf16.gmra.mxu0 %v305
  %v999 = vpop.f32.mrf.mxu0
  %v1000 = vadd.f32 %v967, %v999
  %v1001 = vpop.f32.mrf.mxu0
  %v1002 = vadd.f32 %v969, %v1001
  %1003 = vmatmul.bf16.gmra.mxu0 %v313
  %v1004 = vpop.f32.mrf.mxu0
  %v1005 = vadd.f32 %v972, %v1004
  %v1006 = vpop.f32.mrf.mxu0
  %v1007 = vadd.f32 %v974, %v1006
  %1008 = vmatmul.bf16.gmra.mxu0 %v321
  %v1009 = vpop.f32.mrf.mxu0
  %v1010 = vadd.f32 %v977, %v1009
  %v1011 = vpop.f32.mrf.mxu0
  %v1012 = vadd.f32 %v979, %v1011
  %1013 = vmatmul.bf16.gmra.mxu0 %v329
  %v1014 = vpop.f32.mrf.mxu0
  %v1015 = vadd.f32 %v982, %v1014
  %v1016 = vpop.f32.mrf.mxu0
  %1017 = vdwg.mxu0
  %vm1018 = vcmp.gt.f32.partialorder %v995, 0.0
  %vm1019 = vcmp.gt.f32.partialorder %v997, 0.0
  %vm1020 = vcmp.gt.f32.partialorder %v1000, 0.0
  %vm1021 = vcmp.gt.f32.partialorder %v1002, 0.0
  %vm1022 = vcmp.gt.f32.partialorder %v1005, 0.0
  %vm1023 = vcmp.gt.f32.partialorder %v1007, 0.0
  %vm1024 = vcmp.gt.f32.partialorder %v1010, 0.0
  %vm1025 = vcmp.gt.f32.partialorder %v1012, 0.0
  %vm1026 = vcmp.gt.f32.partialorder %v1015, 0.0
  %v1027 = vmul.f32 %v995, 1.442695
  %v1028 = vpow.pop %v1027
  %v1029 = vmul.f32 %v997, 1.442695
  %v1030 = vpow.pop %v1029
  %v1031 = vmul.f32 %v1000, 1.442695
  %v1032 = vpow.pop %v1031
  %v1033 = vmul.f32 %v1002, 1.442695
  %v1034 = vpow.pop %v1033
  %v1035 = vmul.f32 %v1005, 1.442695
  %v1036 = vpow.pop %v1035
  %v1037 = vmul.f32 %v1007, 1.442695
  %v1038 = vpow.pop %v1037
  %v1039 = vmul.f32 %v1010, 1.442695
  %v1040 = vpow.pop %v1039
  %v1041 = vmul.f32 %v1012, 1.442695
  %v1042 = vpow.pop %v1041
  %v1043 = vmul.f32 %v1015, 1.442695
  %v1044 = vpow.pop %v1043
  %v1045 = vsub.f32 %v1028, 1.0
  %v1046 = vsub.f32 %v1030, 1.0
  %v1047 = vsub.f32 %v1032, 1.0
  %v1048 = vsub.f32 %v1034, 1.0
  %v1049 = vsub.f32 %v1036, 1.0
  %v1050 = vsub.f32 %v1038, 1.0
  %v1051 = vsub.f32 %v1040, 1.0
  %v1052 = vsub.f32 %v1042, 1.0
  %v1053 = vsub.f32 %v1044, 1.0
  %v1054 = vmul.f32 %v1045, 1.6732632
  %v1055 = vmul.f32 %v1046, 1.6732632
  %v1056 = vmul.f32 %v1047, 1.6732632
  %v1057 = vmul.f32 %v1048, 1.6732632
  %v1058 = vmul.f32 %v1049, 1.6732632
  %v1059 = vmul.f32 %v1050, 1.6732632
  %v1060 = vmul.f32 %v1051, 1.6732632
  %v1061 = vmul.f32 %v1052, 1.6732632
  %v1062 = vmul.f32 %v1053, 1.6732632
  %v1063 = vsel %vm1018, %v995, %v1054
  %v1064 = vsel %vm1019, %v997, %v1055
  %v1065 = vsel %vm1020, %v1000, %v1056
  %v1066 = vsel %vm1021, %v1002, %v1057
  %v1067 = vsel %vm1022, %v1005, %v1058
  %v1068 = vsel %vm1023, %v1007, %v1059
  %v1069 = vsel %vm1024, %v1010, %v1060
  %v1070 = vsel %vm1025, %v1012, %v1061
  %v1071 = vsel %vm1026, %v1015, %v1062
  %v1072 = vmul.f32 %v1063, 1.050701
  %v1073 = vmul.f32 %v1064, 1.050701
  %v1074 = vmul.f32 %v1065, 1.050701
  %v1075 = vmul.f32 %v1066, 1.050701
  %v1076 = vmul.f32 %v1067, 1.050701
  %v1077 = vmul.f32 %v1068, 1.050701
  %v1078 = vmul.f32 %v1069, 1.050701
  %v1079 = vmul.f32 %v1070, 1.050701
  %v1080 = vmul.f32 %v1071, 1.050701
  %1081 = vst [vmem:[%s3] sm:$0xff] %v1072
  %1082 = vst [vmem:[%s3 + $0x8] sm:$0xff] %v1073
  %1083 = vst [vmem:[%s3 + $0x10] sm:$0xff] %v1074
  %1084 = vst [vmem:[%s3 + $0x18] sm:$0xff] %v1075
  %1085 = vst [vmem:[%s3 + $0x20] sm:$0xff] %v1076
  %1086 = vst [vmem:[%s3 + $0x28] sm:$0xff] %v1077
  %1087 = vst [vmem:[%s3 + $0x30] sm:$0xff] %v1078
  %1088 = vst [vmem:[%s3 + $0x38] sm:$0xff] %v1079
  %1089 = vst [vmem:[%s3 + $0x40] sm:$0xff] %v1080
  // Predicated region
  $region14: #{vae_forward.8} parent=0 // pred_check
    _
  $region15: #{vae_forward.8} parent=0 // pred_check_branch
    %1091 = sbr.rel (0) target = $region17
  $region16: #{vae_forward.8} parent=0 // pred_region
    _
  $region17: #{vae_forward.8} parent=0 // pred_fallthru
    _
  // Predicated region
  $region18: #{vae_forward.8} parent=0 // pred_check
    _
  $region19: #{vae_forward.8} parent=0 // pred_check_branch
    %1093 = sbr.rel (0) target = $region21
  $region20: #{vae_forward.8} parent=0 // pred_region
    _
  $region21: #{vae_forward.8} parent=0 // pred_fallthru
    _

// kernel: vae_forward.9
$region0: #{vae_forward.9}
  #allocation0 [shape = 'u32[]', space=smem, size = 0x4, offset = 0x4, fixed_abs, tag = 'smem constant byte address 0x4 - core index']
  #allocation1 [shape = 'u32[72,128]{1,0:T(1,128)}', space=vmem, size = 0x9000, scoped, tag = 'internal scratch']
  %s0 = inlined_call_operand.vmem [shape: bf16[8,1024], index: 0, kind: input, shape index: {}]
  %s1 = inlined_call_operand.vmem [shape: bf16[1024,128], index: 1, kind: input, shape index: {}]
  %s2 = inlined_call_operand.vmem [shape: f32[1,128], index: 2, kind: input, shape index: {}]
  %s3 = inlined_call_operand.vmem [shape: f32[8,128], index: 3, kind: output, shape index: {}]
  %s4 = sld [smem:[#allocation0]]
  $region22: #{vae_forward.9} parent=0
    _
  %s6 = ssub.s32 1, %s4
  %s7 = scalar_select 0, %s6, %s4
  // Predicated region
  $region2: #{vae_forward.9} parent=0 // pred_check
    _
  $region3: #{vae_forward.9} parent=0 // pred_check_branch
    %9 = sbr.rel (0) target = $region5
  $region4: #{vae_forward.9} parent=0 // pred_region
    _
  $region5: #{vae_forward.9} parent=0 // pred_fallthru
    _
  // Predicated region
  $region6: #{vae_forward.9} parent=0 // pred_check
    _
  $region7: #{vae_forward.9} parent=0 // pred_check_branch
    %11 = sbr.rel (0) target = $region9
  $region8: #{vae_forward.9} parent=0 // pred_region
    _
  $region9: #{vae_forward.9} parent=0 // pred_fallthru
    _
  // Predicated region
  $region10: #{vae_forward.9} parent=0 // pred_check
    _
  $region11: #{vae_forward.9} parent=0 // pred_check_branch
    %13 = sbr.rel (0) target = $region13
  $region12: #{vae_forward.9} parent=0 // pred_region
    _
  $region13: #{vae_forward.9} parent=0 // pred_fallthru
    _
  %v14 = vld [vmem:[%s0] sm:$0xff]
  %v15 = vld [vmem:[%s0 + $0x8] sm:$0xff]
  %v16 = vld [vmem:[%s0 + $0x10] sm:$0xff]
  %v17 = vld [vmem:[%s0 + $0x18] sm:$0xff]
  %v18 = vld [vmem:[%s1] sm:$0xf]
  %v19 = vld [vmem:[%s1 + $0x4] sm:$0xf]
  %v20 = vld [vmem:[%s1 + $0x8] sm:$0xf]
  %v21 = vld [vmem:[%s1 + $0xc] sm:$0xf]
  %v22 = vld [vmem:[%s1 + $0x10] sm:$0xf]
  %v23 = vld [vmem:[%s1 + $0x14] sm:$0xf]
  %v24 = vld [vmem:[%s1 + $0x18] sm:$0xf]
  %v25 = vld [vmem:[%s1 + $0x1c] sm:$0xf]
  %v26 = vld [vmem:[%s1 + $0x20] sm:$0xf]
  %v27 = vld [vmem:[%s1 + $0x24] sm:$0xf]
  %v28 = vld [vmem:[%s1 + $0x28] sm:$0xf]
  %v29 = vld [vmem:[%s1 + $0x2c] sm:$0xf]
  %v30 = vld [vmem:[%s1 + $0x30] sm:$0xf]
  %v31 = vld [vmem:[%s1 + $0x34] sm:$0xf]
  %v32 = vld [vmem:[%s1 + $0x38] sm:$0xf]
  %v33 = vld [vmem:[%s1 + $0x3c] sm:$0xf]
  %v34 = vld [vmem:[%s1 + $0x40] sm:$0xf]
  %v35 = vld [vmem:[%s1 + $0x44] sm:$0xf]
  %v36 = vld [vmem:[%s1 + $0x48] sm:$0xf]
  %v37 = vld [vmem:[%s1 + $0x4c] sm:$0xf]
  %v38 = vld [vmem:[%s1 + $0x50] sm:$0xf]
  %v39 = vld [vmem:[%s1 + $0x54] sm:$0xf]
  %v40 = vld [vmem:[%s1 + $0x58] sm:$0xf]
  %v41 = vld [vmem:[%s1 + $0x5c] sm:$0xf]
  %v42 = vld [vmem:[%s1 + $0x60] sm:$0xf]
  %v43 = vld [vmem:[%s1 + $0x64] sm:$0xf]
  %v44 = vld [vmem:[%s1 + $0x68] sm:$0xf]
  %v45 = vld [vmem:[%s1 + $0x6c] sm:$0xf]
  %v46 = vld [vmem:[%s1 + $0x70] sm:$0xf]
  %v47 = vld [vmem:[%s1 + $0x74] sm:$0xf]
  %v48 = vld [vmem:[%s1 + $0x78] sm:$0xf]
  %v49 = vld [vmem:[%s1 + $0x7c] sm:$0xf]
  %v50 = vld [vmem:[%s1 + $0x80] sm:$0xf]
  %v51 = vld [vmem:[%s1 + $0x84] sm:$0xf]
  %v52 = vld [vmem:[%s1 + $0x88] sm:$0xf]
  %v53 = vld [vmem:[%s1 + $0x8c] sm:$0xf]
  %v54 = vld [vmem:[%s1 + $0x90] sm:$0xf]
  %v55 = vld [vmem:[%s1 + $0x94] sm:$0xf]
  %v56 = vld [vmem:[%s1 + $0x98] sm:$0xf]
  %v57 = vld [vmem:[%s1 + $0x9c] sm:$0xf]
  %v58 = vld [vmem:[%s1 + $0xa0] sm:$0xf]
  %v59 = vld [vmem:[%s1 + $0xa4] sm:$0xf]
  %v60 = vld [vmem:[%s1 + $0xa8] sm:$0xf]
  %v61 = vld [vmem:[%s1 + $0xac] sm:$0xf]
  %v62 = vld [vmem:[%s1 + $0xb0] sm:$0xf]
  %v63 = vld [vmem:[%s1 + $0xb4] sm:$0xf]
  %v64 = vld [vmem:[%s1 + $0xb8] sm:$0xf]
  %v65 = vld [vmem:[%s1 + $0xbc] sm:$0xf]
  %v66 = vld [vmem:[%s1 + $0xc0] sm:$0xf]
  %v67 = vld [vmem:[%s1 + $0xc4] sm:$0xf]
  %v68 = vld [vmem:[%s1 + $0xc8] sm:$0xf]
  %v69 = vld [vmem:[%s1 + $0xcc] sm:$0xf]
  %v70 = vld [vmem:[%s1 + $0xd0] sm:$0xf]
  %v71 = vld [vmem:[%s1 + $0xd4] sm:$0xf]
  %v72 = vld [vmem:[%s1 + $0xd8] sm:$0xf]
  %v73 = vld [vmem:[%s1 + $0xdc] sm:$0xf]
  %v74 = vld [vmem:[%s1 + $0xe0] sm:$0xf]
  %v75 = vld [vmem:[%s1 + $0xe4] sm:$0xf]
  %v76 = vld [vmem:[%s1 + $0xe8] sm:$0xf]
  %v77 = vld [vmem:[%s1 + $0xec] sm:$0xf]
  %v78 = vld [vmem:[%s1 + $0xf0] sm:$0xf]
  %v79 = vld [vmem:[%s1 + $0xf4] sm:$0xf]
  %v80 = vld [vmem:[%s1 + $0xf8] sm:$0xf]
  %v81 = vld [vmem:[%s1 + $0xfc] sm:$0xf]
  %v82 = vld [vmem:[%s1 + $0x100] sm:$0xf]
  %v83 = vld [vmem:[%s1 + $0x104] sm:$0xf]
  %v84 = vld [vmem:[%s1 + $0x108] sm:$0xf]
  %v85 = vld [vmem:[%s1 + $0x10c] sm:$0xf]
  %v86 = vld [vmem:[%s1 + $0x110] sm:$0xf]
  %v87 = vld [vmem:[%s1 + $0x114] sm:$0xf]
  %v88 = vld [vmem:[%s1 + $0x118] sm:$0xf]
  %v89 = vld [vmem:[%s1 + $0x11c] sm:$0xf]
  %v90 = vld [vmem:[%s1 + $0x120] sm:$0xf]
  %v91 = vld [vmem:[%s1 + $0x124] sm:$0xf]
  %v92 = vld [vmem:[%s1 + $0x128] sm:$0xf]
  %v93 = vld [vmem:[%s1 + $0x12c] sm:$0xf]
  %v94 = vld [vmem:[%s1 + $0x130] sm:$0xf]
  %v95 = vld [vmem:[%s1 + $0x134] sm:$0xf]
  %v96 = vld [vmem:[%s1 + $0x138] sm:$0xf]
  %v97 = vld [vmem:[%s1 + $0x13c] sm:$0xf]
  %v98 = vld [vmem:[%s1 + $0x140] sm:$0xf]
  %v99 = vld [vmem:[%s1 + $0x144] sm:$0xf]
  %v100 = vld [vmem:[%s1 + $0x148] sm:$0xf]
  %v101 = vld [vmem:[%s1 + $0x14c] sm:$0xf]
  %v102 = vld [vmem:[%s1 + $0x150] sm:$0xf]
  %v103 = vld [vmem:[%s1 + $0x154] sm:$0xf]
  %v104 = vld [vmem:[%s1 + $0x158] sm:$0xf]
  %v105 = vld [vmem:[%s1 + $0x15c] sm:$0xf]
  %v106 = vld [vmem:[%s1 + $0x160] sm:$0xf]
  %v107 = vld [vmem:[%s1 + $0x164] sm:$0xf]
  %v108 = vld [vmem:[%s1 + $0x168] sm:$0xf]
  %v109 = vld [vmem:[%s1 + $0x16c] sm:$0xf]
  %v110 = vld [vmem:[%s1 + $0x170] sm:$0xf]
  %v111 = vld [vmem:[%s1 + $0x174] sm:$0xf]
  %v112 = vld [vmem:[%s1 + $0x178] sm:$0xf]
  %v113 = vld [vmem:[%s1 + $0x17c] sm:$0xf]
  %v114 = vld [vmem:[%s1 + $0x180] sm:$0xf]
  %v115 = vld [vmem:[%s1 + $0x184] sm:$0xf]
  %v116 = vld [vmem:[%s1 + $0x188] sm:$0xf]
  %v117 = vld [vmem:[%s1 + $0x18c] sm:$0xf]
  %v118 = vld [vmem:[%s1 + $0x190] sm:$0xf]
  %v119 = vld [vmem:[%s1 + $0x194] sm:$0xf]
  %v120 = vld [vmem:[%s1 + $0x198] sm:$0xf]
  %v121 = vld [vmem:[%s1 + $0x19c] sm:$0xf]
  %v122 = vld [vmem:[%s1 + $0x1a0] sm:$0xf]
  %v123 = vld [vmem:[%s1 + $0x1a4] sm:$0xf]
  %v124 = vld [vmem:[%s1 + $0x1a8] sm:$0xf]
  %v125 = vld [vmem:[%s1 + $0x1ac] sm:$0xf]
  %v126 = vld [vmem:[%s1 + $0x1b0] sm:$0xf]
  %v127 = vld [vmem:[%s1 + $0x1b4] sm:$0xf]
  %v128 = vld [vmem:[%s1 + $0x1b8] sm:$0xf]
  %v129 = vld [vmem:[%s1 + $0x1bc] sm:$0xf]
  %v130 = vld [vmem:[%s1 + $0x1c0] sm:$0xf]
  %v131 = vld [vmem:[%s1 + $0x1c4] sm:$0xf]
  %v132 = vld [vmem:[%s1 + $0x1c8] sm:$0xf]
  %v133 = vld [vmem:[%s1 + $0x1cc] sm:$0xf]
  %v134 = vld [vmem:[%s1 + $0x1d0] sm:$0xf]
  %v135 = vld [vmem:[%s1 + $0x1d4] sm:$0xf]
  %v136 = vld [vmem:[%s1 + $0x1d8] sm:$0xf]
  %v137 = vld [vmem:[%s1 + $0x1dc] sm:$0xf]
  %v138 = vld [vmem:[%s1 + $0x1e0] sm:$0xf]
  %v139 = vld [vmem:[%s1 + $0x1e4] sm:$0xf]
  %v140 = vld [vmem:[%s1 + $0x1e8] sm:$0xf]
  %v141 = vld [vmem:[%s1 + $0x1ec] sm:$0xf]
  %v142 = vld [vmem:[%s1 + $0x1f0] sm:$0xf]
  %v143 = vld [vmem:[%s1 + $0x1f4] sm:$0xf]
  %v144 = vld [vmem:[%s1 + $0x1f8] sm:$0xf]
  %v145 = vld [vmem:[%s1 + $0x1fc] sm:$0xf]
  %v146 = vld [vmem:[%s2] sm:$0x1]
  %v148 = vperm.slane %v146, 0
  %v154 = vunpack.c.l.b16 %v14
  %v155 = vunpack.c.h.b16 %v14
  %v156 = vunpack.c.l.b16 %v15
  %v157 = vunpack.c.h.b16 %v15
  %v158 = vunpack.c.l.b16 %v16
  %v159 = vunpack.c.h.b16 %v16
  %v160 = vunpack.c.l.b16 %v17
  %v161 = vunpack.c.h.b16 %v17
  %v162 = vpack.c.b16 %v154, %v154
  %v163 = vpack.c.b16 %v155, %v155
  %v164 = vpack.c.b16 %v156, %v156
  %v165 = vpack.c.b16 %v157, %v157
  %v166 = vpack.c.b16 %v158, %v158
  %v167 = vpack.c.b16 %v159, %v159
  %v168 = vpack.c.b16 %v160, %v160
  %v169 = vpack.c.b16 %v161, %v161
  %v306 = vunpack.c.l.b16 %v18
  %v307 = vunpack.c.l.b16 %v19
  %v308 = vunpack.c.l.b16 %v20
  %v309 = vunpack.c.l.b16 %v21
  %v310 = vunpack.c.l.b16 %v22
  %v311 = vunpack.c.l.b16 %v23
  %v312 = vunpack.c.l.b16 %v24
  %v313 = vunpack.c.l.b16 %v25
  %v314 = vunpack.c.l.b16 %v26
  %v315 = vunpack.c.l.b16 %v27
  %v316 = vunpack.c.l.b16 %v28
  %v317 = vunpack.c.l.b16 %v29
  %v318 = vunpack.c.l.b16 %v30
  %v319 = vunpack.c.l.b16 %v31
  %v320 = vunpack.c.l.b16 %v32
  %v321 = vunpack.c.l.b16 %v33
  %v322 = vunpack.c.l.b16 %v34
  %v323 = vunpack.c.l.b16 %v35
  %v324 = vunpack.c.l.b16 %v36
  %v325 = vunpack.c.l.b16 %v37
  %v326 = vunpack.c.l.b16 %v38
  %v327 = vunpack.c.l.b16 %v39
  %v328 = vunpack.c.l.b16 %v40
  %v329 = vunpack.c.l.b16 %v41
  %v330 = vunpack.c.l.b16 %v42
  %v331 = vunpack.c.l.b16 %v43
  %v332 = vunpack.c.l.b16 %v44
  %v333 = vunpack.c.l.b16 %v45
  %v334 = vunpack.c.l.b16 %v46
  %v335 = vunpack.c.l.b16 %v47
  %v336 = vunpack.c.l.b16 %v48
  %v337 = vunpack.c.l.b16 %v49
  %v338 = vunpack.c.l.b16 %v50
  %v339 = vunpack.c.l.b16 %v51
  %v340 = vunpack.c.l.b16 %v52
  %v341 = vunpack.c.l.b16 %v53
  %v342 = vunpack.c.l.b16 %v54
  %v343 = vunpack.c.l.b16 %v55
  %v344 = vunpack.c.l.b16 %v56
  %v345 = vunpack.c.l.b16 %v57
  %v346 = vunpack.c.l.b16 %v58
  %v347 = vunpack.c.l.b16 %v59
  %v348 = vunpack.c.l.b16 %v60
  %v349 = vunpack.c.l.b16 %v61
  %v350 = vunpack.c.l.b16 %v62
  %v351 = vunpack.c.l.b16 %v63
  %v352 = vunpack.c.l.b16 %v64
  %v353 = vunpack.c.l.b16 %v65
  %v354 = vunpack.c.l.b16 %v66
  %v355 = vunpack.c.l.b16 %v67
  %v356 = vunpack.c.l.b16 %v68
  %v357 = vunpack.c.l.b16 %v69
  %v358 = vunpack.c.l.b16 %v70
  %v359 = vunpack.c.l.b16 %v71
  %v360 = vunpack.c.l.b16 %v72
  %v361 = vunpack.c.l.b16 %v73
  %v362 = vunpack.c.l.b16 %v74
  %v363 = vunpack.c.l.b16 %v75
  %v364 = vunpack.c.l.b16 %v76
  %v365 = vunpack.c.l.b16 %v77
  %v366 = vunpack.c.l.b16 %v78
  %v367 = vunpack.c.l.b16 %v79
  %v368 = vunpack.c.l.b16 %v80
  %v369 = vunpack.c.l.b16 %v81
  %v370 = vunpack.c.l.b16 %v82
  %v371 = vunpack.c.l.b16 %v83
  %v372 = vunpack.c.l.b16 %v84
  %v373 = vunpack.c.l.b16 %v85
  %v374 = vunpack.c.l.b16 %v86
  %v375 = vunpack.c.l.b16 %v87
  %v376 = vunpack.c.l.b16 %v88
  %v377 = vunpack.c.l.b16 %v89
  %v378 = vunpack.c.l.b16 %v90
  %v379 = vunpack.c.l.b16 %v91
  %v380 = vunpack.c.l.b16 %v92
  %v381 = vunpack.c.l.b16 %v93
  %v382 = vunpack.c.l.b16 %v94
  %v383 = vunpack.c.l.b16 %v95
  %v384 = vunpack.c.l.b16 %v96
  %v385 = vunpack.c.l.b16 %v97
  %v386 = vunpack.c.l.b16 %v98
  %v387 = vunpack.c.l.b16 %v99
  %v388 = vunpack.c.l.b16 %v100
  %v389 = vunpack.c.l.b16 %v101
  %v390 = vunpack.c.l.b16 %v102
  %v391 = vunpack.c.l.b16 %v103
  %v392 = vunpack.c.l.b16 %v104
  %v393 = vunpack.c.l.b16 %v105
  %v394 = vunpack.c.l.b16 %v106
  %v395 = vunpack.c.l.b16 %v107
  %v396 = vunpack.c.l.b16 %v108
  %v397 = vunpack.c.l.b16 %v109
  %v398 = vunpack.c.l.b16 %v110
  %v399 = vunpack.c.l.b16 %v111
  %v400 = vunpack.c.l.b16 %v112
  %v401 = vunpack.c.l.b16 %v113
  %v402 = vunpack.c.l.b16 %v114
  %v403 = vunpack.c.l.b16 %v115
  %v404 = vunpack.c.l.b16 %v116
  %v405 = vunpack.c.l.b16 %v117
  %v406 = vunpack.c.l.b16 %v118
  %v407 = vunpack.c.l.b16 %v119
  %v408 = vunpack.c.l.b16 %v120
  %v409 = vunpack.c.l.b16 %v121
  %v410 = vunpack.c.l.b16 %v122
  %v411 = vunpack.c.l.b16 %v123
  %v412 = vunpack.c.l.b16 %v124
  %v413 = vunpack.c.l.b16 %v125
  %v414 = vunpack.c.l.b16 %v126
  %v415 = vunpack.c.l.b16 %v127
  %v416 = vunpack.c.l.b16 %v128
  %v417 = vunpack.c.l.b16 %v129
  %v418 = vunpack.c.l.b16 %v130
  %v419 = vunpack.c.l.b16 %v131
  %v420 = vunpack.c.l.b16 %v132
  %v421 = vunpack.c.l.b16 %v133
  %v422 = vunpack.c.l.b16 %v134
  %v423 = vunpack.c.l.b16 %v135
  %v424 = vunpack.c.l.b16 %v136
  %v425 = vunpack.c.l.b16 %v137
  %v426 = vunpack.c.l.b16 %v138
  %v427 = vunpack.c.l.b16 %v139
  %v428 = vunpack.c.l.b16 %v140
  %v429 = vunpack.c.l.b16 %v141
  %v430 = vunpack.c.l.b16 %v142
  %v431 = vunpack.c.l.b16 %v143
  %v432 = vunpack.c.l.b16 %v144
  %v433 = vunpack.c.l.b16 %v145
  %v434 = vpack.c.b16 %v307, %v306
  %v435 = vpack.c.b16 %v309, %v308
  %v436 = vpack.c.b16 %v311, %v310
  %v437 = vpack.c.b16 %v313, %v312
  %v438 = vpack.c.b16 %v315, %v314
  %v439 = vpack.c.b16 %v317, %v316
  %v440 = vpack.c.b16 %v319, %v318
  %v441 = vpack.c.b16 %v321, %v320
  %v442 = vpack.c.b16 %v323, %v322
  %v443 = vpack.c.b16 %v325, %v324
  %v444 = vpack.c.b16 %v327, %v326
  %v445 = vpack.c.b16 %v329, %v328
  %v446 = vpack.c.b16 %v331, %v330
  %v447 = vpack.c.b16 %v333, %v332
  %v448 = vpack.c.b16 %v335, %v334
  %v449 = vpack.c.b16 %v337, %v336
  %v450 = vpack.c.b16 %v339, %v338
  %v451 = vpack.c.b16 %v341, %v340
  %v452 = vpack.c.b16 %v343, %v342
  %v453 = vpack.c.b16 %v345, %v344
  %v454 = vpack.c.b16 %v347, %v346
  %v455 = vpack.c.b16 %v349, %v348
  %v456 = vpack.c.b16 %v351, %v350
  %v457 = vpack.c.b16 %v353, %v352
  %v458 = vpack.c.b16 %v355, %v354
  %v459 = vpack.c.b16 %v357, %v356
  %v460 = vpack.c.b16 %v359, %v358
  %v461 = vpack.c.b16 %v361, %v360
  %v462 = vpack.c.b16 %v363, %v362
  %v463 = vpack.c.b16 %v365, %v364
  %v464 = vpack.c.b16 %v367, %v366
  %v465 = vpack.c.b16 %v369, %v368
  %v466 = vpack.c.b16 %v371, %v370
  %v467 = vpack.c.b16 %v373, %v372
  %v468 = vpack.c.b16 %v375, %v374
  %v469 = vpack.c.b16 %v377, %v376
  %v470 = vpack.c.b16 %v379, %v378
  %v471 = vpack.c.b16 %v381, %v380
  %v472 = vpack.c.b16 %v383, %v382
  %v473 = vpack.c.b16 %v385, %v384
  %v474 = vpack.c.b16 %v387, %v386
  %v475 = vpack.c.b16 %v389, %v388
  %v476 = vpack.c.b16 %v391, %v390
  %v477 = vpack.c.b16 %v393, %v392
  %v478 = vpack.c.b16 %v395, %v394
  %v479 = vpack.c.b16 %v397, %v396
  %v480 = vpack.c.b16 %v399, %v398
  %v481 = vpack.c.b16 %v401, %v400
  %v482 = vpack.c.b16 %v403, %v402
  %v483 = vpack.c.b16 %v405, %v404
  %v484 = vpack.c.b16 %v407, %v406
  %v485 = vpack.c.b16 %v409, %v408
  %v486 = vpack.c.b16 %v411, %v410
  %v487 = vpack.c.b16 %v413, %v412
  %v488 = vpack.c.b16 %v415, %v414
  %v489 = vpack.c.b16 %v417, %v416
  %v490 = vpack.c.b16 %v419, %v418
  %v491 = vpack.c.b16 %v421, %v420
  %v492 = vpack.c.b16 %v423, %v422
  %v493 = vpack.c.b16 %v425, %v424
  %v494 = vpack.c.b16 %v427, %v426
  %v495 = vpack.c.b16 %v429, %v428
  %v496 = vpack.c.b16 %v431, %v430
  %v497 = vpack.c.b16 %v433, %v432
  %562 = vmatpush.bf16.msra.mxu0 %v441
  %563 = vmatpush.bf16.msra.mxu0 %v440
  %564 = vmatpush.bf16.msra.mxu0 %v439
  %565 = vmatpush.bf16.msra.mxu0 %v438
  %566 = vmatpush.bf16.msra.mxu0 %v437
  %567 = vmatpush.bf16.msra.mxu0 %v436
  %568 = vmatpush.bf16.msra.mxu0 %v435
  %569 = vmatpush.bf16.msra.mxu0 %v434
  %570 = vmatmul.bf16.gmra.mxu0 %v162
  %v571 = vpop.f32.mrf.mxu0
  %v572 = vadd.f32 %v148, %v571
  %v573 = vpop.f32.mrf.mxu0
  %574 = vdwg.mxu0
  %575 = vmatpush.bf16.msra.mxu0 %v449
  %576 = vmatpush.bf16.msra.mxu0 %v448
  %577 = vmatpush.bf16.msra.mxu0 %v447
  %578 = vmatpush.bf16.msra.mxu0 %v446
  %579 = vmatpush.bf16.msra.mxu0 %v445
  %580 = vmatpush.bf16.msra.mxu0 %v444
  %581 = vmatpush.bf16.msra.mxu0 %v443
  %582 = vmatpush.bf16.msra.mxu0 %v442
  %583 = vmatmul.bf16.gmra.mxu0 %v163
  %v584 = vpop.f32.mrf.mxu0
  %v585 = vadd.f32 %v572, %v584
  %v586 = vpop.f32.mrf.mxu0
  %587 = vdwg.mxu0
  %588 = vmatpush.bf16.msra.mxu0 %v457
  %589 = vmatpush.bf16.msra.mxu0 %v456
  %590 = vmatpush.bf16.msra.mxu0 %v455
  %591 = vmatpush.bf16.msra.mxu0 %v454
  %592 = vmatpush.bf16.msra.mxu0 %v453
  %593 = vmatpush.bf16.msra.mxu0 %v452
  %594 = vmatpush.bf16.msra.mxu0 %v451
  %595 = vmatpush.bf16.msra.mxu0 %v450
  %596 = vmatmul.bf16.gmra.mxu0 %v164
  %v597 = vpop.f32.mrf.mxu0
  %v598 = vadd.f32 %v585, %v597
  %v599 = vpop.f32.mrf.mxu0
  %600 = vdwg.mxu0
  %601 = vmatpush.bf16.msra.mxu0 %v465
  %602 = vmatpush.bf16.msra.mxu0 %v464
  %603 = vmatpush.bf16.msra.mxu0 %v463
  %604 = vmatpush.bf16.msra.mxu0 %v462
  %605 = vmatpush.bf16.msra.mxu0 %v461
  %606 = vmatpush.bf16.msra.mxu0 %v460
  %607 = vmatpush.bf16.msra.mxu0 %v459
  %608 = vmatpush.bf16.msra.mxu0 %v458
  %609 = vmatmul.bf16.gmra.mxu0 %v165
  %v610 = vpop.f32.mrf.mxu0
  %v611 = vadd.f32 %v598, %v610
  %v612 = vpop.f32.mrf.mxu0
  %613 = vdwg.mxu0
  %614 = vmatpush.bf16.msra.mxu0 %v473
  %615 = vmatpush.bf16.msra.mxu0 %v472
  %616 = vmatpush.bf16.msra.mxu0 %v471
  %617 = vmatpush.bf16.msra.mxu0 %v470
  %618 = vmatpush.bf16.msra.mxu0 %v469
  %619 = vmatpush.bf16.msra.mxu0 %v468
  %620 = vmatpush.bf16.msra.mxu0 %v467
  %621 = vmatpush.bf16.msra.mxu0 %v466
  %622 = vmatmul.bf16.gmra.mxu0 %v166
  %v623 = vpop.f32.mrf.mxu0
  %v624 = vadd.f32 %v611, %v623
  %v625 = vpop.f32.mrf.mxu0
  %626 = vdwg.mxu0
  %627 = vmatpush.bf16.msra.mxu0 %v481
  %628 = vmatpush.bf16.msra.mxu0 %v480
  %629 = vmatpush.bf16.msra.mxu0 %v479
  %630 = vmatpush.bf16.msra.mxu0 %v478
  %631 = vmatpush.bf16.msra.mxu0 %v477
  %632 = vmatpush.bf16.msra.mxu0 %v476
  %633 = vmatpush.bf16.msra.mxu0 %v475
  %634 = vmatpush.bf16.msra.mxu0 %v474
  %635 = vmatmul.bf16.gmra.mxu0 %v167
  %v636 = vpop.f32.mrf.mxu0
  %v637 = vadd.f32 %v624, %v636
  %v638 = vpop.f32.mrf.mxu0
  %639 = vdwg.mxu0
  %640 = vmatpush.bf16.msra.mxu0 %v489
  %641 = vmatpush.bf16.msra.mxu0 %v488
  %642 = vmatpush.bf16.msra.mxu0 %v487
  %643 = vmatpush.bf16.msra.mxu0 %v486
  %644 = vmatpush.bf16.msra.mxu0 %v485
  %645 = vmatpush.bf16.msra.mxu0 %v484
  %646 = vmatpush.bf16.msra.mxu0 %v483
  %647 = vmatpush.bf16.msra.mxu0 %v482
  %648 = vmatmul.bf16.gmra.mxu0 %v168
  %v649 = vpop.f32.mrf.mxu0
  %v650 = vadd.f32 %v637, %v649
  %v651 = vpop.f32.mrf.mxu0
  %652 = vdwg.mxu0
  %653 = vmatpush.bf16.msra.mxu0 %v497
  %654 = vmatpush.bf16.msra.mxu0 %v496
  %655 = vmatpush.bf16.msra.mxu0 %v495
  %656 = vmatpush.bf16.msra.mxu0 %v494
  %657 = vmatpush.bf16.msra.mxu0 %v493
  %658 = vmatpush.bf16.msra.mxu0 %v492
  %659 = vmatpush.bf16.msra.mxu0 %v491
  %660 = vmatpush.bf16.msra.mxu0 %v490
  %661 = vmatmul.bf16.gmra.mxu0 %v169
  %v662 = vpop.f32.mrf.mxu0
  %v663 = vadd.f32 %v650, %v662
  %v664 = vpop.f32.mrf.mxu0
  %665 = vdwg.mxu0
  %vm666 = vcmp.gt.f32.partialorder %v663, 0.0
  %v667 = vmul.f32 %v663, 1.442695
  %v668 = vpow.pop %v667
  %v669 = vsub.f32 %v668, 1.0
  %v670 = vmul.f32 %v669, 1.6732632
  %v671 = vsel %vm666, %v663, %v670
  %v672 = vmul.f32 %v671, 1.050701
  %673 = vst [vmem:[%s3] sm:$0xff] %v672
  // Predicated region
  $region14: #{vae_forward.9} parent=0 // pred_check
    _
  $region15: #{vae_forward.9} parent=0 // pred_check_branch
    %675 = sbr.rel (0) target = $region17
  $region16: #{vae_forward.9} parent=0 // pred_region
    _
  $region17: #{vae_forward.9} parent=0 // pred_fallthru
    _
  // Predicated region
  $region18: #{vae_forward.9} parent=0 // pred_check
    _
  $region19: #{vae_forward.9} parent=0 // pred_check_branch
    %677 = sbr.rel (0) target = $region21
  $region20: #{vae_forward.9} parent=0 // pred_region
    _
  $region21: #{vae_forward.9} parent=0 // pred_fallthru
    _

// kernel: vae_forward.10
$region0: #{vae_forward.10}
  #allocation0 [shape = 'u32[]', space=smem, size = 0x4, offset = 0x4, fixed_abs, tag = 'smem constant byte address 0x4 - core index']
  #allocation1 [shape = 'u32[72,128]{1,0:T(1,128)}', space=vmem, size = 0x9000, scoped, tag = 'internal scratch']
  %s0 = inlined_call_operand.vmem [shape: bf16[8,256], index: 0, kind: input, shape index: {}]
  %s1 = inlined_call_operand.vmem [shape: bf16[256,256], index: 1, kind: input, shape index: {}]
  %s2 = inlined_call_operand.vmem [shape: f32[1,256], index: 2, kind: input, shape index: {}]
  %s3 = inlined_call_operand.vmem [shape: f32[8,128], index: 3, kind: input, shape index: {}]
  %s4 = inlined_call_operand.vmem [shape: bf16[8,128], index: 4, kind: input, shape index: {}]
  %s5 = inlined_call_operand.vmem [shape: bf16[128,1024], index: 5, kind: input, shape index: {}]
  %s6 = inlined_call_operand.vmem [shape: bf16[128,1024], index: 6, kind: input, shape index: {}]
  %s7 = inlined_call_operand.vmem [shape: f32[1,1024], index: 7, kind: input, shape index: {}]
  %s8 = inlined_call_operand.vmem [shape: f32[8,1280], index: 8, kind: output, shape index: {}]
  %s9 = sld [smem:[#allocation0]]
  $region42: #{vae_forward.10} parent=0
    _
  %s11 = ssub.s32 1, %s9
  %s12 = scalar_select 0, %s11, %s9
  // Predicated region
  $region2: #{vae_forward.10} parent=0 // pred_check
    _
  $region3: #{vae_forward.10} parent=0 // pred_check_branch
    %14 = sbr.rel (0) target = $region5
  $region4: #{vae_forward.10} parent=0 // pred_region
    _
  $region5: #{vae_forward.10} parent=0 // pred_fallthru
    _
  // Predicated region
  $region6: #{vae_forward.10} parent=0 // pred_check
    _
  $region7: #{vae_forward.10} parent=0 // pred_check_branch
    %16 = sbr.rel (0) target = $region9
  $region8: #{vae_forward.10} parent=0 // pred_region
    _
  $region9: #{vae_forward.10} parent=0 // pred_fallthru
    _
  // Predicated region
  $region10: #{vae_forward.10} parent=0 // pred_check
    _
  $region11: #{vae_forward.10} parent=0 // pred_check_branch
    %18 = sbr.rel (0) target = $region13
  $region12: #{vae_forward.10} parent=0 // pred_region
    _
  $region13: #{vae_forward.10} parent=0 // pred_fallthru
    _
  // Predicated region
  $region14: #{vae_forward.10} parent=0 // pred_check
    _
  $region15: #{vae_forward.10} parent=0 // pred_check_branch
    %20 = sbr.rel (0) target = $region17
  $region16: #{vae_forward.10} parent=0 // pred_region
    _
  $region17: #{vae_forward.10} parent=0 // pred_fallthru
    _
  // Predicated region
  $region18: #{vae_forward.10} parent=0 // pred_check
    _
  $region19: #{vae_forward.10} parent=0 // pred_check_branch
    %22 = sbr.rel (0) target = $region21
  $region20: #{vae_forward.10} parent=0 // pred_region
    _
  $region21: #{vae_forward.10} parent=0 // pred_fallthru
    _
  // Predicated region
  $region22: #{vae_forward.10} parent=0 // pred_check
    _
  $region23: #{vae_forward.10} parent=0 // pred_check_branch
    %24 = sbr.rel (0) target = $region25
  $region24: #{vae_forward.10} parent=0 // pred_region
    _
  $region25: #{vae_forward.10} parent=0 // pred_fallthru
    _
  // Predicated region
  $region26: #{vae_forward.10} parent=0 // pred_check
    _
  $region27: #{vae_forward.10} parent=0 // pred_check_branch
    %26 = sbr.rel (0) target = $region29
  $region28: #{vae_forward.10} parent=0 // pred_region
    _
  $region29: #{vae_forward.10} parent=0 // pred_fallthru
    _
  // Predicated region
  $region30: #{vae_forward.10} parent=0 // pred_check
    _
  $region31: #{vae_forward.10} parent=0 // pred_check_branch
    %28 = sbr.rel (0) target = $region33
  $region32: #{vae_forward.10} parent=0 // pred_region
    _
  $region33: #{vae_forward.10} parent=0 // pred_fallthru
    _
  %v29 = vld [vmem:[%s0] sm:$0xff]
  %v30 = vld [vmem:[%s1] sm:$0xff]
  %v31 = vld [vmem:[%s1 + $0x8] sm:$0xff]
  %v32 = vld [vmem:[%s1 + $0x10] sm:$0xff]
  %v33 = vld [vmem:[%s1 + $0x18] sm:$0xff]
  %v34 = vld [vmem:[%s1 + $0x20] sm:$0xff]
  %v35 = vld [vmem:[%s1 + $0x28] sm:$0xff]
  %v36 = vld [vmem:[%s1 + $0x30] sm:$0xff]
  %v37 = vld [vmem:[%s1 + $0x38] sm:$0xff]
  %v38 = vld [vmem:[%s1 + $0x40] sm:$0xff]
  %v39 = vld [vmem:[%s1 + $0x48] sm:$0xff]
  %v40 = vld [vmem:[%s1 + $0x50] sm:$0xff]
  %v41 = vld [vmem:[%s1 + $0x58] sm:$0xff]
  %v42 = vld [vmem:[%s1 + $0x60] sm:$0xff]
  %v43 = vld [vmem:[%s1 + $0x68] sm:$0xff]
  %v44 = vld [vmem:[%s1 + $0x70] sm:$0xff]
  %v45 = vld [vmem:[%s1 + $0x78] sm:$0xff]
  %v46 = vld [vmem:[%s1 + $0x80] sm:$0xff]
  %v47 = vld [vmem:[%s1 + $0x88] sm:$0xff]
  %v48 = vld [vmem:[%s1 + $0x90] sm:$0xff]
  %v49 = vld [vmem:[%s1 + $0x98] sm:$0xff]
  %v50 = vld [vmem:[%s1 + $0xa0] sm:$0xff]
  %v51 = vld [vmem:[%s1 + $0xa8] sm:$0xff]
  %v52 = vld [vmem:[%s1 + $0xb0] sm:$0xff]
  %v53 = vld [vmem:[%s1 + $0xb8] sm:$0xff]
  %v54 = vld [vmem:[%s1 + $0xc0] sm:$0xff]
  %v55 = vld [vmem:[%s1 + $0xc8] sm:$0xff]
  %v56 = vld [vmem:[%s1 + $0xd0] sm:$0xff]
  %v57 = vld [vmem:[%s1 + $0xd8] sm:$0xff]
  %v58 = vld [vmem:[%s1 + $0xe0] sm:$0xff]
  %v59 = vld [vmem:[%s1 + $0xe8] sm:$0xff]
  %v60 = vld [vmem:[%s1 + $0xf0] sm:$0xff]
  %v61 = vld [vmem:[%s1 + $0xf8] sm:$0xff]
  %v62 = vld [vmem:[%s2] sm:$0x3]
  %v64 = vperm.slane %v62, 0
  %v65 = vperm.slane %v62, 1
  %v69 = vunpack.c.l.b16 %v29
  %v70 = vunpack.c.h.b16 %v29
  %v71 = vpack.c.b16 %v69, %v69
  %v72 = vpack.c.b16 %v70, %v70
  %v107 = vunpack.c.l.b16 %v30
  %v108 = vunpack.c.h.b16 %v30
  %v109 = vunpack.c.l.b16 %v31
  %v110 = vunpack.c.h.b16 %v31
  %v111 = vunpack.c.l.b16 %v32
  %v112 = vunpack.c.h.b16 %v32
  %v113 = vunpack.c.l.b16 %v33
  %v114 = vunpack.c.h.b16 %v33
  %v115 = vunpack.c.l.b16 %v34
  %v116 = vunpack.c.h.b16 %v34
  %v117 = vunpack.c.l.b16 %v35
  %v118 = vunpack.c.h.b16 %v35
  %v119 = vunpack.c.l.b16 %v36
  %v120 = vunpack.c.h.b16 %v36
  %v121 = vunpack.c.l.b16 %v37
  %v122 = vunpack.c.h.b16 %v37
  %v123 = vunpack.c.l.b16 %v38
  %v124 = vunpack.c.h.b16 %v38
  %v125 = vunpack.c.l.b16 %v39
  %v126 = vunpack.c.h.b16 %v39
  %v127 = vunpack.c.l.b16 %v40
  %v128 = vunpack.c.h.b16 %v40
  %v129 = vunpack.c.l.b16 %v41
  %v130 = vunpack.c.h.b16 %v41
  %v131 = vunpack.c.l.b16 %v42
  %v132 = vunpack.c.h.b16 %v42
  %v133 = vunpack.c.l.b16 %v43
  %v134 = vunpack.c.h.b16 %v43
  %v135 = vunpack.c.l.b16 %v44
  %v136 = vunpack.c.h.b16 %v44
  %v137 = vunpack.c.l.b16 %v45
  %v138 = vunpack.c.h.b16 %v45
  %v139 = vunpack.c.l.b16 %v46
  %v140 = vunpack.c.h.b16 %v46
  %v141 = vunpack.c.l.b16 %v47
  %v142 = vunpack.c.h.b16 %v47
  %v143 = vunpack.c.l.b16 %v48
  %v144 = vunpack.c.h.b16 %v48
  %v145 = vunpack.c.l.b16 %v49
  %v146 = vunpack.c.h.b16 %v49
  %v147 = vunpack.c.l.b16 %v50
  %v148 = vunpack.c.h.b16 %v50
  %v149 = vunpack.c.l.b16 %v51
  %v150 = vunpack.c.h.b16 %v51
  %v151 = vunpack.c.l.b16 %v52
  %v152 = vunpack.c.h.b16 %v52
  %v153 = vunpack.c.l.b16 %v53
  %v154 = vunpack.c.h.b16 %v53
  %v155 = vunpack.c.l.b16 %v54
  %v156 = vunpack.c.h.b16 %v54
  %v157 = vunpack.c.l.b16 %v55
  %v158 = vunpack.c.h.b16 %v55
  %v159 = vunpack.c.l.b16 %v56
  %v160 = vunpack.c.h.b16 %v56
  %v161 = vunpack.c.l.b16 %v57
  %v162 = vunpack.c.h.b16 %v57
  %v163 = vunpack.c.l.b16 %v58
  %v164 = vunpack.c.h.b16 %v58
  %v165 = vunpack.c.l.b16 %v59
  %v166 = vunpack.c.h.b16 %v59
  %v167 = vunpack.c.l.b16 %v60
  %v168 = vunpack.c.h.b16 %v60
  %v169 = vunpack.c.l.b16 %v61
  %v170 = vunpack.c.h.b16 %v61
  %v171 = vpack.c.b16 %v109, %v107
  %v172 = vpack.c.b16 %v110, %v108
  %v173 = vpack.c.b16 %v113, %v111
  %v174 = vpack.c.b16 %v114, %v112
  %v175 = vpack.c.b16 %v117, %v115
  %v176 = vpack.c.b16 %v118, %v116
  %v177 = vpack.c.b16 %v121, %v119
  %v178 = vpack.c.b16 %v122, %v120
  %v179 = vpack.c.b16 %v125, %v123
  %v180 = vpack.c.b16 %v126, %v124
  %v181 = vpack.c.b16 %v129, %v127
  %v182 = vpack.c.b16 %v130, %v128
  %v183 = vpack.c.b16 %v133, %v131
  %v184 = vpack.c.b16 %v134, %v132
  %v185 = vpack.c.b16 %v137, %v135
  %v186 = vpack.c.b16 %v138, %v136
  %v187 = vpack.c.b16 %v141, %v139
  %v188 = vpack.c.b16 %v142, %v140
  %v189 = vpack.c.b16 %v145, %v143
  %v190 = vpack.c.b16 %v146, %v144
  %v191 = vpack.c.b16 %v149, %v147
  %v192 = vpack.c.b16 %v150, %v148
  %v193 = vpack.c.b16 %v153, %v151
  %v194 = vpack.c.b16 %v154, %v152
  %v195 = vpack.c.b16 %v157, %v155
  %v196 = vpack.c.b16 %v158, %v156
  %v197 = vpack.c.b16 %v161, %v159
  %v198 = vpack.c.b16 %v162, %v160
  %v199 = vpack.c.b16 %v165, %v163
  %v200 = vpack.c.b16 %v166, %v164
  %v201 = vpack.c.b16 %v169, %v167
  %v202 = vpack.c.b16 %v170, %v168
  %235 = vmatpush.bf16.msra.mxu0 %v185
  %236 = vmatpush.bf16.msra.mxu0 %v183
  %237 = vmatpush.bf16.msra.mxu0 %v181
  %238 = vmatpush.bf16.msra.mxu0 %v179
  %239 = vmatpush.bf16.msra.mxu0 %v177
  %240 = vmatpush.bf16.msra.mxu0 %v175
  %241 = vmatpush.bf16.msra.mxu0 %v173
  %242 = vmatpush.bf16.msra.mxu0 %v171
  %243 = vmatmul.bf16.gmra.mxu0 %v71
  %v244 = vpop.f32.mrf.mxu0
  %v245 = vadd.f32 %v64, %v244
  %v246 = vpop.f32.mrf.mxu0
  %247 = vdwg.mxu0
  %248 = vmatpush.bf16.msra.mxu0 %v201
  %249 = vmatpush.bf16.msra.mxu0 %v199
  %250 = vmatpush.bf16.msra.mxu0 %v197
  %251 = vmatpush.bf16.msra.mxu0 %v195
  %252 = vmatpush.bf16.msra.mxu0 %v193
  %253 = vmatpush.bf16.msra.mxu0 %v191
  %254 = vmatpush.bf16.msra.mxu0 %v189
  %255 = vmatpush.bf16.msra.mxu0 %v187
  %256 = vmatmul.bf16.gmra.mxu0 %v72
  %v257 = vpop.f32.mrf.mxu0
  %v258 = vadd.f32 %v245, %v257
  %v259 = vpop.f32.mrf.mxu0
  %260 = vdwg.mxu0
  %261 = vmatpush.bf16.msra.mxu0 %v186
  %262 = vmatpush.bf16.msra.mxu0 %v184
  %263 = vmatpush.bf16.msra.mxu0 %v182
  %264 = vmatpush.bf16.msra.mxu0 %v180
  %265 = vmatpush.bf16.msra.mxu0 %v178
  %266 = vmatpush.bf16.msra.mxu0 %v176
  %267 = vmatpush.bf16.msra.mxu0 %v174
  %268 = vmatpush.bf16.msra.mxu0 %v172
  %269 = vmatmul.bf16.gmra.mxu0 %v71
  %v270 = vpop.f32.mrf.mxu0
  %v271 = vadd.f32 %v65, %v270
  %v272 = vpop.f32.mrf.mxu0
  %273 = vdwg.mxu0
  %274 = vmatpush.bf16.msra.mxu0 %v202
  %275 = vmatpush.bf16.msra.mxu0 %v200
  %276 = vmatpush.bf16.msra.mxu0 %v198
  %277 = vmatpush.bf16.msra.mxu0 %v196
  %278 = vmatpush.bf16.msra.mxu0 %v194
  %279 = vmatpush.bf16.msra.mxu0 %v192
  %280 = vmatpush.bf16.msra.mxu0 %v190
  %281 = vmatpush.bf16.msra.mxu0 %v188
  %282 = vmatmul.bf16.gmra.mxu0 %v72
  %v283 = vpop.f32.mrf.mxu0
  %v284 = vadd.f32 %v271, %v283
  %v285 = vpop.f32.mrf.mxu0
  %286 = vdwg.mxu0
  %v287 = vld [vmem:[%s3] sm:$0xff]
  %v288 = vmul.f32 %v284, 0.5
  %v289 = vmul.f32 %v288, 1.442695
  %v290 = vpow.pop %v289
  %v291 = vmul.f32 %v287, %v290
  %v292 = vadd.f32 %v258, %v291
  %v293 = vpack.c.bf16 %v292, %v292
  %v294 = vld [vmem:[%s5] sm:$0xff]
  %v295 = vld [vmem:[%s5 + $0x8] sm:$0xff]
  %v296 = vld [vmem:[%s5 + $0x10] sm:$0xff]
  %v297 = vld [vmem:[%s5 + $0x18] sm:$0xff]
  %v298 = vld [vmem:[%s5 + $0x20] sm:$0xff]
  %v299 = vld [vmem:[%s5 + $0x28] sm:$0xff]
  %v300 = vld [vmem:[%s5 + $0x30] sm:$0xff]
  %v301 = vld [vmem:[%s5 + $0x38] sm:$0xff]
  %v302 = vld [vmem:[%s5 + $0x40] sm:$0xff]
  %v303 = vld [vmem:[%s5 + $0x48] sm:$0xff]
  %v304 = vld [vmem:[%s5 + $0x50] sm:$0xff]
  %v305 = vld [vmem:[%s5 + $0x58] sm:$0xff]
  %v306 = vld [vmem:[%s5 + $0x60] sm:$0xff]
  %v307 = vld [vmem:[%s5 + $0x68] sm:$0xff]
  %v308 = vld [vmem:[%s5 + $0x70] sm:$0xff]
  %v309 = vld [vmem:[%s5 + $0x78] sm:$0xff]
  %v310 = vld [vmem:[%s5 + $0x80] sm:$0xff]
  %v311 = vld [vmem:[%s5 + $0x88] sm:$0xff]
  %v312 = vld [vmem:[%s5 + $0x90] sm:$0xff]
  %v313 = vld [vmem:[%s5 + $0x98] sm:$0xff]
  %v314 = vld [vmem:[%s5 + $0xa0] sm:$0xff]
  %v315 = vld [vmem:[%s5 + $0xa8] sm:$0xff]
  %v316 = vld [vmem:[%s5 + $0xb0] sm:$0xff]
  %v317 = vld [vmem:[%s5 + $0xb8] sm:$0xff]
  %v318 = vld [vmem:[%s5 + $0xc0] sm:$0xff]
  %v319 = vld [vmem:[%s5 + $0xc8] sm:$0xff]
  %v320 = vld [vmem:[%s5 + $0xd0] sm:$0xff]
  %v321 = vld [vmem:[%s5 + $0xd8] sm:$0xff]
  %v322 = vld [vmem:[%s5 + $0xe0] sm:$0xff]
  %v323 = vld [vmem:[%s5 + $0xe8] sm:$0xff]
  %v324 = vld [vmem:[%s5 + $0xf0] sm:$0xff]
  %v325 = vld [vmem:[%s5 + $0xf8] sm:$0xff]
  %v326 = vld [vmem:[%s5 + $0x100] sm:$0xff]
  %v327 = vld [vmem:[%s5 + $0x108] sm:$0xff]
  %v328 = vld [vmem:[%s5 + $0x110] sm:$0xff]
  %v329 = vld [vmem:[%s5 + $0x118] sm:$0xff]
  %v330 = vld [vmem:[%s5 + $0x120] sm:$0xff]
  %v331 = vld [vmem:[%s5 + $0x128] sm:$0xff]
  %v332 = vld [vmem:[%s5 + $0x130] sm:$0xff]
  %v333 = vld [vmem:[%s5 + $0x138] sm:$0xff]
  %v334 = vld [vmem:[%s5 + $0x140] sm:$0xff]
  %v335 = vld [vmem:[%s5 + $0x148] sm:$0xff]
  %v336 = vld [vmem:[%s5 + $0x150] sm:$0xff]
  %v337 = vld [vmem:[%s5 + $0x158] sm:$0xff]
  %v338 = vld [vmem:[%s5 + $0x160] sm:$0xff]
  %v339 = vld [vmem:[%s5 + $0x168] sm:$0xff]
  %v340 = vld [vmem:[%s5 + $0x170] sm:$0xff]
  %v341 = vld [vmem:[%s5 + $0x178] sm:$0xff]
  %v342 = vld [vmem:[%s5 + $0x180] sm:$0xff]
  %v343 = vld [vmem:[%s5 + $0x188] sm:$0xff]
  %v344 = vld [vmem:[%s5 + $0x190] sm:$0xff]
  %v345 = vld [vmem:[%s5 + $0x198] sm:$0xff]
  %v346 = vld [vmem:[%s5 + $0x1a0] sm:$0xff]
  %v347 = vld [vmem:[%s5 + $0x1a8] sm:$0xff]
  %v348 = vld [vmem:[%s5 + $0x1b0] sm:$0xff]
  %v349 = vld [vmem:[%s5 + $0x1b8] sm:$0xff]
  %v350 = vld [vmem:[%s5 + $0x1c0] sm:$0xff]
  %v351 = vld [vmem:[%s5 + $0x1c8] sm:$0xff]
  %v352 = vld [vmem:[%s5 + $0x1d0] sm:$0xff]
  %v353 = vld [vmem:[%s5 + $0x1d8] sm:$0xff]
  %v354 = vld [vmem:[%s5 + $0x1e0] sm:$0xff]
  %v355 = vld [vmem:[%s5 + $0x1e8] sm:$0xff]
  %v356 = vld [vmem:[%s5 + $0x1f0] sm:$0xff]
  %v357 = vld [vmem:[%s5 + $0x1f8] sm:$0xff]
  %v358 = vld [vmem:[%s4] sm:$0xf]
  %v359 = vld [vmem:[%s6] sm:$0xff]
  %v360 = vld [vmem:[%s6 + $0x8] sm:$0xff]
  %v361 = vld [vmem:[%s6 + $0x10] sm:$0xff]
  %v362 = vld [vmem:[%s6 + $0x18] sm:$0xff]
  %v363 = vld [vmem:[%s6 + $0x20] sm:$0xff]
  %v364 = vld [vmem:[%s6 + $0x28] sm:$0xff]
  %v365 = vld [vmem:[%s6 + $0x30] sm:$0xff]
  %v366 = vld [vmem:[%s6 + $0x38] sm:$0xff]
  %v367 = vld [vmem:[%s6 + $0x40] sm:$0xff]
  %v368 = vld [vmem:[%s6 + $0x48] sm:$0xff]
  %v369 = vld [vmem:[%s6 + $0x50] sm:$0xff]
  %v370 = vld [vmem:[%s6 + $0x58] sm:$0xff]
  %v371 = vld [vmem:[%s6 + $0x60] sm:$0xff]
  %v372 = vld [vmem:[%s6 + $0x68] sm:$0xff]
  %v373 = vld [vmem:[%s6 + $0x70] sm:$0xff]
  %v374 = vld [vmem:[%s6 + $0x78] sm:$0xff]
  %v375 = vld [vmem:[%s6 + $0x80] sm:$0xff]
  %v376 = vld [vmem:[%s6 + $0x88] sm:$0xff]
  %v377 = vld [vmem:[%s6 + $0x90] sm:$0xff]
  %v378 = vld [vmem:[%s6 + $0x98] sm:$0xff]
  %v379 = vld [vmem:[%s6 + $0xa0] sm:$0xff]
  %v380 = vld [vmem:[%s6 + $0xa8] sm:$0xff]
  %v381 = vld [vmem:[%s6 + $0xb0] sm:$0xff]
  %v382 = vld [vmem:[%s6 + $0xb8] sm:$0xff]
  %v383 = vld [vmem:[%s6 + $0xc0] sm:$0xff]
  %v384 = vld [vmem:[%s6 + $0xc8] sm:$0xff]
  %v385 = vld [vmem:[%s6 + $0xd0] sm:$0xff]
  %v386 = vld [vmem:[%s6 + $0xd8] sm:$0xff]
  %v387 = vld [vmem:[%s6 + $0xe0] sm:$0xff]
  %v388 = vld [vmem:[%s6 + $0xe8] sm:$0xff]
  %v389 = vld [vmem:[%s6 + $0xf0] sm:$0xff]
  %v390 = vld [vmem:[%s6 + $0xf8] sm:$0xff]
  %v391 = vld [vmem:[%s6 + $0x100] sm:$0xff]
  %v392 = vld [vmem:[%s6 + $0x108] sm:$0xff]
  %v393 = vld [vmem:[%s6 + $0x110] sm:$0xff]
  %v394 = vld [vmem:[%s6 + $0x118] sm:$0xff]
  %v395 = vld [vmem:[%s6 + $0x120] sm:$0xff]
  %v396 = vld [vmem:[%s6 + $0x128] sm:$0xff]
  %v397 = vld [vmem:[%s6 + $0x130] sm:$0xff]
  %v398 = vld [vmem:[%s6 + $0x138] sm:$0xff]
  %v399 = vld [vmem:[%s6 + $0x140] sm:$0xff]
  %v400 = vld [vmem:[%s6 + $0x148] sm:$0xff]
  %v401 = vld [vmem:[%s6 + $0x150] sm:$0xff]
  %v402 = vld [vmem:[%s6 + $0x158] sm:$0xff]
  %v403 = vld [vmem:[%s6 + $0x160] sm:$0xff]
  %v404 = vld [vmem:[%s6 + $0x168] sm:$0xff]
  %v405 = vld [vmem:[%s6 + $0x170] sm:$0xff]
  %v406 = vld [vmem:[%s6 + $0x178] sm:$0xff]
  %v407 = vld [vmem:[%s6 + $0x180] sm:$0xff]
  %v408 = vld [vmem:[%s6 + $0x188] sm:$0xff]
  %v409 = vld [vmem:[%s6 + $0x190] sm:$0xff]
  %v410 = vld [vmem:[%s6 + $0x198] sm:$0xff]
  %v411 = vld [vmem:[%s6 + $0x1a0] sm:$0xff]
  %v412 = vld [vmem:[%s6 + $0x1a8] sm:$0xff]
  %v413 = vld [vmem:[%s6 + $0x1b0] sm:$0xff]
  %v414 = vld [vmem:[%s6 + $0x1b8] sm:$0xff]
  %v415 = vld [vmem:[%s6 + $0x1c0] sm:$0xff]
  %v416 = vld [vmem:[%s6 + $0x1c8] sm:$0xff]
  %v417 = vld [vmem:[%s6 + $0x1d0] sm:$0xff]
  %v418 = vld [vmem:[%s6 + $0x1d8] sm:$0xff]
  %v419 = vld [vmem:[%s6 + $0x1e0] sm:$0xff]
  %v420 = vld [vmem:[%s6 + $0x1e8] sm:$0xff]
  %v421 = vld [vmem:[%s6 + $0x1f0] sm:$0xff]
  %v422 = vld [vmem:[%s6 + $0x1f8] sm:$0xff]
  %v487 = vunpack.c.l.b16 %v359
  %v488 = vunpack.c.h.b16 %v359
  %v489 = vunpack.c.l.b16 %v360
  %v490 = vunpack.c.h.b16 %v360
  %v491 = vunpack.c.l.b16 %v361
  %v492 = vunpack.c.h.b16 %v361
  %v493 = vunpack.c.l.b16 %v362
  %v494 = vunpack.c.h.b16 %v362
  %v495 = vunpack.c.l.b16 %v363
  %v496 = vunpack.c.h.b16 %v363
  %v497 = vunpack.c.l.b16 %v364
  %v498 = vunpack.c.h.b16 %v364
  %v499 = vunpack.c.l.b16 %v365
  %v500 = vunpack.c.h.b16 %v365
  %v501 = vunpack.c.l.b16 %v366
  %v502 = vunpack.c.h.b16 %v366
  %v503 = vunpack.c.l.b16 %v367
  %v504 = vunpack.c.h.b16 %v367
  %v505 = vunpack.c.l.b16 %v368
  %v506 = vunpack.c.h.b16 %v368
  %v507 = vunpack.c.l.b16 %v369
  %v508 = vunpack.c.h.b16 %v369
  %v509 = vunpack.c.l.b16 %v370
  %v510 = vunpack.c.h.b16 %v370
  %v511 = vunpack.c.l.b16 %v371
  %v512 = vunpack.c.h.b16 %v371
  %v513 = vunpack.c.l.b16 %v372
  %v514 = vunpack.c.h.b16 %v372
  %v515 = vunpack.c.l.b16 %v373
  %v516 = vunpack.c.h.b16 %v373
  %v517 = vunpack.c.l.b16 %v374
  %v518 = vunpack.c.h.b16 %v374
  %v519 = vunpack.c.l.b16 %v375
  %v520 = vunpack.c.h.b16 %v375
  %v521 = vunpack.c.l.b16 %v376
  %v522 = vunpack.c.h.b16 %v376
  %v523 = vunpack.c.l.b16 %v377
  %v524 = vunpack.c.h.b16 %v377
  %v525 = vunpack.c.l.b16 %v378
  %v526 = vunpack.c.h.b16 %v378
  %v527 = vunpack.c.l.b16 %v379
  %v528 = vunpack.c.h.b16 %v379
  %v529 = vunpack.c.l.b16 %v380
  %v530 = vunpack.c.h.b16 %v380
  %v531 = vunpack.c.l.b16 %v381
  %v532 = vunpack.c.h.b16 %v381
  %v533 = vunpack.c.l.b16 %v382
  %v534 = vunpack.c.h.b16 %v382
  %v535 = vunpack.c.l.b16 %v383
  %v536 = vunpack.c.h.b16 %v383
  %v537 = vunpack.c.l.b16 %v384
  %v538 = vunpack.c.h.b16 %v384
  %v539 = vunpack.c.l.b16 %v385
  %v540 = vunpack.c.h.b16 %v385
  %v541 = vunpack.c.l.b16 %v386
  %v542 = vunpack.c.h.b16 %v386
  %v543 = vunpack.c.l.b16 %v387
  %v544 = vunpack.c.h.b16 %v387
  %v545 = vunpack.c.l.b16 %v388
  %v546 = vunpack.c.h.b16 %v388
  %v547 = vunpack.c.l.b16 %v389
  %v548 = vunpack.c.h.b16 %v389
  %v549 = vunpack.c.l.b16 %v390
  %v550 = vunpack.c.h.b16 %v390
  %v551 = vunpack.c.l.b16 %v391
  %v552 = vunpack.c.h.b16 %v391
  %v553 = vunpack.c.l.b16 %v392
  %v554 = vunpack.c.h.b16 %v392
  %v555 = vunpack.c.l.b16 %v393
  %v556 = vunpack.c.h.b16 %v393
  %v557 = vunpack.c.l.b16 %v394
  %v558 = vunpack.c.h.b16 %v394
  %v559 = vunpack.c.l.b16 %v395
  %v560 = vunpack.c.h.b16 %v395
  %v561 = vunpack.c.l.b16 %v396
  %v562 = vunpack.c.h.b16 %v396
  %v563 = vunpack.c.l.b16 %v397
  %v564 = vunpack.c.h.b16 %v397
  %v565 = vunpack.c.l.b16 %v398
  %v566 = vunpack.c.h.b16 %v398
  %v567 = vunpack.c.l.b16 %v399
  %v568 = vunpack.c.h.b16 %v399
  %v569 = vunpack.c.l.b16 %v400
  %v570 = vunpack.c.h.b16 %v400
  %v571 = vunpack.c.l.b16 %v401
  %v572 = vunpack.c.h.b16 %v401
  %v573 = vunpack.c.l.b16 %v402
  %v574 = vunpack.c.h.b16 %v402
  %v575 = vunpack.c.l.b16 %v403
  %v576 = vunpack.c.h.b16 %v403
  %v577 = vunpack.c.l.b16 %v404
  %v578 = vunpack.c.h.b16 %v404
  %v579 = vunpack.c.l.b16 %v405
  %v580 = vunpack.c.h.b16 %v405
  %v581 = vunpack.c.l.b16 %v406
  %v582 = vunpack.c.h.b16 %v406
  %v583 = vunpack.c.l.b16 %v407
  %v584 = vunpack.c.h.b16 %v407
  %v585 = vunpack.c.l.b16 %v408
  %v586 = vunpack.c.h.b16 %v408
  %v587 = vunpack.c.l.b16 %v409
  %v588 = vunpack.c.h.b16 %v409
  %v589 = vunpack.c.l.b16 %v410
  %v590 = vunpack.c.h.b16 %v410
  %v591 = vunpack.c.l.b16 %v411
  %v592 = vunpack.c.h.b16 %v411
  %v593 = vunpack.c.l.b16 %v412
  %v594 = vunpack.c.h.b16 %v412
  %v595 = vunpack.c.l.b16 %v413
  %v596 = vunpack.c.h.b16 %v413
  %v597 = vunpack.c.l.b16 %v414
  %v598 = vunpack.c.h.b16 %v414
  %v599 = vunpack.c.l.b16 %v415
  %v600 = vunpack.c.h.b16 %v415
  %v601 = vunpack.c.l.b16 %v416
  %v602 = vunpack.c.h.b16 %v416
  %v603 = vunpack.c.l.b16 %v417
  %v604 = vunpack.c.h.b16 %v417
  %v605 = vunpack.c.l.b16 %v418
  %v606 = vunpack.c.h.b16 %v418
  %v607 = vunpack.c.l.b16 %v419
  %v608 = vunpack.c.h.b16 %v419
  %v609 = vunpack.c.l.b16 %v420
  %v610 = vunpack.c.h.b16 %v420
  %v611 = vunpack.c.l.b16 %v421
  %v612 = vunpack.c.h.b16 %v421
  %v613 = vunpack.c.l.b16 %v422
  %v614 = vunpack.c.h.b16 %v422
  %v615 = vpack.c.b16 %v495, %v487
  %v616 = vpack.c.b16 %v496, %v488
  %v617 = vpack.c.b16 %v497, %v489
  %v618 = vpack.c.b16 %v498, %v490
  %v619 = vpack.c.b16 %v499, %v491
  %v620 = vpack.c.b16 %v500, %v492
  %v621 = vpack.c.b16 %v501, %v493
  %v622 = vpack.c.b16 %v502, %v494
  %v623 = vpack.c.b16 %v511, %v503
  %v624 = vpack.c.b16 %v512, %v504
  %v625 = vpack.c.b16 %v513, %v505
  %v626 = vpack.c.b16 %v514, %v506
  %v627 = vpack.c.b16 %v515, %v507
  %v628 = vpack.c.b16 %v516, %v508
  %v629 = vpack.c.b16 %v517, %v509
  %v630 = vpack.c.b16 %v518, %v510
  %v631 = vpack.c.b16 %v527, %v519
  %v632 = vpack.c.b16 %v528, %v520
  %v633 = vpack.c.b16 %v529, %v521
  %v634 = vpack.c.b16 %v530, %v522
  %v635 = vpack.c.b16 %v531, %v523
  %v636 = vpack.c.b16 %v532, %v524
  %v637 = vpack.c.b16 %v533, %v525
  %v638 = vpack.c.b16 %v534, %v526
  %v639 = vpack.c.b16 %v543, %v535
  %v640 = vpack.c.b16 %v544, %v536
  %v641 = vpack.c.b16 %v545, %v537
  %v642 = vpack.c.b16 %v546, %v538
  %v643 = vpack.c.b16 %v547, %v539
  %v644 = vpack.c.b16 %v548, %v540
  %v645 = vpack.c.b16 %v549, %v541
  %v646 = vpack.c.b16 %v550, %v542
  %v647 = vpack.c.b16 %v559, %v551
  %v648 = vpack.c.b16 %v560, %v552
  %v649 = vpack.c.b16 %v561, %v553
  %v650 = vpack.c.b16 %v562, %v554
  %v651 = vpack.c.b16 %v563, %v555
  %v652 = vpack.c.b16 %v564, %v556
  %v653 = vpack.c.b16 %v565, %v557
  %v654 = vpack.c.b16 %v566, %v558
  %v655 = vpack.c.b16 %v575, %v567
  %v656 = vpack.c.b16 %v576, %v568
  %v657 = vpack.c.b16 %v577, %v569
  %v658 = vpack.c.b16 %v578, %v570
  %v659 = vpack.c.b16 %v579, %v571
  %v660 = vpack.c.b16 %v580, %v572
  %v661 = vpack.c.b16 %v581, %v573
  %v662 = vpack.c.b16 %v582, %v574
  %v663 = vpack.c.b16 %v591, %v583
  %v664 = vpack.c.b16 %v592, %v584
  %v665 = vpack.c.b16 %v593, %v585
  %v666 = vpack.c.b16 %v594, %v586
  %v667 = vpack.c.b16 %v595, %v587
  %v668 = vpack.c.b16 %v596, %v588
  %v669 = vpack.c.b16 %v597, %v589
  %v670 = vpack.c.b16 %v598, %v590
  %v671 = vpack.c.b16 %v607, %v599
  %v672 = vpack.c.b16 %v608, %v600
  %v673 = vpack.c.b16 %v609, %v601
  %v674 = vpack.c.b16 %v610, %v602
  %v675 = vpack.c.b16 %v611, %v603
  %v676 = vpack.c.b16 %v612, %v604
  %v677 = vpack.c.b16 %v613, %v605
  %v678 = vpack.c.b16 %v614, %v606
  %743 = vmatpush.bf16.msra.mxu0 %v671
  %744 = vmatpush.bf16.msra.mxu0 %v663
  %745 = vmatpush.bf16.msra.mxu0 %v655
  %746 = vmatpush.bf16.msra.mxu0 %v647
  %747 = vmatpush.bf16.msra.mxu0 %v639
  %748 = vmatpush.bf16.msra.mxu0 %v631
  %749 = vmatpush.bf16.msra.mxu0 %v623
  %750 = vmatpush.bf16.msra.mxu0 %v615
  %751 = vmatmul.bf16.gmra.mxu0 %v358
  %v752 = vpop.f32.mrf.mxu0
  %v753 = vadd.f32 0.0, %v752
  %v754 = vpop.f32.mrf.mxu0
  %755 = vdwg.mxu0
  %756 = vmatpush.bf16.msra.mxu0 %v672
  %757 = vmatpush.bf16.msra.mxu0 %v664
  %758 = vmatpush.bf16.msra.mxu0 %v656
  %759 = vmatpush.bf16.msra.mxu0 %v648
  %760 = vmatpush.bf16.msra.mxu0 %v640
  %761 = vmatpush.bf16.msra.mxu0 %v632
  %762 = vmatpush.bf16.msra.mxu0 %v624
  %763 = vmatpush.bf16.msra.mxu0 %v616
  %764 = vmatmul.bf16.gmra.mxu0 %v358
  %v765 = vpop.f32.mrf.mxu0
  %v766 = vadd.f32 0.0, %v765
  %v767 = vpop.f32.mrf.mxu0
  %768 = vdwg.mxu0
  %769 = vmatpush.bf16.msra.mxu0 %v673
  %770 = vmatpush.bf16.msra.mxu0 %v665
  %771 = vmatpush.bf16.msra.mxu0 %v657
  %772 = vmatpush.bf16.msra.mxu0 %v649
  %773 = vmatpush.bf16.msra.mxu0 %v641
  %774 = vmatpush.bf16.msra.mxu0 %v633
  %775 = vmatpush.bf16.msra.mxu0 %v625
  %776 = vmatpush.bf16.msra.mxu0 %v617
  %777 = vmatmul.bf16.gmra.mxu0 %v358
  %v778 = vpop.f32.mrf.mxu0
  %v779 = vadd.f32 0.0, %v778
  %v780 = vpop.f32.mrf.mxu0
  %781 = vdwg.mxu0
  %782 = vmatpush.bf16.msra.mxu0 %v674
  %783 = vmatpush.bf16.msra.mxu0 %v666
  %784 = vmatpush.bf16.msra.mxu0 %v658
  %785 = vmatpush.bf16.msra.mxu0 %v650
  %786 = vmatpush.bf16.msra.mxu0 %v642
  %787 = vmatpush.bf16.msra.mxu0 %v634
  %788 = vmatpush.bf16.msra.mxu0 %v626
  %789 = vmatpush.bf16.msra.mxu0 %v618
  %790 = vmatmul.bf16.gmra.mxu0 %v358
  %v791 = vpop.f32.mrf.mxu0
  %v792 = vadd.f32 0.0, %v791
  %v793 = vpop.f32.mrf.mxu0
  %794 = vdwg.mxu0
  %795 = vmatpush.bf16.msra.mxu0 %v675
  %796 = vmatpush.bf16.msra.mxu0 %v667
  %797 = vmatpush.bf16.msra.mxu0 %v659
  %798 = vmatpush.bf16.msra.mxu0 %v651
  %799 = vmatpush.bf16.msra.mxu0 %v643
  %800 = vmatpush.bf16.msra.mxu0 %v635
  %801 = vmatpush.bf16.msra.mxu0 %v627
  %802 = vmatpush.bf16.msra.mxu0 %v619
  %803 = vmatmul.bf16.gmra.mxu0 %v358
  %v804 = vpop.f32.mrf.mxu0
  %v805 = vadd.f32 0.0, %v804
  %v806 = vpop.f32.mrf.mxu0
  %807 = vdwg.mxu0
  %808 = vmatpush.bf16.msra.mxu0 %v676
  %809 = vmatpush.bf16.msra.mxu0 %v668
  %810 = vmatpush.bf16.msra.mxu0 %v660
  %811 = vmatpush.bf16.msra.mxu0 %v652
  %812 = vmatpush.bf16.msra.mxu0 %v644
  %813 = vmatpush.bf16.msra.mxu0 %v636
  %814 = vmatpush.bf16.msra.mxu0 %v628
  %815 = vmatpush.bf16.msra.mxu0 %v620
  %816 = vmatmul.bf16.gmra.mxu0 %v358
  %v817 = vpop.f32.mrf.mxu0
  %v818 = vadd.f32 0.0, %v817
  %v819 = vpop.f32.mrf.mxu0
  %820 = vdwg.mxu0
  %821 = vmatpush.bf16.msra.mxu0 %v677
  %822 = vmatpush.bf16.msra.mxu0 %v669
  %823 = vmatpush.bf16.msra.mxu0 %v661
  %824 = vmatpush.bf16.msra.mxu0 %v653
  %825 = vmatpush.bf16.msra.mxu0 %v645
  %826 = vmatpush.bf16.msra.mxu0 %v637
  %827 = vmatpush.bf16.msra.mxu0 %v629
  %828 = vmatpush.bf16.msra.mxu0 %v621
  %829 = vmatmul.bf16.gmra.mxu0 %v358
  %v830 = vpop.f32.mrf.mxu0
  %v831 = vadd.f32 0.0, %v830
  %v832 = vpop.f32.mrf.mxu0
  %833 = vdwg.mxu0
  %834 = vmatpush.bf16.msra.mxu0 %v678
  %835 = vmatpush.bf16.msra.mxu0 %v670
  %836 = vmatpush.bf16.msra.mxu0 %v662
  %837 = vmatpush.bf16.msra.mxu0 %v654
  %838 = vmatpush.bf16.msra.mxu0 %v646
  %839 = vmatpush.bf16.msra.mxu0 %v638
  %840 = vmatpush.bf16.msra.mxu0 %v630
  %841 = vmatpush.bf16.msra.mxu0 %v622
  %842 = vmatmul.bf16.gmra.mxu0 %v358
  %v843 = vpop.f32.mrf.mxu0
  %v844 = vadd.f32 0.0, %v843
  %v845 = vpop.f32.mrf.mxu0
  %846 = vdwg.mxu0
  %v911 = vunpack.c.l.b16 %v294
  %v912 = vunpack.c.h.b16 %v294
  %v913 = vunpack.c.l.b16 %v295
  %v914 = vunpack.c.h.b16 %v295
  %v915 = vunpack.c.l.b16 %v296
  %v916 = vunpack.c.h.b16 %v296
  %v917 = vunpack.c.l.b16 %v297
  %v918 = vunpack.c.h.b16 %v297
  %v919 = vunpack.c.l.b16 %v298
  %v920 = vunpack.c.h.b16 %v298
  %v921 = vunpack.c.l.b16 %v299
  %v922 = vunpack.c.h.b16 %v299
  %v923 = vunpack.c.l.b16 %v300
  %v924 = vunpack.c.h.b16 %v300
  %v925 = vunpack.c.l.b16 %v301
  %v926 = vunpack.c.h.b16 %v301
  %v927 = vunpack.c.l.b16 %v302
  %v928 = vunpack.c.h.b16 %v302
  %v929 = vunpack.c.l.b16 %v303
  %v930 = vunpack.c.h.b16 %v303
  %v931 = vunpack.c.l.b16 %v304
  %v932 = vunpack.c.h.b16 %v304
  %v933 = vunpack.c.l.b16 %v305
  %v934 = vunpack.c.h.b16 %v305
  %v935 = vunpack.c.l.b16 %v306
  %v936 = vunpack.c.h.b16 %v306
  %v937 = vunpack.c.l.b16 %v307
  %v938 = vunpack.c.h.b16 %v307
  %v939 = vunpack.c.l.b16 %v308
  %v940 = vunpack.c.h.b16 %v308
  %v941 = vunpack.c.l.b16 %v309
  %v942 = vunpack.c.h.b16 %v309
  %v943 = vunpack.c.l.b16 %v310
  %v944 = vunpack.c.h.b16 %v310
  %v945 = vunpack.c.l.b16 %v311
  %v946 = vunpack.c.h.b16 %v311
  %v947 = vunpack.c.l.b16 %v312
  %v948 = vunpack.c.h.b16 %v312
  %v949 = vunpack.c.l.b16 %v313
  %v950 = vunpack.c.h.b16 %v313
  %v951 = vunpack.c.l.b16 %v314
  %v952 = vunpack.c.h.b16 %v314
  %v953 = vunpack.c.l.b16 %v315
  %v954 = vunpack.c.h.b16 %v315
  %v955 = vunpack.c.l.b16 %v316
  %v956 = vunpack.c.h.b16 %v316
  %v957 = vunpack.c.l.b16 %v317
  %v958 = vunpack.c.h.b16 %v317
  %v959 = vunpack.c.l.b16 %v318
  %v960 = vunpack.c.h.b16 %v318
  %v961 = vunpack.c.l.b16 %v319
  %v962 = vunpack.c.h.b16 %v319
  %v963 = vunpack.c.l.b16 %v320
  %v964 = vunpack.c.h.b16 %v320
  %v965 = vunpack.c.l.b16 %v321
  %v966 = vunpack.c.h.b16 %v321
  %v967 = vunpack.c.l.b16 %v322
  %v968 = vunpack.c.h.b16 %v322
  %v969 = vunpack.c.l.b16 %v323
  %v970 = vunpack.c.h.b16 %v323
  %v971 = vunpack.c.l.b16 %v324
  %v972 = vunpack.c.h.b16 %v324
  %v973 = vunpack.c.l.b16 %v325
  %v974 = vunpack.c.h.b16 %v325
  %v975 = vunpack.c.l.b16 %v326
  %v976 = vunpack.c.h.b16 %v326
  %v977 = vunpack.c.l.b16 %v327
  %v978 = vunpack.c.h.b16 %v327
  %v979 = vunpack.c.l.b16 %v328
  %v980 = vunpack.c.h.b16 %v328
  %v981 = vunpack.c.l.b16 %v329
  %v982 = vunpack.c.h.b16 %v329
  %v983 = vunpack.c.l.b16 %v330
  %v984 = vunpack.c.h.b16 %v330
  %v985 = vunpack.c.l.b16 %v331
  %v986 = vunpack.c.h.b16 %v331
  %v987 = vunpack.c.l.b16 %v332
  %v988 = vunpack.c.h.b16 %v332
  %v989 = vunpack.c.l.b16 %v333
  %v990 = vunpack.c.h.b16 %v333
  %v991 = vunpack.c.l.b16 %v334
  %v992 = vunpack.c.h.b16 %v334
  %v993 = vunpack.c.l.b16 %v335
  %v994 = vunpack.c.h.b16 %v335
  %v995 = vunpack.c.l.b16 %v336
  %v996 = vunpack.c.h.b16 %v336
  %v997 = vunpack.c.l.b16 %v337
  %v998 = vunpack.c.h.b16 %v337
  %v999 = vunpack.c.l.b16 %v338
  %v1000 = vunpack.c.h.b16 %v338
  %v1001 = vunpack.c.l.b16 %v339
  %v1002 = vunpack.c.h.b16 %v339
  %v1003 = vunpack.c.l.b16 %v340
  %v1004 = vunpack.c.h.b16 %v340
  %v1005 = vunpack.c.l.b16 %v341
  %v1006 = vunpack.c.h.b16 %v341
  %v1007 = vunpack.c.l.b16 %v342
  %v1008 = vunpack.c.h.b16 %v342
  %v1009 = vunpack.c.l.b16 %v343
  %v1010 = vunpack.c.h.b16 %v343
  %v1011 = vunpack.c.l.b16 %v344
  %v1012 = vunpack.c.h.b16 %v344
  %v1013 = vunpack.c.l.b16 %v345
  %v1014 = vunpack.c.h.b16 %v345
  %v1015 = vunpack.c.l.b16 %v346
  %v1016 = vunpack.c.h.b16 %v346
  %v1017 = vunpack.c.l.b16 %v347
  %v1018 = vunpack.c.h.b16 %v347
  %v1019 = vunpack.c.l.b16 %v348
  %v1020 = vunpack.c.h.b16 %v348
  %v1021 = vunpack.c.l.b16 %v349
  %v1022 = vunpack.c.h.b16 %v349
  %v1023 = vunpack.c.l.b16 %v350
  %v1024 = vunpack.c.h.b16 %v350
  %v1025 = vunpack.c.l.b16 %v351
  %v1026 = vunpack.c.h.b16 %v351
  %v1027 = vunpack.c.l.b16 %v352
  %v1028 = vunpack.c.h.b16 %v352
  %v1029 = vunpack.c.l.b16 %v353
  %v1030 = vunpack.c.h.b16 %v353
  %v1031 = vunpack.c.l.b16 %v354
  %v1032 = vunpack.c.h.b16 %v354
  %v1033 = vunpack.c.l.b16 %v355
  %v1034 = vunpack.c.h.b16 %v355
  %v1035 = vunpack.c.l.b16 %v356
  %v1036 = vunpack.c.h.b16 %v356
  %v1037 = vunpack.c.l.b16 %v357
  %v1038 = vunpack.c.h.b16 %v357
  %v1039 = vpack.c.b16 %v919, %v911
  %v1040 = vpack.c.b16 %v920, %v912
  %v1041 = vpack.c.b16 %v921, %v913
  %v1042 = vpack.c.b16 %v922, %v914
  %v1043 = vpack.c.b16 %v923, %v915
  %v1044 = vpack.c.b16 %v924, %v916
  %v1045 = vpack.c.b16 %v925, %v917
  %v1046 = vpack.c.b16 %v926, %v918
  %v1047 = vpack.c.b16 %v935, %v927
  %v1048 = vpack.c.b16 %v936, %v928
  %v1049 = vpack.c.b16 %v937, %v929
  %v1050 = vpack.c.b16 %v938, %v930
  %v1051 = vpack.c.b16 %v939, %v931
  %v1052 = vpack.c.b16 %v940, %v932
  %v1053 = vpack.c.b16 %v941, %v933
  %v1054 = vpack.c.b16 %v942, %v934
  %v1055 = vpack.c.b16 %v951, %v943
  %v1056 = vpack.c.b16 %v952, %v944
  %v1057 = vpack.c.b16 %v953, %v945
  %v1058 = vpack.c.b16 %v954, %v946
  %v1059 = vpack.c.b16 %v955, %v947
  %v1060 = vpack.c.b16 %v956, %v948
  %v1061 = vpack.c.b16 %v957, %v949
  %v1062 = vpack.c.b16 %v958, %v950
  %v1063 = vpack.c.b16 %v967, %v959
  %v1064 = vpack.c.b16 %v968, %v960
  %v1065 = vpack.c.b16 %v969, %v961
  %v1066 = vpack.c.b16 %v970, %v962
  %v1067 = vpack.c.b16 %v971, %v963
  %v1068 = vpack.c.b16 %v972, %v964
  %v1069 = vpack.c.b16 %v973, %v965
  %v1070 = vpack.c.b16 %v974, %v966
  %v1071 = vpack.c.b16 %v983, %v975
  %v1072 = vpack.c.b16 %v984, %v976
  %v1073 = vpack.c.b16 %v985, %v977
  %v1074 = vpack.c.b16 %v986, %v978
  %v1075 = vpack.c.b16 %v987, %v979
  %v1076 = vpack.c.b16 %v988, %v980
  %v1077 = vpack.c.b16 %v989, %v981
  %v1078 = vpack.c.b16 %v990, %v982
  %v1079 = vpack.c.b16 %v999, %v991
  %v1080 = vpack.c.b16 %v1000, %v992
  %v1081 = vpack.c.b16 %v1001, %v993
  %v1082 = vpack.c.b16 %v1002, %v994
  %v1083 = vpack.c.b16 %v1003, %v995
  %v1084 = vpack.c.b16 %v1004, %v996
  %v1085 = vpack.c.b16 %v1005, %v997
  %v1086 = vpack.c.b16 %v1006, %v998
  %v1087 = vpack.c.b16 %v1015, %v1007
  %v1088 = vpack.c.b16 %v1016, %v1008
  %v1089 = vpack.c.b16 %v1017, %v1009
  %v1090 = vpack.c.b16 %v1018, %v1010
  %v1091 = vpack.c.b16 %v1019, %v1011
  %v1092 = vpack.c.b16 %v1020, %v1012
  %v1093 = vpack.c.b16 %v1021, %v1013
  %v1094 = vpack.c.b16 %v1022, %v1014
  %v1095 = vpack.c.b16 %v1031, %v1023
  %v1096 = vpack.c.b16 %v1032, %v1024
  %v1097 = vpack.c.b16 %v1033, %v1025
  %v1098 = vpack.c.b16 %v1034, %v1026
  %v1099 = vpack.c.b16 %v1035, %v1027
  %v1100 = vpack.c.b16 %v1036, %v1028
  %v1101 = vpack.c.b16 %v1037, %v1029
  %v1102 = vpack.c.b16 %v1038, %v1030
  %1167 = vmatpush.bf16.msra.mxu0 %v1095
  %1168 = vmatpush.bf16.msra.mxu0 %v1087
  %1169 = vmatpush.bf16.msra.mxu0 %v1079
  %1170 = vmatpush.bf16.msra.mxu0 %v1071
  %1171 = vmatpush.bf16.msra.mxu0 %v1063
  %1172 = vmatpush.bf16.msra.mxu0 %v1055
  %1173 = vmatpush.bf16.msra.mxu0 %v1047
  %1174 = vmatpush.bf16.msra.mxu0 %v1039
  %1175 = vmatmul.bf16.gmra.mxu0 %v293
  %v1176 = vpop.f32.mrf.mxu0
  %v1177 = vadd.f32 %v753, %v1176
  %v1178 = vpop.f32.mrf.mxu0
  %1179 = vdwg.mxu0
  %1180 = vmatpush.bf16.msra.mxu0 %v1096
  %1181 = vmatpush.bf16.msra.mxu0 %v1088
  %1182 = vmatpush.bf16.msra.mxu0 %v1080
  %1183 = vmatpush.bf16.msra.mxu0 %v1072
  %1184 = vmatpush.bf16.msra.mxu0 %v1064
  %1185 = vmatpush.bf16.msra.mxu0 %v1056
  %1186 = vmatpush.bf16.msra.mxu0 %v1048
  %1187 = vmatpush.bf16.msra.mxu0 %v1040
  %1188 = vmatmul.bf16.gmra.mxu0 %v293
  %v1189 = vpop.f32.mrf.mxu0
  %v1190 = vadd.f32 %v766, %v1189
  %v1191 = vpop.f32.mrf.mxu0
  %1192 = vdwg.mxu0
  %1193 = vmatpush.bf16.msra.mxu0 %v1097
  %1194 = vmatpush.bf16.msra.mxu0 %v1089
  %1195 = vmatpush.bf16.msra.mxu0 %v1081
  %1196 = vmatpush.bf16.msra.mxu0 %v1073
  %1197 = vmatpush.bf16.msra.mxu0 %v1065
  %1198 = vmatpush.bf16.msra.mxu0 %v1057
  %1199 = vmatpush.bf16.msra.mxu0 %v1049
  %1200 = vmatpush.bf16.msra.mxu0 %v1041
  %1201 = vmatmul.bf16.gmra.mxu0 %v293
  %v1202 = vpop.f32.mrf.mxu0
  %v1203 = vadd.f32 %v779, %v1202
  %v1204 = vpop.f32.mrf.mxu0
  %1205 = vdwg.mxu0
  %1206 = vmatpush.bf16.msra.mxu0 %v1098
  %1207 = vmatpush.bf16.msra.mxu0 %v1090
  %1208 = vmatpush.bf16.msra.mxu0 %v1082
  %1209 = vmatpush.bf16.msra.mxu0 %v1074
  %1210 = vmatpush.bf16.msra.mxu0 %v1066
  %1211 = vmatpush.bf16.msra.mxu0 %v1058
  %1212 = vmatpush.bf16.msra.mxu0 %v1050
  %1213 = vmatpush.bf16.msra.mxu0 %v1042
  %1214 = vmatmul.bf16.gmra.mxu0 %v293
  %v1215 = vpop.f32.mrf.mxu0
  %v1216 = vadd.f32 %v792, %v1215
  %v1217 = vpop.f32.mrf.mxu0
  %1218 = vdwg.mxu0
  %1219 = vmatpush.bf16.msra.mxu0 %v1099
  %1220 = vmatpush.bf16.msra.mxu0 %v1091
  %1221 = vmatpush.bf16.msra.mxu0 %v1083
  %1222 = vmatpush.bf16.msra.mxu0 %v1075
  %1223 = vmatpush.bf16.msra.mxu0 %v1067
  %1224 = vmatpush.bf16.msra.mxu0 %v1059
  %1225 = vmatpush.bf16.msra.mxu0 %v1051
  %1226 = vmatpush.bf16.msra.mxu0 %v1043
  %1227 = vmatmul.bf16.gmra.mxu0 %v293
  %v1228 = vpop.f32.mrf.mxu0
  %v1229 = vadd.f32 %v805, %v1228
  %v1230 = vpop.f32.mrf.mxu0
  %1231 = vdwg.mxu0
  %1232 = vmatpush.bf16.msra.mxu0 %v1100
  %1233 = vmatpush.bf16.msra.mxu0 %v1092
  %1234 = vmatpush.bf16.msra.mxu0 %v1084
  %1235 = vmatpush.bf16.msra.mxu0 %v1076
  %1236 = vmatpush.bf16.msra.mxu0 %v1068
  %1237 = vmatpush.bf16.msra.mxu0 %v1060
  %1238 = vmatpush.bf16.msra.mxu0 %v1052
  %1239 = vmatpush.bf16.msra.mxu0 %v1044
  %1240 = vmatmul.bf16.gmra.mxu0 %v293
  %v1241 = vpop.f32.mrf.mxu0
  %v1242 = vadd.f32 %v818, %v1241
  %v1243 = vpop.f32.mrf.mxu0
  %1244 = vdwg.mxu0
  %1245 = vmatpush.bf16.msra.mxu0 %v1101
  %1246 = vmatpush.bf16.msra.mxu0 %v1093
  %1247 = vmatpush.bf16.msra.mxu0 %v1085
  %1248 = vmatpush.bf16.msra.mxu0 %v1077
  %1249 = vmatpush.bf16.msra.mxu0 %v1069
  %1250 = vmatpush.bf16.msra.mxu0 %v1061
  %1251 = vmatpush.bf16.msra.mxu0 %v1053
  %1252 = vmatpush.bf16.msra.mxu0 %v1045
  %1253 = vmatmul.bf16.gmra.mxu0 %v293
  %v1254 = vpop.f32.mrf.mxu0
  %v1255 = vadd.f32 %v831, %v1254
  %v1256 = vpop.f32.mrf.mxu0
  %1257 = vdwg.mxu0
  %1258 = vmatpush.bf16.msra.mxu0 %v1102
  %1259 = vmatpush.bf16.msra.mxu0 %v1094
  %1260 = vmatpush.bf16.msra.mxu0 %v1086
  %1261 = vmatpush.bf16.msra.mxu0 %v1078
  %1262 = vmatpush.bf16.msra.mxu0 %v1070
  %1263 = vmatpush.bf16.msra.mxu0 %v1062
  %1264 = vmatpush.bf16.msra.mxu0 %v1054
  %1265 = vmatpush.bf16.msra.mxu0 %v1046
  %1266 = vmatmul.bf16.gmra.mxu0 %v293
  %v1267 = vpop.f32.mrf.mxu0
  %v1268 = vadd.f32 %v844, %v1267
  %v1269 = vpop.f32.mrf.mxu0
  %1270 = vdwg.mxu0
  %v1271 = vld [vmem:[%s7] sm:$0xff]
  %v1273 = vperm.slane %v1271, 0
  %v1274 = vperm.slane %v1271, 1
  %v1275 = vperm.slane %v1271, 2
  %v1276 = vperm.slane %v1271, 3
  %v1277 = vperm.slane %v1271, 4
  %v1278 = vperm.slane %v1271, 5
  %v1279 = vperm.slane %v1271, 6
  %v1280 = vperm.slane %v1271, 7
  %v1289 = vadd.f32 %v1177, %v1273
  %v1290 = vadd.f32 %v1190, %v1274
  %v1291 = vadd.f32 %v1203, %v1275
  %v1292 = vadd.f32 %v1216, %v1276
  %v1293 = vadd.f32 %v1229, %v1277
  %v1294 = vadd.f32 %v1242, %v1278
  %v1295 = vadd.f32 %v1255, %v1279
  %v1296 = vadd.f32 %v1268, %v1280
  %vm1297 = vcmp.gt.f32.partialorder %v1289, 0.0
  %vm1298 = vcmp.gt.f32.partialorder %v1290, 0.0
  %vm1299 = vcmp.gt.f32.partialorder %v1291, 0.0
  %vm1300 = vcmp.gt.f32.partialorder %v1292, 0.0
  %vm1301 = vcmp.gt.f32.partialorder %v1293, 0.0
  %vm1302 = vcmp.gt.f32.partialorder %v1294, 0.0
  %vm1303 = vcmp.gt.f32.partialorder %v1295, 0.0
  %vm1304 = vcmp.gt.f32.partialorder %v1296, 0.0
  %v1305 = vmul.f32 %v1289, 1.442695
  %v1306 = vpow.pop %v1305
  %v1307 = vmul.f32 %v1290, 1.442695
  %v1308 = vpow.pop %v1307
  %v1309 = vmul.f32 %v1291, 1.442695
  %v1310 = vpow.pop %v1309
  %v1311 = vmul.f32 %v1292, 1.442695
  %v1312 = vpow.pop %v1311
  %v1313 = vmul.f32 %v1293, 1.442695
  %v1314 = vpow.pop %v1313
  %v1315 = vmul.f32 %v1294, 1.442695
  %v1316 = vpow.pop %v1315
  %v1317 = vmul.f32 %v1295, 1.442695
  %v1318 = vpow.pop %v1317
  %v1319 = vmul.f32 %v1296, 1.442695
  %v1320 = vpow.pop %v1319
  %v1321 = vsub.f32 %v1306, 1.0
  %v1322 = vsub.f32 %v1308, 1.0
  %v1323 = vsub.f32 %v1310, 1.0
  %v1324 = vsub.f32 %v1312, 1.0
  %v1325 = vsub.f32 %v1314, 1.0
  %v1326 = vsub.f32 %v1316, 1.0
  %v1327 = vsub.f32 %v1318, 1.0
  %v1328 = vsub.f32 %v1320, 1.0
  %v1329 = vmul.f32 %v1321, 1.6732632
  %v1330 = vmul.f32 %v1322, 1.6732632
  %v1331 = vmul.f32 %v1323, 1.6732632
  %v1332 = vmul.f32 %v1324, 1.6732632
  %v1333 = vmul.f32 %v1325, 1.6732632
  %v1334 = vmul.f32 %v1326, 1.6732632
  %v1335 = vmul.f32 %v1327, 1.6732632
  %v1336 = vmul.f32 %v1328, 1.6732632
  %v1337 = vsel %vm1297, %v1289, %v1329
  %v1338 = vsel %vm1298, %v1290, %v1330
  %v1339 = vsel %vm1299, %v1291, %v1331
  %v1340 = vsel %vm1300, %v1292, %v1332
  %v1341 = vsel %vm1301, %v1293, %v1333
  %v1342 = vsel %vm1302, %v1294, %v1334
  %v1343 = vsel %vm1303, %v1295, %v1335
  %v1344 = vsel %vm1304, %v1296, %v1336
  %v1345 = vmul.f32 %v1337, 1.050701
  %v1346 = vmul.f32 %v1338, 1.050701
  %v1347 = vmul.f32 %v1339, 1.050701
  %v1348 = vmul.f32 %v1340, 1.050701
  %v1349 = vmul.f32 %v1341, 1.050701
  %v1350 = vmul.f32 %v1342, 1.050701
  %v1351 = vmul.f32 %v1343, 1.050701
  %v1352 = vmul.f32 %v1344, 1.050701
  %1353 = vst [vmem:[%s8] sm:$0xff] %v258
  %1354 = vst [vmem:[%s8 + $0x8] sm:$0xff] %v284
  %1355 = vst [vmem:[%s8 + $0x10] sm:$0xff] %v1345
  %1356 = vst [vmem:[%s8 + $0x18] sm:$0xff] %v1346
  %1357 = vst [vmem:[%s8 + $0x20] sm:$0xff] %v1347
  %1358 = vst [vmem:[%s8 + $0x28] sm:$0xff] %v1348
  %1359 = vst [vmem:[%s8 + $0x30] sm:$0xff] %v1349
  %1360 = vst [vmem:[%s8 + $0x38] sm:$0xff] %v1350
  %1361 = vst [vmem:[%s8 + $0x40] sm:$0xff] %v1351
  %1362 = vst [vmem:[%s8 + $0x48] sm:$0xff] %v1352
  // Predicated region
  $region34: #{vae_forward.10} parent=0 // pred_check
    _
  $region35: #{vae_forward.10} parent=0 // pred_check_branch
    %1364 = sbr.rel (0) target = $region37
  $region36: #{vae_forward.10} parent=0 // pred_region
    _
  $region37: #{vae_forward.10} parent=0 // pred_fallthru
    _
  // Predicated region
  $region38: #{vae_forward.10} parent=0 // pred_check
    _
  $region39: #{vae_forward.10} parent=0 // pred_check_branch
    %1366 = sbr.rel (0) target = $region41
  $region40: #{vae_forward.10} parent=0 // pred_region
    _
  $region41: #{vae_forward.10} parent=0 // pred_fallthru
    _

// kernel: vae_forward.11
$region0: #{vae_forward.11}
  #allocation0 [shape = 'u32[]', space=smem, size = 0x4, offset = 0x4, fixed_abs, tag = 'smem constant byte address 0x4 - core index']
  #allocation1 [shape = 'u32[72,128]{1,0:T(1,128)}', space=vmem, size = 0x9000, scoped, tag = 'internal scratch']
  %s0 = inlined_call_operand.vmem [shape: bf16[32,640], index: 0, kind: input, shape index: {}]
  %s1 = inlined_call_operand.vmem [shape: bf16[640,256], index: 1, kind: input, shape index: {}]
  %s2 = inlined_call_operand.vmem [shape: f32[1,256], index: 2, kind: input, shape index: {}]
  %s3 = inlined_call_operand.vmem [shape: f32[32,256], index: 3, kind: output, shape index: {}]
  %s4 = sld [smem:[#allocation0]]
  $region22: #{vae_forward.11} parent=0
    _
  %s6 = ssub.s32 1, %s4
  %s7 = scalar_select 0, %s6, %s4
  // Predicated region
  $region2: #{vae_forward.11} parent=0 // pred_check
    _
  $region3: #{vae_forward.11} parent=0 // pred_check_branch
    %9 = sbr.rel (0) target = $region5
  $region4: #{vae_forward.11} parent=0 // pred_region
    _
  $region5: #{vae_forward.11} parent=0 // pred_fallthru
    _
  // Predicated region
  $region6: #{vae_forward.11} parent=0 // pred_check
    _
  $region7: #{vae_forward.11} parent=0 // pred_check_branch
    %11 = sbr.rel (0) target = $region9
  $region8: #{vae_forward.11} parent=0 // pred_region
    _
  $region9: #{vae_forward.11} parent=0 // pred_fallthru
    _
  // Predicated region
  $region10: #{vae_forward.11} parent=0 // pred_check
    _
  $region11: #{vae_forward.11} parent=0 // pred_check_branch
    %13 = sbr.rel (0) target = $region13
  $region12: #{vae_forward.11} parent=0 // pred_region
    _
  $region13: #{vae_forward.11} parent=0 // pred_fallthru
    _
  %v14 = vld [vmem:[%s0] sm:$0xff]
  %v15 = vld [vmem:[%s0 + $0x8] sm:$0xff]
  %v16 = vld [vmem:[%s0 + $0x10] sm:$0xf]
  %v17 = vld [vmem:[%s0 + $0x14] sm:$0xff]
  %v18 = vld [vmem:[%s0 + $0x1c] sm:$0xff]
  %v19 = vld [vmem:[%s0 + $0x24] sm:$0xf]
  %v20 = vld [vmem:[%s0 + $0x28] sm:$0xff]
  %v21 = vld [vmem:[%s0 + $0x30] sm:$0xff]
  %v22 = vld [vmem:[%s0 + $0x38] sm:$0xf]
  %v23 = vld [vmem:[%s0 + $0x3c] sm:$0xff]
  %v24 = vld [vmem:[%s0 + $0x44] sm:$0xff]
  %v25 = vld [vmem:[%s0 + $0x4c] sm:$0xf]
  %v26 = vld [vmem:[%s1] sm:$0xff]
  %v27 = vld [vmem:[%s1 + $0x8] sm:$0xff]
  %v28 = vld [vmem:[%s1 + $0x10] sm:$0xff]
  %v29 = vld [vmem:[%s1 + $0x18] sm:$0xff]
  %v30 = vld [vmem:[%s1 + $0x20] sm:$0xff]
  %v31 = vld [vmem:[%s1 + $0x28] sm:$0xff]
  %v32 = vld [vmem:[%s1 + $0x30] sm:$0xff]
  %v33 = vld [vmem:[%s1 + $0x38] sm:$0xff]
  %v34 = vld [vmem:[%s1 + $0x40] sm:$0xff]
  %v35 = vld [vmem:[%s1 + $0x48] sm:$0xff]
  %v36 = vld [vmem:[%s1 + $0x50] sm:$0xff]
  %v37 = vld [vmem:[%s1 + $0x58] sm:$0xff]
  %v38 = vld [vmem:[%s1 + $0x60] sm:$0xff]
  %v39 = vld [vmem:[%s1 + $0x68] sm:$0xff]
  %v40 = vld [vmem:[%s1 + $0x70] sm:$0xff]
  %v41 = vld [vmem:[%s1 + $0x78] sm:$0xff]
  %v42 = vld [vmem:[%s1 + $0x80] sm:$0xff]
  %v43 = vld [vmem:[%s1 + $0x88] sm:$0xff]
  %v44 = vld [vmem:[%s1 + $0x90] sm:$0xff]
  %v45 = vld [vmem:[%s1 + $0x98] sm:$0xff]
  %v46 = vld [vmem:[%s1 + $0xa0] sm:$0xff]
  %v47 = vld [vmem:[%s1 + $0xa8] sm:$0xff]
  %v48 = vld [vmem:[%s1 + $0xb0] sm:$0xff]
  %v49 = vld [vmem:[%s1 + $0xb8] sm:$0xff]
  %v50 = vld [vmem:[%s1 + $0xc0] sm:$0xff]
  %v51 = vld [vmem:[%s1 + $0xc8] sm:$0xff]
  %v52 = vld [vmem:[%s1 + $0xd0] sm:$0xff]
  %v53 = vld [vmem:[%s1 + $0xd8] sm:$0xff]
  %v54 = vld [vmem:[%s1 + $0xe0] sm:$0xff]
  %v55 = vld [vmem:[%s1 + $0xe8] sm:$0xff]
  %v56 = vld [vmem:[%s1 + $0xf0] sm:$0xff]
  %v57 = vld [vmem:[%s1 + $0xf8] sm:$0xff]
  %v58 = vld [vmem:[%s1 + $0x100] sm:$0xff]
  %v59 = vld [vmem:[%s1 + $0x108] sm:$0xff]
  %v60 = vld [vmem:[%s1 + $0x110] sm:$0xff]
  %v61 = vld [vmem:[%s1 + $0x118] sm:$0xff]
  %v62 = vld [vmem:[%s1 + $0x120] sm:$0xff]
  %v63 = vld [vmem:[%s1 + $0x128] sm:$0xff]
  %v64 = vld [vmem:[%s1 + $0x130] sm:$0xff]
  %v65 = vld [vmem:[%s1 + $0x138] sm:$0xff]
  %v66 = vld [vmem:[%s1 + $0x140] sm:$0xff]
  %v67 = vld [vmem:[%s1 + $0x148] sm:$0xff]
  %v68 = vld [vmem:[%s1 + $0x150] sm:$0xff]
  %v69 = vld [vmem:[%s1 + $0x158] sm:$0xff]
  %v70 = vld [vmem:[%s1 + $0x160] sm:$0xff]
  %v71 = vld [vmem:[%s1 + $0x168] sm:$0xff]
  %v72 = vld [vmem:[%s1 + $0x170] sm:$0xff]
  %v73 = vld [vmem:[%s1 + $0x178] sm:$0xff]
  %v74 = vld [vmem:[%s1 + $0x180] sm:$0xff]
  %v75 = vld [vmem:[%s1 + $0x188] sm:$0xff]
  %v76 = vld [vmem:[%s1 + $0x190] sm:$0xff]
  %v77 = vld [vmem:[%s1 + $0x198] sm:$0xff]
  %v78 = vld [vmem:[%s1 + $0x1a0] sm:$0xff]
  %v79 = vld [vmem:[%s1 + $0x1a8] sm:$0xff]
  %v80 = vld [vmem:[%s1 + $0x1b0] sm:$0xff]
  %v81 = vld [vmem:[%s1 + $0x1b8] sm:$0xff]
  %v82 = vld [vmem:[%s1 + $0x1c0] sm:$0xff]
  %v83 = vld [vmem:[%s1 + $0x1c8] sm:$0xff]
  %v84 = vld [vmem:[%s1 + $0x1d0] sm:$0xff]
  %v85 = vld [vmem:[%s1 + $0x1d8] sm:$0xff]
  %v86 = vld [vmem:[%s1 + $0x1e0] sm:$0xff]
  %v87 = vld [vmem:[%s1 + $0x1e8] sm:$0xff]
  %v88 = vld [vmem:[%s1 + $0x1f0] sm:$0xff]
  %v89 = vld [vmem:[%s1 + $0x1f8] sm:$0xff]
  %v90 = vld [vmem:[%s1 + $0x200] sm:$0xff]
  %v91 = vld [vmem:[%s1 + $0x208] sm:$0xff]
  %v92 = vld [vmem:[%s1 + $0x210] sm:$0xff]
  %v93 = vld [vmem:[%s1 + $0x218] sm:$0xff]
  %v94 = vld [vmem:[%s1 + $0x220] sm:$0xff]
  %v95 = vld [vmem:[%s1 + $0x228] sm:$0xff]
  %v96 = vld [vmem:[%s1 + $0x230] sm:$0xff]
  %v97 = vld [vmem:[%s1 + $0x238] sm:$0xff]
  %v98 = vld [vmem:[%s1 + $0x240] sm:$0xff]
  %v99 = vld [vmem:[%s1 + $0x248] sm:$0xff]
  %v100 = vld [vmem:[%s1 + $0x250] sm:$0xff]
  %v101 = vld [vmem:[%s1 + $0x258] sm:$0xff]
  %v102 = vld [vmem:[%s1 + $0x260] sm:$0xff]
  %v103 = vld [vmem:[%s1 + $0x268] sm:$0xff]
  %v104 = vld [vmem:[%s1 + $0x270] sm:$0xff]
  %v105 = vld [vmem:[%s1 + $0x278] sm:$0xff]
  %v106 = vld [vmem:[%s2] sm:$0x3]
  %v108 = vperm.slane %v106, 0
  %v109 = vperm.slane %v106, 1
  %v124 = vunpack.c.l.b16 %v14
  %v125 = vunpack.c.h.b16 %v14
  %v126 = vunpack.c.l.b16 %v15
  %v127 = vunpack.c.h.b16 %v15
  %v128 = vunpack.c.l.b16 %v16
  %v129 = vunpack.c.l.b16 %v17
  %v130 = vunpack.c.h.b16 %v17
  %v131 = vunpack.c.l.b16 %v18
  %v132 = vunpack.c.h.b16 %v18
  %v133 = vunpack.c.l.b16 %v19
  %v134 = vunpack.c.l.b16 %v20
  %v135 = vunpack.c.h.b16 %v20
  %v136 = vunpack.c.l.b16 %v21
  %v137 = vunpack.c.h.b16 %v21
  %v138 = vunpack.c.l.b16 %v22
  %v139 = vunpack.c.l.b16 %v23
  %v140 = vunpack.c.h.b16 %v23
  %v141 = vunpack.c.l.b16 %v24
  %v142 = vunpack.c.h.b16 %v24
  %v143 = vunpack.c.l.b16 %v25
  %v144 = vpack.c.b16 %v129, %v124
  %v145 = vpack.c.b16 %v130, %v125
  %v146 = vpack.c.b16 %v131, %v126
  %v147 = vpack.c.b16 %v132, %v127
  %v148 = vpack.c.b16 %v133, %v128
  %v149 = vpack.c.b16 %v139, %v134
  %v150 = vpack.c.b16 %v140, %v135
  %v151 = vpack.c.b16 %v141, %v136
  %v152 = vpack.c.b16 %v142, %v137
  %v153 = vpack.c.b16 %v143, %v138
  %v244 = vunpack.c.l.b16 %v26
  %v245 = vunpack.c.h.b16 %v26
  %v246 = vunpack.c.l.b16 %v27
  %v247 = vunpack.c.h.b16 %v27
  %v248 = vunpack.c.l.b16 %v28
  %v249 = vunpack.c.h.b16 %v28
  %v250 = vunpack.c.l.b16 %v29
  %v251 = vunpack.c.h.b16 %v29
  %v252 = vunpack.c.l.b16 %v30
  %v253 = vunpack.c.h.b16 %v30
  %v254 = vunpack.c.l.b16 %v31
  %v255 = vunpack.c.h.b16 %v31
  %v256 = vunpack.c.l.b16 %v32
  %v257 = vunpack.c.h.b16 %v32
  %v258 = vunpack.c.l.b16 %v33
  %v259 = vunpack.c.h.b16 %v33
  %v260 = vunpack.c.l.b16 %v34
  %v261 = vunpack.c.h.b16 %v34
  %v262 = vunpack.c.l.b16 %v35
  %v263 = vunpack.c.h.b16 %v35
  %v264 = vunpack.c.l.b16 %v36
  %v265 = vunpack.c.h.b16 %v36
  %v266 = vunpack.c.l.b16 %v37
  %v267 = vunpack.c.h.b16 %v37
  %v268 = vunpack.c.l.b16 %v38
  %v269 = vunpack.c.h.b16 %v38
  %v270 = vunpack.c.l.b16 %v39
  %v271 = vunpack.c.h.b16 %v39
  %v272 = vunpack.c.l.b16 %v40
  %v273 = vunpack.c.h.b16 %v40
  %v274 = vunpack.c.l.b16 %v41
  %v275 = vunpack.c.h.b16 %v41
  %v276 = vunpack.c.l.b16 %v42
  %v277 = vunpack.c.h.b16 %v42
  %v278 = vunpack.c.l.b16 %v43
  %v279 = vunpack.c.h.b16 %v43
  %v280 = vunpack.c.l.b16 %v44
  %v281 = vunpack.c.h.b16 %v44
  %v282 = vunpack.c.l.b16 %v45
  %v283 = vunpack.c.h.b16 %v45
  %v284 = vunpack.c.l.b16 %v46
  %v285 = vunpack.c.h.b16 %v46
  %v286 = vunpack.c.l.b16 %v47
  %v287 = vunpack.c.h.b16 %v47
  %v288 = vunpack.c.l.b16 %v48
  %v289 = vunpack.c.h.b16 %v48
  %v290 = vunpack.c.l.b16 %v49
  %v291 = vunpack.c.h.b16 %v49
  %v292 = vunpack.c.l.b16 %v50
  %v293 = vunpack.c.h.b16 %v50
  %v294 = vunpack.c.l.b16 %v51
  %v295 = vunpack.c.h.b16 %v51
  %v296 = vunpack.c.l.b16 %v52
  %v297 = vunpack.c.h.b16 %v52
  %v298 = vunpack.c.l.b16 %v53
  %v299 = vunpack.c.h.b16 %v53
  %v300 = vunpack.c.l.b16 %v54
  %v301 = vunpack.c.h.b16 %v54
  %v302 = vunpack.c.l.b16 %v55
  %v303 = vunpack.c.h.b16 %v55
  %v304 = vunpack.c.l.b16 %v56
  %v305 = vunpack.c.h.b16 %v56
  %v306 = vunpack.c.l.b16 %v57
  %v307 = vunpack.c.h.b16 %v57
  %v308 = vunpack.c.l.b16 %v58
  %v309 = vunpack.c.h.b16 %v58
  %v310 = vunpack.c.l.b16 %v59
  %v311 = vunpack.c.h.b16 %v59
  %v312 = vunpack.c.l.b16 %v60
  %v313 = vunpack.c.h.b16 %v60
  %v314 = vunpack.c.l.b16 %v61
  %v315 = vunpack.c.h.b16 %v61
  %v316 = vunpack.c.l.b16 %v62
  %v317 = vunpack.c.h.b16 %v62
  %v318 = vunpack.c.l.b16 %v63
  %v319 = vunpack.c.h.b16 %v63
  %v320 = vunpack.c.l.b16 %v64
  %v321 = vunpack.c.h.b16 %v64
  %v322 = vunpack.c.l.b16 %v65
  %v323 = vunpack.c.h.b16 %v65
  %v324 = vunpack.c.l.b16 %v66
  %v325 = vunpack.c.h.b16 %v66
  %v326 = vunpack.c.l.b16 %v67
  %v327 = vunpack.c.h.b16 %v67
  %v328 = vunpack.c.l.b16 %v68
  %v329 = vunpack.c.h.b16 %v68
  %v330 = vunpack.c.l.b16 %v69
  %v331 = vunpack.c.h.b16 %v69
  %v332 = vunpack.c.l.b16 %v70
  %v333 = vunpack.c.h.b16 %v70
  %v334 = vunpack.c.l.b16 %v71
  %v335 = vunpack.c.h.b16 %v71
  %v336 = vunpack.c.l.b16 %v72
  %v337 = vunpack.c.h.b16 %v72
  %v338 = vunpack.c.l.b16 %v73
  %v339 = vunpack.c.h.b16 %v73
  %v340 = vunpack.c.l.b16 %v74
  %v341 = vunpack.c.h.b16 %v74
  %v342 = vunpack.c.l.b16 %v75
  %v343 = vunpack.c.h.b16 %v75
  %v344 = vunpack.c.l.b16 %v76
  %v345 = vunpack.c.h.b16 %v76
  %v346 = vunpack.c.l.b16 %v77
  %v347 = vunpack.c.h.b16 %v77
  %v348 = vunpack.c.l.b16 %v78
  %v349 = vunpack.c.h.b16 %v78
  %v350 = vunpack.c.l.b16 %v79
  %v351 = vunpack.c.h.b16 %v79
  %v352 = vunpack.c.l.b16 %v80
  %v353 = vunpack.c.h.b16 %v80
  %v354 = vunpack.c.l.b16 %v81
  %v355 = vunpack.c.h.b16 %v81
  %v356 = vunpack.c.l.b16 %v82
  %v357 = vunpack.c.h.b16 %v82
  %v358 = vunpack.c.l.b16 %v83
  %v359 = vunpack.c.h.b16 %v83
  %v360 = vunpack.c.l.b16 %v84
  %v361 = vunpack.c.h.b16 %v84
  %v362 = vunpack.c.l.b16 %v85
  %v363 = vunpack.c.h.b16 %v85
  %v364 = vunpack.c.l.b16 %v86
  %v365 = vunpack.c.h.b16 %v86
  %v366 = vunpack.c.l.b16 %v87
  %v367 = vunpack.c.h.b16 %v87
  %v368 = vunpack.c.l.b16 %v88
  %v369 = vunpack.c.h.b16 %v88
  %v370 = vunpack.c.l.b16 %v89
  %v371 = vunpack.c.h.b16 %v89
  %v372 = vunpack.c.l.b16 %v90
  %v373 = vunpack.c.h.b16 %v90
  %v374 = vunpack.c.l.b16 %v91
  %v375 = vunpack.c.h.b16 %v91
  %v376 = vunpack.c.l.b16 %v92
  %v377 = vunpack.c.h.b16 %v92
  %v378 = vunpack.c.l.b16 %v93
  %v379 = vunpack.c.h.b16 %v93
  %v380 = vunpack.c.l.b16 %v94
  %v381 = vunpack.c.h.b16 %v94
  %v382 = vunpack.c.l.b16 %v95
  %v383 = vunpack.c.h.b16 %v95
  %v384 = vunpack.c.l.b16 %v96
  %v385 = vunpack.c.h.b16 %v96
  %v386 = vunpack.c.l.b16 %v97
  %v387 = vunpack.c.h.b16 %v97
  %v388 = vunpack.c.l.b16 %v98
  %v389 = vunpack.c.h.b16 %v98
  %v390 = vunpack.c.l.b16 %v99
  %v391 = vunpack.c.h.b16 %v99
  %v392 = vunpack.c.l.b16 %v100
  %v393 = vunpack.c.h.b16 %v100
  %v394 = vunpack.c.l.b16 %v101
  %v395 = vunpack.c.h.b16 %v101
  %v396 = vunpack.c.l.b16 %v102
  %v397 = vunpack.c.h.b16 %v102
  %v398 = vunpack.c.l.b16 %v103
  %v399 = vunpack.c.h.b16 %v103
  %v400 = vunpack.c.l.b16 %v104
  %v401 = vunpack.c.h.b16 %v104
  %v402 = vunpack.c.l.b16 %v105
  %v403 = vunpack.c.h.b16 %v105
  %v404 = vpack.c.b16 %v246, %v244
  %v405 = vpack.c.b16 %v247, %v245
  %v406 = vpack.c.b16 %v250, %v248
  %v407 = vpack.c.b16 %v251, %v249
  %v408 = vpack.c.b16 %v254, %v252
  %v409 = vpack.c.b16 %v255, %v253
  %v410 = vpack.c.b16 %v258, %v256
  %v411 = vpack.c.b16 %v259, %v257
  %v412 = vpack.c.b16 %v262, %v260
  %v413 = vpack.c.b16 %v263, %v261
  %v414 = vpack.c.b16 %v266, %v264
  %v415 = vpack.c.b16 %v267, %v265
  %v416 = vpack.c.b16 %v270, %v268
  %v417 = vpack.c.b16 %v271, %v269
  %v418 = vpack.c.b16 %v274, %v272
  %v419 = vpack.c.b16 %v275, %v273
  %v420 = vpack.c.b16 %v278, %v276
  %v421 = vpack.c.b16 %v279, %v277
  %v422 = vpack.c.b16 %v282, %v280
  %v423 = vpack.c.b16 %v283, %v281
  %v424 = vpack.c.b16 %v286, %v284
  %v425 = vpack.c.b16 %v287, %v285
  %v426 = vpack.c.b16 %v290, %v288
  %v427 = vpack.c.b16 %v291, %v289
  %v428 = vpack.c.b16 %v294, %v292
  %v429 = vpack.c.b16 %v295, %v293
  %v430 = vpack.c.b16 %v298, %v296
  %v431 = vpack.c.b16 %v299, %v297
  %v432 = vpack.c.b16 %v302, %v300
  %v433 = vpack.c.b16 %v303, %v301
  %v434 = vpack.c.b16 %v306, %v304
  %v435 = vpack.c.b16 %v307, %v305
  %v436 = vpack.c.b16 %v310, %v308
  %v437 = vpack.c.b16 %v311, %v309
  %v438 = vpack.c.b16 %v314, %v312
  %v439 = vpack.c.b16 %v315, %v313
  %v440 = vpack.c.b16 %v318, %v316
  %v441 = vpack.c.b16 %v319, %v317
  %v442 = vpack.c.b16 %v322, %v320
  %v443 = vpack.c.b16 %v323, %v321
  %v444 = vpack.c.b16 %v326, %v324
  %v445 = vpack.c.b16 %v327, %v325
  %v446 = vpack.c.b16 %v330, %v328
  %v447 = vpack.c.b16 %v331, %v329
  %v448 = vpack.c.b16 %v334, %v332
  %v449 = vpack.c.b16 %v335, %v333
  %v450 = vpack.c.b16 %v338, %v336
  %v451 = vpack.c.b16 %v339, %v337
  %v452 = vpack.c.b16 %v342, %v340
  %v453 = vpack.c.b16 %v343, %v341
  %v454 = vpack.c.b16 %v346, %v344
  %v455 = vpack.c.b16 %v347, %v345
  %v456 = vpack.c.b16 %v350, %v348
  %v457 = vpack.c.b16 %v351, %v349
  %v458 = vpack.c.b16 %v354, %v352
  %v459 = vpack.c.b16 %v355, %v353
  %v460 = vpack.c.b16 %v358, %v356
  %v461 = vpack.c.b16 %v359, %v357
  %v462 = vpack.c.b16 %v362, %v360
  %v463 = vpack.c.b16 %v363, %v361
  %v464 = vpack.c.b16 %v366, %v364
  %v465 = vpack.c.b16 %v367, %v365
  %v466 = vpack.c.b16 %v370, %v368
  %v467 = vpack.c.b16 %v371, %v369
  %v468 = vpack.c.b16 %v374, %v372
  %v469 = vpack.c.b16 %v375, %v373
  %v470 = vpack.c.b16 %v378, %v376
  %v471 = vpack.c.b16 %v379, %v377
  %v472 = vpack.c.b16 %v382, %v380
  %v473 = vpack.c.b16 %v383, %v381
  %v474 = vpack.c.b16 %v386, %v384
  %v475 = vpack.c.b16 %v387, %v385
  %v476 = vpack.c.b16 %v390, %v388
  %v477 = vpack.c.b16 %v391, %v389
  %v478 = vpack.c.b16 %v394, %v392
  %v479 = vpack.c.b16 %v395, %v393
  %v480 = vpack.c.b16 %v398, %v396
  %v481 = vpack.c.b16 %v399, %v397
  %v482 = vpack.c.b16 %v402, %v400
  %v483 = vpack.c.b16 %v403, %v401
  %564 = vmatpush.bf16.msra.mxu0 %v418
  %565 = vmatpush.bf16.msra.mxu0 %v416
  %566 = vmatpush.bf16.msra.mxu0 %v414
  %567 = vmatpush.bf16.msra.mxu0 %v412
  %568 = vmatpush.bf16.msra.mxu0 %v410
  %569 = vmatpush.bf16.msra.mxu0 %v408
  %570 = vmatpush.bf16.msra.mxu0 %v406
  %571 = vmatpush.bf16.msra.mxu0 %v404
  %572 = vmatmul.bf16.gmra.mxu0 %v144
  %v573 = vpop.f32.mrf.mxu0
  %v574 = vadd.f32 %v108, %v573
  %v575 = vpop.f32.mrf.mxu0
  %v576 = vadd.f32 %v108, %v575
  %577 = vmatmul.bf16.gmra.mxu0 %v149
  %v578 = vpop.f32.mrf.mxu0
  %v579 = vadd.f32 %v108, %v578
  %v580 = vpop.f32.mrf.mxu0
  %v581 = vadd.f32 %v108, %v580
  %582 = vdwg.mxu0
  %583 = vmatpush.bf16.msra.mxu0 %v434
  %584 = vmatpush.bf16.msra.mxu0 %v432
  %585 = vmatpush.bf16.msra.mxu0 %v430
  %586 = vmatpush.bf16.msra.mxu0 %v428
  %587 = vmatpush.bf16.msra.mxu0 %v426
  %588 = vmatpush.bf16.msra.mxu0 %v424
  %589 = vmatpush.bf16.msra.mxu0 %v422
  %590 = vmatpush.bf16.msra.mxu0 %v420
  %591 = vmatmul.bf16.gmra.mxu0 %v145
  %v592 = vpop.f32.mrf.mxu0
  %v593 = vadd.f32 %v574, %v592
  %v594 = vpop.f32.mrf.mxu0
  %v595 = vadd.f32 %v576, %v594
  %596 = vmatmul.bf16.gmra.mxu0 %v150
  %v597 = vpop.f32.mrf.mxu0
  %v598 = vadd.f32 %v579, %v597
  %v599 = vpop.f32.mrf.mxu0
  %v600 = vadd.f32 %v581, %v599
  %601 = vdwg.mxu0
  %602 = vmatpush.bf16.msra.mxu0 %v450
  %603 = vmatpush.bf16.msra.mxu0 %v448
  %604 = vmatpush.bf16.msra.mxu0 %v446
  %605 = vmatpush.bf16.msra.mxu0 %v444
  %606 = vmatpush.bf16.msra.mxu0 %v442
  %607 = vmatpush.bf16.msra.mxu0 %v440
  %608 = vmatpush.bf16.msra.mxu0 %v438
  %609 = vmatpush.bf16.msra.mxu0 %v436
  %610 = vmatmul.bf16.gmra.mxu0 %v146
  %v611 = vpop.f32.mrf.mxu0
  %v612 = vadd.f32 %v593, %v611
  %v613 = vpop.f32.mrf.mxu0
  %v614 = vadd.f32 %v595, %v613
  %615 = vmatmul.bf16.gmra.mxu0 %v151
  %v616 = vpop.f32.mrf.mxu0
  %v617 = vadd.f32 %v598, %v616
  %v618 = vpop.f32.mrf.mxu0
  %v619 = vadd.f32 %v600, %v618
  %620 = vdwg.mxu0
  %621 = vmatpush.bf16.msra.mxu0 %v466
  %622 = vmatpush.bf16.msra.mxu0 %v464
  %623 = vmatpush.bf16.msra.mxu0 %v462
  %624 = vmatpush.bf16.msra.mxu0 %v460
  %625 = vmatpush.bf16.msra.mxu0 %v458
  %626 = vmatpush.bf16.msra.mxu0 %v456
  %627 = vmatpush.bf16.msra.mxu0 %v454
  %628 = vmatpush.bf16.msra.mxu0 %v452
  %629 = vmatmul.bf16.gmra.mxu0 %v147
  %v630 = vpop.f32.mrf.mxu0
  %v631 = vadd.f32 %v612, %v630
  %v632 = vpop.f32.mrf.mxu0
  %v633 = vadd.f32 %v614, %v632
  %634 = vmatmul.bf16.gmra.mxu0 %v152
  %v635 = vpop.f32.mrf.mxu0
  %v636 = vadd.f32 %v617, %v635
  %v637 = vpop.f32.mrf.mxu0
  %v638 = vadd.f32 %v619, %v637
  %639 = vdwg.mxu0
  %640 = vmatpush.bf16.msra.mxu0 %v482
  %641 = vmatpush.bf16.msra.mxu0 %v480
  %642 = vmatpush.bf16.msra.mxu0 %v478
  %643 = vmatpush.bf16.msra.mxu0 %v476
  %644 = vmatpush.bf16.msra.mxu0 %v474
  %645 = vmatpush.bf16.msra.mxu0 %v472
  %646 = vmatpush.bf16.msra.mxu0 %v470
  %647 = vmatpush.bf16.msra.mxu0 %v468
  %648 = vmatmul.bf16.gmra.mxu0 %v148
  %v649 = vpop.f32.mrf.mxu0
  %v650 = vadd.f32 %v631, %v649
  %v651 = vpop.f32.mrf.mxu0
  %v652 = vadd.f32 %v633, %v651
  %653 = vmatmul.bf16.gmra.mxu0 %v153
  %v654 = vpop.f32.mrf.mxu0
  %v655 = vadd.f32 %v636, %v654
  %v656 = vpop.f32.mrf.mxu0
  %v657 = vadd.f32 %v638, %v656
  %658 = vdwg.mxu0
  %659 = vmatpush.bf16.msra.mxu0 %v419
  %660 = vmatpush.bf16.msra.mxu0 %v417
  %661 = vmatpush.bf16.msra.mxu0 %v415
  %662 = vmatpush.bf16.msra.mxu0 %v413
  %663 = vmatpush.bf16.msra.mxu0 %v411
  %664 = vmatpush.bf16.msra.mxu0 %v409
  %665 = vmatpush.bf16.msra.mxu0 %v407
  %666 = vmatpush.bf16.msra.mxu0 %v405
  %667 = vmatmul.bf16.gmra.mxu0 %v144
  %v668 = vpop.f32.mrf.mxu0
  %v669 = vadd.f32 %v109, %v668
  %v670 = vpop.f32.mrf.mxu0
  %v671 = vadd.f32 %v109, %v670
  %672 = vmatmul.bf16.gmra.mxu0 %v149
  %v673 = vpop.f32.mrf.mxu0
  %v674 = vadd.f32 %v109, %v673
  %v675 = vpop.f32.mrf.mxu0
  %v676 = vadd.f32 %v109, %v675
  %677 = vdwg.mxu0
  %678 = vmatpush.bf16.msra.mxu0 %v435
  %679 = vmatpush.bf16.msra.mxu0 %v433
  %680 = vmatpush.bf16.msra.mxu0 %v431
  %681 = vmatpush.bf16.msra.mxu0 %v429
  %682 = vmatpush.bf16.msra.mxu0 %v427
  %683 = vmatpush.bf16.msra.mxu0 %v425
  %684 = vmatpush.bf16.msra.mxu0 %v423
  %685 = vmatpush.bf16.msra.mxu0 %v421
  %686 = vmatmul.bf16.gmra.mxu0 %v145
  %v687 = vpop.f32.mrf.mxu0
  %v688 = vadd.f32 %v669, %v687
  %v689 = vpop.f32.mrf.mxu0
  %v690 = vadd.f32 %v671, %v689
  %691 = vmatmul.bf16.gmra.mxu0 %v150
  %v692 = vpop.f32.mrf.mxu0
  %v693 = vadd.f32 %v674, %v692
  %v694 = vpop.f32.mrf.mxu0
  %v695 = vadd.f32 %v676, %v694
  %696 = vdwg.mxu0
  %697 = vmatpush.bf16.msra.mxu0 %v451
  %698 = vmatpush.bf16.msra.mxu0 %v449
  %699 = vmatpush.bf16.msra.mxu0 %v447
  %700 = vmatpush.bf16.msra.mxu0 %v445
  %701 = vmatpush.bf16.msra.mxu0 %v443
  %702 = vmatpush.bf16.msra.mxu0 %v441
  %703 = vmatpush.bf16.msra.mxu0 %v439
  %704 = vmatpush.bf16.msra.mxu0 %v437
  %705 = vmatmul.bf16.gmra.mxu0 %v146
  %v706 = vpop.f32.mrf.mxu0
  %v707 = vadd.f32 %v688, %v706
  %v708 = vpop.f32.mrf.mxu0
  %v709 = vadd.f32 %v690, %v708
  %710 = vmatmul.bf16.gmra.mxu0 %v151
  %v711 = vpop.f32.mrf.mxu0
  %v712 = vadd.f32 %v693, %v711
  %v713 = vpop.f32.mrf.mxu0
  %v714 = vadd.f32 %v695, %v713
  %715 = vdwg.mxu0
  %716 = vmatpush.bf16.msra.mxu0 %v467
  %717 = vmatpush.bf16.msra.mxu0 %v465
  %718 = vmatpush.bf16.msra.mxu0 %v463
  %719 = vmatpush.bf16.msra.mxu0 %v461
  %720 = vmatpush.bf16.msra.mxu0 %v459
  %721 = vmatpush.bf16.msra.mxu0 %v457
  %722 = vmatpush.bf16.msra.mxu0 %v455
  %723 = vmatpush.bf16.msra.mxu0 %v453
  %724 = vmatmul.bf16.gmra.mxu0 %v147
  %v725 = vpop.f32.mrf.mxu0
  %v726 = vadd.f32 %v707, %v725
  %v727 = vpop.f32.mrf.mxu0
  %v728 = vadd.f32 %v709, %v727
  %729 = vmatmul.bf16.gmra.mxu0 %v152
  %v730 = vpop.f32.mrf.mxu0
  %v731 = vadd.f32 %v712, %v730
  %v732 = vpop.f32.mrf.mxu0
  %v733 = vadd.f32 %v714, %v732
  %734 = vdwg.mxu0
  %735 = vmatpush.bf16.msra.mxu0 %v483
  %736 = vmatpush.bf16.msra.mxu0 %v481
  %737 = vmatpush.bf16.msra.mxu0 %v479
  %738 = vmatpush.bf16.msra.mxu0 %v477
  %739 = vmatpush.bf16.msra.mxu0 %v475
  %740 = vmatpush.bf16.msra.mxu0 %v473
  %741 = vmatpush.bf16.msra.mxu0 %v471
  %742 = vmatpush.bf16.msra.mxu0 %v469
  %743 = vmatmul.bf16.gmra.mxu0 %v148
  %v744 = vpop.f32.mrf.mxu0
  %v745 = vadd.f32 %v726, %v744
  %v746 = vpop.f32.mrf.mxu0
  %v747 = vadd.f32 %v728, %v746
  %748 = vmatmul.bf16.gmra.mxu0 %v153
  %v749 = vpop.f32.mrf.mxu0
  %v750 = vadd.f32 %v731, %v749
  %v751 = vpop.f32.mrf.mxu0
  %v752 = vadd.f32 %v733, %v751
  %753 = vdwg.mxu0
  %vm754 = vcmp.gt.f32.partialorder %v650, 0.0
  %vm755 = vcmp.gt.f32.partialorder %v745, 0.0
  %vm756 = vcmp.gt.f32.partialorder %v652, 0.0
  %vm757 = vcmp.gt.f32.partialorder %v747, 0.0
  %vm758 = vcmp.gt.f32.partialorder %v655, 0.0
  %vm759 = vcmp.gt.f32.partialorder %v750, 0.0
  %vm760 = vcmp.gt.f32.partialorder %v657, 0.0
  %vm761 = vcmp.gt.f32.partialorder %v752, 0.0
  %v762 = vmul.f32 %v650, 1.442695
  %v763 = vpow.pop %v762
  %v764 = vmul.f32 %v745, 1.442695
  %v765 = vpow.pop %v764
  %v766 = vmul.f32 %v652, 1.442695
  %v767 = vpow.pop %v766
  %v768 = vmul.f32 %v747, 1.442695
  %v769 = vpow.pop %v768
  %v770 = vmul.f32 %v655, 1.442695
  %v771 = vpow.pop %v770
  %v772 = vmul.f32 %v750, 1.442695
  %v773 = vpow.pop %v772
  %v774 = vmul.f32 %v657, 1.442695
  %v775 = vpow.pop %v774
  %v776 = vmul.f32 %v752, 1.442695
  %v777 = vpow.pop %v776
  %v778 = vsub.f32 %v763, 1.0
  %v779 = vsub.f32 %v765, 1.0
  %v780 = vsub.f32 %v767, 1.0
  %v781 = vsub.f32 %v769, 1.0
  %v782 = vsub.f32 %v771, 1.0
  %v783 = vsub.f32 %v773, 1.0
  %v784 = vsub.f32 %v775, 1.0
  %v785 = vsub.f32 %v777, 1.0
  %v786 = vmul.f32 %v778, 1.6732632
  %v787 = vmul.f32 %v779, 1.6732632
  %v788 = vmul.f32 %v780, 1.6732632
  %v789 = vmul.f32 %v781, 1.6732632
  %v790 = vmul.f32 %v782, 1.6732632
  %v791 = vmul.f32 %v783, 1.6732632
  %v792 = vmul.f32 %v784, 1.6732632
  %v793 = vmul.f32 %v785, 1.6732632
  %v794 = vsel %vm754, %v650, %v786
  %v795 = vsel %vm755, %v745, %v787
  %v796 = vsel %vm756, %v652, %v788
  %v797 = vsel %vm757, %v747, %v789
  %v798 = vsel %vm758, %v655, %v790
  %v799 = vsel %vm759, %v750, %v791
  %v800 = vsel %vm760, %v657, %v792
  %v801 = vsel %vm761, %v752, %v793
  %v802 = vmul.f32 %v794, 1.050701
  %v803 = vmul.f32 %v795, 1.050701
  %v804 = vmul.f32 %v796, 1.050701
  %v805 = vmul.f32 %v797, 1.050701
  %v806 = vmul.f32 %v798, 1.050701
  %v807 = vmul.f32 %v799, 1.050701
  %v808 = vmul.f32 %v800, 1.050701
  %v809 = vmul.f32 %v801, 1.050701
  %810 = vst [vmem:[%s3] sm:$0xff] %v802
  %811 = vst [vmem:[%s3 + $0x8] sm:$0xff] %v803
  %812 = vst [vmem:[%s3 + $0x10] sm:$0xff] %v804
  %813 = vst [vmem:[%s3 + $0x18] sm:$0xff] %v805
  %814 = vst [vmem:[%s3 + $0x20] sm:$0xff] %v806
  %815 = vst [vmem:[%s3 + $0x28] sm:$0xff] %v807
  %816 = vst [vmem:[%s3 + $0x30] sm:$0xff] %v808
  %817 = vst [vmem:[%s3 + $0x38] sm:$0xff] %v809
  // Predicated region
  $region14: #{vae_forward.11} parent=0 // pred_check
    _
  $region15: #{vae_forward.11} parent=0 // pred_check_branch
    %819 = sbr.rel (0) target = $region17
  $region16: #{vae_forward.11} parent=0 // pred_region
    _
  $region17: #{vae_forward.11} parent=0 // pred_fallthru
    _
  // Predicated region
  $region18: #{vae_forward.11} parent=0 // pred_check
    _
  $region19: #{vae_forward.11} parent=0 // pred_check_branch
    %821 = sbr.rel (0) target = $region21
  $region20: #{vae_forward.11} parent=0 // pred_region
    _
  $region21: #{vae_forward.11} parent=0 // pred_fallthru
    _

// kernel: vae_forward.12
$region0: #{vae_forward.12}
  #allocation0 [shape = 'u32[]', space=smem, size = 0x4, offset = 0x4, fixed_abs, tag = 'smem constant byte address 0x4 - core index']
  #allocation1 [shape = 'u32[72,128]{1,0:T(1,128)}', space=vmem, size = 0x9000, scoped, tag = 'internal scratch']
  %s0 = inlined_call_operand.vmem [shape: bf16[128,640], index: 0, kind: input, shape index: {}]
  %s1 = inlined_call_operand.vmem [shape: bf16[640,256], index: 1, kind: input, shape index: {}]
  %s2 = inlined_call_operand.vmem [shape: f32[1,256], index: 2, kind: input, shape index: {}]
  %s3 = inlined_call_operand.vmem [shape: f32[128,256], index: 3, kind: output, shape index: {}]
  %s4 = sld [smem:[#allocation0]]
  $region22: #{vae_forward.12} parent=0
    _
  %s6 = ssub.s32 1, %s4
  %s7 = scalar_select 0, %s6, %s4
  // Predicated region
  $region2: #{vae_forward.12} parent=0 // pred_check
    _
  $region3: #{vae_forward.12} parent=0 // pred_check_branch
    %9 = sbr.rel (0) target = $region5
  $region4: #{vae_forward.12} parent=0 // pred_region
    _
  $region5: #{vae_forward.12} parent=0 // pred_fallthru
    _
  // Predicated region
  $region6: #{vae_forward.12} parent=0 // pred_check
    _
  $region7: #{vae_forward.12} parent=0 // pred_check_branch
    %11 = sbr.rel (0) target = $region9
  $region8: #{vae_forward.12} parent=0 // pred_region
    _
  $region9: #{vae_forward.12} parent=0 // pred_fallthru
    _
  // Predicated region
  $region10: #{vae_forward.12} parent=0 // pred_check
    _
  $region11: #{vae_forward.12} parent=0 // pred_check_branch
    %13 = sbr.rel (0) target = $region13
  $region12: #{vae_forward.12} parent=0 // pred_region
    _
  $region13: #{vae_forward.12} parent=0 // pred_fallthru
    _
  %v14 = vld [vmem:[%s0] sm:$0xff]
  %v15 = vld [vmem:[%s0 + $0x8] sm:$0xff]
  %v16 = vld [vmem:[%s0 + $0x10] sm:$0xf]
  %v17 = vld [vmem:[%s0 + $0x14] sm:$0xff]
  %v18 = vld [vmem:[%s0 + $0x1c] sm:$0xff]
  %v19 = vld [vmem:[%s0 + $0x24] sm:$0xf]
  %v20 = vld [vmem:[%s0 + $0x28] sm:$0xff]
  %v21 = vld [vmem:[%s0 + $0x30] sm:$0xff]
  %v22 = vld [vmem:[%s0 + $0x38] sm:$0xf]
  %v23 = vld [vmem:[%s0 + $0x3c] sm:$0xff]
  %v24 = vld [vmem:[%s0 + $0x44] sm:$0xff]
  %v25 = vld [vmem:[%s0 + $0x4c] sm:$0xf]
  %v26 = vld [vmem:[%s0 + $0x50] sm:$0xff]
  %v27 = vld [vmem:[%s0 + $0x58] sm:$0xff]
  %v28 = vld [vmem:[%s0 + $0x60] sm:$0xf]
  %v29 = vld [vmem:[%s0 + $0x64] sm:$0xff]
  %v30 = vld [vmem:[%s0 + $0x6c] sm:$0xff]
  %v31 = vld [vmem:[%s0 + $0x74] sm:$0xf]
  %v32 = vld [vmem:[%s0 + $0x78] sm:$0xff]
  %v33 = vld [vmem:[%s0 + $0x80] sm:$0xff]
  %v34 = vld [vmem:[%s0 + $0x88] sm:$0xf]
  %v35 = vld [vmem:[%s0 + $0x8c] sm:$0xff]
  %v36 = vld [vmem:[%s0 + $0x94] sm:$0xff]
  %v37 = vld [vmem:[%s0 + $0x9c] sm:$0xf]
  %v38 = vld [vmem:[%s0 + $0xa0] sm:$0xff]
  %v39 = vld [vmem:[%s0 + $0xa8] sm:$0xff]
  %v40 = vld [vmem:[%s0 + $0xb0] sm:$0xf]
  %v41 = vld [vmem:[%s0 + $0xb4] sm:$0xff]
  %v42 = vld [vmem:[%s0 + $0xbc] sm:$0xff]
  %v43 = vld [vmem:[%s0 + $0xc4] sm:$0xf]
  %v44 = vld [vmem:[%s0 + $0xc8] sm:$0xff]
  %v45 = vld [vmem:[%s0 + $0xd0] sm:$0xff]
  %v46 = vld [vmem:[%s0 + $0xd8] sm:$0xf]
  %v47 = vld [vmem:[%s0 + $0xdc] sm:$0xff]
  %v48 = vld [vmem:[%s0 + $0xe4] sm:$0xff]
  %v49 = vld [vmem:[%s0 + $0xec] sm:$0xf]
  %v50 = vld [vmem:[%s0 + $0xf0] sm:$0xff]
  %v51 = vld [vmem:[%s0 + $0xf8] sm:$0xff]
  %v52 = vld [vmem:[%s0 + $0x100] sm:$0xf]
  %v53 = vld [vmem:[%s0 + $0x104] sm:$0xff]
  %v54 = vld [vmem:[%s0 + $0x10c] sm:$0xff]
  %v55 = vld [vmem:[%s0 + $0x114] sm:$0xf]
  %v56 = vld [vmem:[%s0 + $0x118] sm:$0xff]
  %v57 = vld [vmem:[%s0 + $0x120] sm:$0xff]
  %v58 = vld [vmem:[%s0 + $0x128] sm:$0xf]
  %v59 = vld [vmem:[%s0 + $0x12c] sm:$0xff]
  %v60 = vld [vmem:[%s0 + $0x134] sm:$0xff]
  %v61 = vld [vmem:[%s0 + $0x13c] sm:$0xf]
  %v62 = vld [vmem:[%s1] sm:$0xff]
  %v63 = vld [vmem:[%s1 + $0x8] sm:$0xff]
  %v64 = vld [vmem:[%s1 + $0x10] sm:$0xff]
  %v65 = vld [vmem:[%s1 + $0x18] sm:$0xff]
  %v66 = vld [vmem:[%s1 + $0x20] sm:$0xff]
  %v67 = vld [vmem:[%s1 + $0x28] sm:$0xff]
  %v68 = vld [vmem:[%s1 + $0x30] sm:$0xff]
  %v69 = vld [vmem:[%s1 + $0x38] sm:$0xff]
  %v70 = vld [vmem:[%s1 + $0x40] sm:$0xff]
  %v71 = vld [vmem:[%s1 + $0x48] sm:$0xff]
  %v72 = vld [vmem:[%s1 + $0x50] sm:$0xff]
  %v73 = vld [vmem:[%s1 + $0x58] sm:$0xff]
  %v74 = vld [vmem:[%s1 + $0x60] sm:$0xff]
  %v75 = vld [vmem:[%s1 + $0x68] sm:$0xff]
  %v76 = vld [vmem:[%s1 + $0x70] sm:$0xff]
  %v77 = vld [vmem:[%s1 + $0x78] sm:$0xff]
  %v78 = vld [vmem:[%s1 + $0x80] sm:$0xff]
  %v79 = vld [vmem:[%s1 + $0x88] sm:$0xff]
  %v80 = vld [vmem:[%s1 + $0x90] sm:$0xff]
  %v81 = vld [vmem:[%s1 + $0x98] sm:$0xff]
  %v82 = vld [vmem:[%s1 + $0xa0] sm:$0xff]
  %v83 = vld [vmem:[%s1 + $0xa8] sm:$0xff]
  %v84 = vld [vmem:[%s1 + $0xb0] sm:$0xff]
  %v85 = vld [vmem:[%s1 + $0xb8] sm:$0xff]
  %v86 = vld [vmem:[%s1 + $0xc0] sm:$0xff]
  %v87 = vld [vmem:[%s1 + $0xc8] sm:$0xff]
  %v88 = vld [vmem:[%s1 + $0xd0] sm:$0xff]
  %v89 = vld [vmem:[%s1 + $0xd8] sm:$0xff]
  %v90 = vld [vmem:[%s1 + $0xe0] sm:$0xff]
  %v91 = vld [vmem:[%s1 + $0xe8] sm:$0xff]
  %v92 = vld [vmem:[%s1 + $0xf0] sm:$0xff]
  %v93 = vld [vmem:[%s1 + $0xf8] sm:$0xff]
  %v94 = vld [vmem:[%s1 + $0x100] sm:$0xff]
  %v95 = vld [vmem:[%s1 + $0x108] sm:$0xff]
  %v96 = vld [vmem:[%s1 + $0x110] sm:$0xff]
  %v97 = vld [vmem:[%s1 + $0x118] sm:$0xff]
  %v98 = vld [vmem:[%s1 + $0x120] sm:$0xff]
  %v99 = vld [vmem:[%s1 + $0x128] sm:$0xff]
  %v100 = vld [vmem:[%s1 + $0x130] sm:$0xff]
  %v101 = vld [vmem:[%s1 + $0x138] sm:$0xff]
  %v102 = vld [vmem:[%s1 + $0x140] sm:$0xff]
  %v103 = vld [vmem:[%s1 + $0x148] sm:$0xff]
  %v104 = vld [vmem:[%s1 + $0x150] sm:$0xff]
  %v105 = vld [vmem:[%s1 + $0x158] sm:$0xff]
  %v106 = vld [vmem:[%s1 + $0x160] sm:$0xff]
  %v107 = vld [vmem:[%s1 + $0x168] sm:$0xff]
  %v108 = vld [vmem:[%s1 + $0x170] sm:$0xff]
  %v109 = vld [vmem:[%s1 + $0x178] sm:$0xff]
  %v110 = vld [vmem:[%s1 + $0x180] sm:$0xff]
  %v111 = vld [vmem:[%s1 + $0x188] sm:$0xff]
  %v112 = vld [vmem:[%s1 + $0x190] sm:$0xff]
  %v113 = vld [vmem:[%s1 + $0x198] sm:$0xff]
  %v114 = vld [vmem:[%s1 + $0x1a0] sm:$0xff]
  %v115 = vld [vmem:[%s1 + $0x1a8] sm:$0xff]
  %v116 = vld [vmem:[%s1 + $0x1b0] sm:$0xff]
  %v117 = vld [vmem:[%s1 + $0x1b8] sm:$0xff]
  %v118 = vld [vmem:[%s1 + $0x1c0] sm:$0xff]
  %v119 = vld [vmem:[%s1 + $0x1c8] sm:$0xff]
  %v120 = vld [vmem:[%s1 + $0x1d0] sm:$0xff]
  %v121 = vld [vmem:[%s1 + $0x1d8] sm:$0xff]
  %v122 = vld [vmem:[%s1 + $0x1e0] sm:$0xff]
  %v123 = vld [vmem:[%s1 + $0x1e8] sm:$0xff]
  %v124 = vld [vmem:[%s1 + $0x1f0] sm:$0xff]
  %v125 = vld [vmem:[%s1 + $0x1f8] sm:$0xff]
  %v126 = vld [vmem:[%s1 + $0x200] sm:$0xff]
  %v127 = vld [vmem:[%s1 + $0x208] sm:$0xff]
  %v128 = vld [vmem:[%s1 + $0x210] sm:$0xff]
  %v129 = vld [vmem:[%s1 + $0x218] sm:$0xff]
  %v130 = vld [vmem:[%s1 + $0x220] sm:$0xff]
  %v131 = vld [vmem:[%s1 + $0x228] sm:$0xff]
  %v132 = vld [vmem:[%s1 + $0x230] sm:$0xff]
  %v133 = vld [vmem:[%s1 + $0x238] sm:$0xff]
  %v134 = vld [vmem:[%s1 + $0x240] sm:$0xff]
  %v135 = vld [vmem:[%s1 + $0x248] sm:$0xff]
  %v136 = vld [vmem:[%s1 + $0x250] sm:$0xff]
  %v137 = vld [vmem:[%s1 + $0x258] sm:$0xff]
  %v138 = vld [vmem:[%s1 + $0x260] sm:$0xff]
  %v139 = vld [vmem:[%s1 + $0x268] sm:$0xff]
  %v140 = vld [vmem:[%s1 + $0x270] sm:$0xff]
  %v141 = vld [vmem:[%s1 + $0x278] sm:$0xff]
  %v142 = vld [vmem:[%s2] sm:$0x3]
  %v144 = vperm.slane %v142, 0
  %v145 = vperm.slane %v142, 1
  %v196 = vunpack.c.l.b16 %v14
  %v197 = vunpack.c.h.b16 %v14
  %v198 = vunpack.c.l.b16 %v15
  %v199 = vunpack.c.h.b16 %v15
  %v200 = vunpack.c.l.b16 %v16
  %v201 = vunpack.c.l.b16 %v17
  %v202 = vunpack.c.h.b16 %v17
  %v203 = vunpack.c.l.b16 %v18
  %v204 = vunpack.c.h.b16 %v18
  %v205 = vunpack.c.l.b16 %v19
  %v206 = vunpack.c.l.b16 %v20
  %v207 = vunpack.c.h.b16 %v20
  %v208 = vunpack.c.l.b16 %v21
  %v209 = vunpack.c.h.b16 %v21
  %v210 = vunpack.c.l.b16 %v22
  %v211 = vunpack.c.l.b16 %v23
  %v212 = vunpack.c.h.b16 %v23
  %v213 = vunpack.c.l.b16 %v24
  %v214 = vunpack.c.h.b16 %v24
  %v215 = vunpack.c.l.b16 %v25
  %v216 = vunpack.c.l.b16 %v26
  %v217 = vunpack.c.h.b16 %v26
  %v218 = vunpack.c.l.b16 %v27
  %v219 = vunpack.c.h.b16 %v27
  %v220 = vunpack.c.l.b16 %v28
  %v221 = vunpack.c.l.b16 %v29
  %v222 = vunpack.c.h.b16 %v29
  %v223 = vunpack.c.l.b16 %v30
  %v224 = vunpack.c.h.b16 %v30
  %v225 = vunpack.c.l.b16 %v31
  %v226 = vunpack.c.l.b16 %v32
  %v227 = vunpack.c.h.b16 %v32
  %v228 = vunpack.c.l.b16 %v33
  %v229 = vunpack.c.h.b16 %v33
  %v230 = vunpack.c.l.b16 %v34
  %v231 = vunpack.c.l.b16 %v35
  %v232 = vunpack.c.h.b16 %v35
  %v233 = vunpack.c.l.b16 %v36
  %v234 = vunpack.c.h.b16 %v36
  %v235 = vunpack.c.l.b16 %v37
  %v236 = vunpack.c.l.b16 %v38
  %v237 = vunpack.c.h.b16 %v38
  %v238 = vunpack.c.l.b16 %v39
  %v239 = vunpack.c.h.b16 %v39
  %v240 = vunpack.c.l.b16 %v40
  %v241 = vunpack.c.l.b16 %v41
  %v242 = vunpack.c.h.b16 %v41
  %v243 = vunpack.c.l.b16 %v42
  %v244 = vunpack.c.h.b16 %v42
  %v245 = vunpack.c.l.b16 %v43
  %v246 = vunpack.c.l.b16 %v44
  %v247 = vunpack.c.h.b16 %v44
  %v248 = vunpack.c.l.b16 %v45
  %v249 = vunpack.c.h.b16 %v45
  %v250 = vunpack.c.l.b16 %v46
  %v251 = vunpack.c.l.b16 %v47
  %v252 = vunpack.c.h.b16 %v47
  %v253 = vunpack.c.l.b16 %v48
  %v254 = vunpack.c.h.b16 %v48
  %v255 = vunpack.c.l.b16 %v49
  %v256 = vunpack.c.l.b16 %v50
  %v257 = vunpack.c.h.b16 %v50
  %v258 = vunpack.c.l.b16 %v51
  %v259 = vunpack.c.h.b16 %v51
  %v260 = vunpack.c.l.b16 %v52
  %v261 = vunpack.c.l.b16 %v53
  %v262 = vunpack.c.h.b16 %v53
  %v263 = vunpack.c.l.b16 %v54
  %v264 = vunpack.c.h.b16 %v54
  %v265 = vunpack.c.l.b16 %v55
  %v266 = vunpack.c.l.b16 %v56
  %v267 = vunpack.c.h.b16 %v56
  %v268 = vunpack.c.l.b16 %v57
  %v269 = vunpack.c.h.b16 %v57
  %v270 = vunpack.c.l.b16 %v58
  %v271 = vunpack.c.l.b16 %v59
  %v272 = vunpack.c.h.b16 %v59
  %v273 = vunpack.c.l.b16 %v60
  %v274 = vunpack.c.h.b16 %v60
  %v275 = vunpack.c.l.b16 %v61
  %v276 = vpack.c.b16 %v201, %v196
  %v277 = vpack.c.b16 %v202, %v197
  %v278 = vpack.c.b16 %v203, %v198
  %v279 = vpack.c.b16 %v204, %v199
  %v280 = vpack.c.b16 %v205, %v200
  %v281 = vpack.c.b16 %v211, %v206
  %v282 = vpack.c.b16 %v212, %v207
  %v283 = vpack.c.b16 %v213, %v208
  %v284 = vpack.c.b16 %v214, %v209
  %v285 = vpack.c.b16 %v215, %v210
  %v286 = vpack.c.b16 %v221, %v216
  %v287 = vpack.c.b16 %v222, %v217
  %v288 = vpack.c.b16 %v223, %v218
  %v289 = vpack.c.b16 %v224, %v219
  %v290 = vpack.c.b16 %v225, %v220
  %v291 = vpack.c.b16 %v231, %v226
  %v292 = vpack.c.b16 %v232, %v227
  %v293 = vpack.c.b16 %v233, %v228
  %v294 = vpack.c.b16 %v234, %v229
  %v295 = vpack.c.b16 %v235, %v230
  %v296 = vpack.c.b16 %v241, %v236
  %v297 = vpack.c.b16 %v242, %v237
  %v298 = vpack.c.b16 %v243, %v238
  %v299 = vpack.c.b16 %v244, %v239
  %v300 = vpack.c.b16 %v245, %v240
  %v301 = vpack.c.b16 %v251, %v246
  %v302 = vpack.c.b16 %v252, %v247
  %v303 = vpack.c.b16 %v253, %v248
  %v304 = vpack.c.b16 %v254, %v249
  %v305 = vpack.c.b16 %v255, %v250
  %v306 = vpack.c.b16 %v261, %v256
  %v307 = vpack.c.b16 %v262, %v257
  %v308 = vpack.c.b16 %v263, %v258
  %v309 = vpack.c.b16 %v264, %v259
  %v310 = vpack.c.b16 %v265, %v260
  %v311 = vpack.c.b16 %v271, %v266
  %v312 = vpack.c.b16 %v272, %v267
  %v313 = vpack.c.b16 %v273, %v268
  %v314 = vpack.c.b16 %v274, %v269
  %v315 = vpack.c.b16 %v275, %v270
  %v436 = vunpack.c.l.b16 %v62
  %v437 = vunpack.c.h.b16 %v62
  %v438 = vunpack.c.l.b16 %v63
  %v439 = vunpack.c.h.b16 %v63
  %v440 = vunpack.c.l.b16 %v64
  %v441 = vunpack.c.h.b16 %v64
  %v442 = vunpack.c.l.b16 %v65
  %v443 = vunpack.c.h.b16 %v65
  %v444 = vunpack.c.l.b16 %v66
  %v445 = vunpack.c.h.b16 %v66
  %v446 = vunpack.c.l.b16 %v67
  %v447 = vunpack.c.h.b16 %v67
  %v448 = vunpack.c.l.b16 %v68
  %v449 = vunpack.c.h.b16 %v68
  %v450 = vunpack.c.l.b16 %v69
  %v451 = vunpack.c.h.b16 %v69
  %v452 = vunpack.c.l.b16 %v70
  %v453 = vunpack.c.h.b16 %v70
  %v454 = vunpack.c.l.b16 %v71
  %v455 = vunpack.c.h.b16 %v71
  %v456 = vunpack.c.l.b16 %v72
  %v457 = vunpack.c.h.b16 %v72
  %v458 = vunpack.c.l.b16 %v73
  %v459 = vunpack.c.h.b16 %v73
  %v460 = vunpack.c.l.b16 %v74
  %v461 = vunpack.c.h.b16 %v74
  %v462 = vunpack.c.l.b16 %v75
  %v463 = vunpack.c.h.b16 %v75
  %v464 = vunpack.c.l.b16 %v76
  %v465 = vunpack.c.h.b16 %v76
  %v466 = vunpack.c.l.b16 %v77
  %v467 = vunpack.c.h.b16 %v77
  %v468 = vunpack.c.l.b16 %v78
  %v469 = vunpack.c.h.b16 %v78
  %v470 = vunpack.c.l.b16 %v79
  %v471 = vunpack.c.h.b16 %v79
  %v472 = vunpack.c.l.b16 %v80
  %v473 = vunpack.c.h.b16 %v80
  %v474 = vunpack.c.l.b16 %v81
  %v475 = vunpack.c.h.b16 %v81
  %v476 = vunpack.c.l.b16 %v82
  %v477 = vunpack.c.h.b16 %v82
  %v478 = vunpack.c.l.b16 %v83
  %v479 = vunpack.c.h.b16 %v83
  %v480 = vunpack.c.l.b16 %v84
  %v481 = vunpack.c.h.b16 %v84
  %v482 = vunpack.c.l.b16 %v85
  %v483 = vunpack.c.h.b16 %v85
  %v484 = vunpack.c.l.b16 %v86
  %v485 = vunpack.c.h.b16 %v86
  %v486 = vunpack.c.l.b16 %v87
  %v487 = vunpack.c.h.b16 %v87
  %v488 = vunpack.c.l.b16 %v88
  %v489 = vunpack.c.h.b16 %v88
  %v490 = vunpack.c.l.b16 %v89
  %v491 = vunpack.c.h.b16 %v89
  %v492 = vunpack.c.l.b16 %v90
  %v493 = vunpack.c.h.b16 %v90
  %v494 = vunpack.c.l.b16 %v91
  %v495 = vunpack.c.h.b16 %v91
  %v496 = vunpack.c.l.b16 %v92
  %v497 = vunpack.c.h.b16 %v92
  %v498 = vunpack.c.l.b16 %v93
  %v499 = vunpack.c.h.b16 %v93
  %v500 = vunpack.c.l.b16 %v94
  %v501 = vunpack.c.h.b16 %v94
  %v502 = vunpack.c.l.b16 %v95
  %v503 = vunpack.c.h.b16 %v95
  %v504 = vunpack.c.l.b16 %v96
  %v505 = vunpack.c.h.b16 %v96
  %v506 = vunpack.c.l.b16 %v97
  %v507 = vunpack.c.h.b16 %v97
  %v508 = vunpack.c.l.b16 %v98
  %v509 = vunpack.c.h.b16 %v98
  %v510 = vunpack.c.l.b16 %v99
  %v511 = vunpack.c.h.b16 %v99
  %v512 = vunpack.c.l.b16 %v100
  %v513 = vunpack.c.h.b16 %v100
  %v514 = vunpack.c.l.b16 %v101
  %v515 = vunpack.c.h.b16 %v101
  %v516 = vunpack.c.l.b16 %v102
  %v517 = vunpack.c.h.b16 %v102
  %v518 = vunpack.c.l.b16 %v103
  %v519 = vunpack.c.h.b16 %v103
  %v520 = vunpack.c.l.b16 %v104
  %v521 = vunpack.c.h.b16 %v104
  %v522 = vunpack.c.l.b16 %v105
  %v523 = vunpack.c.h.b16 %v105
  %v524 = vunpack.c.l.b16 %v106
  %v525 = vunpack.c.h.b16 %v106
  %v526 = vunpack.c.l.b16 %v107
  %v527 = vunpack.c.h.b16 %v107
  %v528 = vunpack.c.l.b16 %v108
  %v529 = vunpack.c.h.b16 %v108
  %v530 = vunpack.c.l.b16 %v109
  %v531 = vunpack.c.h.b16 %v109
  %v532 = vunpack.c.l.b16 %v110
  %v533 = vunpack.c.h.b16 %v110
  %v534 = vunpack.c.l.b16 %v111
  %v535 = vunpack.c.h.b16 %v111
  %v536 = vunpack.c.l.b16 %v112
  %v537 = vunpack.c.h.b16 %v112
  %v538 = vunpack.c.l.b16 %v113
  %v539 = vunpack.c.h.b16 %v113
  %v540 = vunpack.c.l.b16 %v114
  %v541 = vunpack.c.h.b16 %v114
  %v542 = vunpack.c.l.b16 %v115
  %v543 = vunpack.c.h.b16 %v115
  %v544 = vunpack.c.l.b16 %v116
  %v545 = vunpack.c.h.b16 %v116
  %v546 = vunpack.c.l.b16 %v117
  %v547 = vunpack.c.h.b16 %v117
  %v548 = vunpack.c.l.b16 %v118
  %v549 = vunpack.c.h.b16 %v118
  %v550 = vunpack.c.l.b16 %v119
  %v551 = vunpack.c.h.b16 %v119
  %v552 = vunpack.c.l.b16 %v120
  %v553 = vunpack.c.h.b16 %v120
  %v554 = vunpack.c.l.b16 %v121
  %v555 = vunpack.c.h.b16 %v121
  %v556 = vunpack.c.l.b16 %v122
  %v557 = vunpack.c.h.b16 %v122
  %v558 = vunpack.c.l.b16 %v123
  %v559 = vunpack.c.h.b16 %v123
  %v560 = vunpack.c.l.b16 %v124
  %v561 = vunpack.c.h.b16 %v124
  %v562 = vunpack.c.l.b16 %v125
  %v563 = vunpack.c.h.b16 %v125
  %v564 = vunpack.c.l.b16 %v126
  %v565 = vunpack.c.h.b16 %v126
  %v566 = vunpack.c.l.b16 %v127
  %v567 = vunpack.c.h.b16 %v127
  %v568 = vunpack.c.l.b16 %v128
  %v569 = vunpack.c.h.b16 %v128
  %v570 = vunpack.c.l.b16 %v129
  %v571 = vunpack.c.h.b16 %v129
  %v572 = vunpack.c.l.b16 %v130
  %v573 = vunpack.c.h.b16 %v130
  %v574 = vunpack.c.l.b16 %v131
  %v575 = vunpack.c.h.b16 %v131
  %v576 = vunpack.c.l.b16 %v132
  %v577 = vunpack.c.h.b16 %v132
  %v578 = vunpack.c.l.b16 %v133
  %v579 = vunpack.c.h.b16 %v133
  %v580 = vunpack.c.l.b16 %v134
  %v581 = vunpack.c.h.b16 %v134
  %v582 = vunpack.c.l.b16 %v135
  %v583 = vunpack.c.h.b16 %v135
  %v584 = vunpack.c.l.b16 %v136
  %v585 = vunpack.c.h.b16 %v136
  %v586 = vunpack.c.l.b16 %v137
  %v587 = vunpack.c.h.b16 %v137
  %v588 = vunpack.c.l.b16 %v138
  %v589 = vunpack.c.h.b16 %v138
  %v590 = vunpack.c.l.b16 %v139
  %v591 = vunpack.c.h.b16 %v139
  %v592 = vunpack.c.l.b16 %v140
  %v593 = vunpack.c.h.b16 %v140
  %v594 = vunpack.c.l.b16 %v141
  %v595 = vunpack.c.h.b16 %v141
  %v596 = vpack.c.b16 %v438, %v436
  %v597 = vpack.c.b16 %v439, %v437
  %v598 = vpack.c.b16 %v442, %v440
  %v599 = vpack.c.b16 %v443, %v441
  %v600 = vpack.c.b16 %v446, %v444
  %v601 = vpack.c.b16 %v447, %v445
  %v602 = vpack.c.b16 %v450, %v448
  %v603 = vpack.c.b16 %v451, %v449
  %v604 = vpack.c.b16 %v454, %v452
  %v605 = vpack.c.b16 %v455, %v453
  %v606 = vpack.c.b16 %v458, %v456
  %v607 = vpack.c.b16 %v459, %v457
  %v608 = vpack.c.b16 %v462, %v460
  %v609 = vpack.c.b16 %v463, %v461
  %v610 = vpack.c.b16 %v466, %v464
  %v611 = vpack.c.b16 %v467, %v465
  %v612 = vpack.c.b16 %v470, %v468
  %v613 = vpack.c.b16 %v471, %v469
  %v614 = vpack.c.b16 %v474, %v472
  %v615 = vpack.c.b16 %v475, %v473
  %v616 = vpack.c.b16 %v478, %v476
  %v617 = vpack.c.b16 %v479, %v477
  %v618 = vpack.c.b16 %v482, %v480
  %v619 = vpack.c.b16 %v483, %v481
  %v620 = vpack.c.b16 %v486, %v484
  %v621 = vpack.c.b16 %v487, %v485
  %v622 = vpack.c.b16 %v490, %v488
  %v623 = vpack.c.b16 %v491, %v489
  %v624 = vpack.c.b16 %v494, %v492
  %v625 = vpack.c.b16 %v495, %v493
  %v626 = vpack.c.b16 %v498, %v496
  %v627 = vpack.c.b16 %v499, %v497
  %v628 = vpack.c.b16 %v502, %v500
  %v629 = vpack.c.b16 %v503, %v501
  %v630 = vpack.c.b16 %v506, %v504
  %v631 = vpack.c.b16 %v507, %v505
  %v632 = vpack.c.b16 %v510, %v508
  %v633 = vpack.c.b16 %v511, %v509
  %v634 = vpack.c.b16 %v514, %v512
  %v635 = vpack.c.b16 %v515, %v513
  %v636 = vpack.c.b16 %v518, %v516
  %v637 = vpack.c.b16 %v519, %v517
  %v638 = vpack.c.b16 %v522, %v520
  %v639 = vpack.c.b16 %v523, %v521
  %v640 = vpack.c.b16 %v526, %v524
  %v641 = vpack.c.b16 %v527, %v525
  %v642 = vpack.c.b16 %v530, %v528
  %v643 = vpack.c.b16 %v531, %v529
  %v644 = vpack.c.b16 %v534, %v532
  %v645 = vpack.c.b16 %v535, %v533
  %v646 = vpack.c.b16 %v538, %v536
  %v647 = vpack.c.b16 %v539, %v537
  %v648 = vpack.c.b16 %v542, %v540
  %v649 = vpack.c.b16 %v543, %v541
  %v650 = vpack.c.b16 %v546, %v544
  %v651 = vpack.c.b16 %v547, %v545
  %v652 = vpack.c.b16 %v550, %v548
  %v653 = vpack.c.b16 %v551, %v549
  %v654 = vpack.c.b16 %v554, %v552
  %v655 = vpack.c.b16 %v555, %v553
  %v656 = vpack.c.b16 %v558, %v556
  %v657 = vpack.c.b16 %v559, %v557
  %v658 = vpack.c.b16 %v562, %v560
  %v659 = vpack.c.b16 %v563, %v561
  %v660 = vpack.c.b16 %v566, %v564
  %v661 = vpack.c.b16 %v567, %v565
  %v662 = vpack.c.b16 %v570, %v568
  %v663 = vpack.c.b16 %v571, %v569
  %v664 = vpack.c.b16 %v574, %v572
  %v665 = vpack.c.b16 %v575, %v573
  %v666 = vpack.c.b16 %v578, %v576
  %v667 = vpack.c.b16 %v579, %v577
  %v668 = vpack.c.b16 %v582, %v580
  %v669 = vpack.c.b16 %v583, %v581
  %v670 = vpack.c.b16 %v586, %v584
  %v671 = vpack.c.b16 %v587, %v585
  %v672 = vpack.c.b16 %v590, %v588
  %v673 = vpack.c.b16 %v591, %v589
  %v674 = vpack.c.b16 %v594, %v592
  %v675 = vpack.c.b16 %v595, %v593
  %756 = vmatpush.bf16.msra.mxu0 %v610
  %757 = vmatpush.bf16.msra.mxu0 %v608
  %758 = vmatpush.bf16.msra.mxu0 %v606
  %759 = vmatpush.bf16.msra.mxu0 %v604
  %760 = vmatpush.bf16.msra.mxu0 %v602
  %761 = vmatpush.bf16.msra.mxu0 %v600
  %762 = vmatpush.bf16.msra.mxu0 %v598
  %763 = vmatpush.bf16.msra.mxu0 %v596
  %764 = vmatmul.bf16.gmra.mxu0 %v276
  %v765 = vpop.f32.mrf.mxu0
  %v766 = vadd.f32 %v144, %v765
  %v767 = vpop.f32.mrf.mxu0
  %v768 = vadd.f32 %v144, %v767
  %769 = vmatmul.bf16.gmra.mxu0 %v281
  %v770 = vpop.f32.mrf.mxu0
  %v771 = vadd.f32 %v144, %v770
  %v772 = vpop.f32.mrf.mxu0
  %v773 = vadd.f32 %v144, %v772
  %774 = vmatmul.bf16.gmra.mxu0 %v286
  %v775 = vpop.f32.mrf.mxu0
  %v776 = vadd.f32 %v144, %v775
  %v777 = vpop.f32.mrf.mxu0
  %v778 = vadd.f32 %v144, %v777
  %779 = vmatmul.bf16.gmra.mxu0 %v291
  %v780 = vpop.f32.mrf.mxu0
  %v781 = vadd.f32 %v144, %v780
  %v782 = vpop.f32.mrf.mxu0
  %v783 = vadd.f32 %v144, %v782
  %784 = vmatmul.bf16.gmra.mxu0 %v296
  %v785 = vpop.f32.mrf.mxu0
  %v786 = vadd.f32 %v144, %v785
  %v787 = vpop.f32.mrf.mxu0
  %v788 = vadd.f32 %v144, %v787
  %789 = vmatmul.bf16.gmra.mxu0 %v301
  %v790 = vpop.f32.mrf.mxu0
  %v791 = vadd.f32 %v144, %v790
  %v792 = vpop.f32.mrf.mxu0
  %v793 = vadd.f32 %v144, %v792
  %794 = vmatmul.bf16.gmra.mxu0 %v306
  %v795 = vpop.f32.mrf.mxu0
  %v796 = vadd.f32 %v144, %v795
  %v797 = vpop.f32.mrf.mxu0
  %v798 = vadd.f32 %v144, %v797
  %799 = vmatmul.bf16.gmra.mxu0 %v311
  %v800 = vpop.f32.mrf.mxu0
  %v801 = vadd.f32 %v144, %v800
  %v802 = vpop.f32.mrf.mxu0
  %v803 = vadd.f32 %v144, %v802
  %804 = vdwg.mxu0
  %805 = vmatpush.bf16.msra.mxu0 %v626
  %806 = vmatpush.bf16.msra.mxu0 %v624
  %807 = vmatpush.bf16.msra.mxu0 %v622
  %808 = vmatpush.bf16.msra.mxu0 %v620
  %809 = vmatpush.bf16.msra.mxu0 %v618
  %810 = vmatpush.bf16.msra.mxu0 %v616
  %811 = vmatpush.bf16.msra.mxu0 %v614
  %812 = vmatpush.bf16.msra.mxu0 %v612
  %813 = vmatmul.bf16.gmra.mxu0 %v277
  %v814 = vpop.f32.mrf.mxu0
  %v815 = vadd.f32 %v766, %v814
  %v816 = vpop.f32.mrf.mxu0
  %v817 = vadd.f32 %v768, %v816
  %818 = vmatmul.bf16.gmra.mxu0 %v282
  %v819 = vpop.f32.mrf.mxu0
  %v820 = vadd.f32 %v771, %v819
  %v821 = vpop.f32.mrf.mxu0
  %v822 = vadd.f32 %v773, %v821
  %823 = vmatmul.bf16.gmra.mxu0 %v287
  %v824 = vpop.f32.mrf.mxu0
  %v825 = vadd.f32 %v776, %v824
  %v826 = vpop.f32.mrf.mxu0
  %v827 = vadd.f32 %v778, %v826
  %828 = vmatmul.bf16.gmra.mxu0 %v292
  %v829 = vpop.f32.mrf.mxu0
  %v830 = vadd.f32 %v781, %v829
  %v831 = vpop.f32.mrf.mxu0
  %v832 = vadd.f32 %v783, %v831
  %833 = vmatmul.bf16.gmra.mxu0 %v297
  %v834 = vpop.f32.mrf.mxu0
  %v835 = vadd.f32 %v786, %v834
  %v836 = vpop.f32.mrf.mxu0
  %v837 = vadd.f32 %v788, %v836
  %838 = vmatmul.bf16.gmra.mxu0 %v302
  %v839 = vpop.f32.mrf.mxu0
  %v840 = vadd.f32 %v791, %v839
  %v841 = vpop.f32.mrf.mxu0
  %v842 = vadd.f32 %v793, %v841
  %843 = vmatmul.bf16.gmra.mxu0 %v307
  %v844 = vpop.f32.mrf.mxu0
  %v845 = vadd.f32 %v796, %v844
  %v846 = vpop.f32.mrf.mxu0
  %v847 = vadd.f32 %v798, %v846
  %848 = vmatmul.bf16.gmra.mxu0 %v312
  %v849 = vpop.f32.mrf.mxu0
  %v850 = vadd.f32 %v801, %v849
  %v851 = vpop.f32.mrf.mxu0
  %v852 = vadd.f32 %v803, %v851
  %853 = vdwg.mxu0
  %854 = vmatpush.bf16.msra.mxu0 %v642
  %855 = vmatpush.bf16.msra.mxu0 %v640
  %856 = vmatpush.bf16.msra.mxu0 %v638
  %857 = vmatpush.bf16.msra.mxu0 %v636
  %858 = vmatpush.bf16.msra.mxu0 %v634
  %859 = vmatpush.bf16.msra.mxu0 %v632
  %860 = vmatpush.bf16.msra.mxu0 %v630
  %861 = vmatpush.bf16.msra.mxu0 %v628
  %862 = vmatmul.bf16.gmra.mxu0 %v278
  %v863 = vpop.f32.mrf.mxu0
  %v864 = vadd.f32 %v815, %v863
  %v865 = vpop.f32.mrf.mxu0
  %v866 = vadd.f32 %v817, %v865
  %867 = vmatmul.bf16.gmra.mxu0 %v283
  %v868 = vpop.f32.mrf.mxu0
  %v869 = vadd.f32 %v820, %v868
  %v870 = vpop.f32.mrf.mxu0
  %v871 = vadd.f32 %v822, %v870
  %872 = vmatmul.bf16.gmra.mxu0 %v288
  %v873 = vpop.f32.mrf.mxu0
  %v874 = vadd.f32 %v825, %v873
  %v875 = vpop.f32.mrf.mxu0
  %v876 = vadd.f32 %v827, %v875
  %877 = vmatmul.bf16.gmra.mxu0 %v293
  %v878 = vpop.f32.mrf.mxu0
  %v879 = vadd.f32 %v830, %v878
  %v880 = vpop.f32.mrf.mxu0
  %v881 = vadd.f32 %v832, %v880
  %882 = vmatmul.bf16.gmra.mxu0 %v298
  %v883 = vpop.f32.mrf.mxu0
  %v884 = vadd.f32 %v835, %v883
  %v885 = vpop.f32.mrf.mxu0
  %v886 = vadd.f32 %v837, %v885
  %887 = vmatmul.bf16.gmra.mxu0 %v303
  %v888 = vpop.f32.mrf.mxu0
  %v889 = vadd.f32 %v840, %v888
  %v890 = vpop.f32.mrf.mxu0
  %v891 = vadd.f32 %v842, %v890
  %892 = vmatmul.bf16.gmra.mxu0 %v308
  %v893 = vpop.f32.mrf.mxu0
  %v894 = vadd.f32 %v845, %v893
  %v895 = vpop.f32.mrf.mxu0
  %v896 = vadd.f32 %v847, %v895
  %897 = vmatmul.bf16.gmra.mxu0 %v313
  %v898 = vpop.f32.mrf.mxu0
  %v899 = vadd.f32 %v850, %v898
  %v900 = vpop.f32.mrf.mxu0
  %v901 = vadd.f32 %v852, %v900
  %902 = vdwg.mxu0
  %903 = vmatpush.bf16.msra.mxu0 %v658
  %904 = vmatpush.bf16.msra.mxu0 %v656
  %905 = vmatpush.bf16.msra.mxu0 %v654
  %906 = vmatpush.bf16.msra.mxu0 %v652
  %907 = vmatpush.bf16.msra.mxu0 %v650
  %908 = vmatpush.bf16.msra.mxu0 %v648
  %909 = vmatpush.bf16.msra.mxu0 %v646
  %910 = vmatpush.bf16.msra.mxu0 %v644
  %911 = vmatmul.bf16.gmra.mxu0 %v279
  %v912 = vpop.f32.mrf.mxu0
  %v913 = vadd.f32 %v864, %v912
  %v914 = vpop.f32.mrf.mxu0
  %v915 = vadd.f32 %v866, %v914
  %916 = vmatmul.bf16.gmra.mxu0 %v284
  %v917 = vpop.f32.mrf.mxu0
  %v918 = vadd.f32 %v869, %v917
  %v919 = vpop.f32.mrf.mxu0
  %v920 = vadd.f32 %v871, %v919
  %921 = vmatmul.bf16.gmra.mxu0 %v289
  %v922 = vpop.f32.mrf.mxu0
  %v923 = vadd.f32 %v874, %v922
  %v924 = vpop.f32.mrf.mxu0
  %v925 = vadd.f32 %v876, %v924
  %926 = vmatmul.bf16.gmra.mxu0 %v294
  %v927 = vpop.f32.mrf.mxu0
  %v928 = vadd.f32 %v879, %v927
  %v929 = vpop.f32.mrf.mxu0
  %v930 = vadd.f32 %v881, %v929
  %931 = vmatmul.bf16.gmra.mxu0 %v299
  %v932 = vpop.f32.mrf.mxu0
  %v933 = vadd.f32 %v884, %v932
  %v934 = vpop.f32.mrf.mxu0
  %v935 = vadd.f32 %v886, %v934
  %936 = vmatmul.bf16.gmra.mxu0 %v304
  %v937 = vpop.f32.mrf.mxu0
  %v938 = vadd.f32 %v889, %v937
  %v939 = vpop.f32.mrf.mxu0
  %v940 = vadd.f32 %v891, %v939
  %941 = vmatmul.bf16.gmra.mxu0 %v309
  %v942 = vpop.f32.mrf.mxu0
  %v943 = vadd.f32 %v894, %v942
  %v944 = vpop.f32.mrf.mxu0
  %v945 = vadd.f32 %v896, %v944
  %946 = vmatmul.bf16.gmra.mxu0 %v314
  %v947 = vpop.f32.mrf.mxu0
  %v948 = vadd.f32 %v899, %v947
  %v949 = vpop.f32.mrf.mxu0
  %v950 = vadd.f32 %v901, %v949
  %951 = vdwg.mxu0
  %952 = vmatpush.bf16.msra.mxu0 %v674
  %953 = vmatpush.bf16.msra.mxu0 %v672
  %954 = vmatpush.bf16.msra.mxu0 %v670
  %955 = vmatpush.bf16.msra.mxu0 %v668
  %956 = vmatpush.bf16.msra.mxu0 %v666
  %957 = vmatpush.bf16.msra.mxu0 %v664
  %958 = vmatpush.bf16.msra.mxu0 %v662
  %959 = vmatpush.bf16.msra.mxu0 %v660
  %960 = vmatmul.bf16.gmra.mxu0 %v280
  %v961 = vpop.f32.mrf.mxu0
  %v962 = vadd.f32 %v913, %v961
  %v963 = vpop.f32.mrf.mxu0
  %v964 = vadd.f32 %v915, %v963
  %965 = vmatmul.bf16.gmra.mxu0 %v285
  %v966 = vpop.f32.mrf.mxu0
  %v967 = vadd.f32 %v918, %v966
  %v968 = vpop.f32.mrf.mxu0
  %v969 = vadd.f32 %v920, %v968
  %970 = vmatmul.bf16.gmra.mxu0 %v290
  %v971 = vpop.f32.mrf.mxu0
  %v972 = vadd.f32 %v923, %v971
  %v973 = vpop.f32.mrf.mxu0
  %v974 = vadd.f32 %v925, %v973
  %975 = vmatmul.bf16.gmra.mxu0 %v295
  %v976 = vpop.f32.mrf.mxu0
  %v977 = vadd.f32 %v928, %v976
  %v978 = vpop.f32.mrf.mxu0
  %v979 = vadd.f32 %v930, %v978
  %980 = vmatmul.bf16.gmra.mxu0 %v300
  %v981 = vpop.f32.mrf.mxu0
  %v982 = vadd.f32 %v933, %v981
  %v983 = vpop.f32.mrf.mxu0
  %v984 = vadd.f32 %v935, %v983
  %985 = vmatmul.bf16.gmra.mxu0 %v305
  %v986 = vpop.f32.mrf.mxu0
  %v987 = vadd.f32 %v938, %v986
  %v988 = vpop.f32.mrf.mxu0
  %v989 = vadd.f32 %v940, %v988
  %990 = vmatmul.bf16.gmra.mxu0 %v310
  %v991 = vpop.f32.mrf.mxu0
  %v992 = vadd.f32 %v943, %v991
  %v993 = vpop.f32.mrf.mxu0
  %v994 = vadd.f32 %v945, %v993
  %995 = vmatmul.bf16.gmra.mxu0 %v315
  %v996 = vpop.f32.mrf.mxu0
  %v997 = vadd.f32 %v948, %v996
  %v998 = vpop.f32.mrf.mxu0
  %v999 = vadd.f32 %v950, %v998
  %1000 = vdwg.mxu0
  %1001 = vmatpush.bf16.msra.mxu0 %v611
  %1002 = vmatpush.bf16.msra.mxu0 %v609
  %1003 = vmatpush.bf16.msra.mxu0 %v607
  %1004 = vmatpush.bf16.msra.mxu0 %v605
  %1005 = vmatpush.bf16.msra.mxu0 %v603
  %1006 = vmatpush.bf16.msra.mxu0 %v601
  %1007 = vmatpush.bf16.msra.mxu0 %v599
  %1008 = vmatpush.bf16.msra.mxu0 %v597
  %1009 = vmatmul.bf16.gmra.mxu0 %v276
  %v1010 = vpop.f32.mrf.mxu0
  %v1011 = vadd.f32 %v145, %v1010
  %v1012 = vpop.f32.mrf.mxu0
  %v1013 = vadd.f32 %v145, %v1012
  %1014 = vmatmul.bf16.gmra.mxu0 %v281
  %v1015 = vpop.f32.mrf.mxu0
  %v1016 = vadd.f32 %v145, %v1015
  %v1017 = vpop.f32.mrf.mxu0
  %v1018 = vadd.f32 %v145, %v1017
  %1019 = vmatmul.bf16.gmra.mxu0 %v286
  %v1020 = vpop.f32.mrf.mxu0
  %v1021 = vadd.f32 %v145, %v1020
  %v1022 = vpop.f32.mrf.mxu0
  %v1023 = vadd.f32 %v145, %v1022
  %1024 = vmatmul.bf16.gmra.mxu0 %v291
  %v1025 = vpop.f32.mrf.mxu0
  %v1026 = vadd.f32 %v145, %v1025
  %v1027 = vpop.f32.mrf.mxu0
  %v1028 = vadd.f32 %v145, %v1027
  %1029 = vmatmul.bf16.gmra.mxu0 %v296
  %v1030 = vpop.f32.mrf.mxu0
  %v1031 = vadd.f32 %v145, %v1030
  %v1032 = vpop.f32.mrf.mxu0
  %v1033 = vadd.f32 %v145, %v1032
  %1034 = vmatmul.bf16.gmra.mxu0 %v301
  %v1035 = vpop.f32.mrf.mxu0
  %v1036 = vadd.f32 %v145, %v1035
  %v1037 = vpop.f32.mrf.mxu0
  %v1038 = vadd.f32 %v145, %v1037
  %1039 = vmatmul.bf16.gmra.mxu0 %v306
  %v1040 = vpop.f32.mrf.mxu0
  %v1041 = vadd.f32 %v145, %v1040
  %v1042 = vpop.f32.mrf.mxu0
  %v1043 = vadd.f32 %v145, %v1042
  %1044 = vmatmul.bf16.gmra.mxu0 %v311
  %v1045 = vpop.f32.mrf.mxu0
  %v1046 = vadd.f32 %v145, %v1045
  %v1047 = vpop.f32.mrf.mxu0
  %v1048 = vadd.f32 %v145, %v1047
  %1049 = vdwg.mxu0
  %1050 = vmatpush.bf16.msra.mxu0 %v627
  %1051 = vmatpush.bf16.msra.mxu0 %v625
  %1052 = vmatpush.bf16.msra.mxu0 %v623
  %1053 = vmatpush.bf16.msra.mxu0 %v621
  %1054 = vmatpush.bf16.msra.mxu0 %v619
  %1055 = vmatpush.bf16.msra.mxu0 %v617
  %1056 = vmatpush.bf16.msra.mxu0 %v615
  %1057 = vmatpush.bf16.msra.mxu0 %v613
  %1058 = vmatmul.bf16.gmra.mxu0 %v277
  %v1059 = vpop.f32.mrf.mxu0
  %v1060 = vadd.f32 %v1011, %v1059
  %v1061 = vpop.f32.mrf.mxu0
  %v1062 = vadd.f32 %v1013, %v1061
  %1063 = vmatmul.bf16.gmra.mxu0 %v282
  %v1064 = vpop.f32.mrf.mxu0
  %v1065 = vadd.f32 %v1016, %v1064
  %v1066 = vpop.f32.mrf.mxu0
  %v1067 = vadd.f32 %v1018, %v1066
  %1068 = vmatmul.bf16.gmra.mxu0 %v287
  %v1069 = vpop.f32.mrf.mxu0
  %v1070 = vadd.f32 %v1021, %v1069
  %v1071 = vpop.f32.mrf.mxu0
  %v1072 = vadd.f32 %v1023, %v1071
  %1073 = vmatmul.bf16.gmra.mxu0 %v292
  %v1074 = vpop.f32.mrf.mxu0
  %v1075 = vadd.f32 %v1026, %v1074
  %v1076 = vpop.f32.mrf.mxu0
  %v1077 = vadd.f32 %v1028, %v1076
  %1078 = vmatmul.bf16.gmra.mxu0 %v297
  %v1079 = vpop.f32.mrf.mxu0
  %v1080 = vadd.f32 %v1031, %v1079
  %v1081 = vpop.f32.mrf.mxu0
  %v1082 = vadd.f32 %v1033, %v1081
  %1083 = vmatmul.bf16.gmra.mxu0 %v302
  %v1084 = vpop.f32.mrf.mxu0
  %v1085 = vadd.f32 %v1036, %v1084
  %v1086 = vpop.f32.mrf.mxu0
  %v1087 = vadd.f32 %v1038, %v1086
  %1088 = vmatmul.bf16.gmra.mxu0 %v307
  %v1089 = vpop.f32.mrf.mxu0
  %v1090 = vadd.f32 %v1041, %v1089
  %v1091 = vpop.f32.mrf.mxu0
  %v1092 = vadd.f32 %v1043, %v1091
  %1093 = vmatmul.bf16.gmra.mxu0 %v312
  %v1094 = vpop.f32.mrf.mxu0
  %v1095 = vadd.f32 %v1046, %v1094
  %v1096 = vpop.f32.mrf.mxu0
  %v1097 = vadd.f32 %v1048, %v1096
  %1098 = vdwg.mxu0
  %1099 = vmatpush.bf16.msra.mxu0 %v643
  %1100 = vmatpush.bf16.msra.mxu0 %v641
  %1101 = vmatpush.bf16.msra.mxu0 %v639
  %1102 = vmatpush.bf16.msra.mxu0 %v637
  %1103 = vmatpush.bf16.msra.mxu0 %v635
  %1104 = vmatpush.bf16.msra.mxu0 %v633
  %1105 = vmatpush.bf16.msra.mxu0 %v631
  %1106 = vmatpush.bf16.msra.mxu0 %v629
  %1107 = vmatmul.bf16.gmra.mxu0 %v278
  %v1108 = vpop.f32.mrf.mxu0
  %v1109 = vadd.f32 %v1060, %v1108
  %v1110 = vpop.f32.mrf.mxu0
  %v1111 = vadd.f32 %v1062, %v1110
  %1112 = vmatmul.bf16.gmra.mxu0 %v283
  %v1113 = vpop.f32.mrf.mxu0
  %v1114 = vadd.f32 %v1065, %v1113
  %v1115 = vpop.f32.mrf.mxu0
  %v1116 = vadd.f32 %v1067, %v1115
  %1117 = vmatmul.bf16.gmra.mxu0 %v288
  %v1118 = vpop.f32.mrf.mxu0
  %v1119 = vadd.f32 %v1070, %v1118
  %v1120 = vpop.f32.mrf.mxu0
  %v1121 = vadd.f32 %v1072, %v1120
  %1122 = vmatmul.bf16.gmra.mxu0 %v293
  %v1123 = vpop.f32.mrf.mxu0
  %v1124 = vadd.f32 %v1075, %v1123
  %v1125 = vpop.f32.mrf.mxu0
  %v1126 = vadd.f32 %v1077, %v1125
  %1127 = vmatmul.bf16.gmra.mxu0 %v298
  %v1128 = vpop.f32.mrf.mxu0
  %v1129 = vadd.f32 %v1080, %v1128
  %v1130 = vpop.f32.mrf.mxu0
  %v1131 = vadd.f32 %v1082, %v1130
  %1132 = vmatmul.bf16.gmra.mxu0 %v303
  %v1133 = vpop.f32.mrf.mxu0
  %v1134 = vadd.f32 %v1085, %v1133
  %v1135 = vpop.f32.mrf.mxu0
  %v1136 = vadd.f32 %v1087, %v1135
  %1137 = vmatmul.bf16.gmra.mxu0 %v308
  %v1138 = vpop.f32.mrf.mxu0
  %v1139 = vadd.f32 %v1090, %v1138
  %v1140 = vpop.f32.mrf.mxu0
  %v1141 = vadd.f32 %v1092, %v1140
  %1142 = vmatmul.bf16.gmra.mxu0 %v313
  %v1143 = vpop.f32.mrf.mxu0
  %v1144 = vadd.f32 %v1095, %v1143
  %v1145 = vpop.f32.mrf.mxu0
  %v1146 = vadd.f32 %v1097, %v1145
  %1147 = vdwg.mxu0
  %1148 = vmatpush.bf16.msra.mxu0 %v659
  %1149 = vmatpush.bf16.msra.mxu0 %v657
  %1150 = vmatpush.bf16.msra.mxu0 %v655
  %1151 = vmatpush.bf16.msra.mxu0 %v653
  %1152 = vmatpush.bf16.msra.mxu0 %v651
  %1153 = vmatpush.bf16.msra.mxu0 %v649
  %1154 = vmatpush.bf16.msra.mxu0 %v647
  %1155 = vmatpush.bf16.msra.mxu0 %v645
  %1156 = vmatmul.bf16.gmra.mxu0 %v279
  %v1157 = vpop.f32.mrf.mxu0
  %v1158 = vadd.f32 %v1109, %v1157
  %v1159 = vpop.f32.mrf.mxu0
  %v1160 = vadd.f32 %v1111, %v1159
  %1161 = vmatmul.bf16.gmra.mxu0 %v284
  %v1162 = vpop.f32.mrf.mxu0
  %v1163 = vadd.f32 %v1114, %v1162
  %v1164 = vpop.f32.mrf.mxu0
  %v1165 = vadd.f32 %v1116, %v1164
  %1166 = vmatmul.bf16.gmra.mxu0 %v289
  %v1167 = vpop.f32.mrf.mxu0
  %v1168 = vadd.f32 %v1119, %v1167
  %v1169 = vpop.f32.mrf.mxu0
  %v1170 = vadd.f32 %v1121, %v1169
  %1171 = vmatmul.bf16.gmra.mxu0 %v294
  %v1172 = vpop.f32.mrf.mxu0
  %v1173 = vadd.f32 %v1124, %v1172
  %v1174 = vpop.f32.mrf.mxu0
  %v1175 = vadd.f32 %v1126, %v1174
  %1176 = vmatmul.bf16.gmra.mxu0 %v299
  %v1177 = vpop.f32.mrf.mxu0
  %v1178 = vadd.f32 %v1129, %v1177
  %v1179 = vpop.f32.mrf.mxu0
  %v1180 = vadd.f32 %v1131, %v1179
  %1181 = vmatmul.bf16.gmra.mxu0 %v304
  %v1182 = vpop.f32.mrf.mxu0
  %v1183 = vadd.f32 %v1134, %v1182
  %v1184 = vpop.f32.mrf.mxu0
  %v1185 = vadd.f32 %v1136, %v1184
  %1186 = vmatmul.bf16.gmra.mxu0 %v309
  %v1187 = vpop.f32.mrf.mxu0
  %v1188 = vadd.f32 %v1139, %v1187
  %v1189 = vpop.f32.mrf.mxu0
  %v1190 = vadd.f32 %v1141, %v1189
  %1191 = vmatmul.bf16.gmra.mxu0 %v314
  %v1192 = vpop.f32.mrf.mxu0
  %v1193 = vadd.f32 %v1144, %v1192
  %v1194 = vpop.f32.mrf.mxu0
  %v1195 = vadd.f32 %v1146, %v1194
  %1196 = vdwg.mxu0
  %1197 = vmatpush.bf16.msra.mxu0 %v675
  %1198 = vmatpush.bf16.msra.mxu0 %v673
  %1199 = vmatpush.bf16.msra.mxu0 %v671
  %1200 = vmatpush.bf16.msra.mxu0 %v669
  %1201 = vmatpush.bf16.msra.mxu0 %v667
  %1202 = vmatpush.bf16.msra.mxu0 %v665
  %1203 = vmatpush.bf16.msra.mxu0 %v663
  %1204 = vmatpush.bf16.msra.mxu0 %v661
  %1205 = vmatmul.bf16.gmra.mxu0 %v280
  %v1206 = vpop.f32.mrf.mxu0
  %v1207 = vadd.f32 %v1158, %v1206
  %v1208 = vpop.f32.mrf.mxu0
  %v1209 = vadd.f32 %v1160, %v1208
  %1210 = vmatmul.bf16.gmra.mxu0 %v285
  %v1211 = vpop.f32.mrf.mxu0
  %v1212 = vadd.f32 %v1163, %v1211
  %v1213 = vpop.f32.mrf.mxu0
  %v1214 = vadd.f32 %v1165, %v1213
  %1215 = vmatmul.bf16.gmra.mxu0 %v290
  %v1216 = vpop.f32.mrf.mxu0
  %v1217 = vadd.f32 %v1168, %v1216
  %v1218 = vpop.f32.mrf.mxu0
  %v1219 = vadd.f32 %v1170, %v1218
  %1220 = vmatmul.bf16.gmra.mxu0 %v295
  %v1221 = vpop.f32.mrf.mxu0
  %v1222 = vadd.f32 %v1173, %v1221
  %v1223 = vpop.f32.mrf.mxu0
  %v1224 = vadd.f32 %v1175, %v1223
  %1225 = vmatmul.bf16.gmra.mxu0 %v300
  %v1226 = vpop.f32.mrf.mxu0
  %v1227 = vadd.f32 %v1178, %v1226
  %v1228 = vpop.f32.mrf.mxu0
  %v1229 = vadd.f32 %v1180, %v1228
  %1230 = vmatmul.bf16.gmra.mxu0 %v305
  %v1231 = vpop.f32.mrf.mxu0
  %v1232 = vadd.f32 %v1183, %v1231
  %v1233 = vpop.f32.mrf.mxu0
  %v1234 = vadd.f32 %v1185, %v1233
  %1235 = vmatmul.bf16.gmra.mxu0 %v310
  %v1236 = vpop.f32.mrf.mxu0
  %v1237 = vadd.f32 %v1188, %v1236
  %v1238 = vpop.f32.mrf.mxu0
  %v1239 = vadd.f32 %v1190, %v1238
  %1240 = vmatmul.bf16.gmra.mxu0 %v315
  %v1241 = vpop.f32.mrf.mxu0
  %v1242 = vadd.f32 %v1193, %v1241
  %v1243 = vpop.f32.mrf.mxu0
  %v1244 = vadd.f32 %v1195, %v1243
  %1245 = vdwg.mxu0
  %vm1246 = vcmp.gt.f32.partialorder %v962, 0.0
  %vm1247 = vcmp.gt.f32.partialorder %v1207, 0.0
  %vm1248 = vcmp.gt.f32.partialorder %v964, 0.0
  %vm1249 = vcmp.gt.f32.partialorder %v1209, 0.0
  %vm1250 = vcmp.gt.f32.partialorder %v967, 0.0
  %vm1251 = vcmp.gt.f32.partialorder %v1212, 0.0
  %vm1252 = vcmp.gt.f32.partialorder %v969, 0.0
  %vm1253 = vcmp.gt.f32.partialorder %v1214, 0.0
  %vm1254 = vcmp.gt.f32.partialorder %v972, 0.0
  %vm1255 = vcmp.gt.f32.partialorder %v1217, 0.0
  %vm1256 = vcmp.gt.f32.partialorder %v974, 0.0
  %vm1257 = vcmp.gt.f32.partialorder %v1219, 0.0
  %vm1258 = vcmp.gt.f32.partialorder %v977, 0.0
  %vm1259 = vcmp.gt.f32.partialorder %v1222, 0.0
  %vm1260 = vcmp.gt.f32.partialorder %v979, 0.0
  %vm1261 = vcmp.gt.f32.partialorder %v1224, 0.0
  %vm1262 = vcmp.gt.f32.partialorder %v982, 0.0
  %vm1263 = vcmp.gt.f32.partialorder %v1227, 0.0
  %vm1264 = vcmp.gt.f32.partialorder %v984, 0.0
  %vm1265 = vcmp.gt.f32.partialorder %v1229, 0.0
  %vm1266 = vcmp.gt.f32.partialorder %v987, 0.0
  %vm1267 = vcmp.gt.f32.partialorder %v1232, 0.0
  %vm1268 = vcmp.gt.f32.partialorder %v989, 0.0
  %vm1269 = vcmp.gt.f32.partialorder %v1234, 0.0
  %vm1270 = vcmp.gt.f32.partialorder %v992, 0.0
  %vm1271 = vcmp.gt.f32.partialorder %v1237, 0.0
  %vm1272 = vcmp.gt.f32.partialorder %v994, 0.0
  %vm1273 = vcmp.gt.f32.partialorder %v1239, 0.0
  %vm1274 = vcmp.gt.f32.partialorder %v997, 0.0
  %vm1275 = vcmp.gt.f32.partialorder %v1242, 0.0
  %vm1276 = vcmp.gt.f32.partialorder %v999, 0.0
  %vm1277 = vcmp.gt.f32.partialorder %v1244, 0.0
  %v1278 = vmul.f32 %v962, 1.442695
  %v1279 = vpow.pop %v1278
  %v1280 = vmul.f32 %v1207, 1.442695
  %v1281 = vpow.pop %v1280
  %v1282 = vmul.f32 %v964, 1.442695
  %v1283 = vpow.pop %v1282
  %v1284 = vmul.f32 %v1209, 1.442695
  %v1285 = vpow.pop %v1284
  %v1286 = vmul.f32 %v967, 1.442695
  %v1287 = vpow.pop %v1286
  %v1288 = vmul.f32 %v1212, 1.442695
  %v1289 = vpow.pop %v1288
  %v1290 = vmul.f32 %v969, 1.442695
  %v1291 = vpow.pop %v1290
  %v1292 = vmul.f32 %v1214, 1.442695
  %v1293 = vpow.pop %v1292
  %v1294 = vmul.f32 %v972, 1.442695
  %v1295 = vpow.pop %v1294
  %v1296 = vmul.f32 %v1217, 1.442695
  %v1297 = vpow.pop %v1296
  %v1298 = vmul.f32 %v974, 1.442695
  %v1299 = vpow.pop %v1298
  %v1300 = vmul.f32 %v1219, 1.442695
  %v1301 = vpow.pop %v1300
  %v1302 = vmul.f32 %v977, 1.442695
  %v1303 = vpow.pop %v1302
  %v1304 = vmul.f32 %v1222, 1.442695
  %v1305 = vpow.pop %v1304
  %v1306 = vmul.f32 %v979, 1.442695
  %v1307 = vpow.pop %v1306
  %v1308 = vmul.f32 %v1224, 1.442695
  %v1309 = vpow.pop %v1308
  %v1310 = vmul.f32 %v982, 1.442695
  %v1311 = vpow.pop %v1310
  %v1312 = vmul.f32 %v1227, 1.442695
  %v1313 = vpow.pop %v1312
  %v1314 = vmul.f32 %v984, 1.442695
  %v1315 = vpow.pop %v1314
  %v1316 = vmul.f32 %v1229, 1.442695
  %v1317 = vpow.pop %v1316
  %v1318 = vmul.f32 %v987, 1.442695
  %v1319 = vpow.pop %v1318
  %v1320 = vmul.f32 %v1232, 1.442695
  %v1321 = vpow.pop %v1320
  %v1322 = vmul.f32 %v989, 1.442695
  %v1323 = vpow.pop %v1322
  %v1324 = vmul.f32 %v1234, 1.442695
  %v1325 = vpow.pop %v1324
  %v1326 = vmul.f32 %v992, 1.442695
  %v1327 = vpow.pop %v1326
  %v1328 = vmul.f32 %v1237, 1.442695
  %v1329 = vpow.pop %v1328
  %v1330 = vmul.f32 %v994, 1.442695
  %v1331 = vpow.pop %v1330
  %v1332 = vmul.f32 %v1239, 1.442695
  %v1333 = vpow.pop %v1332
  %v1334 = vmul.f32 %v997, 1.442695
  %v1335 = vpow.pop %v1334
  %v1336 = vmul.f32 %v1242, 1.442695
  %v1337 = vpow.pop %v1336
  %v1338 = vmul.f32 %v999, 1.442695
  %v1339 = vpow.pop %v1338
  %v1340 = vmul.f32 %v1244, 1.442695
  %v1341 = vpow.pop %v1340
  %v1342 = vsub.f32 %v1279, 1.0
  %v1343 = vsub.f32 %v1281, 1.0
  %v1344 = vsub.f32 %v1283, 1.0
  %v1345 = vsub.f32 %v1285, 1.0
  %v1346 = vsub.f32 %v1287, 1.0
  %v1347 = vsub.f32 %v1289, 1.0
  %v1348 = vsub.f32 %v1291, 1.0
  %v1349 = vsub.f32 %v1293, 1.0
  %v1350 = vsub.f32 %v1295, 1.0
  %v1351 = vsub.f32 %v1297, 1.0
  %v1352 = vsub.f32 %v1299, 1.0
  %v1353 = vsub.f32 %v1301, 1.0
  %v1354 = vsub.f32 %v1303, 1.0
  %v1355 = vsub.f32 %v1305, 1.0
  %v1356 = vsub.f32 %v1307, 1.0
  %v1357 = vsub.f32 %v1309, 1.0
  %v1358 = vsub.f32 %v1311, 1.0
  %v1359 = vsub.f32 %v1313, 1.0
  %v1360 = vsub.f32 %v1315, 1.0
  %v1361 = vsub.f32 %v1317, 1.0
  %v1362 = vsub.f32 %v1319, 1.0
  %v1363 = vsub.f32 %v1321, 1.0
  %v1364 = vsub.f32 %v1323, 1.0
  %v1365 = vsub.f32 %v1325, 1.0
  %v1366 = vsub.f32 %v1327, 1.0
  %v1367 = vsub.f32 %v1329, 1.0
  %v1368 = vsub.f32 %v1331, 1.0
  %v1369 = vsub.f32 %v1333, 1.0
  %v1370 = vsub.f32 %v1335, 1.0
  %v1371 = vsub.f32 %v1337, 1.0
  %v1372 = vsub.f32 %v1339, 1.0
  %v1373 = vsub.f32 %v1341, 1.0
  %v1374 = vmul.f32 %v1342, 1.6732632
  %v1375 = vmul.f32 %v1343, 1.6732632
  %v1376 = vmul.f32 %v1344, 1.6732632
  %v1377 = vmul.f32 %v1345, 1.6732632
  %v1378 = vmul.f32 %v1346, 1.6732632
  %v1379 = vmul.f32 %v1347, 1.6732632
  %v1380 = vmul.f32 %v1348, 1.6732632
  %v1381 = vmul.f32 %v1349, 1.6732632
  %v1382 = vmul.f32 %v1350, 1.6732632
  %v1383 = vmul.f32 %v1351, 1.6732632
  %v1384 = vmul.f32 %v1352, 1.6732632
  %v1385 = vmul.f32 %v1353, 1.6732632
  %v1386 = vmul.f32 %v1354, 1.6732632
  %v1387 = vmul.f32 %v1355, 1.6732632
  %v1388 = vmul.f32 %v1356, 1.6732632
  %v1389 = vmul.f32 %v1357, 1.6732632
  %v1390 = vmul.f32 %v1358, 1.6732632
  %v1391 = vmul.f32 %v1359, 1.6732632
  %v1392 = vmul.f32 %v1360, 1.6732632
  %v1393 = vmul.f32 %v1361, 1.6732632
  %v1394 = vmul.f32 %v1362, 1.6732632
  %v1395 = vmul.f32 %v1363, 1.6732632
  %v1396 = vmul.f32 %v1364, 1.6732632
  %v1397 = vmul.f32 %v1365, 1.6732632
  %v1398 = vmul.f32 %v1366, 1.6732632
  %v1399 = vmul.f32 %v1367, 1.6732632
  %v1400 = vmul.f32 %v1368, 1.6732632
  %v1401 = vmul.f32 %v1369, 1.6732632
  %v1402 = vmul.f32 %v1370, 1.6732632
  %v1403 = vmul.f32 %v1371, 1.6732632
  %v1404 = vmul.f32 %v1372, 1.6732632
  %v1405 = vmul.f32 %v1373, 1.6732632
  %v1406 = vsel %vm1246, %v962, %v1374
  %v1407 = vsel %vm1247, %v1207, %v1375
  %v1408 = vsel %vm1248, %v964, %v1376
  %v1409 = vsel %vm1249, %v1209, %v1377
  %v1410 = vsel %vm1250, %v967, %v1378
  %v1411 = vsel %vm1251, %v1212, %v1379
  %v1412 = vsel %vm1252, %v969, %v1380
  %v1413 = vsel %vm1253, %v1214, %v1381
  %v1414 = vsel %vm1254, %v972, %v1382
  %v1415 = vsel %vm1255, %v1217, %v1383
  %v1416 = vsel %vm1256, %v974, %v1384
  %v1417 = vsel %vm1257, %v1219, %v1385
  %v1418 = vsel %vm1258, %v977, %v1386
  %v1419 = vsel %vm1259, %v1222, %v1387
  %v1420 = vsel %vm1260, %v979, %v1388
  %v1421 = vsel %vm1261, %v1224, %v1389
  %v1422 = vsel %vm1262, %v982, %v1390
  %v1423 = vsel %vm1263, %v1227, %v1391
  %v1424 = vsel %vm1264, %v984, %v1392
  %v1425 = vsel %vm1265, %v1229, %v1393
  %v1426 = vsel %vm1266, %v987, %v1394
  %v1427 = vsel %vm1267, %v1232, %v1395
  %v1428 = vsel %vm1268, %v989, %v1396
  %v1429 = vsel %vm1269, %v1234, %v1397
  %v1430 = vsel %vm1270, %v992, %v1398
  %v1431 = vsel %vm1271, %v1237, %v1399
  %v1432 = vsel %vm1272, %v994, %v1400
  %v1433 = vsel %vm1273, %v1239, %v1401
  %v1434 = vsel %vm1274, %v997, %v1402
  %v1435 = vsel %vm1275, %v1242, %v1403
  %v1436 = vsel %vm1276, %v999, %v1404
  %v1437 = vsel %vm1277, %v1244, %v1405
  %v1438 = vmul.f32 %v1406, 1.050701
  %v1439 = vmul.f32 %v1407, 1.050701
  %v1440 = vmul.f32 %v1408, 1.050701
  %v1441 = vmul.f32 %v1409, 1.050701
  %v1442 = vmul.f32 %v1410, 1.050701
  %v1443 = vmul.f32 %v1411, 1.050701
  %v1444 = vmul.f32 %v1412, 1.050701
  %v1445 = vmul.f32 %v1413, 1.050701
  %v1446 = vmul.f32 %v1414, 1.050701
  %v1447 = vmul.f32 %v1415, 1.050701
  %v1448 = vmul.f32 %v1416, 1.050701
  %v1449 = vmul.f32 %v1417, 1.050701
  %v1450 = vmul.f32 %v1418, 1.050701
  %v1451 = vmul.f32 %v1419, 1.050701
  %v1452 = vmul.f32 %v1420, 1.050701
  %v1453 = vmul.f32 %v1421, 1.050701
  %v1454 = vmul.f32 %v1422, 1.050701
  %v1455 = vmul.f32 %v1423, 1.050701
  %v1456 = vmul.f32 %v1424, 1.050701
  %v1457 = vmul.f32 %v1425, 1.050701
  %v1458 = vmul.f32 %v1426, 1.050701
  %v1459 = vmul.f32 %v1427, 1.050701
  %v1460 = vmul.f32 %v1428, 1.050701
  %v1461 = vmul.f32 %v1429, 1.050701
  %v1462 = vmul.f32 %v1430, 1.050701
  %v1463 = vmul.f32 %v1431, 1.050701
  %v1464 = vmul.f32 %v1432, 1.050701
  %v1465 = vmul.f32 %v1433, 1.050701
  %v1466 = vmul.f32 %v1434, 1.050701
  %v1467 = vmul.f32 %v1435, 1.050701
  %v1468 = vmul.f32 %v1436, 1.050701
  %v1469 = vmul.f32 %v1437, 1.050701
  %1470 = vst [vmem:[%s3] sm:$0xff] %v1438
  %1471 = vst [vmem:[%s3 + $0x8] sm:$0xff] %v1439
  %1472 = vst [vmem:[%s3 + $0x10] sm:$0xff] %v1440
  %1473 = vst [vmem:[%s3 + $0x18] sm:$0xff] %v1441
  %1474 = vst [vmem:[%s3 + $0x20] sm:$0xff] %v1442
  %1475 = vst [vmem:[%s3 + $0x28] sm:$0xff] %v1443
  %1476 = vst [vmem:[%s3 + $0x30] sm:$0xff] %v1444
  %1477 = vst [vmem:[%s3 + $0x38] sm:$0xff] %v1445
  %1478 = vst [vmem:[%s3 + $0x40] sm:$0xff] %v1446
  %1479 = vst [vmem:[%s3 + $0x48] sm:$0xff] %v1447
  %1480 = vst [vmem:[%s3 + $0x50] sm:$0xff] %v1448
  %1481 = vst [vmem:[%s3 + $0x58] sm:$0xff] %v1449
  %1482 = vst [vmem:[%s3 + $0x60] sm:$0xff] %v1450
  %1483 = vst [vmem:[%s3 + $0x68] sm:$0xff] %v1451
  %1484 = vst [vmem:[%s3 + $0x70] sm:$0xff] %v1452
  %1485 = vst [vmem:[%s3 + $0x78] sm:$0xff] %v1453
  %1486 = vst [vmem:[%s3 + $0x80] sm:$0xff] %v1454
  %1487 = vst [vmem:[%s3 + $0x88] sm:$0xff] %v1455
  %1488 = vst [vmem:[%s3 + $0x90] sm:$0xff] %v1456
  %1489 = vst [vmem:[%s3 + $0x98] sm:$0xff] %v1457
  %1490 = vst [vmem:[%s3 + $0xa0] sm:$0xff] %v1458
  %1491 = vst [vmem:[%s3 + $0xa8] sm:$0xff] %v1459
  %1492 = vst [vmem:[%s3 + $0xb0] sm:$0xff] %v1460
  %1493 = vst [vmem:[%s3 + $0xb8] sm:$0xff] %v1461
  %1494 = vst [vmem:[%s3 + $0xc0] sm:$0xff] %v1462
  %1495 = vst [vmem:[%s3 + $0xc8] sm:$0xff] %v1463
  %1496 = vst [vmem:[%s3 + $0xd0] sm:$0xff] %v1464
  %1497 = vst [vmem:[%s3 + $0xd8] sm:$0xff] %v1465
  %1498 = vst [vmem:[%s3 + $0xe0] sm:$0xff] %v1466
  %1499 = vst [vmem:[%s3 + $0xe8] sm:$0xff] %v1467
  %1500 = vst [vmem:[%s3 + $0xf0] sm:$0xff] %v1468
  %1501 = vst [vmem:[%s3 + $0xf8] sm:$0xff] %v1469
  // Predicated region
  $region14: #{vae_forward.12} parent=0 // pred_check
    _
  $region15: #{vae_forward.12} parent=0 // pred_check_branch
    %1503 = sbr.rel (0) target = $region17
  $region16: #{vae_forward.12} parent=0 // pred_region
    _
  $region17: #{vae_forward.12} parent=0 // pred_fallthru
    _
  // Predicated region
  $region18: #{vae_forward.12} parent=0 // pred_check
    _
  $region19: #{vae_forward.12} parent=0 // pred_check_branch
    %1505 = sbr.rel (0) target = $region21
  $region20: #{vae_forward.12} parent=0 // pred_region
    _
  $region21: #{vae_forward.12} parent=0 // pred_fallthru
    _

// kernel: vae_forward.13
$region0: #{vae_forward.13}
  #allocation0 [shape = 'u32[]', space=smem, size = 0x4, offset = 0x4, fixed_abs, tag = 'smem constant byte address 0x4 - core index']
  #allocation1 [shape = 'u32[72,128]{1,0:T(1,128)}', space=vmem, size = 0x9000, scoped, tag = 'internal scratch']
  %s0 = inlined_call_operand.vmem [shape: bf16[512,640], index: 0, kind: input, shape index: {}]
  %s1 = inlined_call_operand.vmem [shape: bf16[640,128], index: 1, kind: input, shape index: {}]
  %s2 = inlined_call_operand.vmem [shape: f32[1,128], index: 2, kind: input, shape index: {}]
  %s3 = inlined_call_operand.vmem [shape: f32[512,128], index: 3, kind: output, shape index: {}]
  %s4 = sld [smem:[#allocation0]]
  $region45: #{vae_forward.13} parent=0
    _
  %s6 = ssub.s32 1, %s4
  %s7 = scalar_select 0, %s6, %s4
  loop: start=0, step=1, limit=4
  $region2: #{vae_forward.13} parent=0 // loop_pre_header
    _
  $region3: #{vae_forward.13} parent=0 // loop_header
    %s9 = sphi 0, %s13
    %p10 = scmp.ge.s32.totalorder %s9, 4
    %s19 = sphi 0, %s21
    %s22 = sphi 0, %s19
    %s23 = sphi 0, %s22
    %s39 = sphi 0, %s23
    %s43 = sphi 0, %s43
    %s45 = sphi 0, %s43
    %s46 = sphi 0, %s45
    %s60 = sphi 0, %s46
    %s64 = sphi 0, %s64
    %s66 = sphi 0, %s64
    %s67 = sphi 0, %s66
    %s81 = sphi 0, %s67
    %s87 = sphi 0, %s89
    %s90 = sphi 0, %s87
    %s91 = sphi 0, %s90
    %s107 = sphi 0, %s91
  $region4: #{vae_forward.13} parent=0 // loop_header_branch
    %12 = sbr.rel (%p10) target = $region8
  $region5: #{vae_forward.13} parent=0 // loop_body
    %s14 = ssub.s32 %s9, 1
    %s15 = ssub.s32 %s9, 2
    %s16 = sadd.s32 %s9, 1
    %s17 = ssub.s32 %s9, %s16
    %p18 = scmp.eq.s32.totalorder %s17, 0
    %s20 = sadd.s32 %s19, 1
    %s21 = scalar_select %p18, %s19, %s20
    %p24 = pneg %p18
    %p25 = scmp.eq.s32.totalorder %s9, 1
    %p26 = por %p24, %p25
    %p27 = scmp.ne.s32.totalorder %s19, %s22
    %p28 = scmp.eq.s32.totalorder %s9, 0
    %p29 = por %p27, %p28
    %p30 = scmp.ne.s32.totalorder %s19, %s22
    %p31 = scmp.eq.s32.totalorder %s14, 1
    %p32 = por %p30, %p31
    %p33 = scmp.ne.s32.totalorder %s22, %s23
    %p34 = scmp.eq.s32.totalorder %s14, 0
    %p35 = por %p33, %p34
    %p36 = scmp.ne.s32.totalorder %s22, %s23
    %p37 = scmp.eq.s32.totalorder %s15, 1
    %p38 = por %p36, %p37
    %p40 = scmp.ne.s32.totalorder %s23, %s39
    %p41 = scmp.eq.s32.totalorder %s15, 0
    %p42 = por %p40, %p41
    %s44 = sadd.s32 %s43, 1
    %p47 = scmp.eq.s32.totalorder %s9, 1
    %p48 = scmp.ne.s32.totalorder %s43, %s45
    %p49 = scmp.eq.s32.totalorder %s9, 0
    %p50 = por %p48, %p49
    %p51 = scmp.ne.s32.totalorder %s43, %s45
    %p52 = scmp.eq.s32.totalorder %s14, 1
    %p53 = por %p51, %p52
    %p54 = scmp.ne.s32.totalorder %s45, %s46
    %p55 = scmp.eq.s32.totalorder %s14, 0
    %p56 = por %p54, %p55
    %p57 = scmp.ne.s32.totalorder %s45, %s46
    %p58 = scmp.eq.s32.totalorder %s15, 1
    %p59 = por %p57, %p58
    %p61 = scmp.ne.s32.totalorder %s46, %s60
    %p62 = scmp.eq.s32.totalorder %s15, 0
    %p63 = por %p61, %p62
    %s65 = sadd.s32 %s64, 1
    %p68 = scmp.eq.s32.totalorder %s9, 1
    %p69 = scmp.ne.s32.totalorder %s64, %s66
    %p70 = scmp.eq.s32.totalorder %s9, 0
    %p71 = por %p69, %p70
    %p72 = scmp.ne.s32.totalorder %s64, %s66
    %p73 = scmp.eq.s32.totalorder %s14, 1
    %p74 = por %p72, %p73
    %p75 = scmp.ne.s32.totalorder %s66, %s67
    %p76 = scmp.eq.s32.totalorder %s14, 0
    %p77 = por %p75, %p76
    %p78 = scmp.ne.s32.totalorder %s66, %s67
    %p79 = scmp.eq.s32.totalorder %s15, 1
    %p80 = por %p78, %p79
    %p82 = scmp.ne.s32.totalorder %s67, %s81
    %p83 = scmp.eq.s32.totalorder %s15, 0
    %p84 = por %p82, %p83
    %s85 = ssub.s32 %s9, %s16
    %p86 = scmp.eq.s32.totalorder %s85, 0
    %s88 = sadd.s32 %s87, 1
    %s89 = scalar_select %p86, %s87, %s88
    %p92 = pneg %p86
    %p93 = scmp.eq.s32.totalorder %s9, 1
    %p94 = por %p92, %p93
    %p95 = scmp.ne.s32.totalorder %s87, %s90
    %p96 = scmp.eq.s32.totalorder %s9, 0
    %p97 = por %p95, %p96
    %p98 = scmp.ne.s32.totalorder %s87, %s90
    %p99 = scmp.eq.s32.totalorder %s14, 1
    %p100 = por %p98, %p99
    %p101 = scmp.ne.s32.totalorder %s90, %s91
    %p102 = scmp.eq.s32.totalorder %s14, 0
    %p103 = por %p101, %p102
    %p104 = scmp.ne.s32.totalorder %s90, %s91
    %p105 = scmp.eq.s32.totalorder %s15, 1
    %p106 = por %p104, %p105
    %p108 = scmp.ne.s32.totalorder %s91, %s107
    %p109 = scmp.eq.s32.totalorder %s15, 0
    %p110 = por %p108, %p109
    %p111 = scmp.le.s32.totalorder 1, %s9
    %p112 = scmp.lt.s32.totalorder %s9, 3
    %p113 = pnand %p111, %p112
    %p114 = pneg %p113
    // Predicated region
    $region9: #{vae_forward.13} parent=5 // pred_check
      _
    $region10: #{vae_forward.13} parent=5 // pred_check_branch
      %116 = sbr.rel (%p113) target = $region12
    $region11: #{vae_forward.13} parent=5 // pred_region
      %s117 = ssub.s32 %s9, 1
      // Predicated region
      $region13: #{vae_forward.13} parent=11 // pred_check
        %p118 = pneg %p56
      $region14: #{vae_forward.13} parent=11 // pred_check_branch
        %120 = sbr.rel (%p118) target = $region16
      $region15: #{vae_forward.13} parent=11 // pred_region
        _
      $region16: #{vae_forward.13} parent=11 // pred_fallthru
        _
      // Predicated region
      $region17: #{vae_forward.13} parent=11 // pred_check
        %p121 = pneg %p77
      $region18: #{vae_forward.13} parent=11 // pred_check_branch
        %123 = sbr.rel (%p121) target = $region20
      $region19: #{vae_forward.13} parent=11 // pred_region
        _
      $region20: #{vae_forward.13} parent=11 // pred_fallthru
        _
    $region12: #{vae_forward.13} parent=5 // pred_fallthru
      _
    %p124 = scmp.lt.s32.totalorder %s9, 2
    // Predicated region
    $region21: #{vae_forward.13} parent=5 // pred_check
      %p125 = pneg %p124
    $region22: #{vae_forward.13} parent=5 // pred_check_branch
      %127 = sbr.rel (%p125) target = $region24
    $region23: #{vae_forward.13} parent=5 // pred_region
      // Predicated region
      $region25: #{vae_forward.13} parent=23 // pred_check
        %p128 = pneg %p29
      $region26: #{vae_forward.13} parent=23 // pred_check_branch
        %130 = sbr.rel (%p128) target = $region28
      $region27: #{vae_forward.13} parent=23 // pred_region
        %s131 = smul.u32 32, %s9
        %p132 = scmp.lt.s32.totalorder %s131, 63
        %s133 = scalar_select %p132, %s131, 63
        %s134 = smul.addr %s133, 5
        %s135 = smul.addr %s134, 4
        %s136 = scalar_lea.vmem %s0, %s135
        %s137 = smul.u32 32, %s9
      $region28: #{vae_forward.13} parent=23 // pred_fallthru
        _
    $region24: #{vae_forward.13} parent=5 // pred_fallthru
      _
    %p138 = scmp.le.s32.totalorder 1, %s9
    %p139 = scmp.lt.s32.totalorder %s9, 3
    %p140 = pnand %p138, %p139
    %p141 = pneg %p140
    // Predicated region
    $region29: #{vae_forward.13} parent=5 // pred_check
      _
    $region30: #{vae_forward.13} parent=5 // pred_check_branch
      %143 = sbr.rel (%p140) target = $region32
    $region31: #{vae_forward.13} parent=5 // pred_region
      %s144 = ssub.s32 %s9, 1
      %s145 = smul.u32 32, %s14
      %p146 = scmp.lt.s32.totalorder %s145, 63
      %s147 = scalar_select %p146, %s145, 63
      %s148 = smul.addr %s147, 5
      %s149 = smul.addr %s148, 4
      %s150 = scalar_lea.vmem %s0, %s149
      %p151 = pneg %p35
      %p152 = pneg %p32
      %p153 = pneg %p56
      %p154 = pneg %p53
      %p155 = pneg %p77
      %p156 = pneg %p74
      %p157 = pneg %p103
      %p158 = pneg %p100
      %s159 = smul.u32 32, %s14
      %p160 = scmp.lt.s32.totalorder %s159, 63
      %s161 = scalar_select %p160, %s159, 63
      %s162 = smul.addr %s161, 8
      %s163 = scalar_lea.vmem %s3, %s162
      %s164 = smul.u32 32, %s14
      %p165 = scmp.lt.s32.totalorder %s164, 63
      %s166 = scalar_select %p165, %s164, 63
      %s167 = smul.addr %s166, 5
      %s168 = smul.addr %s167, 4
      %s169 = scalar_lea.vmem %s0, %s168
      %s170 = smul.u32 32, %s14
      %s171 = smul.u32 32, %s14
      %p172 = scmp.lt.s32.totalorder %s171, 63
      %s173 = scalar_select %p172, %s171, 63
      %s174 = smul.addr %s173, 8
      %s175 = scalar_lea.vmem %s3, %s174
      %s176 = smul.u32 32, %s14
      %v177 = vld [vmem:[%s169] sm:$0xff]
      %v178 = vld [vmem:[%s169 + $0x8] sm:$0xff]
      %v179 = vld [vmem:[%s169 + $0x10] sm:$0xf]
      %v180 = vld [vmem:[%s169 + $0x14] sm:$0xff]
      %v181 = vld [vmem:[%s169 + $0x1c] sm:$0xff]
      %v182 = vld [vmem:[%s169 + $0x24] sm:$0xf]
      %v183 = vld [vmem:[%s169 + $0x28] sm:$0xff]
      %v184 = vld [vmem:[%s169 + $0x30] sm:$0xff]
      %v185 = vld [vmem:[%s169 + $0x38] sm:$0xf]
      %v186 = vld [vmem:[%s169 + $0x3c] sm:$0xff]
      %v187 = vld [vmem:[%s169 + $0x44] sm:$0xff]
      %v188 = vld [vmem:[%s169 + $0x4c] sm:$0xf]
      %v189 = vld [vmem:[%s169 + $0x50] sm:$0xff]
      %v190 = vld [vmem:[%s169 + $0x58] sm:$0xff]
      %v191 = vld [vmem:[%s169 + $0x60] sm:$0xf]
      %v192 = vld [vmem:[%s169 + $0x64] sm:$0xff]
      %v193 = vld [vmem:[%s169 + $0x6c] sm:$0xff]
      %v194 = vld [vmem:[%s169 + $0x74] sm:$0xf]
      %v195 = vld [vmem:[%s169 + $0x78] sm:$0xff]
      %v196 = vld [vmem:[%s169 + $0x80] sm:$0xff]
      %v197 = vld [vmem:[%s169 + $0x88] sm:$0xf]
      %v198 = vld [vmem:[%s169 + $0x8c] sm:$0xff]
      %v199 = vld [vmem:[%s169 + $0x94] sm:$0xff]
      %v200 = vld [vmem:[%s169 + $0x9c] sm:$0xf]
      %v201 = vld [vmem:[%s169 + $0xa0] sm:$0xff]
      %v202 = vld [vmem:[%s169 + $0xa8] sm:$0xff]
      %v203 = vld [vmem:[%s169 + $0xb0] sm:$0xf]
      %v204 = vld [vmem:[%s169 + $0xb4] sm:$0xff]
      %v205 = vld [vmem:[%s169 + $0xbc] sm:$0xff]
      %v206 = vld [vmem:[%s169 + $0xc4] sm:$0xf]
      %v207 = vld [vmem:[%s169 + $0xc8] sm:$0xff]
      %v208 = vld [vmem:[%s169 + $0xd0] sm:$0xff]
      %v209 = vld [vmem:[%s169 + $0xd8] sm:$0xf]
      %v210 = vld [vmem:[%s169 + $0xdc] sm:$0xff]
      %v211 = vld [vmem:[%s169 + $0xe4] sm:$0xff]
      %v212 = vld [vmem:[%s169 + $0xec] sm:$0xf]
      %v213 = vld [vmem:[%s169 + $0xf0] sm:$0xff]
      %v214 = vld [vmem:[%s169 + $0xf8] sm:$0xff]
      %v215 = vld [vmem:[%s169 + $0x100] sm:$0xf]
      %v216 = vld [vmem:[%s169 + $0x104] sm:$0xff]
      %v217 = vld [vmem:[%s169 + $0x10c] sm:$0xff]
      %v218 = vld [vmem:[%s169 + $0x114] sm:$0xf]
      %v219 = vld [vmem:[%s169 + $0x118] sm:$0xff]
      %v220 = vld [vmem:[%s169 + $0x120] sm:$0xff]
      %v221 = vld [vmem:[%s169 + $0x128] sm:$0xf]
      %v222 = vld [vmem:[%s169 + $0x12c] sm:$0xff]
      %v223 = vld [vmem:[%s169 + $0x134] sm:$0xff]
      %v224 = vld [vmem:[%s169 + $0x13c] sm:$0xf]
      %v225 = vld [vmem:[%s169 + $0x140] sm:$0xff]
      %v226 = vld [vmem:[%s169 + $0x148] sm:$0xff]
      %v227 = vld [vmem:[%s169 + $0x150] sm:$0xf]
      %v228 = vld [vmem:[%s169 + $0x154] sm:$0xff]
      %v229 = vld [vmem:[%s169 + $0x15c] sm:$0xff]
      %v230 = vld [vmem:[%s169 + $0x164] sm:$0xf]
      %v231 = vld [vmem:[%s169 + $0x168] sm:$0xff]
      %v232 = vld [vmem:[%s169 + $0x170] sm:$0xff]
      %v233 = vld [vmem:[%s169 + $0x178] sm:$0xf]
      %v234 = vld [vmem:[%s169 + $0x17c] sm:$0xff]
      %v235 = vld [vmem:[%s169 + $0x184] sm:$0xff]
      %v236 = vld [vmem:[%s169 + $0x18c] sm:$0xf]
      %v237 = vld [vmem:[%s169 + $0x190] sm:$0xff]
      %v238 = vld [vmem:[%s169 + $0x198] sm:$0xff]
      %v239 = vld [vmem:[%s169 + $0x1a0] sm:$0xf]
      %v240 = vld [vmem:[%s169 + $0x1a4] sm:$0xff]
      %v241 = vld [vmem:[%s169 + $0x1ac] sm:$0xff]
      %v242 = vld [vmem:[%s169 + $0x1b4] sm:$0xf]
      %v243 = vld [vmem:[%s169 + $0x1b8] sm:$0xff]
      %v244 = vld [vmem:[%s169 + $0x1c0] sm:$0xff]
      %v245 = vld [vmem:[%s169 + $0x1c8] sm:$0xf]
      %v246 = vld [vmem:[%s169 + $0x1cc] sm:$0xff]
      %v247 = vld [vmem:[%s169 + $0x1d4] sm:$0xff]
      %v248 = vld [vmem:[%s169 + $0x1dc] sm:$0xf]
      %v249 = vld [vmem:[%s169 + $0x1e0] sm:$0xff]
      %v250 = vld [vmem:[%s169 + $0x1e8] sm:$0xff]
      %v251 = vld [vmem:[%s169 + $0x1f0] sm:$0xf]
      %v252 = vld [vmem:[%s169 + $0x1f4] sm:$0xff]
      %v253 = vld [vmem:[%s169 + $0x1fc] sm:$0xff]
      %v254 = vld [vmem:[%s169 + $0x204] sm:$0xf]
      %v255 = vld [vmem:[%s169 + $0x208] sm:$0xff]
      %v256 = vld [vmem:[%s169 + $0x210] sm:$0xff]
      %v257 = vld [vmem:[%s169 + $0x218] sm:$0xf]
      %v258 = vld [vmem:[%s169 + $0x21c] sm:$0xff]
      %v259 = vld [vmem:[%s169 + $0x224] sm:$0xff]
      %v260 = vld [vmem:[%s169 + $0x22c] sm:$0xf]
      %v261 = vld [vmem:[%s169 + $0x230] sm:$0xff]
      %v262 = vld [vmem:[%s169 + $0x238] sm:$0xff]
      %v263 = vld [vmem:[%s169 + $0x240] sm:$0xf]
      %v264 = vld [vmem:[%s169 + $0x244] sm:$0xff]
      %v265 = vld [vmem:[%s169 + $0x24c] sm:$0xff]
      %v266 = vld [vmem:[%s169 + $0x254] sm:$0xf]
      %v267 = vld [vmem:[%s169 + $0x258] sm:$0xff]
      %v268 = vld [vmem:[%s169 + $0x260] sm:$0xff]
      %v269 = vld [vmem:[%s169 + $0x268] sm:$0xf]
      %v270 = vld [vmem:[%s169 + $0x26c] sm:$0xff]
      %v271 = vld [vmem:[%s169 + $0x274] sm:$0xff]
      %v272 = vld [vmem:[%s169 + $0x27c] sm:$0xf]
      %v273 = vld [vmem:[%s1] sm:$0xf]
      %v274 = vld [vmem:[%s1 + $0x4] sm:$0xf]
      %v275 = vld [vmem:[%s1 + $0x8] sm:$0xf]
      %v276 = vld [vmem:[%s1 + $0xc] sm:$0xf]
      %v277 = vld [vmem:[%s1 + $0x10] sm:$0xf]
      %v278 = vld [vmem:[%s1 + $0x14] sm:$0xf]
      %v279 = vld [vmem:[%s1 + $0x18] sm:$0xf]
      %v280 = vld [vmem:[%s1 + $0x1c] sm:$0xf]
      %v281 = vld [vmem:[%s1 + $0x20] sm:$0xf]
      %v282 = vld [vmem:[%s1 + $0x24] sm:$0xf]
      %v283 = vld [vmem:[%s1 + $0x28] sm:$0xf]
      %v284 = vld [vmem:[%s1 + $0x2c] sm:$0xf]
      %v285 = vld [vmem:[%s1 + $0x30] sm:$0xf]
      %v286 = vld [vmem:[%s1 + $0x34] sm:$0xf]
      %v287 = vld [vmem:[%s1 + $0x38] sm:$0xf]
      %v288 = vld [vmem:[%s1 + $0x3c] sm:$0xf]
      %v289 = vld [vmem:[%s1 + $0x40] sm:$0xf]
      %v290 = vld [vmem:[%s1 + $0x44] sm:$0xf]
      %v291 = vld [vmem:[%s1 + $0x48] sm:$0xf]
      %v292 = vld [vmem:[%s1 + $0x4c] sm:$0xf]
      %v293 = vld [vmem:[%s1 + $0x50] sm:$0xf]
      %v294 = vld [vmem:[%s1 + $0x54] sm:$0xf]
      %v295 = vld [vmem:[%s1 + $0x58] sm:$0xf]
      %v296 = vld [vmem:[%s1 + $0x5c] sm:$0xf]
      %v297 = vld [vmem:[%s1 + $0x60] sm:$0xf]
      %v298 = vld [vmem:[%s1 + $0x64] sm:$0xf]
      %v299 = vld [vmem:[%s1 + $0x68] sm:$0xf]
      %v300 = vld [vmem:[%s1 + $0x6c] sm:$0xf]
      %v301 = vld [vmem:[%s1 + $0x70] sm:$0xf]
      %v302 = vld [vmem:[%s1 + $0x74] sm:$0xf]
      %v303 = vld [vmem:[%s1 + $0x78] sm:$0xf]
      %v304 = vld [vmem:[%s1 + $0x7c] sm:$0xf]
      %v305 = vld [vmem:[%s1 + $0x80] sm:$0xf]
      %v306 = vld [vmem:[%s1 + $0x84] sm:$0xf]
      %v307 = vld [vmem:[%s1 + $0x88] sm:$0xf]
      %v308 = vld [vmem:[%s1 + $0x8c] sm:$0xf]
      %v309 = vld [vmem:[%s1 + $0x90] sm:$0xf]
      %v310 = vld [vmem:[%s1 + $0x94] sm:$0xf]
      %v311 = vld [vmem:[%s1 + $0x98] sm:$0xf]
      %v312 = vld [vmem:[%s1 + $0x9c] sm:$0xf]
      %v313 = vld [vmem:[%s1 + $0xa0] sm:$0xf]
      %v314 = vld [vmem:[%s1 + $0xa4] sm:$0xf]
      %v315 = vld [vmem:[%s1 + $0xa8] sm:$0xf]
      %v316 = vld [vmem:[%s1 + $0xac] sm:$0xf]
      %v317 = vld [vmem:[%s1 + $0xb0] sm:$0xf]
      %v318 = vld [vmem:[%s1 + $0xb4] sm:$0xf]
      %v319 = vld [vmem:[%s1 + $0xb8] sm:$0xf]
      %v320 = vld [vmem:[%s1 + $0xbc] sm:$0xf]
      %v321 = vld [vmem:[%s1 + $0xc0] sm:$0xf]
      %v322 = vld [vmem:[%s1 + $0xc4] sm:$0xf]
      %v323 = vld [vmem:[%s1 + $0xc8] sm:$0xf]
      %v324 = vld [vmem:[%s1 + $0xcc] sm:$0xf]
      %v325 = vld [vmem:[%s1 + $0xd0] sm:$0xf]
      %v326 = vld [vmem:[%s1 + $0xd4] sm:$0xf]
      %v327 = vld [vmem:[%s1 + $0xd8] sm:$0xf]
      %v328 = vld [vmem:[%s1 + $0xdc] sm:$0xf]
      %v329 = vld [vmem:[%s1 + $0xe0] sm:$0xf]
      %v330 = vld [vmem:[%s1 + $0xe4] sm:$0xf]
      %v331 = vld [vmem:[%s1 + $0xe8] sm:$0xf]
      %v332 = vld [vmem:[%s1 + $0xec] sm:$0xf]
      %v333 = vld [vmem:[%s1 + $0xf0] sm:$0xf]
      %v334 = vld [vmem:[%s1 + $0xf4] sm:$0xf]
      %v335 = vld [vmem:[%s1 + $0xf8] sm:$0xf]
      %v336 = vld [vmem:[%s1 + $0xfc] sm:$0xf]
      %v337 = vld [vmem:[%s1 + $0x100] sm:$0xf]
      %v338 = vld [vmem:[%s1 + $0x104] sm:$0xf]
      %v339 = vld [vmem:[%s1 + $0x108] sm:$0xf]
      %v340 = vld [vmem:[%s1 + $0x10c] sm:$0xf]
      %v341 = vld [vmem:[%s1 + $0x110] sm:$0xf]
      %v342 = vld [vmem:[%s1 + $0x114] sm:$0xf]
      %v343 = vld [vmem:[%s1 + $0x118] sm:$0xf]
      %v344 = vld [vmem:[%s1 + $0x11c] sm:$0xf]
      %v345 = vld [vmem:[%s1 + $0x120] sm:$0xf]
      %v346 = vld [vmem:[%s1 + $0x124] sm:$0xf]
      %v347 = vld [vmem:[%s1 + $0x128] sm:$0xf]
      %v348 = vld [vmem:[%s1 + $0x12c] sm:$0xf]
      %v349 = vld [vmem:[%s1 + $0x130] sm:$0xf]
      %v350 = vld [vmem:[%s1 + $0x134] sm:$0xf]
      %v351 = vld [vmem:[%s1 + $0x138] sm:$0xf]
      %v352 = vld [vmem:[%s1 + $0x13c] sm:$0xf]
      %v353 = vld [vmem:[%s2] sm:$0x1]
      %v355 = vperm.slane %v353, 0
      %v453 = vunpack.c.l.b16 %v177
      %v454 = vunpack.c.h.b16 %v177
      %v455 = vunpack.c.l.b16 %v178
      %v456 = vunpack.c.h.b16 %v178
      %v457 = vunpack.c.l.b16 %v179
      %v458 = vunpack.c.l.b16 %v180
      %v459 = vunpack.c.h.b16 %v180
      %v460 = vunpack.c.l.b16 %v181
      %v461 = vunpack.c.h.b16 %v181
      %v462 = vunpack.c.l.b16 %v182
      %v463 = vunpack.c.l.b16 %v183
      %v464 = vunpack.c.h.b16 %v183
      %v465 = vunpack.c.l.b16 %v184
      %v466 = vunpack.c.h.b16 %v184
      %v467 = vunpack.c.l.b16 %v185
      %v468 = vunpack.c.l.b16 %v186
      %v469 = vunpack.c.h.b16 %v186
      %v470 = vunpack.c.l.b16 %v187
      %v471 = vunpack.c.h.b16 %v187
      %v472 = vunpack.c.l.b16 %v188
      %v473 = vunpack.c.l.b16 %v189
      %v474 = vunpack.c.h.b16 %v189
      %v475 = vunpack.c.l.b16 %v190
      %v476 = vunpack.c.h.b16 %v190
      %v477 = vunpack.c.l.b16 %v191
      %v478 = vunpack.c.l.b16 %v192
      %v479 = vunpack.c.h.b16 %v192
      %v480 = vunpack.c.l.b16 %v193
      %v481 = vunpack.c.h.b16 %v193
      %v482 = vunpack.c.l.b16 %v194
      %v483 = vunpack.c.l.b16 %v195
      %v484 = vunpack.c.h.b16 %v195
      %v485 = vunpack.c.l.b16 %v196
      %v486 = vunpack.c.h.b16 %v196
      %v487 = vunpack.c.l.b16 %v197
      %v488 = vunpack.c.l.b16 %v198
      %v489 = vunpack.c.h.b16 %v198
      %v490 = vunpack.c.l.b16 %v199
      %v491 = vunpack.c.h.b16 %v199
      %v492 = vunpack.c.l.b16 %v200
      %v493 = vunpack.c.l.b16 %v201
      %v494 = vunpack.c.h.b16 %v201
      %v495 = vunpack.c.l.b16 %v202
      %v496 = vunpack.c.h.b16 %v202
      %v497 = vunpack.c.l.b16 %v203
      %v498 = vunpack.c.l.b16 %v204
      %v499 = vunpack.c.h.b16 %v204
      %v500 = vunpack.c.l.b16 %v205
      %v501 = vunpack.c.h.b16 %v205
      %v502 = vunpack.c.l.b16 %v206
      %v503 = vunpack.c.l.b16 %v207
      %v504 = vunpack.c.h.b16 %v207
      %v505 = vunpack.c.l.b16 %v208
      %v506 = vunpack.c.h.b16 %v208
      %v507 = vunpack.c.l.b16 %v209
      %v508 = vunpack.c.l.b16 %v210
      %v509 = vunpack.c.h.b16 %v210
      %v510 = vunpack.c.l.b16 %v211
      %v511 = vunpack.c.h.b16 %v211
      %v512 = vunpack.c.l.b16 %v212
      %v513 = vunpack.c.l.b16 %v213
      %v514 = vunpack.c.h.b16 %v213
      %v515 = vunpack.c.l.b16 %v214
      %v516 = vunpack.c.h.b16 %v214
      %v517 = vunpack.c.l.b16 %v215
      %v518 = vunpack.c.l.b16 %v216
      %v519 = vunpack.c.h.b16 %v216
      %v520 = vunpack.c.l.b16 %v217
      %v521 = vunpack.c.h.b16 %v217
      %v522 = vunpack.c.l.b16 %v218
      %v523 = vunpack.c.l.b16 %v219
      %v524 = vunpack.c.h.b16 %v219
      %v525 = vunpack.c.l.b16 %v220
      %v526 = vunpack.c.h.b16 %v220
      %v527 = vunpack.c.l.b16 %v221
      %v528 = vunpack.c.l.b16 %v222
      %v529 = vunpack.c.h.b16 %v222
      %v530 = vunpack.c.l.b16 %v223
      %v531 = vunpack.c.h.b16 %v223
      %v532 = vunpack.c.l.b16 %v224
      %v533 = vunpack.c.l.b16 %v225
      %v534 = vunpack.c.h.b16 %v225
      %v535 = vunpack.c.l.b16 %v226
      %v536 = vunpack.c.h.b16 %v226
      %v537 = vunpack.c.l.b16 %v227
      %v538 = vunpack.c.l.b16 %v228
      %v539 = vunpack.c.h.b16 %v228
      %v540 = vunpack.c.l.b16 %v229
      %v541 = vunpack.c.h.b16 %v229
      %v542 = vunpack.c.l.b16 %v230
      %v543 = vunpack.c.l.b16 %v231
      %v544 = vunpack.c.h.b16 %v231
      %v545 = vunpack.c.l.b16 %v232
      %v546 = vunpack.c.h.b16 %v232
      %v547 = vunpack.c.l.b16 %v233
      %v548 = vunpack.c.l.b16 %v234
      %v549 = vunpack.c.h.b16 %v234
      %v550 = vunpack.c.l.b16 %v235
      %v551 = vunpack.c.h.b16 %v235
      %v552 = vunpack.c.l.b16 %v236
      %v553 = vunpack.c.l.b16 %v237
      %v554 = vunpack.c.h.b16 %v237
      %v555 = vunpack.c.l.b16 %v238
      %v556 = vunpack.c.h.b16 %v238
      %v557 = vunpack.c.l.b16 %v239
      %v558 = vunpack.c.l.b16 %v240
      %v559 = vunpack.c.h.b16 %v240
      %v560 = vunpack.c.l.b16 %v241
      %v561 = vunpack.c.h.b16 %v241
      %v562 = vunpack.c.l.b16 %v242
      %v563 = vunpack.c.l.b16 %v243
      %v564 = vunpack.c.h.b16 %v243
      %v565 = vunpack.c.l.b16 %v244
      %v566 = vunpack.c.h.b16 %v244
      %v567 = vunpack.c.l.b16 %v245
      %v568 = vunpack.c.l.b16 %v246
      %v569 = vunpack.c.h.b16 %v246
      %v570 = vunpack.c.l.b16 %v247
      %v571 = vunpack.c.h.b16 %v247
      %v572 = vunpack.c.l.b16 %v248
      %v573 = vunpack.c.l.b16 %v249
      %v574 = vunpack.c.h.b16 %v249
      %v575 = vunpack.c.l.b16 %v250
      %v576 = vunpack.c.h.b16 %v250
      %v577 = vunpack.c.l.b16 %v251
      %v578 = vunpack.c.l.b16 %v252
      %v579 = vunpack.c.h.b16 %v252
      %v580 = vunpack.c.l.b16 %v253
      %v581 = vunpack.c.h.b16 %v253
      %v582 = vunpack.c.l.b16 %v254
      %v583 = vunpack.c.l.b16 %v255
      %v584 = vunpack.c.h.b16 %v255
      %v585 = vunpack.c.l.b16 %v256
      %v586 = vunpack.c.h.b16 %v256
      %v587 = vunpack.c.l.b16 %v257
      %v588 = vunpack.c.l.b16 %v258
      %v589 = vunpack.c.h.b16 %v258
      %v590 = vunpack.c.l.b16 %v259
      %v591 = vunpack.c.h.b16 %v259
      %v592 = vunpack.c.l.b16 %v260
      %v593 = vunpack.c.l.b16 %v261
      %v594 = vunpack.c.h.b16 %v261
      %v595 = vunpack.c.l.b16 %v262
      %v596 = vunpack.c.h.b16 %v262
      %v597 = vunpack.c.l.b16 %v263
      %v598 = vunpack.c.l.b16 %v264
      %v599 = vunpack.c.h.b16 %v264
      %v600 = vunpack.c.l.b16 %v265
      %v601 = vunpack.c.h.b16 %v265
      %v602 = vunpack.c.l.b16 %v266
      %v603 = vunpack.c.l.b16 %v267
      %v604 = vunpack.c.h.b16 %v267
      %v605 = vunpack.c.l.b16 %v268
      %v606 = vunpack.c.h.b16 %v268
      %v607 = vunpack.c.l.b16 %v269
      %v608 = vunpack.c.l.b16 %v270
      %v609 = vunpack.c.h.b16 %v270
      %v610 = vunpack.c.l.b16 %v271
      %v611 = vunpack.c.h.b16 %v271
      %v612 = vunpack.c.l.b16 %v272
      %v613 = vpack.c.b16 %v458, %v453
      %v614 = vpack.c.b16 %v459, %v454
      %v615 = vpack.c.b16 %v460, %v455
      %v616 = vpack.c.b16 %v461, %v456
      %v617 = vpack.c.b16 %v462, %v457
      %v618 = vpack.c.b16 %v468, %v463
      %v619 = vpack.c.b16 %v469, %v464
      %v620 = vpack.c.b16 %v470, %v465
      %v621 = vpack.c.b16 %v471, %v466
      %v622 = vpack.c.b16 %v472, %v467
      %v623 = vpack.c.b16 %v478, %v473
      %v624 = vpack.c.b16 %v479, %v474
      %v625 = vpack.c.b16 %v480, %v475
      %v626 = vpack.c.b16 %v481, %v476
      %v627 = vpack.c.b16 %v482, %v477
      %v628 = vpack.c.b16 %v488, %v483
      %v629 = vpack.c.b16 %v489, %v484
      %v630 = vpack.c.b16 %v490, %v485
      %v631 = vpack.c.b16 %v491, %v486
      %v632 = vpack.c.b16 %v492, %v487
      %v633 = vpack.c.b16 %v498, %v493
      %v634 = vpack.c.b16 %v499, %v494
      %v635 = vpack.c.b16 %v500, %v495
      %v636 = vpack.c.b16 %v501, %v496
      %v637 = vpack.c.b16 %v502, %v497
      %v638 = vpack.c.b16 %v508, %v503
      %v639 = vpack.c.b16 %v509, %v504
      %v640 = vpack.c.b16 %v510, %v505
      %v641 = vpack.c.b16 %v511, %v506
      %v642 = vpack.c.b16 %v512, %v507
      %v643 = vpack.c.b16 %v518, %v513
      %v644 = vpack.c.b16 %v519, %v514
      %v645 = vpack.c.b16 %v520, %v515
      %v646 = vpack.c.b16 %v521, %v516
      %v647 = vpack.c.b16 %v522, %v517
      %v648 = vpack.c.b16 %v528, %v523
      %v649 = vpack.c.b16 %v529, %v524
      %v650 = vpack.c.b16 %v530, %v525
      %v651 = vpack.c.b16 %v531, %v526
      %v652 = vpack.c.b16 %v532, %v527
      %v653 = vpack.c.b16 %v538, %v533
      %v654 = vpack.c.b16 %v539, %v534
      %v655 = vpack.c.b16 %v540, %v535
      %v656 = vpack.c.b16 %v541, %v536
      %v657 = vpack.c.b16 %v542, %v537
      %v658 = vpack.c.b16 %v548, %v543
      %v659 = vpack.c.b16 %v549, %v544
      %v660 = vpack.c.b16 %v550, %v545
      %v661 = vpack.c.b16 %v551, %v546
      %v662 = vpack.c.b16 %v552, %v547
      %v663 = vpack.c.b16 %v558, %v553
      %v664 = vpack.c.b16 %v559, %v554
      %v665 = vpack.c.b16 %v560, %v555
      %v666 = vpack.c.b16 %v561, %v556
      %v667 = vpack.c.b16 %v562, %v557
      %v668 = vpack.c.b16 %v568, %v563
      %v669 = vpack.c.b16 %v569, %v564
      %v670 = vpack.c.b16 %v570, %v565
      %v671 = vpack.c.b16 %v571, %v566
      %v672 = vpack.c.b16 %v572, %v567
      %v673 = vpack.c.b16 %v578, %v573
      %v674 = vpack.c.b16 %v579, %v574
      %v675 = vpack.c.b16 %v580, %v575
      %v676 = vpack.c.b16 %v581, %v576
      %v677 = vpack.c.b16 %v582, %v577
      %v678 = vpack.c.b16 %v588, %v583
      %v679 = vpack.c.b16 %v589, %v584
      %v680 = vpack.c.b16 %v590, %v585
      %v681 = vpack.c.b16 %v591, %v586
      %v682 = vpack.c.b16 %v592, %v587
      %v683 = vpack.c.b16 %v598, %v593
      %v684 = vpack.c.b16 %v599, %v594
      %v685 = vpack.c.b16 %v600, %v595
      %v686 = vpack.c.b16 %v601, %v596
      %v687 = vpack.c.b16 %v602, %v597
      %v688 = vpack.c.b16 %v608, %v603
      %v689 = vpack.c.b16 %v609, %v604
      %v690 = vpack.c.b16 %v610, %v605
      %v691 = vpack.c.b16 %v611, %v606
      %v692 = vpack.c.b16 %v612, %v607
      %v853 = vunpack.c.l.b16 %v273
      %v854 = vunpack.c.l.b16 %v274
      %v855 = vunpack.c.l.b16 %v275
      %v856 = vunpack.c.l.b16 %v276
      %v857 = vunpack.c.l.b16 %v277
      %v858 = vunpack.c.l.b16 %v278
      %v859 = vunpack.c.l.b16 %v279
      %v860 = vunpack.c.l.b16 %v280
      %v861 = vunpack.c.l.b16 %v281
      %v862 = vunpack.c.l.b16 %v282
      %v863 = vunpack.c.l.b16 %v283
      %v864 = vunpack.c.l.b16 %v284
      %v865 = vunpack.c.l.b16 %v285
      %v866 = vunpack.c.l.b16 %v286
      %v867 = vunpack.c.l.b16 %v287
      %v868 = vunpack.c.l.b16 %v288
      %v869 = vunpack.c.l.b16 %v289
      %v870 = vunpack.c.l.b16 %v290
      %v871 = vunpack.c.l.b16 %v291
      %v872 = vunpack.c.l.b16 %v292
      %v873 = vunpack.c.l.b16 %v293
      %v874 = vunpack.c.l.b16 %v294
      %v875 = vunpack.c.l.b16 %v295
      %v876 = vunpack.c.l.b16 %v296
      %v877 = vunpack.c.l.b16 %v297
      %v878 = vunpack.c.l.b16 %v298
      %v879 = vunpack.c.l.b16 %v299
      %v880 = vunpack.c.l.b16 %v300
      %v881 = vunpack.c.l.b16 %v301
      %v882 = vunpack.c.l.b16 %v302
      %v883 = vunpack.c.l.b16 %v303
      %v884 = vunpack.c.l.b16 %v304
      %v885 = vunpack.c.l.b16 %v305
      %v886 = vunpack.c.l.b16 %v306
      %v887 = vunpack.c.l.b16 %v307
      %v888 = vunpack.c.l.b16 %v308
      %v889 = vunpack.c.l.b16 %v309
      %v890 = vunpack.c.l.b16 %v310
      %v891 = vunpack.c.l.b16 %v311
      %v892 = vunpack.c.l.b16 %v312
      %v893 = vunpack.c.l.b16 %v313
      %v894 = vunpack.c.l.b16 %v314
      %v895 = vunpack.c.l.b16 %v315
      %v896 = vunpack.c.l.b16 %v316
      %v897 = vunpack.c.l.b16 %v317
      %v898 = vunpack.c.l.b16 %v318
      %v899 = vunpack.c.l.b16 %v319
      %v900 = vunpack.c.l.b16 %v320
      %v901 = vunpack.c.l.b16 %v321
      %v902 = vunpack.c.l.b16 %v322
      %v903 = vunpack.c.l.b16 %v323
      %v904 = vunpack.c.l.b16 %v324
      %v905 = vunpack.c.l.b16 %v325
      %v906 = vunpack.c.l.b16 %v326
      %v907 = vunpack.c.l.b16 %v327
      %v908 = vunpack.c.l.b16 %v328
      %v909 = vunpack.c.l.b16 %v329
      %v910 = vunpack.c.l.b16 %v330
      %v911 = vunpack.c.l.b16 %v331
      %v912 = vunpack.c.l.b16 %v332
      %v913 = vunpack.c.l.b16 %v333
      %v914 = vunpack.c.l.b16 %v334
      %v915 = vunpack.c.l.b16 %v335
      %v916 = vunpack.c.l.b16 %v336
      %v917 = vunpack.c.l.b16 %v337
      %v918 = vunpack.c.l.b16 %v338
      %v919 = vunpack.c.l.b16 %v339
      %v920 = vunpack.c.l.b16 %v340
      %v921 = vunpack.c.l.b16 %v341
      %v922 = vunpack.c.l.b16 %v342
      %v923 = vunpack.c.l.b16 %v343
      %v924 = vunpack.c.l.b16 %v344
      %v925 = vunpack.c.l.b16 %v345
      %v926 = vunpack.c.l.b16 %v346
      %v927 = vunpack.c.l.b16 %v347
      %v928 = vunpack.c.l.b16 %v348
      %v929 = vunpack.c.l.b16 %v349
      %v930 = vunpack.c.l.b16 %v350
      %v931 = vunpack.c.l.b16 %v351
      %v932 = vunpack.c.l.b16 %v352
      %v933 = vpack.c.b16 %v854, %v853
      %v934 = vpack.c.b16 %v856, %v855
      %v935 = vpack.c.b16 %v858, %v857
      %v936 = vpack.c.b16 %v860, %v859
      %v937 = vpack.c.b16 %v862, %v861
      %v938 = vpack.c.b16 %v864, %v863
      %v939 = vpack.c.b16 %v866, %v865
      %v940 = vpack.c.b16 %v868, %v867
      %v941 = vpack.c.b16 %v870, %v869
      %v942 = vpack.c.b16 %v872, %v871
      %v943 = vpack.c.b16 %v874, %v873
      %v944 = vpack.c.b16 %v876, %v875
      %v945 = vpack.c.b16 %v878, %v877
      %v946 = vpack.c.b16 %v880, %v879
      %v947 = vpack.c.b16 %v882, %v881
      %v948 = vpack.c.b16 %v884, %v883
      %v949 = vpack.c.b16 %v886, %v885
      %v950 = vpack.c.b16 %v888, %v887
      %v951 = vpack.c.b16 %v890, %v889
      %v952 = vpack.c.b16 %v892, %v891
      %v953 = vpack.c.b16 %v894, %v893
      %v954 = vpack.c.b16 %v896, %v895
      %v955 = vpack.c.b16 %v898, %v897
      %v956 = vpack.c.b16 %v900, %v899
      %v957 = vpack.c.b16 %v902, %v901
      %v958 = vpack.c.b16 %v904, %v903
      %v959 = vpack.c.b16 %v906, %v905
      %v960 = vpack.c.b16 %v908, %v907
      %v961 = vpack.c.b16 %v910, %v909
      %v962 = vpack.c.b16 %v912, %v911
      %v963 = vpack.c.b16 %v914, %v913
      %v964 = vpack.c.b16 %v916, %v915
      %v965 = vpack.c.b16 %v918, %v917
      %v966 = vpack.c.b16 %v920, %v919
      %v967 = vpack.c.b16 %v922, %v921
      %v968 = vpack.c.b16 %v924, %v923
      %v969 = vpack.c.b16 %v926, %v925
      %v970 = vpack.c.b16 %v928, %v927
      %v971 = vpack.c.b16 %v930, %v929
      %v972 = vpack.c.b16 %v932, %v931
      %1013 = vmatpush.bf16.msra.mxu0 %v940
      %1014 = vmatpush.bf16.msra.mxu0 %v939
      %1015 = vmatpush.bf16.msra.mxu0 %v938
      %1016 = vmatpush.bf16.msra.mxu0 %v937
      %1017 = vmatpush.bf16.msra.mxu0 %v936
      %1018 = vmatpush.bf16.msra.mxu0 %v935
      %1019 = vmatpush.bf16.msra.mxu0 %v934
      %1020 = vmatpush.bf16.msra.mxu0 %v933
      %1021 = vmatmul.bf16.gmra.mxu0 %v613
      %v1022 = vpop.f32.mrf.mxu0
      %v1023 = vadd.f32 %v355, %v1022
      %v1024 = vpop.f32.mrf.mxu0
      %v1025 = vadd.f32 %v355, %v1024
      %1026 = vmatmul.bf16.gmra.mxu0 %v618
      %v1027 = vpop.f32.mrf.mxu0
      %v1028 = vadd.f32 %v355, %v1027
      %v1029 = vpop.f32.mrf.mxu0
      %v1030 = vadd.f32 %v355, %v1029
      %1031 = vmatmul.bf16.gmra.mxu0 %v623
      %v1032 = vpop.f32.mrf.mxu0
      %v1033 = vadd.f32 %v355, %v1032
      %v1034 = vpop.f32.mrf.mxu0
      %v1035 = vadd.f32 %v355, %v1034
      %1036 = vmatmul.bf16.gmra.mxu0 %v628
      %v1037 = vpop.f32.mrf.mxu0
      %v1038 = vadd.f32 %v355, %v1037
      %v1039 = vpop.f32.mrf.mxu0
      %v1040 = vadd.f32 %v355, %v1039
      %1041 = vmatmul.bf16.gmra.mxu0 %v633
      %v1042 = vpop.f32.mrf.mxu0
      %v1043 = vadd.f32 %v355, %v1042
      %v1044 = vpop.f32.mrf.mxu0
      %v1045 = vadd.f32 %v355, %v1044
      %1046 = vmatmul.bf16.gmra.mxu0 %v638
      %v1047 = vpop.f32.mrf.mxu0
      %v1048 = vadd.f32 %v355, %v1047
      %v1049 = vpop.f32.mrf.mxu0
      %v1050 = vadd.f32 %v355, %v1049
      %1051 = vmatmul.bf16.gmra.mxu0 %v643
      %v1052 = vpop.f32.mrf.mxu0
      %v1053 = vadd.f32 %v355, %v1052
      %v1054 = vpop.f32.mrf.mxu0
      %v1055 = vadd.f32 %v355, %v1054
      %1056 = vmatmul.bf16.gmra.mxu0 %v648
      %v1057 = vpop.f32.mrf.mxu0
      %v1058 = vadd.f32 %v355, %v1057
      %v1059 = vpop.f32.mrf.mxu0
      %v1060 = vadd.f32 %v355, %v1059
      %1061 = vmatmul.bf16.gmra.mxu0 %v653
      %v1062 = vpop.f32.mrf.mxu0
      %v1063 = vadd.f32 %v355, %v1062
      %v1064 = vpop.f32.mrf.mxu0
      %v1065 = vadd.f32 %v355, %v1064
      %1066 = vmatmul.bf16.gmra.mxu0 %v658
      %v1067 = vpop.f32.mrf.mxu0
      %v1068 = vadd.f32 %v355, %v1067
      %v1069 = vpop.f32.mrf.mxu0
      %v1070 = vadd.f32 %v355, %v1069
      %1071 = vmatmul.bf16.gmra.mxu0 %v663
      %v1072 = vpop.f32.mrf.mxu0
      %v1073 = vadd.f32 %v355, %v1072
      %v1074 = vpop.f32.mrf.mxu0
      %v1075 = vadd.f32 %v355, %v1074
      %1076 = vmatmul.bf16.gmra.mxu0 %v668
      %v1077 = vpop.f32.mrf.mxu0
      %v1078 = vadd.f32 %v355, %v1077
      %v1079 = vpop.f32.mrf.mxu0
      %v1080 = vadd.f32 %v355, %v1079
      %1081 = vmatmul.bf16.gmra.mxu0 %v673
      %v1082 = vpop.f32.mrf.mxu0
      %v1083 = vadd.f32 %v355, %v1082
      %v1084 = vpop.f32.mrf.mxu0
      %v1085 = vadd.f32 %v355, %v1084
      %1086 = vmatmul.bf16.gmra.mxu0 %v678
      %v1087 = vpop.f32.mrf.mxu0
      %v1088 = vadd.f32 %v355, %v1087
      %v1089 = vpop.f32.mrf.mxu0
      %v1090 = vadd.f32 %v355, %v1089
      %1091 = vmatmul.bf16.gmra.mxu0 %v683
      %v1092 = vpop.f32.mrf.mxu0
      %v1093 = vadd.f32 %v355, %v1092
      %v1094 = vpop.f32.mrf.mxu0
      %v1095 = vadd.f32 %v355, %v1094
      %1096 = vmatmul.bf16.gmra.mxu0 %v688
      %v1097 = vpop.f32.mrf.mxu0
      %v1098 = vadd.f32 %v355, %v1097
      %v1099 = vpop.f32.mrf.mxu0
      %v1100 = vadd.f32 %v355, %v1099
      %1101 = vdwg.mxu0
      %1102 = vmatpush.bf16.msra.mxu0 %v948
      %1103 = vmatpush.bf16.msra.mxu0 %v947
      %1104 = vmatpush.bf16.msra.mxu0 %v946
      %1105 = vmatpush.bf16.msra.mxu0 %v945
      %1106 = vmatpush.bf16.msra.mxu0 %v944
      %1107 = vmatpush.bf16.msra.mxu0 %v943
      %1108 = vmatpush.bf16.msra.mxu0 %v942
      %1109 = vmatpush.bf16.msra.mxu0 %v941
      %1110 = vmatmul.bf16.gmra.mxu0 %v614
      %v1111 = vpop.f32.mrf.mxu0
      %v1112 = vadd.f32 %v1023, %v1111
      %v1113 = vpop.f32.mrf.mxu0
      %v1114 = vadd.f32 %v1025, %v1113
      %1115 = vmatmul.bf16.gmra.mxu0 %v619
      %v1116 = vpop.f32.mrf.mxu0
      %v1117 = vadd.f32 %v1028, %v1116
      %v1118 = vpop.f32.mrf.mxu0
      %v1119 = vadd.f32 %v1030, %v1118
      %1120 = vmatmul.bf16.gmra.mxu0 %v624
      %v1121 = vpop.f32.mrf.mxu0
      %v1122 = vadd.f32 %v1033, %v1121
      %v1123 = vpop.f32.mrf.mxu0
      %v1124 = vadd.f32 %v1035, %v1123
      %1125 = vmatmul.bf16.gmra.mxu0 %v629
      %v1126 = vpop.f32.mrf.mxu0
      %v1127 = vadd.f32 %v1038, %v1126
      %v1128 = vpop.f32.mrf.mxu0
      %v1129 = vadd.f32 %v1040, %v1128
      %1130 = vmatmul.bf16.gmra.mxu0 %v634
      %v1131 = vpop.f32.mrf.mxu0
      %v1132 = vadd.f32 %v1043, %v1131
      %v1133 = vpop.f32.mrf.mxu0
      %v1134 = vadd.f32 %v1045, %v1133
      %1135 = vmatmul.bf16.gmra.mxu0 %v639
      %v1136 = vpop.f32.mrf.mxu0
      %v1137 = vadd.f32 %v1048, %v1136
      %v1138 = vpop.f32.mrf.mxu0
      %v1139 = vadd.f32 %v1050, %v1138
      %1140 = vmatmul.bf16.gmra.mxu0 %v644
      %v1141 = vpop.f32.mrf.mxu0
      %v1142 = vadd.f32 %v1053, %v1141
      %v1143 = vpop.f32.mrf.mxu0
      %v1144 = vadd.f32 %v1055, %v1143
      %1145 = vmatmul.bf16.gmra.mxu0 %v649
      %v1146 = vpop.f32.mrf.mxu0
      %v1147 = vadd.f32 %v1058, %v1146
      %v1148 = vpop.f32.mrf.mxu0
      %v1149 = vadd.f32 %v1060, %v1148
      %1150 = vmatmul.bf16.gmra.mxu0 %v654
      %v1151 = vpop.f32.mrf.mxu0
      %v1152 = vadd.f32 %v1063, %v1151
      %v1153 = vpop.f32.mrf.mxu0
      %v1154 = vadd.f32 %v1065, %v1153
      %1155 = vmatmul.bf16.gmra.mxu0 %v659
      %v1156 = vpop.f32.mrf.mxu0
      %v1157 = vadd.f32 %v1068, %v1156
      %v1158 = vpop.f32.mrf.mxu0
      %v1159 = vadd.f32 %v1070, %v1158
      %1160 = vmatmul.bf16.gmra.mxu0 %v664
      %v1161 = vpop.f32.mrf.mxu0
      %v1162 = vadd.f32 %v1073, %v1161
      %v1163 = vpop.f32.mrf.mxu0
      %v1164 = vadd.f32 %v1075, %v1163
      %1165 = vmatmul.bf16.gmra.mxu0 %v669
      %v1166 = vpop.f32.mrf.mxu0
      %v1167 = vadd.f32 %v1078, %v1166
      %v1168 = vpop.f32.mrf.mxu0
      %v1169 = vadd.f32 %v1080, %v1168
      %1170 = vmatmul.bf16.gmra.mxu0 %v674
      %v1171 = vpop.f32.mrf.mxu0
      %v1172 = vadd.f32 %v1083, %v1171
      %v1173 = vpop.f32.mrf.mxu0
      %v1174 = vadd.f32 %v1085, %v1173
      %1175 = vmatmul.bf16.gmra.mxu0 %v679
      %v1176 = vpop.f32.mrf.mxu0
      %v1177 = vadd.f32 %v1088, %v1176
      %v1178 = vpop.f32.mrf.mxu0
      %v1179 = vadd.f32 %v1090, %v1178
      %1180 = vmatmul.bf16.gmra.mxu0 %v684
      %v1181 = vpop.f32.mrf.mxu0
      %v1182 = vadd.f32 %v1093, %v1181
      %v1183 = vpop.f32.mrf.mxu0
      %v1184 = vadd.f32 %v1095, %v1183
      %1185 = vmatmul.bf16.gmra.mxu0 %v689
      %v1186 = vpop.f32.mrf.mxu0
      %v1187 = vadd.f32 %v1098, %v1186
      %v1188 = vpop.f32.mrf.mxu0
      %v1189 = vadd.f32 %v1100, %v1188
      %1190 = vdwg.mxu0
      %1191 = vmatpush.bf16.msra.mxu0 %v956
      %1192 = vmatpush.bf16.msra.mxu0 %v955
      %1193 = vmatpush.bf16.msra.mxu0 %v954
      %1194 = vmatpush.bf16.msra.mxu0 %v953
      %1195 = vmatpush.bf16.msra.mxu0 %v952
      %1196 = vmatpush.bf16.msra.mxu0 %v951
      %1197 = vmatpush.bf16.msra.mxu0 %v950
      %1198 = vmatpush.bf16.msra.mxu0 %v949
      %1199 = vmatmul.bf16.gmra.mxu0 %v615
      %v1200 = vpop.f32.mrf.mxu0
      %v1201 = vadd.f32 %v1112, %v1200
      %v1202 = vpop.f32.mrf.mxu0
      %v1203 = vadd.f32 %v1114, %v1202
      %1204 = vmatmul.bf16.gmra.mxu0 %v620
      %v1205 = vpop.f32.mrf.mxu0
      %v1206 = vadd.f32 %v1117, %v1205
      %v1207 = vpop.f32.mrf.mxu0
      %v1208 = vadd.f32 %v1119, %v1207
      %1209 = vmatmul.bf16.gmra.mxu0 %v625
      %v1210 = vpop.f32.mrf.mxu0
      %v1211 = vadd.f32 %v1122, %v1210
      %v1212 = vpop.f32.mrf.mxu0
      %v1213 = vadd.f32 %v1124, %v1212
      %1214 = vmatmul.bf16.gmra.mxu0 %v630
      %v1215 = vpop.f32.mrf.mxu0
      %v1216 = vadd.f32 %v1127, %v1215
      %v1217 = vpop.f32.mrf.mxu0
      %v1218 = vadd.f32 %v1129, %v1217
      %1219 = vmatmul.bf16.gmra.mxu0 %v635
      %v1220 = vpop.f32.mrf.mxu0
      %v1221 = vadd.f32 %v1132, %v1220
      %v1222 = vpop.f32.mrf.mxu0
      %v1223 = vadd.f32 %v1134, %v1222
      %1224 = vmatmul.bf16.gmra.mxu0 %v640
      %v1225 = vpop.f32.mrf.mxu0
      %v1226 = vadd.f32 %v1137, %v1225
      %v1227 = vpop.f32.mrf.mxu0
      %v1228 = vadd.f32 %v1139, %v1227
      %1229 = vmatmul.bf16.gmra.mxu0 %v645
      %v1230 = vpop.f32.mrf.mxu0
      %v1231 = vadd.f32 %v1142, %v1230
      %v1232 = vpop.f32.mrf.mxu0
      %v1233 = vadd.f32 %v1144, %v1232
      %1234 = vmatmul.bf16.gmra.mxu0 %v650
      %v1235 = vpop.f32.mrf.mxu0
      %v1236 = vadd.f32 %v1147, %v1235
      %v1237 = vpop.f32.mrf.mxu0
      %v1238 = vadd.f32 %v1149, %v1237
      %1239 = vmatmul.bf16.gmra.mxu0 %v655
      %v1240 = vpop.f32.mrf.mxu0
      %v1241 = vadd.f32 %v1152, %v1240
      %v1242 = vpop.f32.mrf.mxu0
      %v1243 = vadd.f32 %v1154, %v1242
      %1244 = vmatmul.bf16.gmra.mxu0 %v660
      %v1245 = vpop.f32.mrf.mxu0
      %v1246 = vadd.f32 %v1157, %v1245
      %v1247 = vpop.f32.mrf.mxu0
      %v1248 = vadd.f32 %v1159, %v1247
      %1249 = vmatmul.bf16.gmra.mxu0 %v665
      %v1250 = vpop.f32.mrf.mxu0
      %v1251 = vadd.f32 %v1162, %v1250
      %v1252 = vpop.f32.mrf.mxu0
      %v1253 = vadd.f32 %v1164, %v1252
      %1254 = vmatmul.bf16.gmra.mxu0 %v670
      %v1255 = vpop.f32.mrf.mxu0
      %v1256 = vadd.f32 %v1167, %v1255
      %v1257 = vpop.f32.mrf.mxu0
      %v1258 = vadd.f32 %v1169, %v1257
      %1259 = vmatmul.bf16.gmra.mxu0 %v675
      %v1260 = vpop.f32.mrf.mxu0
      %v1261 = vadd.f32 %v1172, %v1260
      %v1262 = vpop.f32.mrf.mxu0
      %v1263 = vadd.f32 %v1174, %v1262
      %1264 = vmatmul.bf16.gmra.mxu0 %v680
      %v1265 = vpop.f32.mrf.mxu0
      %v1266 = vadd.f32 %v1177, %v1265
      %v1267 = vpop.f32.mrf.mxu0
      %v1268 = vadd.f32 %v1179, %v1267
      %1269 = vmatmul.bf16.gmra.mxu0 %v685
      %v1270 = vpop.f32.mrf.mxu0
      %v1271 = vadd.f32 %v1182, %v1270
      %v1272 = vpop.f32.mrf.mxu0
      %v1273 = vadd.f32 %v1184, %v1272
      %1274 = vmatmul.bf16.gmra.mxu0 %v690
      %v1275 = vpop.f32.mrf.mxu0
      %v1276 = vadd.f32 %v1187, %v1275
      %v1277 = vpop.f32.mrf.mxu0
      %v1278 = vadd.f32 %v1189, %v1277
      %1279 = vdwg.mxu0
      %1280 = vmatpush.bf16.msra.mxu0 %v964
      %1281 = vmatpush.bf16.msra.mxu0 %v963
      %1282 = vmatpush.bf16.msra.mxu0 %v962
      %1283 = vmatpush.bf16.msra.mxu0 %v961
      %1284 = vmatpush.bf16.msra.mxu0 %v960
      %1285 = vmatpush.bf16.msra.mxu0 %v959
      %1286 = vmatpush.bf16.msra.mxu0 %v958
      %1287 = vmatpush.bf16.msra.mxu0 %v957
      %1288 = vmatmul.bf16.gmra.mxu0 %v616
      %v1289 = vpop.f32.mrf.mxu0
      %v1290 = vadd.f32 %v1201, %v1289
      %v1291 = vpop.f32.mrf.mxu0
      %v1292 = vadd.f32 %v1203, %v1291
      %1293 = vmatmul.bf16.gmra.mxu0 %v621
      %v1294 = vpop.f32.mrf.mxu0
      %v1295 = vadd.f32 %v1206, %v1294
      %v1296 = vpop.f32.mrf.mxu0
      %v1297 = vadd.f32 %v1208, %v1296
      %1298 = vmatmul.bf16.gmra.mxu0 %v626
      %v1299 = vpop.f32.mrf.mxu0
      %v1300 = vadd.f32 %v1211, %v1299
      %v1301 = vpop.f32.mrf.mxu0
      %v1302 = vadd.f32 %v1213, %v1301
      %1303 = vmatmul.bf16.gmra.mxu0 %v631
      %v1304 = vpop.f32.mrf.mxu0
      %v1305 = vadd.f32 %v1216, %v1304
      %v1306 = vpop.f32.mrf.mxu0
      %v1307 = vadd.f32 %v1218, %v1306
      %1308 = vmatmul.bf16.gmra.mxu0 %v636
      %v1309 = vpop.f32.mrf.mxu0
      %v1310 = vadd.f32 %v1221, %v1309
      %v1311 = vpop.f32.mrf.mxu0
      %v1312 = vadd.f32 %v1223, %v1311
      %1313 = vmatmul.bf16.gmra.mxu0 %v641
      %v1314 = vpop.f32.mrf.mxu0
      %v1315 = vadd.f32 %v1226, %v1314
      %v1316 = vpop.f32.mrf.mxu0
      %v1317 = vadd.f32 %v1228, %v1316
      %1318 = vmatmul.bf16.gmra.mxu0 %v646
      %v1319 = vpop.f32.mrf.mxu0
      %v1320 = vadd.f32 %v1231, %v1319
      %v1321 = vpop.f32.mrf.mxu0
      %v1322 = vadd.f32 %v1233, %v1321
      %1323 = vmatmul.bf16.gmra.mxu0 %v651
      %v1324 = vpop.f32.mrf.mxu0
      %v1325 = vadd.f32 %v1236, %v1324
      %v1326 = vpop.f32.mrf.mxu0
      %v1327 = vadd.f32 %v1238, %v1326
      %1328 = vmatmul.bf16.gmra.mxu0 %v656
      %v1329 = vpop.f32.mrf.mxu0
      %v1330 = vadd.f32 %v1241, %v1329
      %v1331 = vpop.f32.mrf.mxu0
      %v1332 = vadd.f32 %v1243, %v1331
      %1333 = vmatmul.bf16.gmra.mxu0 %v661
      %v1334 = vpop.f32.mrf.mxu0
      %v1335 = vadd.f32 %v1246, %v1334
      %v1336 = vpop.f32.mrf.mxu0
      %v1337 = vadd.f32 %v1248, %v1336
      %1338 = vmatmul.bf16.gmra.mxu0 %v666
      %v1339 = vpop.f32.mrf.mxu0
      %v1340 = vadd.f32 %v1251, %v1339
      %v1341 = vpop.f32.mrf.mxu0
      %v1342 = vadd.f32 %v1253, %v1341
      %1343 = vmatmul.bf16.gmra.mxu0 %v671
      %v1344 = vpop.f32.mrf.mxu0
      %v1345 = vadd.f32 %v1256, %v1344
      %v1346 = vpop.f32.mrf.mxu0
      %v1347 = vadd.f32 %v1258, %v1346
      %1348 = vmatmul.bf16.gmra.mxu0 %v676
      %v1349 = vpop.f32.mrf.mxu0
      %v1350 = vadd.f32 %v1261, %v1349
      %v1351 = vpop.f32.mrf.mxu0
      %v1352 = vadd.f32 %v1263, %v1351
      %1353 = vmatmul.bf16.gmra.mxu0 %v681
      %v1354 = vpop.f32.mrf.mxu0
      %v1355 = vadd.f32 %v1266, %v1354
      %v1356 = vpop.f32.mrf.mxu0
      %v1357 = vadd.f32 %v1268, %v1356
      %1358 = vmatmul.bf16.gmra.mxu0 %v686
      %v1359 = vpop.f32.mrf.mxu0
      %v1360 = vadd.f32 %v1271, %v1359
      %v1361 = vpop.f32.mrf.mxu0
      %v1362 = vadd.f32 %v1273, %v1361
      %1363 = vmatmul.bf16.gmra.mxu0 %v691
      %v1364 = vpop.f32.mrf.mxu0
      %v1365 = vadd.f32 %v1276, %v1364
      %v1366 = vpop.f32.mrf.mxu0
      %v1367 = vadd.f32 %v1278, %v1366
      %1368 = vdwg.mxu0
      %1369 = vmatpush.bf16.msra.mxu0 %v972
      %1370 = vmatpush.bf16.msra.mxu0 %v971
      %1371 = vmatpush.bf16.msra.mxu0 %v970
      %1372 = vmatpush.bf16.msra.mxu0 %v969
      %1373 = vmatpush.bf16.msra.mxu0 %v968
      %1374 = vmatpush.bf16.msra.mxu0 %v967
      %1375 = vmatpush.bf16.msra.mxu0 %v966
      %1376 = vmatpush.bf16.msra.mxu0 %v965
      %1377 = vmatmul.bf16.gmra.mxu0 %v617
      %v1378 = vpop.f32.mrf.mxu0
      %v1379 = vadd.f32 %v1290, %v1378
      %v1380 = vpop.f32.mrf.mxu0
      %v1381 = vadd.f32 %v1292, %v1380
      %1382 = vmatmul.bf16.gmra.mxu0 %v622
      %v1383 = vpop.f32.mrf.mxu0
      %v1384 = vadd.f32 %v1295, %v1383
      %v1385 = vpop.f32.mrf.mxu0
      %v1386 = vadd.f32 %v1297, %v1385
      %1387 = vmatmul.bf16.gmra.mxu0 %v627
      %v1388 = vpop.f32.mrf.mxu0
      %v1389 = vadd.f32 %v1300, %v1388
      %v1390 = vpop.f32.mrf.mxu0
      %v1391 = vadd.f32 %v1302, %v1390
      %1392 = vmatmul.bf16.gmra.mxu0 %v632
      %v1393 = vpop.f32.mrf.mxu0
      %v1394 = vadd.f32 %v1305, %v1393
      %v1395 = vpop.f32.mrf.mxu0
      %v1396 = vadd.f32 %v1307, %v1395
      %1397 = vmatmul.bf16.gmra.mxu0 %v637
      %v1398 = vpop.f32.mrf.mxu0
      %v1399 = vadd.f32 %v1310, %v1398
      %v1400 = vpop.f32.mrf.mxu0
      %v1401 = vadd.f32 %v1312, %v1400
      %1402 = vmatmul.bf16.gmra.mxu0 %v642
      %v1403 = vpop.f32.mrf.mxu0
      %v1404 = vadd.f32 %v1315, %v1403
      %v1405 = vpop.f32.mrf.mxu0
      %v1406 = vadd.f32 %v1317, %v1405
      %1407 = vmatmul.bf16.gmra.mxu0 %v647
      %v1408 = vpop.f32.mrf.mxu0
      %v1409 = vadd.f32 %v1320, %v1408
      %v1410 = vpop.f32.mrf.mxu0
      %v1411 = vadd.f32 %v1322, %v1410
      %1412 = vmatmul.bf16.gmra.mxu0 %v652
      %v1413 = vpop.f32.mrf.mxu0
      %v1414 = vadd.f32 %v1325, %v1413
      %v1415 = vpop.f32.mrf.mxu0
      %v1416 = vadd.f32 %v1327, %v1415
      %1417 = vmatmul.bf16.gmra.mxu0 %v657
      %v1418 = vpop.f32.mrf.mxu0
      %v1419 = vadd.f32 %v1330, %v1418
      %v1420 = vpop.f32.mrf.mxu0
      %v1421 = vadd.f32 %v1332, %v1420
      %1422 = vmatmul.bf16.gmra.mxu0 %v662
      %v1423 = vpop.f32.mrf.mxu0
      %v1424 = vadd.f32 %v1335, %v1423
      %v1425 = vpop.f32.mrf.mxu0
      %v1426 = vadd.f32 %v1337, %v1425
      %1427 = vmatmul.bf16.gmra.mxu0 %v667
      %v1428 = vpop.f32.mrf.mxu0
      %v1429 = vadd.f32 %v1340, %v1428
      %v1430 = vpop.f32.mrf.mxu0
      %v1431 = vadd.f32 %v1342, %v1430
      %1432 = vmatmul.bf16.gmra.mxu0 %v672
      %v1433 = vpop.f32.mrf.mxu0
      %v1434 = vadd.f32 %v1345, %v1433
      %v1435 = vpop.f32.mrf.mxu0
      %v1436 = vadd.f32 %v1347, %v1435
      %1437 = vmatmul.bf16.gmra.mxu0 %v677
      %v1438 = vpop.f32.mrf.mxu0
      %v1439 = vadd.f32 %v1350, %v1438
      %v1440 = vpop.f32.mrf.mxu0
      %v1441 = vadd.f32 %v1352, %v1440
      %1442 = vmatmul.bf16.gmra.mxu0 %v682
      %v1443 = vpop.f32.mrf.mxu0
      %v1444 = vadd.f32 %v1355, %v1443
      %v1445 = vpop.f32.mrf.mxu0
      %v1446 = vadd.f32 %v1357, %v1445
      %1447 = vmatmul.bf16.gmra.mxu0 %v687
      %v1448 = vpop.f32.mrf.mxu0
      %v1449 = vadd.f32 %v1360, %v1448
      %v1450 = vpop.f32.mrf.mxu0
      %v1451 = vadd.f32 %v1362, %v1450
      %1452 = vmatmul.bf16.gmra.mxu0 %v692
      %v1453 = vpop.f32.mrf.mxu0
      %v1454 = vadd.f32 %v1365, %v1453
      %v1455 = vpop.f32.mrf.mxu0
      %v1456 = vadd.f32 %v1367, %v1455
      %1457 = vdwg.mxu0
      %v1458 = vxor.u32 %v1379, 2147483648
      %v1459 = vxor.u32 %v1381, 2147483648
      %v1460 = vxor.u32 %v1384, 2147483648
      %v1461 = vxor.u32 %v1386, 2147483648
      %v1462 = vxor.u32 %v1389, 2147483648
      %v1463 = vxor.u32 %v1391, 2147483648
      %v1464 = vxor.u32 %v1394, 2147483648
      %v1465 = vxor.u32 %v1396, 2147483648
      %v1466 = vxor.u32 %v1399, 2147483648
      %v1467 = vxor.u32 %v1401, 2147483648
      %v1468 = vxor.u32 %v1404, 2147483648
      %v1469 = vxor.u32 %v1406, 2147483648
      %v1470 = vxor.u32 %v1409, 2147483648
      %v1471 = vxor.u32 %v1411, 2147483648
      %v1472 = vxor.u32 %v1414, 2147483648
      %v1473 = vxor.u32 %v1416, 2147483648
      %v1474 = vxor.u32 %v1419, 2147483648
      %v1475 = vxor.u32 %v1421, 2147483648
      %v1476 = vxor.u32 %v1424, 2147483648
      %v1477 = vxor.u32 %v1426, 2147483648
      %v1478 = vxor.u32 %v1429, 2147483648
      %v1479 = vxor.u32 %v1431, 2147483648
      %v1480 = vxor.u32 %v1434, 2147483648
      %v1481 = vxor.u32 %v1436, 2147483648
      %v1482 = vxor.u32 %v1439, 2147483648
      %v1483 = vxor.u32 %v1441, 2147483648
      %v1484 = vxor.u32 %v1444, 2147483648
      %v1485 = vxor.u32 %v1446, 2147483648
      %v1486 = vxor.u32 %v1449, 2147483648
      %v1487 = vxor.u32 %v1451, 2147483648
      %v1488 = vxor.u32 %v1454, 2147483648
      %v1489 = vxor.u32 %v1456, 2147483648
      %v1490 = vmul.f32 %v1458, 1.442695
      %v1491 = vpow.pop %v1490
      %v1492 = vmul.f32 %v1459, 1.442695
      %v1493 = vpow.pop %v1492
      %v1494 = vmul.f32 %v1460, 1.442695
      %v1495 = vpow.pop %v1494
      %v1496 = vmul.f32 %v1461, 1.442695
      %v1497 = vpow.pop %v1496
      %v1498 = vmul.f32 %v1462, 1.442695
      %v1499 = vpow.pop %v1498
      %v1500 = vmul.f32 %v1463, 1.442695
      %v1501 = vpow.pop %v1500
      %v1502 = vmul.f32 %v1464, 1.442695
      %v1503 = vpow.pop %v1502
      %v1504 = vmul.f32 %v1465, 1.442695
      %v1505 = vpow.pop %v1504
      %v1506 = vmul.f32 %v1466, 1.442695
      %v1507 = vpow.pop %v1506
      %v1508 = vmul.f32 %v1467, 1.442695
      %v1509 = vpow.pop %v1508
      %v1510 = vmul.f32 %v1468, 1.442695
      %v1511 = vpow.pop %v1510
      %v1512 = vmul.f32 %v1469, 1.442695
      %v1513 = vpow.pop %v1512
      %v1514 = vmul.f32 %v1470, 1.442695
      %v1515 = vpow.pop %v1514
      %v1516 = vmul.f32 %v1471, 1.442695
      %v1517 = vpow.pop %v1516
      %v1518 = vmul.f32 %v1472, 1.442695
      %v1519 = vpow.pop %v1518
      %v1520 = vmul.f32 %v1473, 1.442695
      %v1521 = vpow.pop %v1520
      %v1522 = vmul.f32 %v1474, 1.442695
      %v1523 = vpow.pop %v1522
      %v1524 = vmul.f32 %v1475, 1.442695
      %v1525 = vpow.pop %v1524
      %v1526 = vmul.f32 %v1476, 1.442695
      %v1527 = vpow.pop %v1526
      %v1528 = vmul.f32 %v1477, 1.442695
      %v1529 = vpow.pop %v1528
      %v1530 = vmul.f32 %v1478, 1.442695
      %v1531 = vpow.pop %v1530
      %v1532 = vmul.f32 %v1479, 1.442695
      %v1533 = vpow.pop %v1532
      %v1534 = vmul.f32 %v1480, 1.442695
      %v1535 = vpow.pop %v1534
      %v1536 = vmul.f32 %v1481, 1.442695
      %v1537 = vpow.pop %v1536
      %v1538 = vmul.f32 %v1482, 1.442695
      %v1539 = vpow.pop %v1538
      %v1540 = vmul.f32 %v1483, 1.442695
      %v1541 = vpow.pop %v1540
      %v1542 = vmul.f32 %v1484, 1.442695
      %v1543 = vpow.pop %v1542
      %v1544 = vmul.f32 %v1485, 1.442695
      %v1545 = vpow.pop %v1544
      %v1546 = vmul.f32 %v1486, 1.442695
      %v1547 = vpow.pop %v1546
      %v1548 = vmul.f32 %v1487, 1.442695
      %v1549 = vpow.pop %v1548
      %v1550 = vmul.f32 %v1488, 1.442695
      %v1551 = vpow.pop %v1550
      %v1552 = vmul.f32 %v1489, 1.442695
      %v1553 = vpow.pop %v1552
      %v1554 = vadd.f32 %v1491, 1.0
      %v1555 = vadd.f32 %v1493, 1.0
      %v1556 = vadd.f32 %v1495, 1.0
      %v1557 = vadd.f32 %v1497, 1.0
      %v1558 = vadd.f32 %v1499, 1.0
      %v1559 = vadd.f32 %v1501, 1.0
      %v1560 = vadd.f32 %v1503, 1.0
      %v1561 = vadd.f32 %v1505, 1.0
      %v1562 = vadd.f32 %v1507, 1.0
      %v1563 = vadd.f32 %v1509, 1.0
      %v1564 = vadd.f32 %v1511, 1.0
      %v1565 = vadd.f32 %v1513, 1.0
      %v1566 = vadd.f32 %v1515, 1.0
      %v1567 = vadd.f32 %v1517, 1.0
      %v1568 = vadd.f32 %v1519, 1.0
      %v1569 = vadd.f32 %v1521, 1.0
      %v1570 = vadd.f32 %v1523, 1.0
      %v1571 = vadd.f32 %v1525, 1.0
      %v1572 = vadd.f32 %v1527, 1.0
      %v1573 = vadd.f32 %v1529, 1.0
      %v1574 = vadd.f32 %v1531, 1.0
      %v1575 = vadd.f32 %v1533, 1.0
      %v1576 = vadd.f32 %v1535, 1.0
      %v1577 = vadd.f32 %v1537, 1.0
      %v1578 = vadd.f32 %v1539, 1.0
      %v1579 = vadd.f32 %v1541, 1.0
      %v1580 = vadd.f32 %v1543, 1.0
      %v1581 = vadd.f32 %v1545, 1.0
      %v1582 = vadd.f32 %v1547, 1.0
      %v1583 = vadd.f32 %v1549, 1.0
      %v1584 = vadd.f32 %v1551, 1.0
      %v1585 = vadd.f32 %v1553, 1.0
      %v1586 = vrcp.pop %v1554
      %v1587 = vmul.f32 %v1554, %v1586
      %v1588 = vsub.f32 1.0, %v1587
      %v1589 = vmul.f32 %v1586, %v1588
      %v1590 = vadd.f32 %v1586, %v1589
      %vm1591 = vweird.f32 %v1554
      %vm1592 = vweird.f32 %v1586
      %vm1593 = vmor %vm1591, %vm1592
      %v1594 = vsel %vm1593, %v1586, %v1590
      %v1595 = vand.u32 2147483647, %v1554
      %vm1596 = vcmp.eq.f32.partialorder %v1595, 8.507059e+37
      %v1597 = vand.u32 %v1554, 2147483648
      %v1598 = vor.u32 1.1754944e-38, %v1597
      %v1599 = vsel %vm1596, %v1598, %v1594
      %v1600 = vmul.f32 1.0, %v1599
      %v1601 = vrcp.pop %v1555
      %v1602 = vmul.f32 %v1555, %v1601
      %v1603 = vsub.f32 1.0, %v1602
      %v1604 = vmul.f32 %v1601, %v1603
      %v1605 = vadd.f32 %v1601, %v1604
      %vm1606 = vweird.f32 %v1555
      %vm1607 = vweird.f32 %v1601
      %vm1608 = vmor %vm1606, %vm1607
      %v1609 = vsel %vm1608, %v1601, %v1605
      %v1610 = vand.u32 2147483647, %v1555
      %vm1611 = vcmp.eq.f32.partialorder %v1610, 8.507059e+37
      %v1612 = vand.u32 %v1555, 2147483648
      %v1613 = vor.u32 1.1754944e-38, %v1612
      %v1614 = vsel %vm1611, %v1613, %v1609
      %v1615 = vmul.f32 1.0, %v1614
      %v1616 = vrcp.pop %v1556
      %v1617 = vmul.f32 %v1556, %v1616
      %v1618 = vsub.f32 1.0, %v1617
      %v1619 = vmul.f32 %v1616, %v1618
      %v1620 = vadd.f32 %v1616, %v1619
      %vm1621 = vweird.f32 %v1556
      %vm1622 = vweird.f32 %v1616
      %vm1623 = vmor %vm1621, %vm1622
      %v1624 = vsel %vm1623, %v1616, %v1620
      %v1625 = vand.u32 2147483647, %v1556
      %vm1626 = vcmp.eq.f32.partialorder %v1625, 8.507059e+37
      %v1627 = vand.u32 %v1556, 2147483648
      %v1628 = vor.u32 1.1754944e-38, %v1627
      %v1629 = vsel %vm1626, %v1628, %v1624
      %v1630 = vmul.f32 1.0, %v1629
      %v1631 = vrcp.pop %v1557
      %v1632 = vmul.f32 %v1557, %v1631
      %v1633 = vsub.f32 1.0, %v1632
      %v1634 = vmul.f32 %v1631, %v1633
      %v1635 = vadd.f32 %v1631, %v1634
      %vm1636 = vweird.f32 %v1557
      %vm1637 = vweird.f32 %v1631
      %vm1638 = vmor %vm1636, %vm1637
      %v1639 = vsel %vm1638, %v1631, %v1635
      %v1640 = vand.u32 2147483647, %v1557
      %vm1641 = vcmp.eq.f32.partialorder %v1640, 8.507059e+37
      %v1642 = vand.u32 %v1557, 2147483648
      %v1643 = vor.u32 1.1754944e-38, %v1642
      %v1644 = vsel %vm1641, %v1643, %v1639
      %v1645 = vmul.f32 1.0, %v1644
      %v1646 = vrcp.pop %v1558
      %v1647 = vmul.f32 %v1558, %v1646
      %v1648 = vsub.f32 1.0, %v1647
      %v1649 = vmul.f32 %v1646, %v1648
      %v1650 = vadd.f32 %v1646, %v1649
      %vm1651 = vweird.f32 %v1558
      %vm1652 = vweird.f32 %v1646
      %vm1653 = vmor %vm1651, %vm1652
      %v1654 = vsel %vm1653, %v1646, %v1650
      %v1655 = vand.u32 2147483647, %v1558
      %vm1656 = vcmp.eq.f32.partialorder %v1655, 8.507059e+37
      %v1657 = vand.u32 %v1558, 2147483648
      %v1658 = vor.u32 1.1754944e-38, %v1657
      %v1659 = vsel %vm1656, %v1658, %v1654
      %v1660 = vmul.f32 1.0, %v1659
      %v1661 = vrcp.pop %v1559
      %v1662 = vmul.f32 %v1559, %v1661
      %v1663 = vsub.f32 1.0, %v1662
      %v1664 = vmul.f32 %v1661, %v1663
      %v1665 = vadd.f32 %v1661, %v1664
      %vm1666 = vweird.f32 %v1559
      %vm1667 = vweird.f32 %v1661
      %vm1668 = vmor %vm1666, %vm1667
      %v1669 = vsel %vm1668, %v1661, %v1665
      %v1670 = vand.u32 2147483647, %v1559
      %vm1671 = vcmp.eq.f32.partialorder %v1670, 8.507059e+37
      %v1672 = vand.u32 %v1559, 2147483648
      %v1673 = vor.u32 1.1754944e-38, %v1672
      %v1674 = vsel %vm1671, %v1673, %v1669
      %v1675 = vmul.f32 1.0, %v1674
      %v1676 = vrcp.pop %v1560
      %v1677 = vmul.f32 %v1560, %v1676
      %v1678 = vsub.f32 1.0, %v1677
      %v1679 = vmul.f32 %v1676, %v1678
      %v1680 = vadd.f32 %v1676, %v1679
      %vm1681 = vweird.f32 %v1560
      %vm1682 = vweird.f32 %v1676
      %vm1683 = vmor %vm1681, %vm1682
      %v1684 = vsel %vm1683, %v1676, %v1680
      %v1685 = vand.u32 2147483647, %v1560
      %vm1686 = vcmp.eq.f32.partialorder %v1685, 8.507059e+37
      %v1687 = vand.u32 %v1560, 2147483648
      %v1688 = vor.u32 1.1754944e-38, %v1687
      %v1689 = vsel %vm1686, %v1688, %v1684
      %v1690 = vmul.f32 1.0, %v1689
      %v1691 = vrcp.pop %v1561
      %v1692 = vmul.f32 %v1561, %v1691
      %v1693 = vsub.f32 1.0, %v1692
      %v1694 = vmul.f32 %v1691, %v1693
      %v1695 = vadd.f32 %v1691, %v1694
      %vm1696 = vweird.f32 %v1561
      %vm1697 = vweird.f32 %v1691
      %vm1698 = vmor %vm1696, %vm1697
      %v1699 = vsel %vm1698, %v1691, %v1695
      %v1700 = vand.u32 2147483647, %v1561
      %vm1701 = vcmp.eq.f32.partialorder %v1700, 8.507059e+37
      %v1702 = vand.u32 %v1561, 2147483648
      %v1703 = vor.u32 1.1754944e-38, %v1702
      %v1704 = vsel %vm1701, %v1703, %v1699
      %v1705 = vmul.f32 1.0, %v1704
      %v1706 = vrcp.pop %v1562
      %v1707 = vmul.f32 %v1562, %v1706
      %v1708 = vsub.f32 1.0, %v1707
      %v1709 = vmul.f32 %v1706, %v1708
      %v1710 = vadd.f32 %v1706, %v1709
      %vm1711 = vweird.f32 %v1562
      %vm1712 = vweird.f32 %v1706
      %vm1713 = vmor %vm1711, %vm1712
      %v1714 = vsel %vm1713, %v1706, %v1710
      %v1715 = vand.u32 2147483647, %v1562
      %vm1716 = vcmp.eq.f32.partialorder %v1715, 8.507059e+37
      %v1717 = vand.u32 %v1562, 2147483648
      %v1718 = vor.u32 1.1754944e-38, %v1717
      %v1719 = vsel %vm1716, %v1718, %v1714
      %v1720 = vmul.f32 1.0, %v1719
      %v1721 = vrcp.pop %v1563
      %v1722 = vmul.f32 %v1563, %v1721
      %v1723 = vsub.f32 1.0, %v1722
      %v1724 = vmul.f32 %v1721, %v1723
      %v1725 = vadd.f32 %v1721, %v1724
      %vm1726 = vweird.f32 %v1563
      %vm1727 = vweird.f32 %v1721
      %vm1728 = vmor %vm1726, %vm1727
      %v1729 = vsel %vm1728, %v1721, %v1725
      %v1730 = vand.u32 2147483647, %v1563
      %vm1731 = vcmp.eq.f32.partialorder %v1730, 8.507059e+37
      %v1732 = vand.u32 %v1563, 2147483648
      %v1733 = vor.u32 1.1754944e-38, %v1732
      %v1734 = vsel %vm1731, %v1733, %v1729
      %v1735 = vmul.f32 1.0, %v1734
      %v1736 = vrcp.pop %v1564
      %v1737 = vmul.f32 %v1564, %v1736
      %v1738 = vsub.f32 1.0, %v1737
      %v1739 = vmul.f32 %v1736, %v1738
      %v1740 = vadd.f32 %v1736, %v1739
      %vm1741 = vweird.f32 %v1564
      %vm1742 = vweird.f32 %v1736
      %vm1743 = vmor %vm1741, %vm1742
      %v1744 = vsel %vm1743, %v1736, %v1740
      %v1745 = vand.u32 2147483647, %v1564
      %vm1746 = vcmp.eq.f32.partialorder %v1745, 8.507059e+37
      %v1747 = vand.u32 %v1564, 2147483648
      %v1748 = vor.u32 1.1754944e-38, %v1747
      %v1749 = vsel %vm1746, %v1748, %v1744
      %v1750 = vmul.f32 1.0, %v1749
      %v1751 = vrcp.pop %v1565
      %v1752 = vmul.f32 %v1565, %v1751
      %v1753 = vsub.f32 1.0, %v1752
      %v1754 = vmul.f32 %v1751, %v1753
      %v1755 = vadd.f32 %v1751, %v1754
      %vm1756 = vweird.f32 %v1565
      %vm1757 = vweird.f32 %v1751
      %vm1758 = vmor %vm1756, %vm1757
      %v1759 = vsel %vm1758, %v1751, %v1755
      %v1760 = vand.u32 2147483647, %v1565
      %vm1761 = vcmp.eq.f32.partialorder %v1760, 8.507059e+37
      %v1762 = vand.u32 %v1565, 2147483648
      %v1763 = vor.u32 1.1754944e-38, %v1762
      %v1764 = vsel %vm1761, %v1763, %v1759
      %v1765 = vmul.f32 1.0, %v1764
      %v1766 = vrcp.pop %v1566
      %v1767 = vmul.f32 %v1566, %v1766
      %v1768 = vsub.f32 1.0, %v1767
      %v1769 = vmul.f32 %v1766, %v1768
      %v1770 = vadd.f32 %v1766, %v1769
      %vm1771 = vweird.f32 %v1566
      %vm1772 = vweird.f32 %v1766
      %vm1773 = vmor %vm1771, %vm1772
      %v1774 = vsel %vm1773, %v1766, %v1770
      %v1775 = vand.u32 2147483647, %v1566
      %vm1776 = vcmp.eq.f32.partialorder %v1775, 8.507059e+37
      %v1777 = vand.u32 %v1566, 2147483648
      %v1778 = vor.u32 1.1754944e-38, %v1777
      %v1779 = vsel %vm1776, %v1778, %v1774
      %v1780 = vmul.f32 1.0, %v1779
      %v1781 = vrcp.pop %v1567
      %v1782 = vmul.f32 %v1567, %v1781
      %v1783 = vsub.f32 1.0, %v1782
      %v1784 = vmul.f32 %v1781, %v1783
      %v1785 = vadd.f32 %v1781, %v1784
      %vm1786 = vweird.f32 %v1567
      %vm1787 = vweird.f32 %v1781
      %vm1788 = vmor %vm1786, %vm1787
      %v1789 = vsel %vm1788, %v1781, %v1785
      %v1790 = vand.u32 2147483647, %v1567
      %vm1791 = vcmp.eq.f32.partialorder %v1790, 8.507059e+37
      %v1792 = vand.u32 %v1567, 2147483648
      %v1793 = vor.u32 1.1754944e-38, %v1792
      %v1794 = vsel %vm1791, %v1793, %v1789
      %v1795 = vmul.f32 1.0, %v1794
      %v1796 = vrcp.pop %v1568
      %v1797 = vmul.f32 %v1568, %v1796
      %v1798 = vsub.f32 1.0, %v1797
      %v1799 = vmul.f32 %v1796, %v1798
      %v1800 = vadd.f32 %v1796, %v1799
      %vm1801 = vweird.f32 %v1568
      %vm1802 = vweird.f32 %v1796
      %vm1803 = vmor %vm1801, %vm1802
      %v1804 = vsel %vm1803, %v1796, %v1800
      %v1805 = vand.u32 2147483647, %v1568
      %vm1806 = vcmp.eq.f32.partialorder %v1805, 8.507059e+37
      %v1807 = vand.u32 %v1568, 2147483648
      %v1808 = vor.u32 1.1754944e-38, %v1807
      %v1809 = vsel %vm1806, %v1808, %v1804
      %v1810 = vmul.f32 1.0, %v1809
      %v1811 = vrcp.pop %v1569
      %v1812 = vmul.f32 %v1569, %v1811
      %v1813 = vsub.f32 1.0, %v1812
      %v1814 = vmul.f32 %v1811, %v1813
      %v1815 = vadd.f32 %v1811, %v1814
      %vm1816 = vweird.f32 %v1569
      %vm1817 = vweird.f32 %v1811
      %vm1818 = vmor %vm1816, %vm1817
      %v1819 = vsel %vm1818, %v1811, %v1815
      %v1820 = vand.u32 2147483647, %v1569
      %vm1821 = vcmp.eq.f32.partialorder %v1820, 8.507059e+37
      %v1822 = vand.u32 %v1569, 2147483648
      %v1823 = vor.u32 1.1754944e-38, %v1822
      %v1824 = vsel %vm1821, %v1823, %v1819
      %v1825 = vmul.f32 1.0, %v1824
      %v1826 = vrcp.pop %v1570
      %v1827 = vmul.f32 %v1570, %v1826
      %v1828 = vsub.f32 1.0, %v1827
      %v1829 = vmul.f32 %v1826, %v1828
      %v1830 = vadd.f32 %v1826, %v1829
      %vm1831 = vweird.f32 %v1570
      %vm1832 = vweird.f32 %v1826
      %vm1833 = vmor %vm1831, %vm1832
      %v1834 = vsel %vm1833, %v1826, %v1830
      %v1835 = vand.u32 2147483647, %v1570
      %vm1836 = vcmp.eq.f32.partialorder %v1835, 8.507059e+37
      %v1837 = vand.u32 %v1570, 2147483648
      %v1838 = vor.u32 1.1754944e-38, %v1837
      %v1839 = vsel %vm1836, %v1838, %v1834
      %v1840 = vmul.f32 1.0, %v1839
      %v1841 = vrcp.pop %v1571
      %v1842 = vmul.f32 %v1571, %v1841
      %v1843 = vsub.f32 1.0, %v1842
      %v1844 = vmul.f32 %v1841, %v1843
      %v1845 = vadd.f32 %v1841, %v1844
      %vm1846 = vweird.f32 %v1571
      %vm1847 = vweird.f32 %v1841
      %vm1848 = vmor %vm1846, %vm1847
      %v1849 = vsel %vm1848, %v1841, %v1845
      %v1850 = vand.u32 2147483647, %v1571
      %vm1851 = vcmp.eq.f32.partialorder %v1850, 8.507059e+37
      %v1852 = vand.u32 %v1571, 2147483648
      %v1853 = vor.u32 1.1754944e-38, %v1852
      %v1854 = vsel %vm1851, %v1853, %v1849
      %v1855 = vmul.f32 1.0, %v1854
      %v1856 = vrcp.pop %v1572
      %v1857 = vmul.f32 %v1572, %v1856
      %v1858 = vsub.f32 1.0, %v1857
      %v1859 = vmul.f32 %v1856, %v1858
      %v1860 = vadd.f32 %v1856, %v1859
      %vm1861 = vweird.f32 %v1572
      %vm1862 = vweird.f32 %v1856
      %vm1863 = vmor %vm1861, %vm1862
      %v1864 = vsel %vm1863, %v1856, %v1860
      %v1865 = vand.u32 2147483647, %v1572
      %vm1866 = vcmp.eq.f32.partialorder %v1865, 8.507059e+37
      %v1867 = vand.u32 %v1572, 2147483648
      %v1868 = vor.u32 1.1754944e-38, %v1867
      %v1869 = vsel %vm1866, %v1868, %v1864
      %v1870 = vmul.f32 1.0, %v1869
      %v1871 = vrcp.pop %v1573
      %v1872 = vmul.f32 %v1573, %v1871
      %v1873 = vsub.f32 1.0, %v1872
      %v1874 = vmul.f32 %v1871, %v1873
      %v1875 = vadd.f32 %v1871, %v1874
      %vm1876 = vweird.f32 %v1573
      %vm1877 = vweird.f32 %v1871
      %vm1878 = vmor %vm1876, %vm1877
      %v1879 = vsel %vm1878, %v1871, %v1875
      %v1880 = vand.u32 2147483647, %v1573
      %vm1881 = vcmp.eq.f32.partialorder %v1880, 8.507059e+37
      %v1882 = vand.u32 %v1573, 2147483648
      %v1883 = vor.u32 1.1754944e-38, %v1882
      %v1884 = vsel %vm1881, %v1883, %v1879
      %v1885 = vmul.f32 1.0, %v1884
      %v1886 = vrcp.pop %v1574
      %v1887 = vmul.f32 %v1574, %v1886
      %v1888 = vsub.f32 1.0, %v1887
      %v1889 = vmul.f32 %v1886, %v1888
      %v1890 = vadd.f32 %v1886, %v1889
      %vm1891 = vweird.f32 %v1574
      %vm1892 = vweird.f32 %v1886
      %vm1893 = vmor %vm1891, %vm1892
      %v1894 = vsel %vm1893, %v1886, %v1890
      %v1895 = vand.u32 2147483647, %v1574
      %vm1896 = vcmp.eq.f32.partialorder %v1895, 8.507059e+37
      %v1897 = vand.u32 %v1574, 2147483648
      %v1898 = vor.u32 1.1754944e-38, %v1897
      %v1899 = vsel %vm1896, %v1898, %v1894
      %v1900 = vmul.f32 1.0, %v1899
      %v1901 = vrcp.pop %v1575
      %v1902 = vmul.f32 %v1575, %v1901
      %v1903 = vsub.f32 1.0, %v1902
      %v1904 = vmul.f32 %v1901, %v1903
      %v1905 = vadd.f32 %v1901, %v1904
      %vm1906 = vweird.f32 %v1575
      %vm1907 = vweird.f32 %v1901
      %vm1908 = vmor %vm1906, %vm1907
      %v1909 = vsel %vm1908, %v1901, %v1905
      %v1910 = vand.u32 2147483647, %v1575
      %vm1911 = vcmp.eq.f32.partialorder %v1910, 8.507059e+37
      %v1912 = vand.u32 %v1575, 2147483648
      %v1913 = vor.u32 1.1754944e-38, %v1912
      %v1914 = vsel %vm1911, %v1913, %v1909
      %v1915 = vmul.f32 1.0, %v1914
      %v1916 = vrcp.pop %v1576
      %v1917 = vmul.f32 %v1576, %v1916
      %v1918 = vsub.f32 1.0, %v1917
      %v1919 = vmul.f32 %v1916, %v1918
      %v1920 = vadd.f32 %v1916, %v1919
      %vm1921 = vweird.f32 %v1576
      %vm1922 = vweird.f32 %v1916
      %vm1923 = vmor %vm1921, %vm1922
      %v1924 = vsel %vm1923, %v1916, %v1920
      %v1925 = vand.u32 2147483647, %v1576
      %vm1926 = vcmp.eq.f32.partialorder %v1925, 8.507059e+37
      %v1927 = vand.u32 %v1576, 2147483648
      %v1928 = vor.u32 1.1754944e-38, %v1927
      %v1929 = vsel %vm1926, %v1928, %v1924
      %v1930 = vmul.f32 1.0, %v1929
      %v1931 = vrcp.pop %v1577
      %v1932 = vmul.f32 %v1577, %v1931
      %v1933 = vsub.f32 1.0, %v1932
      %v1934 = vmul.f32 %v1931, %v1933
      %v1935 = vadd.f32 %v1931, %v1934
      %vm1936 = vweird.f32 %v1577
      %vm1937 = vweird.f32 %v1931
      %vm1938 = vmor %vm1936, %vm1937
      %v1939 = vsel %vm1938, %v1931, %v1935
      %v1940 = vand.u32 2147483647, %v1577
      %vm1941 = vcmp.eq.f32.partialorder %v1940, 8.507059e+37
      %v1942 = vand.u32 %v1577, 2147483648
      %v1943 = vor.u32 1.1754944e-38, %v1942
      %v1944 = vsel %vm1941, %v1943, %v1939
      %v1945 = vmul.f32 1.0, %v1944
      %v1946 = vrcp.pop %v1578
      %v1947 = vmul.f32 %v1578, %v1946
      %v1948 = vsub.f32 1.0, %v1947
      %v1949 = vmul.f32 %v1946, %v1948
      %v1950 = vadd.f32 %v1946, %v1949
      %vm1951 = vweird.f32 %v1578
      %vm1952 = vweird.f32 %v1946
      %vm1953 = vmor %vm1951, %vm1952
      %v1954 = vsel %vm1953, %v1946, %v1950
      %v1955 = vand.u32 2147483647, %v1578
      %vm1956 = vcmp.eq.f32.partialorder %v1955, 8.507059e+37
      %v1957 = vand.u32 %v1578, 2147483648
      %v1958 = vor.u32 1.1754944e-38, %v1957
      %v1959 = vsel %vm1956, %v1958, %v1954
      %v1960 = vmul.f32 1.0, %v1959
      %v1961 = vrcp.pop %v1579
      %v1962 = vmul.f32 %v1579, %v1961
      %v1963 = vsub.f32 1.0, %v1962
      %v1964 = vmul.f32 %v1961, %v1963
      %v1965 = vadd.f32 %v1961, %v1964
      %vm1966 = vweird.f32 %v1579
      %vm1967 = vweird.f32 %v1961
      %vm1968 = vmor %vm1966, %vm1967
      %v1969 = vsel %vm1968, %v1961, %v1965
      %v1970 = vand.u32 2147483647, %v1579
      %vm1971 = vcmp.eq.f32.partialorder %v1970, 8.507059e+37
      %v1972 = vand.u32 %v1579, 2147483648
      %v1973 = vor.u32 1.1754944e-38, %v1972
      %v1974 = vsel %vm1971, %v1973, %v1969
      %v1975 = vmul.f32 1.0, %v1974
      %v1976 = vrcp.pop %v1580
      %v1977 = vmul.f32 %v1580, %v1976
      %v1978 = vsub.f32 1.0, %v1977
      %v1979 = vmul.f32 %v1976, %v1978
      %v1980 = vadd.f32 %v1976, %v1979
      %vm1981 = vweird.f32 %v1580
      %vm1982 = vweird.f32 %v1976
      %vm1983 = vmor %vm1981, %vm1982
      %v1984 = vsel %vm1983, %v1976, %v1980
      %v1985 = vand.u32 2147483647, %v1580
      %vm1986 = vcmp.eq.f32.partialorder %v1985, 8.507059e+37
      %v1987 = vand.u32 %v1580, 2147483648
      %v1988 = vor.u32 1.1754944e-38, %v1987
      %v1989 = vsel %vm1986, %v1988, %v1984
      %v1990 = vmul.f32 1.0, %v1989
      %v1991 = vrcp.pop %v1581
      %v1992 = vmul.f32 %v1581, %v1991
      %v1993 = vsub.f32 1.0, %v1992
      %v1994 = vmul.f32 %v1991, %v1993
      %v1995 = vadd.f32 %v1991, %v1994
      %vm1996 = vweird.f32 %v1581
      %vm1997 = vweird.f32 %v1991
      %vm1998 = vmor %vm1996, %vm1997
      %v1999 = vsel %vm1998, %v1991, %v1995
      %v2000 = vand.u32 2147483647, %v1581
      %vm2001 = vcmp.eq.f32.partialorder %v2000, 8.507059e+37
      %v2002 = vand.u32 %v1581, 2147483648
      %v2003 = vor.u32 1.1754944e-38, %v2002
      %v2004 = vsel %vm2001, %v2003, %v1999
      %v2005 = vmul.f32 1.0, %v2004
      %v2006 = vrcp.pop %v1582
      %v2007 = vmul.f32 %v1582, %v2006
      %v2008 = vsub.f32 1.0, %v2007
      %v2009 = vmul.f32 %v2006, %v2008
      %v2010 = vadd.f32 %v2006, %v2009
      %vm2011 = vweird.f32 %v1582
      %vm2012 = vweird.f32 %v2006
      %vm2013 = vmor %vm2011, %vm2012
      %v2014 = vsel %vm2013, %v2006, %v2010
      %v2015 = vand.u32 2147483647, %v1582
      %vm2016 = vcmp.eq.f32.partialorder %v2015, 8.507059e+37
      %v2017 = vand.u32 %v1582, 2147483648
      %v2018 = vor.u32 1.1754944e-38, %v2017
      %v2019 = vsel %vm2016, %v2018, %v2014
      %v2020 = vmul.f32 1.0, %v2019
      %v2021 = vrcp.pop %v1583
      %v2022 = vmul.f32 %v1583, %v2021
      %v2023 = vsub.f32 1.0, %v2022
      %v2024 = vmul.f32 %v2021, %v2023
      %v2025 = vadd.f32 %v2021, %v2024
      %vm2026 = vweird.f32 %v1583
      %vm2027 = vweird.f32 %v2021
      %vm2028 = vmor %vm2026, %vm2027
      %v2029 = vsel %vm2028, %v2021, %v2025
      %v2030 = vand.u32 2147483647, %v1583
      %vm2031 = vcmp.eq.f32.partialorder %v2030, 8.507059e+37
      %v2032 = vand.u32 %v1583, 2147483648
      %v2033 = vor.u32 1.1754944e-38, %v2032
      %v2034 = vsel %vm2031, %v2033, %v2029
      %v2035 = vmul.f32 1.0, %v2034
      %v2036 = vrcp.pop %v1584
      %v2037 = vmul.f32 %v1584, %v2036
      %v2038 = vsub.f32 1.0, %v2037
      %v2039 = vmul.f32 %v2036, %v2038
      %v2040 = vadd.f32 %v2036, %v2039
      %vm2041 = vweird.f32 %v1584
      %vm2042 = vweird.f32 %v2036
      %vm2043 = vmor %vm2041, %vm2042
      %v2044 = vsel %vm2043, %v2036, %v2040
      %v2045 = vand.u32 2147483647, %v1584
      %vm2046 = vcmp.eq.f32.partialorder %v2045, 8.507059e+37
      %v2047 = vand.u32 %v1584, 2147483648
      %v2048 = vor.u32 1.1754944e-38, %v2047
      %v2049 = vsel %vm2046, %v2048, %v2044
      %v2050 = vmul.f32 1.0, %v2049
      %v2051 = vrcp.pop %v1585
      %v2052 = vmul.f32 %v1585, %v2051
      %v2053 = vsub.f32 1.0, %v2052
      %v2054 = vmul.f32 %v2051, %v2053
      %v2055 = vadd.f32 %v2051, %v2054
      %vm2056 = vweird.f32 %v1585
      %vm2057 = vweird.f32 %v2051
      %vm2058 = vmor %vm2056, %vm2057
      %v2059 = vsel %vm2058, %v2051, %v2055
      %v2060 = vand.u32 2147483647, %v1585
      %vm2061 = vcmp.eq.f32.partialorder %v2060, 8.507059e+37
      %v2062 = vand.u32 %v1585, 2147483648
      %v2063 = vor.u32 1.1754944e-38, %v2062
      %v2064 = vsel %vm2061, %v2063, %v2059
      %v2065 = vmul.f32 1.0, %v2064
      %2066 = vst [vmem:[%s175] sm:$0xff] %v1600
      %2067 = vst [vmem:[%s175 + $0x8] sm:$0xff] %v1615
      %2068 = vst [vmem:[%s175 + $0x10] sm:$0xff] %v1630
      %2069 = vst [vmem:[%s175 + $0x18] sm:$0xff] %v1645
      %2070 = vst [vmem:[%s175 + $0x20] sm:$0xff] %v1660
      %2071 = vst [vmem:[%s175 + $0x28] sm:$0xff] %v1675
      %2072 = vst [vmem:[%s175 + $0x30] sm:$0xff] %v1690
      %2073 = vst [vmem:[%s175 + $0x38] sm:$0xff] %v1705
      %2074 = vst [vmem:[%s175 + $0x40] sm:$0xff] %v1720
      %2075 = vst [vmem:[%s175 + $0x48] sm:$0xff] %v1735
      %2076 = vst [vmem:[%s175 + $0x50] sm:$0xff] %v1750
      %2077 = vst [vmem:[%s175 + $0x58] sm:$0xff] %v1765
      %2078 = vst [vmem:[%s175 + $0x60] sm:$0xff] %v1780
      %2079 = vst [vmem:[%s175 + $0x68] sm:$0xff] %v1795
      %2080 = vst [vmem:[%s175 + $0x70] sm:$0xff] %v1810
      %2081 = vst [vmem:[%s175 + $0x78] sm:$0xff] %v1825
      %2082 = vst [vmem:[%s175 + $0x80] sm:$0xff] %v1840
      %2083 = vst [vmem:[%s175 + $0x88] sm:$0xff] %v1855
      %2084 = vst [vmem:[%s175 + $0x90] sm:$0xff] %v1870
      %2085 = vst [vmem:[%s175 + $0x98] sm:$0xff] %v1885
      %2086 = vst [vmem:[%s175 + $0xa0] sm:$0xff] %v1900
      %2087 = vst [vmem:[%s175 + $0xa8] sm:$0xff] %v1915
      %2088 = vst [vmem:[%s175 + $0xb0] sm:$0xff] %v1930
      %2089 = vst [vmem:[%s175 + $0xb8] sm:$0xff] %v1945
      %2090 = vst [vmem:[%s175 + $0xc0] sm:$0xff] %v1960
      %2091 = vst [vmem:[%s175 + $0xc8] sm:$0xff] %v1975
      %2092 = vst [vmem:[%s175 + $0xd0] sm:$0xff] %v1990
      %2093 = vst [vmem:[%s175 + $0xd8] sm:$0xff] %v2005
      %2094 = vst [vmem:[%s175 + $0xe0] sm:$0xff] %v2020
      %2095 = vst [vmem:[%s175 + $0xe8] sm:$0xff] %v2035
      %2096 = vst [vmem:[%s175 + $0xf0] sm:$0xff] %v2050
      %2097 = vst [vmem:[%s175 + $0xf8] sm:$0xff] %v2065
      %s2098 = smul.u32 32, %s14
      %p2099 = scmp.lt.s32.totalorder %s2098, 63
      %s2100 = scalar_select %p2099, %s2098, 63
      %s2101 = smul.addr %s2100, 8
      %s2102 = scalar_lea.vmem %s3, %s2101
      // Predicated region
      $region33: #{vae_forward.13} parent=31 // pred_check
        %p2103 = pneg %p100
      $region34: #{vae_forward.13} parent=31 // pred_check_branch
        %2105 = sbr.rel (%p2103) target = $region36
      $region35: #{vae_forward.13} parent=31 // pred_region
        %s2106 = smul.u32 32, %s14
      $region36: #{vae_forward.13} parent=31 // pred_fallthru
        _
    $region32: #{vae_forward.13} parent=5 // pred_fallthru
      _
    %p2107 = scmp.le.s32.totalorder 2, %s9
    // Predicated region
    $region37: #{vae_forward.13} parent=5 // pred_check
      %p2108 = pneg %p2107
    $region38: #{vae_forward.13} parent=5 // pred_check_branch
      %2110 = sbr.rel (%p2108) target = $region40
    $region39: #{vae_forward.13} parent=5 // pred_region
      %s2111 = ssub.s32 %s9, 2
      // Predicated region
      $region41: #{vae_forward.13} parent=39 // pred_check
        %p2112 = pneg %p106
      $region42: #{vae_forward.13} parent=39 // pred_check_branch
        %2114 = sbr.rel (%p2112) target = $region44
      $region43: #{vae_forward.13} parent=39 // pred_region
        %s2115 = smul.u32 32, %s15
        %p2116 = scmp.lt.s32.totalorder %s2115, 63
        %s2117 = scalar_select %p2116, %s2115, 63
        %s2118 = smul.addr %s2117, 8
        %s2119 = scalar_lea.vmem %s3, %s2118
      $region44: #{vae_forward.13} parent=39 // pred_fallthru
        _
    $region40: #{vae_forward.13} parent=5 // pred_fallthru
      _
  $region6: #{vae_forward.13} parent=0 // loop_footer
    %s13 = sadd.s32 1, %s9
  $region7: #{vae_forward.13} parent=0 // loop_footer_branch
    %8 = sbr.rel target = $region3
  $region8: #{vae_forward.13} parent=0 // loop_exit
    _

</llo_original>
